<compile_context>
chip_gen: v5e
topology: v5e:2x2
jax: 0.10.0
libtpu: 0.0.40
codegen_flags: <defaults>
</compile_context>

<pallas_src>
import math
import functools

import jax
import jax.numpy as jnp
from jax import lax
from jax.experimental import pallas as pl
from jax.experimental.pallas import tpu as pltpu

LN_EPS = 1e-5          # PyTorch nn.LayerNorm default
NORM_EPS = 1e-12       # F.normalize default
MSC_T = 1000.0         # Modality_Shared_Codebook temperature
N_BISECT = 30          # sparsemax bisection iterations (f32-exact by ~24; finisher below)


# ---------------------------------------------------------------------------
# small in-kernel math helpers (vector ops only)
# ---------------------------------------------------------------------------
def _erf(x):
    # Abramowitz–Stegun 7.1.26, |err| < 1.5e-7 (~= f32 eps). nn.GELU() exact semantics.
    p = 0.3275911
    a1, a2, a3, a4, a5 = 0.254829592, -0.284496736, 1.421413741, -1.453152027, 1.061405429
    ax = jnp.abs(x)
    t = 1.0 / (1.0 + p * ax)
    poly = ((((a5 * t + a4) * t + a3) * t + a2) * t + a1) * t
    y = 1.0 - poly * jnp.exp(-ax * ax)
    return jnp.where(x >= 0.0, y, -y)


def _gelu_exact(x):
    return 0.5 * x * (1.0 + _erf(x * (1.0 / math.sqrt(2.0))))


def _layernorm(x, g, b):
    mu = jnp.mean(x, axis=-1, keepdims=True)
    var = jnp.mean((x - mu) ** 2, axis=-1, keepdims=True)
    return (x - mu) * lax.rsqrt(var + LN_EPS) * g + b


# ---------------------------------------------------------------------------
# Single fused kernel: proj(audio) + proj(text) -> MSC (both modalities) ->
# batched sparsemax -> embeds -> contrastive loss + embed regularization.
# Everything fits comfortably in VMEM (codebook 2x512 KiB, scores ~0.5 MiB).
# ---------------------------------------------------------------------------
def ase_fused_kernel(a_ref, t_ref, mask_ref,
                     ag1, ab1, aw1, ac1, ag2, ab2, aw2, ac2,
                     tg1, tb1, tw1, tc1, tg2, tb2, tw2, tc2,
                     cbt_ref, cb_ref, tgt_ref, temp_ref, o_ref,
                     *, B, Ta, St, sqrt_d, T, n_bisect):
    C = cb_ref.shape[0]
    E = cb_ref.shape[1]

    def proj(x, g1, b1, w1, c1, g2, b2, w2, c2):
        h = _layernorm(x, g1[...], b1[...])
        h = jnp.dot(h, w1[...], preferred_element_type=jnp.float32) + c1[...]
        h = _gelu_exact(h)
        h = _layernorm(h, g2[...], b2[...])
        return jnp.dot(h, w2[...], preferred_element_type=jnp.float32) + c2[...]

    # projection heads (cast inside the kernel; no wrapper HBM pass)
    qa = proj(a_ref[...].astype(jnp.float32),
              ag1, ab1, aw1, ac1, ag2, ab2, aw2, ac2)          # [B*Ta, E]
    qt = proj(t_ref[...].astype(jnp.float32),
              tg1, tb1, tw1, tc1, tg2, tb2, tw2, tc2)          # [B*St, E]

    # Modality_Shared_Codebook attention scores with lane-dense N = C
    cbt = cbt_ref[...]                                          # [E, C], pre-transposed
    sa = jnp.dot(qa, cbt, preferred_element_type=jnp.float32)   # [B*Ta, C]
    sa = sa / sqrt_d
    sa = sa / T
    st = jnp.dot(qt, cbt, preferred_element_type=jnp.float32)   # [B*St, C]
    st = st / sqrt_d
    st = st * mask_ref[...].astype(jnp.float32)                 # multiplicative mask (ref semantics)
    st = st / T

    # max over the sequence dimension, per batch element
    z_a = jnp.max(sa.reshape(B, Ta, C), axis=1)                 # [B, C]
    z_t = jnp.max(st.reshape(B, St, C), axis=1)                 # [B, C]
    z = jnp.concatenate([z_a, z_t], axis=0)                     # [2B, C] (audio rows, then text)

    # ---- sparsemax over codes, batched over all 2B rows -------------------
    z = z - jnp.max(z, axis=-1, keepdims=True)                  # shift-invariant; z_max -> 0
    R = 2 * B
    lo = jnp.full((R, 1), -1.0, jnp.float32)                    # tau in [z_max - 1, z_max]
    hi = jnp.zeros((R, 1), jnp.float32)

    def body(_, carry):
        lo, hi = carry
        mid = 0.5 * (lo + hi)
        s = jnp.sum(jnp.maximum(z - mid, 0.0), axis=-1, keepdims=True)
        ge = s >= 1.0
        return jnp.where(ge, mid, lo), jnp.where(ge, hi, mid)

    lo, hi = lax.fori_loop(0, n_bisect, body, (lo, hi), unroll=True)
    tau0 = 0.5 * (lo + hi)

    # exact closed-form threshold on the bisection-determined support
    # (matches torch: taus = (sum of supported zs - 1) / k)
    supp = (z > tau0).astype(jnp.float32)
    k = jnp.sum(supp, axis=-1, keepdims=True)                   # k >= 1 always
    tau = (jnp.sum(z * supp, axis=-1, keepdims=True) - 1.0) / k
    p = jnp.maximum(z - tau, 0.0)                               # [2B, C]

    # attn_weight @ codebook for both modalities at once
    emb = jnp.dot(p, cb_ref[...], preferred_element_type=jnp.float32)   # [2B, E]

    # ---- contrastive loss + embed regularization --------------------------
    def l2norm(x):
        n = jnp.sqrt(jnp.sum(x * x, axis=-1, keepdims=True))
        return x / jnp.maximum(n, NORM_EPS)

    a_n = l2norm(emb[:B])                                       # [B, E]
    t_n = l2norm(emb[B:])                                       # [B, E]

    temp = temp_ref[0, 0]                                       # scalar from SMEM
    tgt = tgt_ref[...]                                          # [B, B]

    sim_a2t = lax.dot_general(a_n, t_n, (((1,), (1,)), ((), ())),
                              preferred_element_type=jnp.float32) / temp
    sim_t2a = lax.dot_general(t_n, a_n, (((1,), (1,)), ((), ())),
                              preferred_element_type=jnp.float32) / temp

    def soft_ce(sim):
        m = jnp.max(sim, axis=-1, keepdims=True)
        lse = jnp.log(jnp.sum(jnp.exp(sim - m), axis=-1, keepdims=True)) + m
        rows = jnp.sum(-(sim - lse) * tgt, axis=-1, keepdims=True)      # [B, 1]
        return jnp.sum(rows, axis=0, keepdims=True) * (1.0 / B)         # [1, 1]

    loss = 0.5 * (soft_ce(sim_a2t) + soft_ce(sim_t2a))

    def reg(x):   # mean(|x|) / sqrt(sum(x^2)) on the normalized embeds (ref order)
        s_abs = jnp.sum(jnp.sum(jnp.abs(x), axis=-1, keepdims=True), axis=0, keepdims=True)
        s_sq = jnp.sum(jnp.sum(x * x, axis=-1, keepdims=True), axis=0, keepdims=True)
        return (s_abs * (1.0 / (B * E))) / jnp.sqrt(s_sq)

    loss = loss + reg(a_n) + reg(t_n)
    o_ref[...] = loss.astype(o_ref.dtype)


# ---------------------------------------------------------------------------
# ASE forward: one fused pallas_call
# ---------------------------------------------------------------------------
def ase_forward(params, audio_frame_feats, text_feats, attn_mask, idx):
    B, Ta, Wa = audio_frame_feats.shape
    _, Tt, Wt = text_feats.shape
    St = Tt - 1                                   # CLS-like token dropped for word_proj

    a2d = audio_frame_feats.reshape(B * Ta, Wa)   # layout plumbing only (no dtype pass)
    t2d = text_feats[:, 1:, :].reshape(B * St, Wt)
    mask_col = attn_mask.astype(jnp.float32).reshape(B * St, 1)

    idx = idx.reshape(-1, 1)
    pos_idx = (idx == idx.T).astype(jnp.float32)
    sim_targets = pos_idx / jnp.sum(pos_idx, axis=1, keepdims=True)     # [B, B]

    cb = params["codebook"]                       # [C, E]
    cb_t = cb.T                                   # [E, C] lane-dense RHS for the big matmul
    temp = params["temp"].reshape(1, 1).astype(jnp.float32)

    E = cb.shape[1]
    kernel = functools.partial(
        ase_fused_kernel, B=B, Ta=Ta, St=St,
        sqrt_d=math.sqrt(E), T=MSC_T, n_bisect=N_BISECT)

    inputs = (a2d, t2d, mask_col,
              *params["frame_proj"], *params["word_proj"],
              cb_t, cb, sim_targets, temp)
    in_specs = ([pl.BlockSpec(memory_space=pltpu.MemorySpace.VMEM)] * (len(inputs) - 1)
                + [pl.BlockSpec(memory_space=pltpu.MemorySpace.SMEM)])   # temp -> SMEM scalar

    out = pl.pallas_call(
        kernel,
        out_shape=jax.ShapeDtypeStruct((1, 1), jnp.float32),
        in_specs=in_specs,
        out_specs=pl.BlockSpec(memory_space=pltpu.MemorySpace.VMEM),
    )(*inputs)
    return out[0, 0]


# ---------------------------------------------------------------------------
# deterministic parameter init (synthetic; mirrors the __init__ shapes)
# ---------------------------------------------------------------------------
def _init_proj(key, in_width, embed):
    k1, k2 = jax.random.split(key)
    g1 = jnp.ones((1, in_width), jnp.float32)
    b1 = jnp.zeros((1, in_width), jnp.float32)
    w1 = jax.random.normal(k1, (in_width, embed), jnp.float32) / math.sqrt(in_width)
    c1 = jnp.zeros((1, embed), jnp.float32)
    g2 = jnp.ones((1, embed), jnp.float32)
    b2 = jnp.zeros((1, embed), jnp.float32)
    w2 = jax.random.normal(k2, (embed, embed), jnp.float32) / math.sqrt(embed)
    c2 = jnp.zeros((1, embed), jnp.float32)
    return (g1, b1, w1, c1, g2, b2, w2, c2)


def init_params(key, audio_width, text_width, embed_size, code_num, temp):
    kf, kw, kc = jax.random.split(key, 3)
    return {
        "frame_proj": _init_proj(kf, audio_width, embed_size),
        "word_proj": _init_proj(kw, text_width, embed_size),
        "codebook": jax.random.normal(kc, (code_num, embed_size), jnp.float32),
        "temp": jnp.asarray(temp, jnp.float32),
    }


if __name__ == "__main__":
    key = jax.random.PRNGKey(0)
    B, Ta, Tt = 2, 8, 9                 # Tt includes the CLS-like token (dropped)
    audio_width = 32
    text_width = 32
    embed_size = 32
    code_num = 4096                     # as in the module's __init__
    config = {"embed_size": embed_size, "temp": 0.07, "embed_regularization": True}

    k_par, k_aud, k_txt = jax.random.split(key, 3)
    params = init_params(k_par, audio_width, text_width, embed_size, code_num, config["temp"])

    # stub encoder outputs (see TODO above)
    audio_frame_feats = jax.random.normal(k_aud, (B, Ta, audio_width), jnp.float32)
    text_feats = jax.random.normal(k_txt, (B, Tt, text_width), jnp.float32)
    attn_mask = jnp.array([[1, 1, 1, 1, 1, 1, 0, 0],
                           [1, 1, 1, 1, 1, 0, 0, 0]], jnp.float32)   # [B, Tt-1]
    idx = jnp.array([0, 1], jnp.int32)

    loss = ase_forward(params, audio_frame_feats, text_feats, attn_mask, idx)
    jax.block_until_ready(loss)
    print("KERNEL_OK")
</pallas_src>

<mosaic_0001>
module attributes {stable_mosaic.version = 11 : i64} {
  func.func @ase_fused_kernel(%arg0: memref<16x32xf32, #tpu.memory_space<vmem>>, %arg1: memref<16x32xf32, #tpu.memory_space<vmem>>, %arg2: memref<16x1xf32, #tpu.memory_space<vmem>>, %arg3: memref<1x32xf32, #tpu.memory_space<vmem>>, %arg4: memref<1x32xf32, #tpu.memory_space<vmem>>, %arg5: memref<32x32xf32, #tpu.memory_space<vmem>>, %arg6: memref<1x32xf32, #tpu.memory_space<vmem>>, %arg7: memref<1x32xf32, #tpu.memory_space<vmem>>, %arg8: memref<1x32xf32, #tpu.memory_space<vmem>>, %arg9: memref<32x32xf32, #tpu.memory_space<vmem>>, %arg10: memref<1x32xf32, #tpu.memory_space<vmem>>, %arg11: memref<1x32xf32, #tpu.memory_space<vmem>>, %arg12: memref<1x32xf32, #tpu.memory_space<vmem>>, %arg13: memref<32x32xf32, #tpu.memory_space<vmem>>, %arg14: memref<1x32xf32, #tpu.memory_space<vmem>>, %arg15: memref<1x32xf32, #tpu.memory_space<vmem>>, %arg16: memref<1x32xf32, #tpu.memory_space<vmem>>, %arg17: memref<32x32xf32, #tpu.memory_space<vmem>>, %arg18: memref<1x32xf32, #tpu.memory_space<vmem>>, %arg19: memref<32x4096xf32, #tpu.memory_space<vmem>>, %arg20: memref<4096x32xf32, #tpu.memory_space<vmem>>, %arg21: memref<2x2xf32, #tpu.memory_space<vmem>>, %arg22: memref<1x1xf32, #tpu.memory_space<smem>>, %arg23: memref<1x1xf32, #tpu.memory_space<vmem>>) attributes {dimension_semantics = [], scalar_prefetch = 0 : i64, scratch_operands = 0 : i64, tpu.core_type = #tpu.core_type<tc>} {
    %c0 = arith.constant 0 : index
    %c0_0 = arith.constant 0 : index
    %0 = vector.load %arg0[%c0, %c0_0] : memref<16x32xf32, #tpu.memory_space<vmem>>, vector<16x32xf32>
    %c0_1 = arith.constant 0 : index
    %c0_2 = arith.constant 0 : index
    %1 = vector.load %arg3[%c0_1, %c0_2] : memref<1x32xf32, #tpu.memory_space<vmem>>, vector<1x32xf32>
    %c0_3 = arith.constant 0 : index
    %c0_4 = arith.constant 0 : index
    %2 = vector.load %arg4[%c0_3, %c0_4] : memref<1x32xf32, #tpu.memory_space<vmem>>, vector<1x32xf32>
    %cst = arith.constant dense<0.000000e+00> : vector<16xf32>
    %3 = vector.multi_reduction <add>, %0, %cst [1] : vector<16x32xf32> to vector<16xf32>
    %4 = vector.shape_cast %3 : vector<16xf32> to vector<16x1xf32>
    %cst_5 = arith.constant 3.200000e+01 : f32
    %5 = vector.broadcast %cst_5 : f32 to vector<16x1xf32>
    %6 = arith.divf %4, %5 : vector<16x1xf32>
    %7 = vector.broadcast %6 : vector<16x1xf32> to vector<16x32xf32>
    %8 = arith.subf %0, %7 : vector<16x32xf32>
    %9 = arith.mulf %8, %8 : vector<16x32xf32>
    %cst_6 = arith.constant dense<0.000000e+00> : vector<16xf32>
    %10 = vector.multi_reduction <add>, %9, %cst_6 [1] : vector<16x32xf32> to vector<16xf32>
    %11 = vector.shape_cast %10 : vector<16xf32> to vector<16x1xf32>
    %cst_7 = arith.constant 3.200000e+01 : f32
    %12 = vector.broadcast %cst_7 : f32 to vector<16x1xf32>
    %13 = arith.divf %11, %12 : vector<16x1xf32>
    %14 = vector.broadcast %6 : vector<16x1xf32> to vector<16x32xf32>
    %15 = arith.subf %0, %14 : vector<16x32xf32>
    %cst_8 = arith.constant 9.99999974E-6 : f32
    %16 = vector.broadcast %cst_8 : f32 to vector<16x1xf32>
    %17 = arith.addf %13, %16 : vector<16x1xf32>
    %18 = math.rsqrt %17 : vector<16x1xf32>
    %19 = vector.broadcast %18 : vector<16x1xf32> to vector<16x32xf32>
    %20 = arith.mulf %15, %19 : vector<16x32xf32>
    %21 = vector.broadcast %1 : vector<1x32xf32> to vector<16x32xf32>
    %22 = arith.mulf %20, %21 : vector<16x32xf32>
    %23 = vector.broadcast %2 : vector<1x32xf32> to vector<16x32xf32>
    %24 = arith.addf %22, %23 : vector<16x32xf32>
    %c0_9 = arith.constant 0 : index
    %c0_10 = arith.constant 0 : index
    %25 = vector.load %arg5[%c0_9, %c0_10] : memref<32x32xf32, #tpu.memory_space<vmem>>, vector<32x32xf32>
    %cst_11 = arith.constant dense<0.000000e+00> : vector<16x32xf32>
    %26 = tpu.matmul %24, %25, %cst_11 {dimension_numbers = #tpu.dot_dimension_numbers<[1], [0], [0], [1], [0, 0, 1, 1], [], []>} : vector<16x32xf32>, vector<32x32xf32>, vector<16x32xf32> -> vector<16x32xf32>
    %c0_12 = arith.constant 0 : index
    %c0_13 = arith.constant 0 : index
    %27 = vector.load %arg6[%c0_12, %c0_13] : memref<1x32xf32, #tpu.memory_space<vmem>>, vector<1x32xf32>
    %28 = vector.broadcast %27 : vector<1x32xf32> to vector<16x32xf32>
    %29 = arith.addf %26, %28 : vector<16x32xf32>
    %cst_14 = arith.constant 5.000000e-01 : f32
    %30 = vector.broadcast %cst_14 : f32 to vector<16x32xf32>
    %31 = arith.mulf %30, %29 : vector<16x32xf32>
    %cst_15 = arith.constant 0.707106769 : f32
    %32 = vector.broadcast %cst_15 : f32 to vector<16x32xf32>
    %33 = arith.mulf %29, %32 : vector<16x32xf32>
    %34 = math.absf %33 : vector<16x32xf32>
    %cst_16 = arith.constant 0.327591091 : f32
    %35 = vector.broadcast %cst_16 : f32 to vector<16x32xf32>
    %36 = arith.mulf %35, %34 : vector<16x32xf32>
    %cst_17 = arith.constant 1.000000e+00 : f32
    %37 = vector.broadcast %cst_17 : f32 to vector<16x32xf32>
    %38 = arith.addf %37, %36 : vector<16x32xf32>
    %cst_18 = arith.constant 1.000000e+00 : f32
    %39 = vector.broadcast %cst_18 : f32 to vector<16x32xf32>
    %40 = arith.divf %39, %38 : vector<16x32xf32>
    %cst_19 = arith.constant 1.06140542 : f32
    %41 = vector.broadcast %cst_19 : f32 to vector<16x32xf32>
    %42 = arith.mulf %41, %40 : vector<16x32xf32>
    %cst_20 = arith.constant -1.45315206 : f32
    %43 = vector.broadcast %cst_20 : f32 to vector<16x32xf32>
    %44 = arith.addf %42, %43 : vector<16x32xf32>
    %45 = arith.mulf %44, %40 : vector<16x32xf32>
    %cst_21 = arith.constant 1.42141378 : f32
    %46 = vector.broadcast %cst_21 : f32 to vector<16x32xf32>
    %47 = arith.addf %45, %46 : vector<16x32xf32>
    %48 = arith.mulf %47, %40 : vector<16x32xf32>
    %cst_22 = arith.constant -0.284496725 : f32
    %49 = vector.broadcast %cst_22 : f32 to vector<16x32xf32>
    %50 = arith.addf %48, %49 : vector<16x32xf32>
    %51 = arith.mulf %50, %40 : vector<16x32xf32>
    %cst_23 = arith.constant 0.254829586 : f32
    %52 = vector.broadcast %cst_23 : f32 to vector<16x32xf32>
    %53 = arith.addf %51, %52 : vector<16x32xf32>
    %54 = arith.mulf %53, %40 : vector<16x32xf32>
    %cst_24 = arith.constant 0.000000e+00 : f32
    %55 = vector.broadcast %cst_24 : f32 to vector<16x32xf32>
    %56 = arith.subf %55, %34 : vector<16x32xf32>
    %57 = arith.mulf %56, %34 : vector<16x32xf32>
    %58 = math.exp %57 : vector<16x32xf32>
    %59 = arith.mulf %54, %58 : vector<16x32xf32>
    %cst_25 = arith.constant 1.000000e+00 : f32
    %60 = vector.broadcast %cst_25 : f32 to vector<16x32xf32>
    %61 = arith.subf %60, %59 : vector<16x32xf32>
    %cst_26 = arith.constant 0.000000e+00 : f32
    %62 = vector.broadcast %cst_26 : f32 to vector<16x32xf32>
    %63 = arith.cmpf oge, %33, %62 : vector<16x32xf32>
    %cst_27 = arith.constant 0.000000e+00 : f32
    %64 = vector.broadcast %cst_27 : f32 to vector<16x32xf32>
    %65 = arith.subf %64, %61 : vector<16x32xf32>
    %66 = arith.select %63, %61, %65 : vector<16x32xi1>, vector<16x32xf32>
    %cst_28 = arith.constant 1.000000e+00 : f32
    %67 = vector.broadcast %cst_28 : f32 to vector<16x32xf32>
    %68 = arith.addf %67, %66 : vector<16x32xf32>
    %69 = arith.mulf %31, %68 : vector<16x32xf32>
    %c0_29 = arith.constant 0 : index
    %c0_30 = arith.constant 0 : index
    %70 = vector.load %arg7[%c0_29, %c0_30] : memref<1x32xf32, #tpu.memory_space<vmem>>, vector<1x32xf32>
    %c0_31 = arith.constant 0 : index
    %c0_32 = arith.constant 0 : index
    %71 = vector.load %arg8[%c0_31, %c0_32] : memref<1x32xf32, #tpu.memory_space<vmem>>, vector<1x32xf32>
    %cst_33 = arith.constant dense<0.000000e+00> : vector<16xf32>
    %72 = vector.multi_reduction <add>, %69, %cst_33 [1] : vector<16x32xf32> to vector<16xf32>
    %73 = vector.shape_cast %72 : vector<16xf32> to vector<16x1xf32>
    %cst_34 = arith.constant 3.200000e+01 : f32
    %74 = vector.broadcast %cst_34 : f32 to vector<16x1xf32>
    %75 = arith.divf %73, %74 : vector<16x1xf32>
    %76 = vector.broadcast %75 : vector<16x1xf32> to vector<16x32xf32>
    %77 = arith.subf %69, %76 : vector<16x32xf32>
    %78 = arith.mulf %77, %77 : vector<16x32xf32>
    %cst_35 = arith.constant dense<0.000000e+00> : vector<16xf32>
    %79 = vector.multi_reduction <add>, %78, %cst_35 [1] : vector<16x32xf32> to vector<16xf32>
    %80 = vector.shape_cast %79 : vector<16xf32> to vector<16x1xf32>
    %cst_36 = arith.constant 3.200000e+01 : f32
    %81 = vector.broadcast %cst_36 : f32 to vector<16x1xf32>
    %82 = arith.divf %80, %81 : vector<16x1xf32>
    %83 = vector.broadcast %75 : vector<16x1xf32> to vector<16x32xf32>
    %84 = arith.subf %69, %83 : vector<16x32xf32>
    %cst_37 = arith.constant 9.99999974E-6 : f32
    %85 = vector.broadcast %cst_37 : f32 to vector<16x1xf32>
    %86 = arith.addf %82, %85 : vector<16x1xf32>
    %87 = math.rsqrt %86 : vector<16x1xf32>
    %88 = vector.broadcast %87 : vector<16x1xf32> to vector<16x32xf32>
    %89 = arith.mulf %84, %88 : vector<16x32xf32>
    %90 = vector.broadcast %70 : vector<1x32xf32> to vector<16x32xf32>
    %91 = arith.mulf %89, %90 : vector<16x32xf32>
    %92 = vector.broadcast %71 : vector<1x32xf32> to vector<16x32xf32>
    %93 = arith.addf %91, %92 : vector<16x32xf32>
    %c0_38 = arith.constant 0 : index
    %c0_39 = arith.constant 0 : index
    %94 = vector.load %arg9[%c0_38, %c0_39] : memref<32x32xf32, #tpu.memory_space<vmem>>, vector<32x32xf32>
    %cst_40 = arith.constant dense<0.000000e+00> : vector<16x32xf32>
    %95 = tpu.matmul %93, %94, %cst_40 {dimension_numbers = #tpu.dot_dimension_numbers<[1], [0], [0], [1], [0, 0, 1, 1], [], []>} : vector<16x32xf32>, vector<32x32xf32>, vector<16x32xf32> -> vector<16x32xf32>
    %c0_41 = arith.constant 0 : index
    %c0_42 = arith.constant 0 : index
    %96 = vector.load %arg10[%c0_41, %c0_42] : memref<1x32xf32, #tpu.memory_space<vmem>>, vector<1x32xf32>
    %97 = vector.broadcast %96 : vector<1x32xf32> to vector<16x32xf32>
    %98 = arith.addf %95, %97 : vector<16x32xf32>
    %c0_43 = arith.constant 0 : index
    %c0_44 = arith.constant 0 : index
    %99 = vector.load %arg1[%c0_43, %c0_44] : memref<16x32xf32, #tpu.memory_space<vmem>>, vector<16x32xf32>
    %c0_45 = arith.constant 0 : index
    %c0_46 = arith.constant 0 : index
    %100 = vector.load %arg11[%c0_45, %c0_46] : memref<1x32xf32, #tpu.memory_space<vmem>>, vector<1x32xf32>
    %c0_47 = arith.constant 0 : index
    %c0_48 = arith.constant 0 : index
    %101 = vector.load %arg12[%c0_47, %c0_48] : memref<1x32xf32, #tpu.memory_space<vmem>>, vector<1x32xf32>
    %cst_49 = arith.constant dense<0.000000e+00> : vector<16xf32>
    %102 = vector.multi_reduction <add>, %99, %cst_49 [1] : vector<16x32xf32> to vector<16xf32>
    %103 = vector.shape_cast %102 : vector<16xf32> to vector<16x1xf32>
    %cst_50 = arith.constant 3.200000e+01 : f32
    %104 = vector.broadcast %cst_50 : f32 to vector<16x1xf32>
    %105 = arith.divf %103, %104 : vector<16x1xf32>
    %106 = vector.broadcast %105 : vector<16x1xf32> to vector<16x32xf32>
    %107 = arith.subf %99, %106 : vector<16x32xf32>
    %108 = arith.mulf %107, %107 : vector<16x32xf32>
    %cst_51 = arith.constant dense<0.000000e+00> : vector<16xf32>
    %109 = vector.multi_reduction <add>, %108, %cst_51 [1] : vector<16x32xf32> to vector<16xf32>
    %110 = vector.shape_cast %109 : vector<16xf32> to vector<16x1xf32>
    %cst_52 = arith.constant 3.200000e+01 : f32
    %111 = vector.broadcast %cst_52 : f32 to vector<16x1xf32>
    %112 = arith.divf %110, %111 : vector<16x1xf32>
    %113 = vector.broadcast %105 : vector<16x1xf32> to vector<16x32xf32>
    %114 = arith.subf %99, %113 : vector<16x32xf32>
    %cst_53 = arith.constant 9.99999974E-6 : f32
    %115 = vector.broadcast %cst_53 : f32 to vector<16x1xf32>
    %116 = arith.addf %112, %115 : vector<16x1xf32>
    %117 = math.rsqrt %116 : vector<16x1xf32>
    %118 = vector.broadcast %117 : vector<16x1xf32> to vector<16x32xf32>
    %119 = arith.mulf %114, %118 : vector<16x32xf32>
    %120 = vector.broadcast %100 : vector<1x32xf32> to vector<16x32xf32>
    %121 = arith.mulf %119, %120 : vector<16x32xf32>
    %122 = vector.broadcast %101 : vector<1x32xf32> to vector<16x32xf32>
    %123 = arith.addf %121, %122 : vector<16x32xf32>
    %c0_54 = arith.constant 0 : index
    %c0_55 = arith.constant 0 : index
    %124 = vector.load %arg13[%c0_54, %c0_55] : memref<32x32xf32, #tpu.memory_space<vmem>>, vector<32x32xf32>
    %cst_56 = arith.constant dense<0.000000e+00> : vector<16x32xf32>
    %125 = tpu.matmul %123, %124, %cst_56 {dimension_numbers = #tpu.dot_dimension_numbers<[1], [0], [0], [1], [0, 0, 1, 1], [], []>} : vector<16x32xf32>, vector<32x32xf32>, vector<16x32xf32> -> vector<16x32xf32>
    %c0_57 = arith.constant 0 : index
    %c0_58 = arith.constant 0 : index
    %126 = vector.load %arg14[%c0_57, %c0_58] : memref<1x32xf32, #tpu.memory_space<vmem>>, vector<1x32xf32>
    %127 = vector.broadcast %126 : vector<1x32xf32> to vector<16x32xf32>
    %128 = arith.addf %125, %127 : vector<16x32xf32>
    %cst_59 = arith.constant 5.000000e-01 : f32
    %129 = vector.broadcast %cst_59 : f32 to vector<16x32xf32>
    %130 = arith.mulf %129, %128 : vector<16x32xf32>
    %cst_60 = arith.constant 0.707106769 : f32
    %131 = vector.broadcast %cst_60 : f32 to vector<16x32xf32>
    %132 = arith.mulf %128, %131 : vector<16x32xf32>
    %133 = math.absf %132 : vector<16x32xf32>
    %cst_61 = arith.constant 0.327591091 : f32
    %134 = vector.broadcast %cst_61 : f32 to vector<16x32xf32>
    %135 = arith.mulf %134, %133 : vector<16x32xf32>
    %cst_62 = arith.constant 1.000000e+00 : f32
    %136 = vector.broadcast %cst_62 : f32 to vector<16x32xf32>
    %137 = arith.addf %136, %135 : vector<16x32xf32>
    %cst_63 = arith.constant 1.000000e+00 : f32
    %138 = vector.broadcast %cst_63 : f32 to vector<16x32xf32>
    %139 = arith.divf %138, %137 : vector<16x32xf32>
    %cst_64 = arith.constant 1.06140542 : f32
    %140 = vector.broadcast %cst_64 : f32 to vector<16x32xf32>
    %141 = arith.mulf %140, %139 : vector<16x32xf32>
    %cst_65 = arith.constant -1.45315206 : f32
    %142 = vector.broadcast %cst_65 : f32 to vector<16x32xf32>
    %143 = arith.addf %141, %142 : vector<16x32xf32>
    %144 = arith.mulf %143, %139 : vector<16x32xf32>
    %cst_66 = arith.constant 1.42141378 : f32
    %145 = vector.broadcast %cst_66 : f32 to vector<16x32xf32>
    %146 = arith.addf %144, %145 : vector<16x32xf32>
    %147 = arith.mulf %146, %139 : vector<16x32xf32>
    %cst_67 = arith.constant -0.284496725 : f32
    %148 = vector.broadcast %cst_67 : f32 to vector<16x32xf32>
    %149 = arith.addf %147, %148 : vector<16x32xf32>
    %150 = arith.mulf %149, %139 : vector<16x32xf32>
    %cst_68 = arith.constant 0.254829586 : f32
    %151 = vector.broadcast %cst_68 : f32 to vector<16x32xf32>
    %152 = arith.addf %150, %151 : vector<16x32xf32>
    %153 = arith.mulf %152, %139 : vector<16x32xf32>
    %cst_69 = arith.constant 0.000000e+00 : f32
    %154 = vector.broadcast %cst_69 : f32 to vector<16x32xf32>
    %155 = arith.subf %154, %133 : vector<16x32xf32>
    %156 = arith.mulf %155, %133 : vector<16x32xf32>
    %157 = math.exp %156 : vector<16x32xf32>
    %158 = arith.mulf %153, %157 : vector<16x32xf32>
    %cst_70 = arith.constant 1.000000e+00 : f32
    %159 = vector.broadcast %cst_70 : f32 to vector<16x32xf32>
    %160 = arith.subf %159, %158 : vector<16x32xf32>
    %cst_71 = arith.constant 0.000000e+00 : f32
    %161 = vector.broadcast %cst_71 : f32 to vector<16x32xf32>
    %162 = arith.cmpf oge, %132, %161 : vector<16x32xf32>
    %cst_72 = arith.constant 0.000000e+00 : f32
    %163 = vector.broadcast %cst_72 : f32 to vector<16x32xf32>
    %164 = arith.subf %163, %160 : vector<16x32xf32>
    %165 = arith.select %162, %160, %164 : vector<16x32xi1>, vector<16x32xf32>
    %cst_73 = arith.constant 1.000000e+00 : f32
    %166 = vector.broadcast %cst_73 : f32 to vector<16x32xf32>
    %167 = arith.addf %166, %165 : vector<16x32xf32>
    %168 = arith.mulf %130, %167 : vector<16x32xf32>
    %c0_74 = arith.constant 0 : index
    %c0_75 = arith.constant 0 : index
    %169 = vector.load %arg15[%c0_74, %c0_75] : memref<1x32xf32, #tpu.memory_space<vmem>>, vector<1x32xf32>
    %c0_76 = arith.constant 0 : index
    %c0_77 = arith.constant 0 : index
    %170 = vector.load %arg16[%c0_76, %c0_77] : memref<1x32xf32, #tpu.memory_space<vmem>>, vector<1x32xf32>
    %cst_78 = arith.constant dense<0.000000e+00> : vector<16xf32>
    %171 = vector.multi_reduction <add>, %168, %cst_78 [1] : vector<16x32xf32> to vector<16xf32>
    %172 = vector.shape_cast %171 : vector<16xf32> to vector<16x1xf32>
    %cst_79 = arith.constant 3.200000e+01 : f32
    %173 = vector.broadcast %cst_79 : f32 to vector<16x1xf32>
    %174 = arith.divf %172, %173 : vector<16x1xf32>
    %175 = vector.broadcast %174 : vector<16x1xf32> to vector<16x32xf32>
    %176 = arith.subf %168, %175 : vector<16x32xf32>
    %177 = arith.mulf %176, %176 : vector<16x32xf32>
    %cst_80 = arith.constant dense<0.000000e+00> : vector<16xf32>
    %178 = vector.multi_reduction <add>, %177, %cst_80 [1] : vector<16x32xf32> to vector<16xf32>
    %179 = vector.shape_cast %178 : vector<16xf32> to vector<16x1xf32>
    %cst_81 = arith.constant 3.200000e+01 : f32
    %180 = vector.broadcast %cst_81 : f32 to vector<16x1xf32>
    %181 = arith.divf %179, %180 : vector<16x1xf32>
    %182 = vector.broadcast %174 : vector<16x1xf32> to vector<16x32xf32>
    %183 = arith.subf %168, %182 : vector<16x32xf32>
    %cst_82 = arith.constant 9.99999974E-6 : f32
    %184 = vector.broadcast %cst_82 : f32 to vector<16x1xf32>
    %185 = arith.addf %181, %184 : vector<16x1xf32>
    %186 = math.rsqrt %185 : vector<16x1xf32>
    %187 = vector.broadcast %186 : vector<16x1xf32> to vector<16x32xf32>
    %188 = arith.mulf %183, %187 : vector<16x32xf32>
    %189 = vector.broadcast %169 : vector<1x32xf32> to vector<16x32xf32>
    %190 = arith.mulf %188, %189 : vector<16x32xf32>
    %191 = vector.broadcast %170 : vector<1x32xf32> to vector<16x32xf32>
    %192 = arith.addf %190, %191 : vector<16x32xf32>
    %c0_83 = arith.constant 0 : index
    %c0_84 = arith.constant 0 : index
    %193 = vector.load %arg17[%c0_83, %c0_84] : memref<32x32xf32, #tpu.memory_space<vmem>>, vector<32x32xf32>
    %cst_85 = arith.constant dense<0.000000e+00> : vector<16x32xf32>
    %194 = tpu.matmul %192, %193, %cst_85 {dimension_numbers = #tpu.dot_dimension_numbers<[1], [0], [0], [1], [0, 0, 1, 1], [], []>} : vector<16x32xf32>, vector<32x32xf32>, vector<16x32xf32> -> vector<16x32xf32>
    %c0_86 = arith.constant 0 : index
    %c0_87 = arith.constant 0 : index
    %195 = vector.load %arg18[%c0_86, %c0_87] : memref<1x32xf32, #tpu.memory_space<vmem>>, vector<1x32xf32>
    %196 = vector.broadcast %195 : vector<1x32xf32> to vector<16x32xf32>
    %197 = arith.addf %194, %196 : vector<16x32xf32>
    %c0_88 = arith.constant 0 : index
    %c0_89 = arith.constant 0 : index
    %198 = vector.load %arg19[%c0_88, %c0_89] : memref<32x4096xf32, #tpu.memory_space<vmem>>, vector<32x4096xf32>
    %cst_90 = arith.constant dense<0.000000e+00> : vector<16x4096xf32>
    %199 = tpu.matmul %98, %198, %cst_90 {dimension_numbers = #tpu.dot_dimension_numbers<[1], [0], [0], [1], [0, 0, 1, 1], [], []>} : vector<16x32xf32>, vector<32x4096xf32>, vector<16x4096xf32> -> vector<16x4096xf32>
    %cst_91 = arith.constant 5.65685415 : f32
    %200 = vector.broadcast %cst_91 : f32 to vector<16x4096xf32>
    %201 = arith.divf %199, %200 : vector<16x4096xf32>
    %cst_92 = arith.constant 1.000000e+03 : f32
    %202 = vector.broadcast %cst_92 : f32 to vector<16x4096xf32>
    %203 = arith.divf %201, %202 : vector<16x4096xf32>
    %cst_93 = arith.constant dense<0.000000e+00> : vector<16x4096xf32>
    %204 = tpu.matmul %197, %198, %cst_93 {dimension_numbers = #tpu.dot_dimension_numbers<[1], [0], [0], [1], [0, 0, 1, 1], [], []>} : vector<16x32xf32>, vector<32x4096xf32>, vector<16x4096xf32> -> vector<16x4096xf32>
    %cst_94 = arith.constant 5.65685415 : f32
    %205 = vector.broadcast %cst_94 : f32 to vector<16x4096xf32>
    %206 = arith.divf %204, %205 : vector<16x4096xf32>
    %c0_95 = arith.constant 0 : index
    %c0_96 = arith.constant 0 : index
    %207 = vector.load %arg2[%c0_95, %c0_96] : memref<16x1xf32, #tpu.memory_space<vmem>>, vector<16x1xf32>
    %208 = vector.broadcast %207 : vector<16x1xf32> to vector<16x4096xf32>
    %209 = arith.mulf %206, %208 : vector<16x4096xf32>
    %cst_97 = arith.constant 1.000000e+03 : f32
    %210 = vector.broadcast %cst_97 : f32 to vector<16x4096xf32>
    %211 = arith.divf %209, %210 : vector<16x4096xf32>
    %212 = vector.shape_cast %203 : vector<16x4096xf32> to vector<2x8x4096xf32>
    %cst_98 = arith.constant dense<0xFF800000> : vector<2x4096xf32>
    %213 = vector.multi_reduction <maximumf>, %212, %cst_98 [1] : vector<2x8x4096xf32> to vector<2x4096xf32>
    %214 = vector.shape_cast %211 : vector<16x4096xf32> to vector<2x8x4096xf32>
    %cst_99 = arith.constant dense<0xFF800000> : vector<2x4096xf32>
    %215 = vector.multi_reduction <maximumf>, %214, %cst_99 [1] : vector<2x8x4096xf32> to vector<2x4096xf32>
    %216 = tpu.concatenate %213, %215 in 0 : vector<2x4096xf32>, vector<2x4096xf32> -> vector<4x4096xf32>
    %cst_100 = arith.constant dense<0xFF800000> : vector<4xf32>
    %217 = vector.multi_reduction <maximumf>, %216, %cst_100 [1] : vector<4x4096xf32> to vector<4xf32>
    %218 = vector.shape_cast %217 : vector<4xf32> to vector<4x1xf32>
    %219 = vector.broadcast %218 : vector<4x1xf32> to vector<4x4096xf32>
    %220 = arith.subf %216, %219 : vector<4x4096xf32>
    %cst_101 = arith.constant -1.000000e+00 : f32
    %221 = vector.broadcast %cst_101 : f32 to vector<4x1xf32>
    %cst_102 = arith.constant 0.000000e+00 : f32
    %222 = vector.broadcast %cst_102 : f32 to vector<4x1xf32>
    %c0_i32 = arith.constant 0 : i32
    %223 = arith.addf %221, %222 : vector<4x1xf32>
    %cst_103 = arith.constant 5.000000e-01 : f32
    %224 = vector.broadcast %cst_103 : f32 to vector<4x1xf32>
    %225 = arith.mulf %224, %223 : vector<4x1xf32>
    %226 = vector.broadcast %225 : vector<4x1xf32> to vector<4x4096xf32>
    %227 = arith.subf %220, %226 : vector<4x4096xf32>
    %cst_104 = arith.constant 0.000000e+00 : f32
    %228 = vector.broadcast %cst_104 : f32 to vector<4x4096xf32>
    %229 = arith.maximumf %227, %228 : vector<4x4096xf32>
    %cst_105 = arith.constant dense<0.000000e+00> : vector<4xf32>
    %230 = vector.multi_reduction <add>, %229, %cst_105 [1] : vector<4x4096xf32> to vector<4xf32>
    %231 = vector.shape_cast %230 : vector<4xf32> to vector<4x1xf32>
    %cst_106 = arith.constant 1.000000e+00 : f32
    %232 = vector.broadcast %cst_106 : f32 to vector<4x1xf32>
    %233 = arith.cmpf oge, %231, %232 : vector<4x1xf32>
    %234 = arith.select %233, %225, %221 : vector<4x1xi1>, vector<4x1xf32>
    %235 = arith.select %233, %222, %225 : vector<4x1xi1>, vector<4x1xf32>
    %c1_i32 = arith.constant 1 : i32
    %236 = arith.addf %234, %235 : vector<4x1xf32>
    %cst_107 = arith.constant 5.000000e-01 : f32
    %237 = vector.broadcast %cst_107 : f32 to vector<4x1xf32>
    %238 = arith.mulf %237, %236 : vector<4x1xf32>
    %239 = vector.broadcast %238 : vector<4x1xf32> to vector<4x4096xf32>
    %240 = arith.subf %220, %239 : vector<4x4096xf32>
    %cst_108 = arith.constant 0.000000e+00 : f32
    %241 = vector.broadcast %cst_108 : f32 to vector<4x4096xf32>
    %242 = arith.maximumf %240, %241 : vector<4x4096xf32>
    %cst_109 = arith.constant dense<0.000000e+00> : vector<4xf32>
    %243 = vector.multi_reduction <add>, %242, %cst_109 [1] : vector<4x4096xf32> to vector<4xf32>
    %244 = vector.shape_cast %243 : vector<4xf32> to vector<4x1xf32>
    %cst_110 = arith.constant 1.000000e+00 : f32
    %245 = vector.broadcast %cst_110 : f32 to vector<4x1xf32>
    %246 = arith.cmpf oge, %244, %245 : vector<4x1xf32>
    %247 = arith.select %246, %238, %234 : vector<4x1xi1>, vector<4x1xf32>
    %248 = arith.select %246, %235, %238 : vector<4x1xi1>, vector<4x1xf32>
    %c2_i32 = arith.constant 2 : i32
    %249 = arith.addf %247, %248 : vector<4x1xf32>
    %cst_111 = arith.constant 5.000000e-01 : f32
    %250 = vector.broadcast %cst_111 : f32 to vector<4x1xf32>
    %251 = arith.mulf %250, %249 : vector<4x1xf32>
    %252 = vector.broadcast %251 : vector<4x1xf32> to vector<4x4096xf32>
    %253 = arith.subf %220, %252 : vector<4x4096xf32>
    %cst_112 = arith.constant 0.000000e+00 : f32
    %254 = vector.broadcast %cst_112 : f32 to vector<4x4096xf32>
    %255 = arith.maximumf %253, %254 : vector<4x4096xf32>
    %cst_113 = arith.constant dense<0.000000e+00> : vector<4xf32>
    %256 = vector.multi_reduction <add>, %255, %cst_113 [1] : vector<4x4096xf32> to vector<4xf32>
    %257 = vector.shape_cast %256 : vector<4xf32> to vector<4x1xf32>
    %cst_114 = arith.constant 1.000000e+00 : f32
    %258 = vector.broadcast %cst_114 : f32 to vector<4x1xf32>
    %259 = arith.cmpf oge, %257, %258 : vector<4x1xf32>
    %260 = arith.select %259, %251, %247 : vector<4x1xi1>, vector<4x1xf32>
    %261 = arith.select %259, %248, %251 : vector<4x1xi1>, vector<4x1xf32>
    %c3_i32 = arith.constant 3 : i32
    %262 = arith.addf %260, %261 : vector<4x1xf32>
    %cst_115 = arith.constant 5.000000e-01 : f32
    %263 = vector.broadcast %cst_115 : f32 to vector<4x1xf32>
    %264 = arith.mulf %263, %262 : vector<4x1xf32>
    %265 = vector.broadcast %264 : vector<4x1xf32> to vector<4x4096xf32>
    %266 = arith.subf %220, %265 : vector<4x4096xf32>
    %cst_116 = arith.constant 0.000000e+00 : f32
    %267 = vector.broadcast %cst_116 : f32 to vector<4x4096xf32>
    %268 = arith.maximumf %266, %267 : vector<4x4096xf32>
    %cst_117 = arith.constant dense<0.000000e+00> : vector<4xf32>
    %269 = vector.multi_reduction <add>, %268, %cst_117 [1] : vector<4x4096xf32> to vector<4xf32>
    %270 = vector.shape_cast %269 : vector<4xf32> to vector<4x1xf32>
    %cst_118 = arith.constant 1.000000e+00 : f32
    %271 = vector.broadcast %cst_118 : f32 to vector<4x1xf32>
    %272 = arith.cmpf oge, %270, %271 : vector<4x1xf32>
    %273 = arith.select %272, %264, %260 : vector<4x1xi1>, vector<4x1xf32>
    %274 = arith.select %272, %261, %264 : vector<4x1xi1>, vector<4x1xf32>
    %c4_i32 = arith.constant 4 : i32
    %275 = arith.addf %273, %274 : vector<4x1xf32>
    %cst_119 = arith.constant 5.000000e-01 : f32
    %276 = vector.broadcast %cst_119 : f32 to vector<4x1xf32>
    %277 = arith.mulf %276, %275 : vector<4x1xf32>
    %278 = vector.broadcast %277 : vector<4x1xf32> to vector<4x4096xf32>
    %279 = arith.subf %220, %278 : vector<4x4096xf32>
    %cst_120 = arith.constant 0.000000e+00 : f32
    %280 = vector.broadcast %cst_120 : f32 to vector<4x4096xf32>
    %281 = arith.maximumf %279, %280 : vector<4x4096xf32>
    %cst_121 = arith.constant dense<0.000000e+00> : vector<4xf32>
    %282 = vector.multi_reduction <add>, %281, %cst_121 [1] : vector<4x4096xf32> to vector<4xf32>
    %283 = vector.shape_cast %282 : vector<4xf32> to vector<4x1xf32>
    %cst_122 = arith.constant 1.000000e+00 : f32
    %284 = vector.broadcast %cst_122 : f32 to vector<4x1xf32>
    %285 = arith.cmpf oge, %283, %284 : vector<4x1xf32>
    %286 = arith.select %285, %277, %273 : vector<4x1xi1>, vector<4x1xf32>
    %287 = arith.select %285, %274, %277 : vector<4x1xi1>, vector<4x1xf32>
    %c5_i32 = arith.constant 5 : i32
    %288 = arith.addf %286, %287 : vector<4x1xf32>
    %cst_123 = arith.constant 5.000000e-01 : f32
    %289 = vector.broadcast %cst_123 : f32 to vector<4x1xf32>
    %290 = arith.mulf %289, %288 : vector<4x1xf32>
    %291 = vector.broadcast %290 : vector<4x1xf32> to vector<4x4096xf32>
    %292 = arith.subf %220, %291 : vector<4x4096xf32>
    %cst_124 = arith.constant 0.000000e+00 : f32
    %293 = vector.broadcast %cst_124 : f32 to vector<4x4096xf32>
    %294 = arith.maximumf %292, %293 : vector<4x4096xf32>
    %cst_125 = arith.constant dense<0.000000e+00> : vector<4xf32>
    %295 = vector.multi_reduction <add>, %294, %cst_125 [1] : vector<4x4096xf32> to vector<4xf32>
    %296 = vector.shape_cast %295 : vector<4xf32> to vector<4x1xf32>
    %cst_126 = arith.constant 1.000000e+00 : f32
    %297 = vector.broadcast %cst_126 : f32 to vector<4x1xf32>
    %298 = arith.cmpf oge, %296, %297 : vector<4x1xf32>
    %299 = arith.select %298, %290, %286 : vector<4x1xi1>, vector<4x1xf32>
    %300 = arith.select %298, %287, %290 : vector<4x1xi1>, vector<4x1xf32>
    %c6_i32 = arith.constant 6 : i32
    %301 = arith.addf %299, %300 : vector<4x1xf32>
    %cst_127 = arith.constant 5.000000e-01 : f32
    %302 = vector.broadcast %cst_127 : f32 to vector<4x1xf32>
    %303 = arith.mulf %302, %301 : vector<4x1xf32>
    %304 = vector.broadcast %303 : vector<4x1xf32> to vector<4x4096xf32>
    %305 = arith.subf %220, %304 : vector<4x4096xf32>
    %cst_128 = arith.constant 0.000000e+00 : f32
    %306 = vector.broadcast %cst_128 : f32 to vector<4x4096xf32>
    %307 = arith.maximumf %305, %306 : vector<4x4096xf32>
    %cst_129 = arith.constant dense<0.000000e+00> : vector<4xf32>
    %308 = vector.multi_reduction <add>, %307, %cst_129 [1] : vector<4x4096xf32> to vector<4xf32>
    %309 = vector.shape_cast %308 : vector<4xf32> to vector<4x1xf32>
    %cst_130 = arith.constant 1.000000e+00 : f32
    %310 = vector.broadcast %cst_130 : f32 to vector<4x1xf32>
    %311 = arith.cmpf oge, %309, %310 : vector<4x1xf32>
    %312 = arith.select %311, %303, %299 : vector<4x1xi1>, vector<4x1xf32>
    %313 = arith.select %311, %300, %303 : vector<4x1xi1>, vector<4x1xf32>
    %c7_i32 = arith.constant 7 : i32
    %314 = arith.addf %312, %313 : vector<4x1xf32>
    %cst_131 = arith.constant 5.000000e-01 : f32
    %315 = vector.broadcast %cst_131 : f32 to vector<4x1xf32>
    %316 = arith.mulf %315, %314 : vector<4x1xf32>
    %317 = vector.broadcast %316 : vector<4x1xf32> to vector<4x4096xf32>
    %318 = arith.subf %220, %317 : vector<4x4096xf32>
    %cst_132 = arith.constant 0.000000e+00 : f32
    %319 = vector.broadcast %cst_132 : f32 to vector<4x4096xf32>
    %320 = arith.maximumf %318, %319 : vector<4x4096xf32>
    %cst_133 = arith.constant dense<0.000000e+00> : vector<4xf32>
    %321 = vector.multi_reduction <add>, %320, %cst_133 [1] : vector<4x4096xf32> to vector<4xf32>
    %322 = vector.shape_cast %321 : vector<4xf32> to vector<4x1xf32>
    %cst_134 = arith.constant 1.000000e+00 : f32
    %323 = vector.broadcast %cst_134 : f32 to vector<4x1xf32>
    %324 = arith.cmpf oge, %322, %323 : vector<4x1xf32>
    %325 = arith.select %324, %316, %312 : vector<4x1xi1>, vector<4x1xf32>
    %326 = arith.select %324, %313, %316 : vector<4x1xi1>, vector<4x1xf32>
    %c8_i32 = arith.constant 8 : i32
    %327 = arith.addf %325, %326 : vector<4x1xf32>
    %cst_135 = arith.constant 5.000000e-01 : f32
    %328 = vector.broadcast %cst_135 : f32 to vector<4x1xf32>
    %329 = arith.mulf %328, %327 : vector<4x1xf32>
    %330 = vector.broadcast %329 : vector<4x1xf32> to vector<4x4096xf32>
    %331 = arith.subf %220, %330 : vector<4x4096xf32>
    %cst_136 = arith.constant 0.000000e+00 : f32
    %332 = vector.broadcast %cst_136 : f32 to vector<4x4096xf32>
    %333 = arith.maximumf %331, %332 : vector<4x4096xf32>
    %cst_137 = arith.constant dense<0.000000e+00> : vector<4xf32>
    %334 = vector.multi_reduction <add>, %333, %cst_137 [1] : vector<4x4096xf32> to vector<4xf32>
    %335 = vector.shape_cast %334 : vector<4xf32> to vector<4x1xf32>
    %cst_138 = arith.constant 1.000000e+00 : f32
    %336 = vector.broadcast %cst_138 : f32 to vector<4x1xf32>
    %337 = arith.cmpf oge, %335, %336 : vector<4x1xf32>
    %338 = arith.select %337, %329, %325 : vector<4x1xi1>, vector<4x1xf32>
    %339 = arith.select %337, %326, %329 : vector<4x1xi1>, vector<4x1xf32>
    %c9_i32 = arith.constant 9 : i32
    %340 = arith.addf %338, %339 : vector<4x1xf32>
    %cst_139 = arith.constant 5.000000e-01 : f32
    %341 = vector.broadcast %cst_139 : f32 to vector<4x1xf32>
    %342 = arith.mulf %341, %340 : vector<4x1xf32>
    %343 = vector.broadcast %342 : vector<4x1xf32> to vector<4x4096xf32>
    %344 = arith.subf %220, %343 : vector<4x4096xf32>
    %cst_140 = arith.constant 0.000000e+00 : f32
    %345 = vector.broadcast %cst_140 : f32 to vector<4x4096xf32>
    %346 = arith.maximumf %344, %345 : vector<4x4096xf32>
    %cst_141 = arith.constant dense<0.000000e+00> : vector<4xf32>
    %347 = vector.multi_reduction <add>, %346, %cst_141 [1] : vector<4x4096xf32> to vector<4xf32>
    %348 = vector.shape_cast %347 : vector<4xf32> to vector<4x1xf32>
    %cst_142 = arith.constant 1.000000e+00 : f32
    %349 = vector.broadcast %cst_142 : f32 to vector<4x1xf32>
    %350 = arith.cmpf oge, %348, %349 : vector<4x1xf32>
    %351 = arith.select %350, %342, %338 : vector<4x1xi1>, vector<4x1xf32>
    %352 = arith.select %350, %339, %342 : vector<4x1xi1>, vector<4x1xf32>
    %c10_i32 = arith.constant 10 : i32
    %353 = arith.addf %351, %352 : vector<4x1xf32>
    %cst_143 = arith.constant 5.000000e-01 : f32
    %354 = vector.broadcast %cst_143 : f32 to vector<4x1xf32>
    %355 = arith.mulf %354, %353 : vector<4x1xf32>
    %356 = vector.broadcast %355 : vector<4x1xf32> to vector<4x4096xf32>
    %357 = arith.subf %220, %356 : vector<4x4096xf32>
    %cst_144 = arith.constant 0.000000e+00 : f32
    %358 = vector.broadcast %cst_144 : f32 to vector<4x4096xf32>
    %359 = arith.maximumf %357, %358 : vector<4x4096xf32>
    %cst_145 = arith.constant dense<0.000000e+00> : vector<4xf32>
    %360 = vector.multi_reduction <add>, %359, %cst_145 [1] : vector<4x4096xf32> to vector<4xf32>
    %361 = vector.shape_cast %360 : vector<4xf32> to vector<4x1xf32>
    %cst_146 = arith.constant 1.000000e+00 : f32
    %362 = vector.broadcast %cst_146 : f32 to vector<4x1xf32>
    %363 = arith.cmpf oge, %361, %362 : vector<4x1xf32>
    %364 = arith.select %363, %355, %351 : vector<4x1xi1>, vector<4x1xf32>
    %365 = arith.select %363, %352, %355 : vector<4x1xi1>, vector<4x1xf32>
    %c11_i32 = arith.constant 11 : i32
    %366 = arith.addf %364, %365 : vector<4x1xf32>
    %cst_147 = arith.constant 5.000000e-01 : f32
    %367 = vector.broadcast %cst_147 : f32 to vector<4x1xf32>
    %368 = arith.mulf %367, %366 : vector<4x1xf32>
    %369 = vector.broadcast %368 : vector<4x1xf32> to vector<4x4096xf32>
    %370 = arith.subf %220, %369 : vector<4x4096xf32>
    %cst_148 = arith.constant 0.000000e+00 : f32
    %371 = vector.broadcast %cst_148 : f32 to vector<4x4096xf32>
    %372 = arith.maximumf %370, %371 : vector<4x4096xf32>
    %cst_149 = arith.constant dense<0.000000e+00> : vector<4xf32>
    %373 = vector.multi_reduction <add>, %372, %cst_149 [1] : vector<4x4096xf32> to vector<4xf32>
    %374 = vector.shape_cast %373 : vector<4xf32> to vector<4x1xf32>
    %cst_150 = arith.constant 1.000000e+00 : f32
    %375 = vector.broadcast %cst_150 : f32 to vector<4x1xf32>
    %376 = arith.cmpf oge, %374, %375 : vector<4x1xf32>
    %377 = arith.select %376, %368, %364 : vector<4x1xi1>, vector<4x1xf32>
    %378 = arith.select %376, %365, %368 : vector<4x1xi1>, vector<4x1xf32>
    %c12_i32 = arith.constant 12 : i32
    %379 = arith.addf %377, %378 : vector<4x1xf32>
    %cst_151 = arith.constant 5.000000e-01 : f32
    %380 = vector.broadcast %cst_151 : f32 to vector<4x1xf32>
    %381 = arith.mulf %380, %379 : vector<4x1xf32>
    %382 = vector.broadcast %381 : vector<4x1xf32> to vector<4x4096xf32>
    %383 = arith.subf %220, %382 : vector<4x4096xf32>
    %cst_152 = arith.constant 0.000000e+00 : f32
    %384 = vector.broadcast %cst_152 : f32 to vector<4x4096xf32>
    %385 = arith.maximumf %383, %384 : vector<4x4096xf32>
    %cst_153 = arith.constant dense<0.000000e+00> : vector<4xf32>
    %386 = vector.multi_reduction <add>, %385, %cst_153 [1] : vector<4x4096xf32> to vector<4xf32>
    %387 = vector.shape_cast %386 : vector<4xf32> to vector<4x1xf32>
    %cst_154 = arith.constant 1.000000e+00 : f32
    %388 = vector.broadcast %cst_154 : f32 to vector<4x1xf32>
    %389 = arith.cmpf oge, %387, %388 : vector<4x1xf32>
    %390 = arith.select %389, %381, %377 : vector<4x1xi1>, vector<4x1xf32>
    %391 = arith.select %389, %378, %381 : vector<4x1xi1>, vector<4x1xf32>
    %c13_i32 = arith.constant 13 : i32
    %392 = arith.addf %390, %391 : vector<4x1xf32>
    %cst_155 = arith.constant 5.000000e-01 : f32
    %393 = vector.broadcast %cst_155 : f32 to vector<4x1xf32>
    %394 = arith.mulf %393, %392 : vector<4x1xf32>
    %395 = vector.broadcast %394 : vector<4x1xf32> to vector<4x4096xf32>
    %396 = arith.subf %220, %395 : vector<4x4096xf32>
    %cst_156 = arith.constant 0.000000e+00 : f32
    %397 = vector.broadcast %cst_156 : f32 to vector<4x4096xf32>
    %398 = arith.maximumf %396, %397 : vector<4x4096xf32>
    %cst_157 = arith.constant dense<0.000000e+00> : vector<4xf32>
    %399 = vector.multi_reduction <add>, %398, %cst_157 [1] : vector<4x4096xf32> to vector<4xf32>
    %400 = vector.shape_cast %399 : vector<4xf32> to vector<4x1xf32>
    %cst_158 = arith.constant 1.000000e+00 : f32
    %401 = vector.broadcast %cst_158 : f32 to vector<4x1xf32>
    %402 = arith.cmpf oge, %400, %401 : vector<4x1xf32>
    %403 = arith.select %402, %394, %390 : vector<4x1xi1>, vector<4x1xf32>
    %404 = arith.select %402, %391, %394 : vector<4x1xi1>, vector<4x1xf32>
    %c14_i32 = arith.constant 14 : i32
    %405 = arith.addf %403, %404 : vector<4x1xf32>
    %cst_159 = arith.constant 5.000000e-01 : f32
    %406 = vector.broadcast %cst_159 : f32 to vector<4x1xf32>
    %407 = arith.mulf %406, %405 : vector<4x1xf32>
    %408 = vector.broadcast %407 : vector<4x1xf32> to vector<4x4096xf32>
    %409 = arith.subf %220, %408 : vector<4x4096xf32>
    %cst_160 = arith.constant 0.000000e+00 : f32
    %410 = vector.broadcast %cst_160 : f32 to vector<4x4096xf32>
    %411 = arith.maximumf %409, %410 : vector<4x4096xf32>
    %cst_161 = arith.constant dense<0.000000e+00> : vector<4xf32>
    %412 = vector.multi_reduction <add>, %411, %cst_161 [1] : vector<4x4096xf32> to vector<4xf32>
    %413 = vector.shape_cast %412 : vector<4xf32> to vector<4x1xf32>
    %cst_162 = arith.constant 1.000000e+00 : f32
    %414 = vector.broadcast %cst_162 : f32 to vector<4x1xf32>
    %415 = arith.cmpf oge, %413, %414 : vector<4x1xf32>
    %416 = arith.select %415, %407, %403 : vector<4x1xi1>, vector<4x1xf32>
    %417 = arith.select %415, %404, %407 : vector<4x1xi1>, vector<4x1xf32>
    %c15_i32 = arith.constant 15 : i32
    %418 = arith.addf %416, %417 : vector<4x1xf32>
    %cst_163 = arith.constant 5.000000e-01 : f32
    %419 = vector.broadcast %cst_163 : f32 to vector<4x1xf32>
    %420 = arith.mulf %419, %418 : vector<4x1xf32>
    %421 = vector.broadcast %420 : vector<4x1xf32> to vector<4x4096xf32>
    %422 = arith.subf %220, %421 : vector<4x4096xf32>
    %cst_164 = arith.constant 0.000000e+00 : f32
    %423 = vector.broadcast %cst_164 : f32 to vector<4x4096xf32>
    %424 = arith.maximumf %422, %423 : vector<4x4096xf32>
    %cst_165 = arith.constant dense<0.000000e+00> : vector<4xf32>
    %425 = vector.multi_reduction <add>, %424, %cst_165 [1] : vector<4x4096xf32> to vector<4xf32>
    %426 = vector.shape_cast %425 : vector<4xf32> to vector<4x1xf32>
    %cst_166 = arith.constant 1.000000e+00 : f32
    %427 = vector.broadcast %cst_166 : f32 to vector<4x1xf32>
    %428 = arith.cmpf oge, %426, %427 : vector<4x1xf32>
    %429 = arith.select %428, %420, %416 : vector<4x1xi1>, vector<4x1xf32>
    %430 = arith.select %428, %417, %420 : vector<4x1xi1>, vector<4x1xf32>
    %c16_i32 = arith.constant 16 : i32
    %431 = arith.addf %429, %430 : vector<4x1xf32>
    %cst_167 = arith.constant 5.000000e-01 : f32
    %432 = vector.broadcast %cst_167 : f32 to vector<4x1xf32>
    %433 = arith.mulf %432, %431 : vector<4x1xf32>
    %434 = vector.broadcast %433 : vector<4x1xf32> to vector<4x4096xf32>
    %435 = arith.subf %220, %434 : vector<4x4096xf32>
    %cst_168 = arith.constant 0.000000e+00 : f32
    %436 = vector.broadcast %cst_168 : f32 to vector<4x4096xf32>
    %437 = arith.maximumf %435, %436 : vector<4x4096xf32>
    %cst_169 = arith.constant dense<0.000000e+00> : vector<4xf32>
    %438 = vector.multi_reduction <add>, %437, %cst_169 [1] : vector<4x4096xf32> to vector<4xf32>
    %439 = vector.shape_cast %438 : vector<4xf32> to vector<4x1xf32>
    %cst_170 = arith.constant 1.000000e+00 : f32
    %440 = vector.broadcast %cst_170 : f32 to vector<4x1xf32>
    %441 = arith.cmpf oge, %439, %440 : vector<4x1xf32>
    %442 = arith.select %441, %433, %429 : vector<4x1xi1>, vector<4x1xf32>
    %443 = arith.select %441, %430, %433 : vector<4x1xi1>, vector<4x1xf32>
    %c17_i32 = arith.constant 17 : i32
    %444 = arith.addf %442, %443 : vector<4x1xf32>
    %cst_171 = arith.constant 5.000000e-01 : f32
    %445 = vector.broadcast %cst_171 : f32 to vector<4x1xf32>
    %446 = arith.mulf %445, %444 : vector<4x1xf32>
    %447 = vector.broadcast %446 : vector<4x1xf32> to vector<4x4096xf32>
    %448 = arith.subf %220, %447 : vector<4x4096xf32>
    %cst_172 = arith.constant 0.000000e+00 : f32
    %449 = vector.broadcast %cst_172 : f32 to vector<4x4096xf32>
    %450 = arith.maximumf %448, %449 : vector<4x4096xf32>
    %cst_173 = arith.constant dense<0.000000e+00> : vector<4xf32>
    %451 = vector.multi_reduction <add>, %450, %cst_173 [1] : vector<4x4096xf32> to vector<4xf32>
    %452 = vector.shape_cast %451 : vector<4xf32> to vector<4x1xf32>
    %cst_174 = arith.constant 1.000000e+00 : f32
    %453 = vector.broadcast %cst_174 : f32 to vector<4x1xf32>
    %454 = arith.cmpf oge, %452, %453 : vector<4x1xf32>
    %455 = arith.select %454, %446, %442 : vector<4x1xi1>, vector<4x1xf32>
    %456 = arith.select %454, %443, %446 : vector<4x1xi1>, vector<4x1xf32>
    %c18_i32 = arith.constant 18 : i32
    %457 = arith.addf %455, %456 : vector<4x1xf32>
    %cst_175 = arith.constant 5.000000e-01 : f32
    %458 = vector.broadcast %cst_175 : f32 to vector<4x1xf32>
    %459 = arith.mulf %458, %457 : vector<4x1xf32>
    %460 = vector.broadcast %459 : vector<4x1xf32> to vector<4x4096xf32>
    %461 = arith.subf %220, %460 : vector<4x4096xf32>
    %cst_176 = arith.constant 0.000000e+00 : f32
    %462 = vector.broadcast %cst_176 : f32 to vector<4x4096xf32>
    %463 = arith.maximumf %461, %462 : vector<4x4096xf32>
    %cst_177 = arith.constant dense<0.000000e+00> : vector<4xf32>
    %464 = vector.multi_reduction <add>, %463, %cst_177 [1] : vector<4x4096xf32> to vector<4xf32>
    %465 = vector.shape_cast %464 : vector<4xf32> to vector<4x1xf32>
    %cst_178 = arith.constant 1.000000e+00 : f32
    %466 = vector.broadcast %cst_178 : f32 to vector<4x1xf32>
    %467 = arith.cmpf oge, %465, %466 : vector<4x1xf32>
    %468 = arith.select %467, %459, %455 : vector<4x1xi1>, vector<4x1xf32>
    %469 = arith.select %467, %456, %459 : vector<4x1xi1>, vector<4x1xf32>
    %c19_i32 = arith.constant 19 : i32
    %470 = arith.addf %468, %469 : vector<4x1xf32>
    %cst_179 = arith.constant 5.000000e-01 : f32
    %471 = vector.broadcast %cst_179 : f32 to vector<4x1xf32>
    %472 = arith.mulf %471, %470 : vector<4x1xf32>
    %473 = vector.broadcast %472 : vector<4x1xf32> to vector<4x4096xf32>
    %474 = arith.subf %220, %473 : vector<4x4096xf32>
    %cst_180 = arith.constant 0.000000e+00 : f32
    %475 = vector.broadcast %cst_180 : f32 to vector<4x4096xf32>
    %476 = arith.maximumf %474, %475 : vector<4x4096xf32>
    %cst_181 = arith.constant dense<0.000000e+00> : vector<4xf32>
    %477 = vector.multi_reduction <add>, %476, %cst_181 [1] : vector<4x4096xf32> to vector<4xf32>
    %478 = vector.shape_cast %477 : vector<4xf32> to vector<4x1xf32>
    %cst_182 = arith.constant 1.000000e+00 : f32
    %479 = vector.broadcast %cst_182 : f32 to vector<4x1xf32>
    %480 = arith.cmpf oge, %478, %479 : vector<4x1xf32>
    %481 = arith.select %480, %472, %468 : vector<4x1xi1>, vector<4x1xf32>
    %482 = arith.select %480, %469, %472 : vector<4x1xi1>, vector<4x1xf32>
    %c20_i32 = arith.constant 20 : i32
    %483 = arith.addf %481, %482 : vector<4x1xf32>
    %cst_183 = arith.constant 5.000000e-01 : f32
    %484 = vector.broadcast %cst_183 : f32 to vector<4x1xf32>
    %485 = arith.mulf %484, %483 : vector<4x1xf32>
    %486 = vector.broadcast %485 : vector<4x1xf32> to vector<4x4096xf32>
    %487 = arith.subf %220, %486 : vector<4x4096xf32>
    %cst_184 = arith.constant 0.000000e+00 : f32
    %488 = vector.broadcast %cst_184 : f32 to vector<4x4096xf32>
    %489 = arith.maximumf %487, %488 : vector<4x4096xf32>
    %cst_185 = arith.constant dense<0.000000e+00> : vector<4xf32>
    %490 = vector.multi_reduction <add>, %489, %cst_185 [1] : vector<4x4096xf32> to vector<4xf32>
    %491 = vector.shape_cast %490 : vector<4xf32> to vector<4x1xf32>
    %cst_186 = arith.constant 1.000000e+00 : f32
    %492 = vector.broadcast %cst_186 : f32 to vector<4x1xf32>
    %493 = arith.cmpf oge, %491, %492 : vector<4x1xf32>
    %494 = arith.select %493, %485, %481 : vector<4x1xi1>, vector<4x1xf32>
    %495 = arith.select %493, %482, %485 : vector<4x1xi1>, vector<4x1xf32>
    %c21_i32 = arith.constant 21 : i32
    %496 = arith.addf %494, %495 : vector<4x1xf32>
    %cst_187 = arith.constant 5.000000e-01 : f32
    %497 = vector.broadcast %cst_187 : f32 to vector<4x1xf32>
    %498 = arith.mulf %497, %496 : vector<4x1xf32>
    %499 = vector.broadcast %498 : vector<4x1xf32> to vector<4x4096xf32>
    %500 = arith.subf %220, %499 : vector<4x4096xf32>
    %cst_188 = arith.constant 0.000000e+00 : f32
    %501 = vector.broadcast %cst_188 : f32 to vector<4x4096xf32>
    %502 = arith.maximumf %500, %501 : vector<4x4096xf32>
    %cst_189 = arith.constant dense<0.000000e+00> : vector<4xf32>
    %503 = vector.multi_reduction <add>, %502, %cst_189 [1] : vector<4x4096xf32> to vector<4xf32>
    %504 = vector.shape_cast %503 : vector<4xf32> to vector<4x1xf32>
    %cst_190 = arith.constant 1.000000e+00 : f32
    %505 = vector.broadcast %cst_190 : f32 to vector<4x1xf32>
    %506 = arith.cmpf oge, %504, %505 : vector<4x1xf32>
    %507 = arith.select %506, %498, %494 : vector<4x1xi1>, vector<4x1xf32>
    %508 = arith.select %506, %495, %498 : vector<4x1xi1>, vector<4x1xf32>
    %c22_i32 = arith.constant 22 : i32
    %509 = arith.addf %507, %508 : vector<4x1xf32>
    %cst_191 = arith.constant 5.000000e-01 : f32
    %510 = vector.broadcast %cst_191 : f32 to vector<4x1xf32>
    %511 = arith.mulf %510, %509 : vector<4x1xf32>
    %512 = vector.broadcast %511 : vector<4x1xf32> to vector<4x4096xf32>
    %513 = arith.subf %220, %512 : vector<4x4096xf32>
    %cst_192 = arith.constant 0.000000e+00 : f32
    %514 = vector.broadcast %cst_192 : f32 to vector<4x4096xf32>
    %515 = arith.maximumf %513, %514 : vector<4x4096xf32>
    %cst_193 = arith.constant dense<0.000000e+00> : vector<4xf32>
    %516 = vector.multi_reduction <add>, %515, %cst_193 [1] : vector<4x4096xf32> to vector<4xf32>
    %517 = vector.shape_cast %516 : vector<4xf32> to vector<4x1xf32>
    %cst_194 = arith.constant 1.000000e+00 : f32
    %518 = vector.broadcast %cst_194 : f32 to vector<4x1xf32>
    %519 = arith.cmpf oge, %517, %518 : vector<4x1xf32>
    %520 = arith.select %519, %511, %507 : vector<4x1xi1>, vector<4x1xf32>
    %521 = arith.select %519, %508, %511 : vector<4x1xi1>, vector<4x1xf32>
    %c23_i32 = arith.constant 23 : i32
    %522 = arith.addf %520, %521 : vector<4x1xf32>
    %cst_195 = arith.constant 5.000000e-01 : f32
    %523 = vector.broadcast %cst_195 : f32 to vector<4x1xf32>
    %524 = arith.mulf %523, %522 : vector<4x1xf32>
    %525 = vector.broadcast %524 : vector<4x1xf32> to vector<4x4096xf32>
    %526 = arith.subf %220, %525 : vector<4x4096xf32>
    %cst_196 = arith.constant 0.000000e+00 : f32
    %527 = vector.broadcast %cst_196 : f32 to vector<4x4096xf32>
    %528 = arith.maximumf %526, %527 : vector<4x4096xf32>
    %cst_197 = arith.constant dense<0.000000e+00> : vector<4xf32>
    %529 = vector.multi_reduction <add>, %528, %cst_197 [1] : vector<4x4096xf32> to vector<4xf32>
    %530 = vector.shape_cast %529 : vector<4xf32> to vector<4x1xf32>
    %cst_198 = arith.constant 1.000000e+00 : f32
    %531 = vector.broadcast %cst_198 : f32 to vector<4x1xf32>
    %532 = arith.cmpf oge, %530, %531 : vector<4x1xf32>
    %533 = arith.select %532, %524, %520 : vector<4x1xi1>, vector<4x1xf32>
    %534 = arith.select %532, %521, %524 : vector<4x1xi1>, vector<4x1xf32>
    %c24_i32 = arith.constant 24 : i32
    %535 = arith.addf %533, %534 : vector<4x1xf32>
    %cst_199 = arith.constant 5.000000e-01 : f32
    %536 = vector.broadcast %cst_199 : f32 to vector<4x1xf32>
    %537 = arith.mulf %536, %535 : vector<4x1xf32>
    %538 = vector.broadcast %537 : vector<4x1xf32> to vector<4x4096xf32>
    %539 = arith.subf %220, %538 : vector<4x4096xf32>
    %cst_200 = arith.constant 0.000000e+00 : f32
    %540 = vector.broadcast %cst_200 : f32 to vector<4x4096xf32>
    %541 = arith.maximumf %539, %540 : vector<4x4096xf32>
    %cst_201 = arith.constant dense<0.000000e+00> : vector<4xf32>
    %542 = vector.multi_reduction <add>, %541, %cst_201 [1] : vector<4x4096xf32> to vector<4xf32>
    %543 = vector.shape_cast %542 : vector<4xf32> to vector<4x1xf32>
    %cst_202 = arith.constant 1.000000e+00 : f32
    %544 = vector.broadcast %cst_202 : f32 to vector<4x1xf32>
    %545 = arith.cmpf oge, %543, %544 : vector<4x1xf32>
    %546 = arith.select %545, %537, %533 : vector<4x1xi1>, vector<4x1xf32>
    %547 = arith.select %545, %534, %537 : vector<4x1xi1>, vector<4x1xf32>
    %c25_i32 = arith.constant 25 : i32
    %548 = arith.addf %546, %547 : vector<4x1xf32>
    %cst_203 = arith.constant 5.000000e-01 : f32
    %549 = vector.broadcast %cst_203 : f32 to vector<4x1xf32>
    %550 = arith.mulf %549, %548 : vector<4x1xf32>
    %551 = vector.broadcast %550 : vector<4x1xf32> to vector<4x4096xf32>
    %552 = arith.subf %220, %551 : vector<4x4096xf32>
    %cst_204 = arith.constant 0.000000e+00 : f32
    %553 = vector.broadcast %cst_204 : f32 to vector<4x4096xf32>
    %554 = arith.maximumf %552, %553 : vector<4x4096xf32>
    %cst_205 = arith.constant dense<0.000000e+00> : vector<4xf32>
    %555 = vector.multi_reduction <add>, %554, %cst_205 [1] : vector<4x4096xf32> to vector<4xf32>
    %556 = vector.shape_cast %555 : vector<4xf32> to vector<4x1xf32>
    %cst_206 = arith.constant 1.000000e+00 : f32
    %557 = vector.broadcast %cst_206 : f32 to vector<4x1xf32>
    %558 = arith.cmpf oge, %556, %557 : vector<4x1xf32>
    %559 = arith.select %558, %550, %546 : vector<4x1xi1>, vector<4x1xf32>
    %560 = arith.select %558, %547, %550 : vector<4x1xi1>, vector<4x1xf32>
    %c26_i32 = arith.constant 26 : i32
    %561 = arith.addf %559, %560 : vector<4x1xf32>
    %cst_207 = arith.constant 5.000000e-01 : f32
    %562 = vector.broadcast %cst_207 : f32 to vector<4x1xf32>
    %563 = arith.mulf %562, %561 : vector<4x1xf32>
    %564 = vector.broadcast %563 : vector<4x1xf32> to vector<4x4096xf32>
    %565 = arith.subf %220, %564 : vector<4x4096xf32>
    %cst_208 = arith.constant 0.000000e+00 : f32
    %566 = vector.broadcast %cst_208 : f32 to vector<4x4096xf32>
    %567 = arith.maximumf %565, %566 : vector<4x4096xf32>
    %cst_209 = arith.constant dense<0.000000e+00> : vector<4xf32>
    %568 = vector.multi_reduction <add>, %567, %cst_209 [1] : vector<4x4096xf32> to vector<4xf32>
    %569 = vector.shape_cast %568 : vector<4xf32> to vector<4x1xf32>
    %cst_210 = arith.constant 1.000000e+00 : f32
    %570 = vector.broadcast %cst_210 : f32 to vector<4x1xf32>
    %571 = arith.cmpf oge, %569, %570 : vector<4x1xf32>
    %572 = arith.select %571, %563, %559 : vector<4x1xi1>, vector<4x1xf32>
    %573 = arith.select %571, %560, %563 : vector<4x1xi1>, vector<4x1xf32>
    %c27_i32 = arith.constant 27 : i32
    %574 = arith.addf %572, %573 : vector<4x1xf32>
    %cst_211 = arith.constant 5.000000e-01 : f32
    %575 = vector.broadcast %cst_211 : f32 to vector<4x1xf32>
    %576 = arith.mulf %575, %574 : vector<4x1xf32>
    %577 = vector.broadcast %576 : vector<4x1xf32> to vector<4x4096xf32>
    %578 = arith.subf %220, %577 : vector<4x4096xf32>
    %cst_212 = arith.constant 0.000000e+00 : f32
    %579 = vector.broadcast %cst_212 : f32 to vector<4x4096xf32>
    %580 = arith.maximumf %578, %579 : vector<4x4096xf32>
    %cst_213 = arith.constant dense<0.000000e+00> : vector<4xf32>
    %581 = vector.multi_reduction <add>, %580, %cst_213 [1] : vector<4x4096xf32> to vector<4xf32>
    %582 = vector.shape_cast %581 : vector<4xf32> to vector<4x1xf32>
    %cst_214 = arith.constant 1.000000e+00 : f32
    %583 = vector.broadcast %cst_214 : f32 to vector<4x1xf32>
    %584 = arith.cmpf oge, %582, %583 : vector<4x1xf32>
    %585 = arith.select %584, %576, %572 : vector<4x1xi1>, vector<4x1xf32>
    %586 = arith.select %584, %573, %576 : vector<4x1xi1>, vector<4x1xf32>
    %c28_i32 = arith.constant 28 : i32
    %587 = arith.addf %585, %586 : vector<4x1xf32>
    %cst_215 = arith.constant 5.000000e-01 : f32
    %588 = vector.broadcast %cst_215 : f32 to vector<4x1xf32>
    %589 = arith.mulf %588, %587 : vector<4x1xf32>
    %590 = vector.broadcast %589 : vector<4x1xf32> to vector<4x4096xf32>
    %591 = arith.subf %220, %590 : vector<4x4096xf32>
    %cst_216 = arith.constant 0.000000e+00 : f32
    %592 = vector.broadcast %cst_216 : f32 to vector<4x4096xf32>
    %593 = arith.maximumf %591, %592 : vector<4x4096xf32>
    %cst_217 = arith.constant dense<0.000000e+00> : vector<4xf32>
    %594 = vector.multi_reduction <add>, %593, %cst_217 [1] : vector<4x4096xf32> to vector<4xf32>
    %595 = vector.shape_cast %594 : vector<4xf32> to vector<4x1xf32>
    %cst_218 = arith.constant 1.000000e+00 : f32
    %596 = vector.broadcast %cst_218 : f32 to vector<4x1xf32>
    %597 = arith.cmpf oge, %595, %596 : vector<4x1xf32>
    %598 = arith.select %597, %589, %585 : vector<4x1xi1>, vector<4x1xf32>
    %599 = arith.select %597, %586, %589 : vector<4x1xi1>, vector<4x1xf32>
    %c29_i32 = arith.constant 29 : i32
    %600 = arith.addf %598, %599 : vector<4x1xf32>
    %cst_219 = arith.constant 5.000000e-01 : f32
    %601 = vector.broadcast %cst_219 : f32 to vector<4x1xf32>
    %602 = arith.mulf %601, %600 : vector<4x1xf32>
    %603 = vector.broadcast %602 : vector<4x1xf32> to vector<4x4096xf32>
    %604 = arith.subf %220, %603 : vector<4x4096xf32>
    %cst_220 = arith.constant 0.000000e+00 : f32
    %605 = vector.broadcast %cst_220 : f32 to vector<4x4096xf32>
    %606 = arith.maximumf %604, %605 : vector<4x4096xf32>
    %cst_221 = arith.constant dense<0.000000e+00> : vector<4xf32>
    %607 = vector.multi_reduction <add>, %606, %cst_221 [1] : vector<4x4096xf32> to vector<4xf32>
    %608 = vector.shape_cast %607 : vector<4xf32> to vector<4x1xf32>
    %cst_222 = arith.constant 1.000000e+00 : f32
    %609 = vector.broadcast %cst_222 : f32 to vector<4x1xf32>
    %610 = arith.cmpf oge, %608, %609 : vector<4x1xf32>
    %611 = arith.select %610, %602, %598 : vector<4x1xi1>, vector<4x1xf32>
    %612 = arith.select %610, %599, %602 : vector<4x1xi1>, vector<4x1xf32>
    %613 = arith.addf %611, %612 : vector<4x1xf32>
    %cst_223 = arith.constant 5.000000e-01 : f32
    %614 = vector.broadcast %cst_223 : f32 to vector<4x1xf32>
    %615 = arith.mulf %614, %613 : vector<4x1xf32>
    %616 = vector.broadcast %615 : vector<4x1xf32> to vector<4x4096xf32>
    %617 = arith.cmpf ogt, %220, %616 : vector<4x4096xf32>
    %618 = arith.extui %617 : vector<4x4096xi1> to vector<4x4096xi32>
    %619 = arith.sitofp %618 : vector<4x4096xi32> to vector<4x4096xf32>
    %cst_224 = arith.constant dense<0.000000e+00> : vector<4xf32>
    %620 = vector.multi_reduction <add>, %619, %cst_224 [1] : vector<4x4096xf32> to vector<4xf32>
    %621 = vector.shape_cast %620 : vector<4xf32> to vector<4x1xf32>
    %622 = arith.mulf %220, %619 : vector<4x4096xf32>
    %cst_225 = arith.constant dense<0.000000e+00> : vector<4xf32>
    %623 = vector.multi_reduction <add>, %622, %cst_225 [1] : vector<4x4096xf32> to vector<4xf32>
    %624 = vector.shape_cast %623 : vector<4xf32> to vector<4x1xf32>
    %cst_226 = arith.constant 1.000000e+00 : f32
    %625 = vector.broadcast %cst_226 : f32 to vector<4x1xf32>
    %626 = arith.subf %624, %625 : vector<4x1xf32>
    %627 = arith.divf %626, %621 : vector<4x1xf32>
    %628 = vector.broadcast %627 : vector<4x1xf32> to vector<4x4096xf32>
    %629 = arith.subf %220, %628 : vector<4x4096xf32>
    %cst_227 = arith.constant 0.000000e+00 : f32
    %630 = vector.broadcast %cst_227 : f32 to vector<4x4096xf32>
    %631 = arith.maximumf %629, %630 : vector<4x4096xf32>
    %c0_228 = arith.constant 0 : index
    %c0_229 = arith.constant 0 : index
    %632 = vector.load %arg20[%c0_228, %c0_229] : memref<4096x32xf32, #tpu.memory_space<vmem>>, vector<4096x32xf32>
    %cst_230 = arith.constant dense<0.000000e+00> : vector<4x32xf32>
    %633 = tpu.matmul %631, %632, %cst_230 {dimension_numbers = #tpu.dot_dimension_numbers<[1], [0], [0], [1], [0, 0, 1, 1], [], []>} : vector<4x4096xf32>, vector<4096x32xf32>, vector<4x32xf32> -> vector<4x32xf32>
    %634 = vector.extract_strided_slice %633 {offsets = [0, 0], sizes = [2, 32], strides = [1, 1]} : vector<4x32xf32> to vector<2x32xf32>
    %635 = arith.mulf %634, %634 : vector<2x32xf32>
    %cst_231 = arith.constant dense<0.000000e+00> : vector<2xf32>
    %636 = vector.multi_reduction <add>, %635, %cst_231 [1] : vector<2x32xf32> to vector<2xf32>
    %637 = vector.shape_cast %636 : vector<2xf32> to vector<2x1xf32>
    %638 = math.sqrt %637 : vector<2x1xf32>
    %cst_232 = arith.constant 9.99999996E-13 : f32
    %639 = vector.broadcast %cst_232 : f32 to vector<2x1xf32>
    %640 = arith.maximumf %638, %639 : vector<2x1xf32>
    %641 = vector.broadcast %640 : vector<2x1xf32> to vector<2x32xf32>
    %642 = arith.divf %634, %641 : vector<2x32xf32>
    %643 = vector.extract_strided_slice %633 {offsets = [2, 0], sizes = [2, 32], strides = [1, 1]} : vector<4x32xf32> to vector<2x32xf32>
    %644 = arith.mulf %643, %643 : vector<2x32xf32>
    %cst_233 = arith.constant dense<0.000000e+00> : vector<2xf32>
    %645 = vector.multi_reduction <add>, %644, %cst_233 [1] : vector<2x32xf32> to vector<2xf32>
    %646 = vector.shape_cast %645 : vector<2xf32> to vector<2x1xf32>
    %647 = math.sqrt %646 : vector<2x1xf32>
    %cst_234 = arith.constant 9.99999996E-13 : f32
    %648 = vector.broadcast %cst_234 : f32 to vector<2x1xf32>
    %649 = arith.maximumf %647, %648 : vector<2x1xf32>
    %650 = vector.broadcast %649 : vector<2x1xf32> to vector<2x32xf32>
    %651 = arith.divf %643, %650 : vector<2x32xf32>
    %c0_235 = arith.constant 0 : index
    %c0_236 = arith.constant 0 : index
    %652 = memref.load %arg22[%c0_235, %c0_236] : memref<1x1xf32, #tpu.memory_space<smem>>
    %c0_237 = arith.constant 0 : index
    %c0_238 = arith.constant 0 : index
    %653 = vector.load %arg21[%c0_237, %c0_238] : memref<2x2xf32, #tpu.memory_space<vmem>>, vector<2x2xf32>
    %cst_239 = arith.constant dense<0.000000e+00> : vector<2x2xf32>
    %654 = tpu.matmul %642, %651, %cst_239 {dimension_numbers = #tpu.dot_dimension_numbers<[1], [1], [0], [0], [0, 0, 1, 0], [], []>} : vector<2x32xf32>, vector<2x32xf32>, vector<2x2xf32> -> vector<2x2xf32>
    %655 = vector.broadcast %652 : f32 to vector<2x2xf32>
    %656 = arith.divf %654, %655 : vector<2x2xf32>
    %cst_240 = arith.constant dense<0.000000e+00> : vector<2x2xf32>
    %657 = tpu.matmul %651, %642, %cst_240 {dimension_numbers = #tpu.dot_dimension_numbers<[1], [1], [0], [0], [0, 0, 1, 0], [], []>} : vector<2x32xf32>, vector<2x32xf32>, vector<2x2xf32> -> vector<2x2xf32>
    %658 = vector.broadcast %652 : f32 to vector<2x2xf32>
    %659 = arith.divf %657, %658 : vector<2x2xf32>
    %cst_241 = arith.constant dense<0xFF800000> : vector<2xf32>
    %660 = vector.multi_reduction <maximumf>, %656, %cst_241 [1] : vector<2x2xf32> to vector<2xf32>
    %661 = vector.shape_cast %660 : vector<2xf32> to vector<2x1xf32>
    %662 = vector.broadcast %661 : vector<2x1xf32> to vector<2x2xf32>
    %663 = arith.subf %656, %662 : vector<2x2xf32>
    %664 = math.exp %663 : vector<2x2xf32>
    %cst_242 = arith.constant dense<0.000000e+00> : vector<2xf32>
    %665 = vector.multi_reduction <add>, %664, %cst_242 [1] : vector<2x2xf32> to vector<2xf32>
    %666 = vector.shape_cast %665 : vector<2xf32> to vector<2x1xf32>
    %667 = math.log %666 : vector<2x1xf32>
    %668 = arith.addf %667, %661 : vector<2x1xf32>
    %669 = vector.broadcast %668 : vector<2x1xf32> to vector<2x2xf32>
    %670 = arith.subf %656, %669 : vector<2x2xf32>
    %cst_243 = arith.constant 0.000000e+00 : f32
    %671 = vector.broadcast %cst_243 : f32 to vector<2x2xf32>
    %672 = arith.subf %671, %670 : vector<2x2xf32>
    %673 = arith.mulf %672, %653 : vector<2x2xf32>
    %cst_244 = arith.constant dense<0.000000e+00> : vector<2xf32>
    %674 = vector.multi_reduction <add>, %673, %cst_244 [1] : vector<2x2xf32> to vector<2xf32>
    %675 = vector.shape_cast %674 : vector<2xf32> to vector<2x1xf32>
    %cst_245 = arith.constant dense<0.000000e+00> : vector<1xf32>
    %676 = vector.multi_reduction <add>, %675, %cst_245 [0] : vector<2x1xf32> to vector<1xf32>
    %677 = vector.shape_cast %676 : vector<1xf32> to vector<1x1xf32>
    %cst_246 = arith.constant 5.000000e-01 : f32
    %678 = vector.broadcast %cst_246 : f32 to vector<1x1xf32>
    %679 = arith.mulf %677, %678 : vector<1x1xf32>
    %cst_247 = arith.constant dense<0xFF800000> : vector<2xf32>
    %680 = vector.multi_reduction <maximumf>, %659, %cst_247 [1] : vector<2x2xf32> to vector<2xf32>
    %681 = vector.shape_cast %680 : vector<2xf32> to vector<2x1xf32>
    %682 = vector.broadcast %681 : vector<2x1xf32> to vector<2x2xf32>
    %683 = arith.subf %659, %682 : vector<2x2xf32>
    %684 = math.exp %683 : vector<2x2xf32>
    %cst_248 = arith.constant dense<0.000000e+00> : vector<2xf32>
    %685 = vector.multi_reduction <add>, %684, %cst_248 [1] : vector<2x2xf32> to vector<2xf32>
    %686 = vector.shape_cast %685 : vector<2xf32> to vector<2x1xf32>
    %687 = math.log %686 : vector<2x1xf32>
    %688 = arith.addf %687, %681 : vector<2x1xf32>
    %689 = vector.broadcast %688 : vector<2x1xf32> to vector<2x2xf32>
    %690 = arith.subf %659, %689 : vector<2x2xf32>
    %cst_249 = arith.constant 0.000000e+00 : f32
    %691 = vector.broadcast %cst_249 : f32 to vector<2x2xf32>
    %692 = arith.subf %691, %690 : vector<2x2xf32>
    %693 = arith.mulf %692, %653 : vector<2x2xf32>
    %cst_250 = arith.constant dense<0.000000e+00> : vector<2xf32>
    %694 = vector.multi_reduction <add>, %693, %cst_250 [1] : vector<2x2xf32> to vector<2xf32>
    %695 = vector.shape_cast %694 : vector<2xf32> to vector<2x1xf32>
    %cst_251 = arith.constant dense<0.000000e+00> : vector<1xf32>
    %696 = vector.multi_reduction <add>, %695, %cst_251 [0] : vector<2x1xf32> to vector<1xf32>
    %697 = vector.shape_cast %696 : vector<1xf32> to vector<1x1xf32>
    %cst_252 = arith.constant 5.000000e-01 : f32
    %698 = vector.broadcast %cst_252 : f32 to vector<1x1xf32>
    %699 = arith.mulf %697, %698 : vector<1x1xf32>
    %700 = arith.addf %679, %699 : vector<1x1xf32>
    %cst_253 = arith.constant 5.000000e-01 : f32
    %701 = vector.broadcast %cst_253 : f32 to vector<1x1xf32>
    %702 = arith.mulf %701, %700 : vector<1x1xf32>
    %703 = math.absf %642 : vector<2x32xf32>
    %cst_254 = arith.constant dense<0.000000e+00> : vector<2xf32>
    %704 = vector.multi_reduction <add>, %703, %cst_254 [1] : vector<2x32xf32> to vector<2xf32>
    %705 = vector.shape_cast %704 : vector<2xf32> to vector<2x1xf32>
    %cst_255 = arith.constant dense<0.000000e+00> : vector<1xf32>
    %706 = vector.multi_reduction <add>, %705, %cst_255 [0] : vector<2x1xf32> to vector<1xf32>
    %707 = vector.shape_cast %706 : vector<1xf32> to vector<1x1xf32>
    %708 = arith.mulf %642, %642 : vector<2x32xf32>
    %cst_256 = arith.constant dense<0.000000e+00> : vector<2xf32>
    %709 = vector.multi_reduction <add>, %708, %cst_256 [1] : vector<2x32xf32> to vector<2xf32>
    %710 = vector.shape_cast %709 : vector<2xf32> to vector<2x1xf32>
    %cst_257 = arith.constant dense<0.000000e+00> : vector<1xf32>
    %711 = vector.multi_reduction <add>, %710, %cst_257 [0] : vector<2x1xf32> to vector<1xf32>
    %712 = vector.shape_cast %711 : vector<1xf32> to vector<1x1xf32>
    %cst_258 = arith.constant 1.562500e-02 : f32
    %713 = vector.broadcast %cst_258 : f32 to vector<1x1xf32>
    %714 = arith.mulf %707, %713 : vector<1x1xf32>
    %715 = math.sqrt %712 : vector<1x1xf32>
    %716 = arith.divf %714, %715 : vector<1x1xf32>
    %717 = arith.addf %702, %716 : vector<1x1xf32>
    %718 = math.absf %651 : vector<2x32xf32>
    %cst_259 = arith.constant dense<0.000000e+00> : vector<2xf32>
    %719 = vector.multi_reduction <add>, %718, %cst_259 [1] : vector<2x32xf32> to vector<2xf32>
    %720 = vector.shape_cast %719 : vector<2xf32> to vector<2x1xf32>
    %cst_260 = arith.constant dense<0.000000e+00> : vector<1xf32>
    %721 = vector.multi_reduction <add>, %720, %cst_260 [0] : vector<2x1xf32> to vector<1xf32>
    %722 = vector.shape_cast %721 : vector<1xf32> to vector<1x1xf32>
    %723 = arith.mulf %651, %651 : vector<2x32xf32>
    %cst_261 = arith.constant dense<0.000000e+00> : vector<2xf32>
    %724 = vector.multi_reduction <add>, %723, %cst_261 [1] : vector<2x32xf32> to vector<2xf32>
    %725 = vector.shape_cast %724 : vector<2xf32> to vector<2x1xf32>
    %cst_262 = arith.constant dense<0.000000e+00> : vector<1xf32>
    %726 = vector.multi_reduction <add>, %725, %cst_262 [0] : vector<2x1xf32> to vector<1xf32>
    %727 = vector.shape_cast %726 : vector<1xf32> to vector<1x1xf32>
    %cst_263 = arith.constant 1.562500e-02 : f32
    %728 = vector.broadcast %cst_263 : f32 to vector<1x1xf32>
    %729 = arith.mulf %722, %728 : vector<1x1xf32>
    %730 = math.sqrt %727 : vector<1x1xf32>
    %731 = arith.divf %729, %730 : vector<1x1xf32>
    %732 = arith.addf %717, %731 : vector<1x1xf32>
    %c0_264 = arith.constant 0 : index
    %c0_265 = arith.constant 0 : index
    %733 = vector.load %arg23[%c0_264, %c0_265] : memref<1x1xf32, #tpu.memory_space<vmem>>, vector<1x1xf32>
    tpu.vector_store %arg23[%c0_264, %c0_265], %732 {strides = array<i32>} : memref<1x1xf32, #tpu.memory_space<vmem>>, vector<1x1xf32>,
    return
  }
}

</mosaic_0001>

<llo_original>
// kernel: tpu_custom_call.1
$region0: #{tpu_custom_call.1}
  #allocation0 [shape = 'u32[]', space=smem, size = 0x4, offset = 0x4, fixed_abs, tag = 'smem constant byte address 0x4 - core index']
  #allocation1 [shape = 'u32[72,128]{1,0:T(1,128)}', space=vmem, size = 0x9000, scoped, tag = 'internal scratch']
  #allocation2 [shape = 'f32[1,1]{1,0:T(1,128)S(6)}', space=smem, size = 0x200, scoped, tag = 'scoped memory for tpu_custom_call.1']
  %s0 = inlined_call_operand.vmem [shape: f32[16,32], index: 0, kind: input, shape index: {}]
  %s1 = inlined_call_operand.vmem [shape: f32[16,32], index: 1, kind: input, shape index: {}]
  %s2 = inlined_call_operand.vmem [shape: f32[16,1], index: 2, kind: input, shape index: {}]
  %s3 = inlined_call_operand.vmem [shape: f32[1,32], index: 3, kind: input, shape index: {}]
  %s4 = inlined_call_operand.vmem [shape: f32[1,32], index: 4, kind: input, shape index: {}]
  %s5 = inlined_call_operand.vmem [shape: f32[32,32], index: 5, kind: input, shape index: {}]
  %s6 = inlined_call_operand.vmem [shape: f32[1,32], index: 6, kind: input, shape index: {}]
  %s7 = inlined_call_operand.vmem [shape: f32[1,32], index: 7, kind: input, shape index: {}]
  %s8 = inlined_call_operand.vmem [shape: f32[1,32], index: 8, kind: input, shape index: {}]
  %s9 = inlined_call_operand.vmem [shape: f32[32,32], index: 9, kind: input, shape index: {}]
  %s10 = inlined_call_operand.vmem [shape: f32[1,32], index: 10, kind: input, shape index: {}]
  %s11 = inlined_call_operand.vmem [shape: f32[1,32], index: 11, kind: input, shape index: {}]
  %s12 = inlined_call_operand.vmem [shape: f32[1,32], index: 12, kind: input, shape index: {}]
  %s13 = inlined_call_operand.vmem [shape: f32[32,32], index: 13, kind: input, shape index: {}]
  %s14 = inlined_call_operand.vmem [shape: f32[1,32], index: 14, kind: input, shape index: {}]
  %s15 = inlined_call_operand.vmem [shape: f32[1,32], index: 15, kind: input, shape index: {}]
  %s16 = inlined_call_operand.vmem [shape: f32[1,32], index: 16, kind: input, shape index: {}]
  %s17 = inlined_call_operand.vmem [shape: f32[32,32], index: 17, kind: input, shape index: {}]
  %s18 = inlined_call_operand.vmem [shape: f32[1,32], index: 18, kind: input, shape index: {}]
  %s19 = inlined_call_operand.vmem [shape: f32[32,4096], index: 19, kind: input, shape index: {}]
  %s20 = inlined_call_operand.vmem [shape: f32[4096,32], index: 20, kind: input, shape index: {}]
  %s21 = inlined_call_operand.vmem [shape: f32[2,2], index: 21, kind: input, shape index: {}]
  %s22 = inlined_call_operand.<no memory space> [shape: f32[1,1], index: 22, kind: input, shape index: {}]
  %s23 = inlined_call_operand.hbm [shape: f32[1,1], index: 23, kind: output, shape index: {}]
  %s24 = sld [smem:[#allocation0]]
  $region102: #{tpu_custom_call.1} parent=0
    _
  %s26 = ssub.s32 1, %s24
  %s27 = scalar_select 0, %s26, %s24
  %28 = sst [smem:[#allocation2]] %s22
  $region1: #{tpu_custom_call.1} parent=0
    #allocation3 [shape = 'u8[512]{0}', space=vmem, size = 0x400, scoped, tag = 'output window, operand 0, single buffered']
    #allocation4 [shape = 's32[1]{0}', space=sflag, size = 0x4, scoped, tag = 'scoped memory for tpu_custom_call.1']
    %29 = vsyncpa [#allocation4], 0
    // Predicated region
    $region2: #{tpu_custom_call.1} parent=1 // pred_check
      _
    $region3: #{tpu_custom_call.1} parent=1 // pred_check_branch
      %31 = sbr.rel (0) target = $region5
    $region4: #{tpu_custom_call.1} parent=1 // pred_region
      _
    $region5: #{tpu_custom_call.1} parent=1 // pred_fallthru
      _
    // Predicated region
    $region6: #{tpu_custom_call.1} parent=1 // pred_check
      _
    $region7: #{tpu_custom_call.1} parent=1 // pred_check_branch
      %33 = sbr.rel (0) target = $region9
    $region8: #{tpu_custom_call.1} parent=1 // pred_region
      _
    $region9: #{tpu_custom_call.1} parent=1 // pred_fallthru
      _
    // Predicated region
    $region10: #{tpu_custom_call.1} parent=1 // pred_check
      _
    $region11: #{tpu_custom_call.1} parent=1 // pred_check_branch
      %35 = sbr.rel (0) target = $region13
    $region12: #{tpu_custom_call.1} parent=1 // pred_region
      _
    $region13: #{tpu_custom_call.1} parent=1 // pred_fallthru
      _
    // Predicated region
    $region14: #{tpu_custom_call.1} parent=1 // pred_check
      _
    $region15: #{tpu_custom_call.1} parent=1 // pred_check_branch
      %37 = sbr.rel (0) target = $region17
    $region16: #{tpu_custom_call.1} parent=1 // pred_region
      _
    $region17: #{tpu_custom_call.1} parent=1 // pred_fallthru
      _
    // Predicated region
    $region18: #{tpu_custom_call.1} parent=1 // pred_check
      _
    $region19: #{tpu_custom_call.1} parent=1 // pred_check_branch
      %39 = sbr.rel (0) target = $region21
    $region20: #{tpu_custom_call.1} parent=1 // pred_region
      _
    $region21: #{tpu_custom_call.1} parent=1 // pred_fallthru
      _
    // Predicated region
    $region22: #{tpu_custom_call.1} parent=1 // pred_check
      _
    $region23: #{tpu_custom_call.1} parent=1 // pred_check_branch
      %41 = sbr.rel (0) target = $region25
    $region24: #{tpu_custom_call.1} parent=1 // pred_region
      _
    $region25: #{tpu_custom_call.1} parent=1 // pred_fallthru
      _
    // Predicated region
    $region26: #{tpu_custom_call.1} parent=1 // pred_check
      _
    $region27: #{tpu_custom_call.1} parent=1 // pred_check_branch
      %43 = sbr.rel (0) target = $region29
    $region28: #{tpu_custom_call.1} parent=1 // pred_region
      _
    $region29: #{tpu_custom_call.1} parent=1 // pred_fallthru
      _
    // Predicated region
    $region30: #{tpu_custom_call.1} parent=1 // pred_check
      _
    $region31: #{tpu_custom_call.1} parent=1 // pred_check_branch
      %45 = sbr.rel (0) target = $region33
    $region32: #{tpu_custom_call.1} parent=1 // pred_region
      _
    $region33: #{tpu_custom_call.1} parent=1 // pred_fallthru
      _
    // Predicated region
    $region34: #{tpu_custom_call.1} parent=1 // pred_check
      _
    $region35: #{tpu_custom_call.1} parent=1 // pred_check_branch
      %47 = sbr.rel (0) target = $region37
    $region36: #{tpu_custom_call.1} parent=1 // pred_region
      _
    $region37: #{tpu_custom_call.1} parent=1 // pred_fallthru
      _
    // Predicated region
    $region38: #{tpu_custom_call.1} parent=1 // pred_check
      _
    $region39: #{tpu_custom_call.1} parent=1 // pred_check_branch
      %49 = sbr.rel (0) target = $region41
    $region40: #{tpu_custom_call.1} parent=1 // pred_region
      _
    $region41: #{tpu_custom_call.1} parent=1 // pred_fallthru
      _
    // Predicated region
    $region42: #{tpu_custom_call.1} parent=1 // pred_check
      _
    $region43: #{tpu_custom_call.1} parent=1 // pred_check_branch
      %51 = sbr.rel (0) target = $region45
    $region44: #{tpu_custom_call.1} parent=1 // pred_region
      _
    $region45: #{tpu_custom_call.1} parent=1 // pred_fallthru
      _
    // Predicated region
    $region46: #{tpu_custom_call.1} parent=1 // pred_check
      _
    $region47: #{tpu_custom_call.1} parent=1 // pred_check_branch
      %53 = sbr.rel (0) target = $region49
    $region48: #{tpu_custom_call.1} parent=1 // pred_region
      _
    $region49: #{tpu_custom_call.1} parent=1 // pred_fallthru
      _
    // Predicated region
    $region50: #{tpu_custom_call.1} parent=1 // pred_check
      _
    $region51: #{tpu_custom_call.1} parent=1 // pred_check_branch
      %55 = sbr.rel (0) target = $region53
    $region52: #{tpu_custom_call.1} parent=1 // pred_region
      _
    $region53: #{tpu_custom_call.1} parent=1 // pred_fallthru
      _
    // Predicated region
    $region54: #{tpu_custom_call.1} parent=1 // pred_check
      _
    $region55: #{tpu_custom_call.1} parent=1 // pred_check_branch
      %57 = sbr.rel (0) target = $region57
    $region56: #{tpu_custom_call.1} parent=1 // pred_region
      _
    $region57: #{tpu_custom_call.1} parent=1 // pred_fallthru
      _
    // Predicated region
    $region58: #{tpu_custom_call.1} parent=1 // pred_check
      _
    $region59: #{tpu_custom_call.1} parent=1 // pred_check_branch
      %59 = sbr.rel (0) target = $region61
    $region60: #{tpu_custom_call.1} parent=1 // pred_region
      _
    $region61: #{tpu_custom_call.1} parent=1 // pred_fallthru
      _
    // Predicated region
    $region62: #{tpu_custom_call.1} parent=1 // pred_check
      _
    $region63: #{tpu_custom_call.1} parent=1 // pred_check_branch
      %61 = sbr.rel (0) target = $region65
    $region64: #{tpu_custom_call.1} parent=1 // pred_region
      _
    $region65: #{tpu_custom_call.1} parent=1 // pred_fallthru
      _
    // Predicated region
    $region66: #{tpu_custom_call.1} parent=1 // pred_check
      _
    $region67: #{tpu_custom_call.1} parent=1 // pred_check_branch
      %63 = sbr.rel (0) target = $region69
    $region68: #{tpu_custom_call.1} parent=1 // pred_region
      _
    $region69: #{tpu_custom_call.1} parent=1 // pred_fallthru
      _
    // Predicated region
    $region70: #{tpu_custom_call.1} parent=1 // pred_check
      _
    $region71: #{tpu_custom_call.1} parent=1 // pred_check_branch
      %65 = sbr.rel (0) target = $region73
    $region72: #{tpu_custom_call.1} parent=1 // pred_region
      _
    $region73: #{tpu_custom_call.1} parent=1 // pred_fallthru
      _
    // Predicated region
    $region74: #{tpu_custom_call.1} parent=1 // pred_check
      _
    $region75: #{tpu_custom_call.1} parent=1 // pred_check_branch
      %67 = sbr.rel (0) target = $region77
    $region76: #{tpu_custom_call.1} parent=1 // pred_region
      _
    $region77: #{tpu_custom_call.1} parent=1 // pred_fallthru
      _
    // Predicated region
    $region78: #{tpu_custom_call.1} parent=1 // pred_check
      _
    $region79: #{tpu_custom_call.1} parent=1 // pred_check_branch
      %69 = sbr.rel (0) target = $region81
    $region80: #{tpu_custom_call.1} parent=1 // pred_region
      _
    $region81: #{tpu_custom_call.1} parent=1 // pred_fallthru
      _
    // Predicated region
    $region82: #{tpu_custom_call.1} parent=1 // pred_check
      _
    $region83: #{tpu_custom_call.1} parent=1 // pred_check_branch
      %71 = sbr.rel (0) target = $region85
    $region84: #{tpu_custom_call.1} parent=1 // pred_region
      _
    $region85: #{tpu_custom_call.1} parent=1 // pred_fallthru
      _
    // Predicated region
    $region86: #{tpu_custom_call.1} parent=1 // pred_check
      _
    $region87: #{tpu_custom_call.1} parent=1 // pred_check_branch
      %73 = sbr.rel (0) target = $region89
    $region88: #{tpu_custom_call.1} parent=1 // pred_region
      _
    $region89: #{tpu_custom_call.1} parent=1 // pred_fallthru
      _
    // Predicated region
    $region90: #{tpu_custom_call.1} parent=1 // pred_check
      _
    $region91: #{tpu_custom_call.1} parent=1 // pred_check_branch
      %75 = sbr.rel (0) target = $region93
    $region92: #{tpu_custom_call.1} parent=1 // pred_region
      _
    $region93: #{tpu_custom_call.1} parent=1 // pred_fallthru
      _
    %v76 = vld [vmem:[%s0] sm:$0xff]
    %v77 = vld [vmem:[%s0 + $0x8] sm:$0xff]
    %v78 = vld [vmem:[%s3] sm:$0x1]
    %v79 = vld [vmem:[%s4] sm:$0x1]
    %vm80 = vcmask 261120
    %v81 = vsel %vm80, %v76, 0.0
    %82 = vadd.xlane.f32.xlu0 %v81
    %v83 = vpop.xlane.xlu0 %82
    %v84 = vsel %vm80, %v77, 0.0
    %85 = vadd.xlane.f32.xlu0 %v84
    %v86 = vpop.xlane.xlu0 %85
    %v87 = vrcp.pop 32.0
    %v88 = vmul.f32 32.0, %v87
    %v89 = vsub.f32 1.0, %v88
    %v90 = vmul.f32 %v87, %v89
    %v91 = vadd.f32 %v87, %v90
    %vm92 = vweird.f32 %v87
    %v93 = vsel %vm92, %v87, %v91
    %v94 = vmul.f32 %v83, %v93
    %v95 = vmul.f32 %v86, %v93
    %v96 = vsub.f32 %v76, %v94
    %v97 = vsub.f32 %v77, %v95
    %v98 = vmul.f32 %v96, %v96
    %v99 = vmul.f32 %v97, %v97
    %v100 = vsel %vm80, %v98, 0.0
    %101 = vadd.xlane.f32.xlu0 %v100
    %v102 = vpop.xlane.xlu0 %101
    %v103 = vsel %vm80, %v99, 0.0
    %104 = vadd.xlane.f32.xlu0 %v103
    %v105 = vpop.xlane.xlu0 %104
    %v106 = vmul.f32 %v102, %v93
    %v107 = vmul.f32 %v105, %v93
    %v108 = vadd.f32 %v106, 1e-05
    %v109 = vadd.f32 %v107, 1e-05
    %v110 = vrsqrt.pop %v108
    %v111 = vmul.f32 %v110, %v108
    %v112 = vmul.f32 %v111, %v110
    %v113 = vmul.f32 0.5, %v112
    %v114 = vsub.f32 1.5, %v113
    %v115 = vmul.f32 %v110, %v114
    %vm116 = vweird.f32 %v108
    %vm117 = vweird.f32 %v110
    %vm118 = vmor %vm116, %vm117
    %v119 = vsel %vm118, %v110, %v115
    %v120 = vrsqrt.pop %v109
    %v121 = vmul.f32 %v120, %v109
    %v122 = vmul.f32 %v121, %v120
    %v123 = vmul.f32 0.5, %v122
    %v124 = vsub.f32 1.5, %v123
    %v125 = vmul.f32 %v120, %v124
    %vm126 = vweird.f32 %v109
    %vm127 = vweird.f32 %v120
    %vm128 = vmor %vm126, %vm127
    %v129 = vsel %vm128, %v120, %v125
    %v130 = vmul.f32 %v96, %v119
    %v131 = vmul.f32 %v97, %v129
    %v133 = vperm.slane %v78, 0
    %v135 = vmul.f32 %v130, %v133
    %v136 = vmul.f32 %v131, %v133
    %v138 = vperm.slane %v79, 0
    %v140 = vadd.f32 %v135, %v138
    %v141 = vadd.f32 %v136, %v138
    %v142 = vld [vmem:[%s5] sm:$0xff]
    %v143 = vld [vmem:[%s5 + $0x8] sm:$0xff]
    %v144 = vld [vmem:[%s5 + $0x10] sm:$0xff]
    %v145 = vld [vmem:[%s5 + $0x18] sm:$0xff]
    %v146 = vld [vmem:[%s6] sm:$0x1]
    %v148 = vperm.slane %v146, 0
    %v151 = vsel %vm80, %v140, 0
    %v154 = vsel %vm80, %v141, 0
    %156 = vmatpush.msra.mxu0 0.0
    %157 = vmatpush.msra.mxu0 0.0
    %158 = vmatpush.msra.mxu0 0.0
    %159 = vmatpush.msra.mxu0 0.0
    %160 = vmatpush.msra.mxu0 0.0
    %161 = vmatpush.msra.mxu0 0.0
    %162 = vmatpush.msra.mxu0 0.0
    %163 = vmatpush.msra.mxu0 0.0
    %164 = vmatpush.msra.mxu0 0.0
    %165 = vmatpush.msra.mxu0 0.0
    %166 = vmatpush.msra.mxu0 0.0
    %167 = vmatpush.msra.mxu0 0.0
    %168 = vmatpush.msra.mxu0 %v145
    %169 = vmatpush.msra.mxu0 %v144
    %170 = vmatpush.msra.mxu0 %v143
    %171 = vmatpush.msra.mxu0 %v142
    %172 = vmatmul.f32.gmra.mxu0 %v151
    %v173 = vpop.f32.mrf.mxu0
    %v174 = vadd.f32 %v148, %v173
    %175 = vmatmul.f32.gmra.mxu0 %v154
    %v176 = vpop.f32.mrf.mxu0
    %v177 = vadd.f32 %v148, %v176
    %178 = vdwg.mxu0
    %v179 = vmul.f32 %v174, 0.5
    %v180 = vmul.f32 %v177, 0.5
    %v181 = vmul.f32 %v174, 0.70710677
    %v182 = vmul.f32 %v177, 0.70710677
    %v183 = vand.u32 2147483647, %v181
    %v184 = vand.u32 2147483647, %v182
    %v185 = vmul.f32 %v183, 0.3275911
    %v186 = vmul.f32 %v184, 0.3275911
    %v187 = vadd.f32 %v185, 1.0
    %v188 = vadd.f32 %v186, 1.0
    %v189 = vrcp.pop %v187
    %v190 = vmul.f32 %v187, %v189
    %v191 = vsub.f32 1.0, %v190
    %v192 = vmul.f32 %v189, %v191
    %v193 = vadd.f32 %v189, %v192
    %vm194 = vweird.f32 %v187
    %vm195 = vweird.f32 %v189
    %vm196 = vmor %vm194, %vm195
    %v197 = vsel %vm196, %v189, %v193
    %v198 = vand.u32 2147483647, %v187
    %vm199 = vcmp.eq.f32.partialorder %v198, 8.507059e+37
    %v200 = vand.u32 %v187, 2147483648
    %v201 = vor.u32 1.1754944e-38, %v200
    %v202 = vsel %vm199, %v201, %v197
    %v203 = vmul.f32 1.0, %v202
    %v204 = vrcp.pop %v188
    %v205 = vmul.f32 %v188, %v204
    %v206 = vsub.f32 1.0, %v205
    %v207 = vmul.f32 %v204, %v206
    %v208 = vadd.f32 %v204, %v207
    %vm209 = vweird.f32 %v188
    %vm210 = vweird.f32 %v204
    %vm211 = vmor %vm209, %vm210
    %v212 = vsel %vm211, %v204, %v208
    %v213 = vand.u32 2147483647, %v188
    %vm214 = vcmp.eq.f32.partialorder %v213, 8.507059e+37
    %v215 = vand.u32 %v188, 2147483648
    %v216 = vor.u32 1.1754944e-38, %v215
    %v217 = vsel %vm214, %v216, %v212
    %v218 = vmul.f32 1.0, %v217
    %v219 = vmul.f32 %v203, 1.0614054
    %v220 = vmul.f32 %v218, 1.0614054
    %v221 = vadd.f32 %v219, -1.4531521
    %v222 = vadd.f32 %v220, -1.4531521
    %v223 = vmul.f32 %v221, %v203
    %v224 = vmul.f32 %v222, %v218
    %v225 = vadd.f32 %v223, 1.4214138
    %v226 = vadd.f32 %v224, 1.4214138
    %v227 = vmul.f32 %v225, %v203
    %v228 = vmul.f32 %v226, %v218
    %v229 = vadd.f32 %v227, -0.28449672
    %v230 = vadd.f32 %v228, -0.28449672
    %v231 = vmul.f32 %v229, %v203
    %v232 = vmul.f32 %v230, %v218
    %v233 = vadd.f32 %v231, 0.2548296
    %v234 = vadd.f32 %v232, 0.2548296
    %v235 = vmul.f32 %v233, %v203
    %v236 = vmul.f32 %v234, %v218
    %v237 = vsub.f32 0.0, %v183
    %v238 = vsub.f32 0.0, %v184
    %v239 = vmul.f32 %v237, %v183
    %v240 = vmul.f32 %v238, %v184
    %v241 = vmul.f32 %v239, 1.442695
    %v242 = vpow.pop %v241
    %v243 = vmul.f32 %v240, 1.442695
    %v244 = vpow.pop %v243
    %v245 = vmul.f32 %v235, %v242
    %v246 = vmul.f32 %v236, %v244
    %v247 = vsub.f32 1.0, %v245
    %v248 = vsub.f32 1.0, %v246
    %vm249 = vcmp.ge.f32.partialorder %v181, 0.0
    %vm250 = vcmp.ge.f32.partialorder %v182, 0.0
    %v251 = vsub.f32 0.0, %v247
    %v252 = vsub.f32 0.0, %v248
    %v253 = vsel %vm249, %v247, %v251
    %v254 = vsel %vm250, %v248, %v252
    %v255 = vadd.f32 %v253, 1.0
    %v256 = vadd.f32 %v254, 1.0
    %v257 = vmul.f32 %v179, %v255
    %v258 = vmul.f32 %v180, %v256
    %v259 = vld [vmem:[%s7] sm:$0x1]
    %v260 = vld [vmem:[%s8] sm:$0x1]
    %v261 = vsel %vm80, %v257, 0.0
    %262 = vadd.xlane.f32.xlu0 %v261
    %v263 = vpop.xlane.xlu0 %262
    %v264 = vsel %vm80, %v258, 0.0
    %265 = vadd.xlane.f32.xlu0 %v264
    %v266 = vpop.xlane.xlu0 %265
    %v267 = vmul.f32 %v263, %v93
    %v268 = vmul.f32 %v266, %v93
    %v269 = vsub.f32 %v257, %v267
    %v270 = vsub.f32 %v258, %v268
    %v271 = vmul.f32 %v269, %v269
    %v272 = vmul.f32 %v270, %v270
    %v273 = vsel %vm80, %v271, 0.0
    %274 = vadd.xlane.f32.xlu0 %v273
    %v275 = vpop.xlane.xlu0 %274
    %v276 = vsel %vm80, %v272, 0.0
    %277 = vadd.xlane.f32.xlu0 %v276
    %v278 = vpop.xlane.xlu0 %277
    %v279 = vmul.f32 %v275, %v93
    %v280 = vmul.f32 %v278, %v93
    %v281 = vadd.f32 %v279, 1e-05
    %v282 = vadd.f32 %v280, 1e-05
    %v283 = vrsqrt.pop %v281
    %v284 = vmul.f32 %v283, %v281
    %v285 = vmul.f32 %v284, %v283
    %v286 = vmul.f32 0.5, %v285
    %v287 = vsub.f32 1.5, %v286
    %v288 = vmul.f32 %v283, %v287
    %vm289 = vweird.f32 %v281
    %vm290 = vweird.f32 %v283
    %vm291 = vmor %vm289, %vm290
    %v292 = vsel %vm291, %v283, %v288
    %v293 = vrsqrt.pop %v282
    %v294 = vmul.f32 %v293, %v282
    %v295 = vmul.f32 %v294, %v293
    %v296 = vmul.f32 0.5, %v295
    %v297 = vsub.f32 1.5, %v296
    %v298 = vmul.f32 %v293, %v297
    %vm299 = vweird.f32 %v282
    %vm300 = vweird.f32 %v293
    %vm301 = vmor %vm299, %vm300
    %v302 = vsel %vm301, %v293, %v298
    %v303 = vmul.f32 %v269, %v292
    %v304 = vmul.f32 %v270, %v302
    %v306 = vperm.slane %v259, 0
    %v308 = vmul.f32 %v303, %v306
    %v309 = vmul.f32 %v304, %v306
    %v311 = vperm.slane %v260, 0
    %v313 = vadd.f32 %v308, %v311
    %v314 = vadd.f32 %v309, %v311
    %v315 = vld [vmem:[%s9] sm:$0xff]
    %v316 = vld [vmem:[%s9 + $0x8] sm:$0xff]
    %v317 = vld [vmem:[%s9 + $0x10] sm:$0xff]
    %v318 = vld [vmem:[%s9 + $0x18] sm:$0xff]
    %v319 = vld [vmem:[%s10] sm:$0x1]
    %v321 = vperm.slane %v319, 0
    %v324 = vsel %vm80, %v313, 0
    %v327 = vsel %vm80, %v314, 0
    %329 = vmatpush.msra.mxu0 0.0
    %330 = vmatpush.msra.mxu0 0.0
    %331 = vmatpush.msra.mxu0 0.0
    %332 = vmatpush.msra.mxu0 0.0
    %333 = vmatpush.msra.mxu0 0.0
    %334 = vmatpush.msra.mxu0 0.0
    %335 = vmatpush.msra.mxu0 0.0
    %336 = vmatpush.msra.mxu0 0.0
    %337 = vmatpush.msra.mxu0 0.0
    %338 = vmatpush.msra.mxu0 0.0
    %339 = vmatpush.msra.mxu0 0.0
    %340 = vmatpush.msra.mxu0 0.0
    %341 = vmatpush.msra.mxu0 %v318
    %342 = vmatpush.msra.mxu0 %v317
    %343 = vmatpush.msra.mxu0 %v316
    %344 = vmatpush.msra.mxu0 %v315
    %345 = vmatmul.f32.gmra.mxu0 %v324
    %v346 = vpop.f32.mrf.mxu0
    %v347 = vadd.f32 %v321, %v346
    %348 = vmatmul.f32.gmra.mxu0 %v327
    %v349 = vpop.f32.mrf.mxu0
    %v350 = vadd.f32 %v321, %v349
    %351 = vdwg.mxu0
    %v352 = vld [vmem:[%s1] sm:$0xff]
    %v353 = vld [vmem:[%s1 + $0x8] sm:$0xff]
    %v354 = vld [vmem:[%s11] sm:$0x1]
    %v355 = vld [vmem:[%s12] sm:$0x1]
    %v356 = vsel %vm80, %v352, 0.0
    %357 = vadd.xlane.f32.xlu0 %v356
    %v358 = vpop.xlane.xlu0 %357
    %v359 = vsel %vm80, %v353, 0.0
    %360 = vadd.xlane.f32.xlu0 %v359
    %v361 = vpop.xlane.xlu0 %360
    %v362 = vmul.f32 %v358, %v93
    %v363 = vmul.f32 %v361, %v93
    %v364 = vsub.f32 %v352, %v362
    %v365 = vsub.f32 %v353, %v363
    %v366 = vmul.f32 %v364, %v364
    %v367 = vmul.f32 %v365, %v365
    %v368 = vsel %vm80, %v366, 0.0
    %369 = vadd.xlane.f32.xlu0 %v368
    %v370 = vpop.xlane.xlu0 %369
    %v371 = vsel %vm80, %v367, 0.0
    %372 = vadd.xlane.f32.xlu0 %v371
    %v373 = vpop.xlane.xlu0 %372
    %v374 = vmul.f32 %v370, %v93
    %v375 = vmul.f32 %v373, %v93
    %v376 = vadd.f32 %v374, 1e-05
    %v377 = vadd.f32 %v375, 1e-05
    %v378 = vrsqrt.pop %v376
    %v379 = vmul.f32 %v378, %v376
    %v380 = vmul.f32 %v379, %v378
    %v381 = vmul.f32 0.5, %v380
    %v382 = vsub.f32 1.5, %v381
    %v383 = vmul.f32 %v378, %v382
    %vm384 = vweird.f32 %v376
    %vm385 = vweird.f32 %v378
    %vm386 = vmor %vm384, %vm385
    %v387 = vsel %vm386, %v378, %v383
    %v388 = vrsqrt.pop %v377
    %v389 = vmul.f32 %v388, %v377
    %v390 = vmul.f32 %v389, %v388
    %v391 = vmul.f32 0.5, %v390
    %v392 = vsub.f32 1.5, %v391
    %v393 = vmul.f32 %v388, %v392
    %vm394 = vweird.f32 %v377
    %vm395 = vweird.f32 %v388
    %vm396 = vmor %vm394, %vm395
    %v397 = vsel %vm396, %v388, %v393
    %v398 = vmul.f32 %v364, %v387
    %v399 = vmul.f32 %v365, %v397
    %v401 = vperm.slane %v354, 0
    %v403 = vmul.f32 %v398, %v401
    %v404 = vmul.f32 %v399, %v401
    %v406 = vperm.slane %v355, 0
    %v408 = vadd.f32 %v403, %v406
    %v409 = vadd.f32 %v404, %v406
    %v410 = vld [vmem:[%s13] sm:$0xff]
    %v411 = vld [vmem:[%s13 + $0x8] sm:$0xff]
    %v412 = vld [vmem:[%s13 + $0x10] sm:$0xff]
    %v413 = vld [vmem:[%s13 + $0x18] sm:$0xff]
    %v414 = vld [vmem:[%s14] sm:$0x1]
    %v416 = vperm.slane %v414, 0
    %v419 = vsel %vm80, %v408, 0
    %v422 = vsel %vm80, %v409, 0
    %424 = vmatpush.msra.mxu0 0.0
    %425 = vmatpush.msra.mxu0 0.0
    %426 = vmatpush.msra.mxu0 0.0
    %427 = vmatpush.msra.mxu0 0.0
    %428 = vmatpush.msra.mxu0 0.0
    %429 = vmatpush.msra.mxu0 0.0
    %430 = vmatpush.msra.mxu0 0.0
    %431 = vmatpush.msra.mxu0 0.0
    %432 = vmatpush.msra.mxu0 0.0
    %433 = vmatpush.msra.mxu0 0.0
    %434 = vmatpush.msra.mxu0 0.0
    %435 = vmatpush.msra.mxu0 0.0
    %436 = vmatpush.msra.mxu0 %v413
    %437 = vmatpush.msra.mxu0 %v412
    %438 = vmatpush.msra.mxu0 %v411
    %439 = vmatpush.msra.mxu0 %v410
    %440 = vmatmul.f32.gmra.mxu0 %v419
    %v441 = vpop.f32.mrf.mxu0
    %v442 = vadd.f32 %v416, %v441
    %443 = vmatmul.f32.gmra.mxu0 %v422
    %v444 = vpop.f32.mrf.mxu0
    %v445 = vadd.f32 %v416, %v444
    %446 = vdwg.mxu0
    %v447 = vmul.f32 %v442, 0.5
    %v448 = vmul.f32 %v445, 0.5
    %v449 = vmul.f32 %v442, 0.70710677
    %v450 = vmul.f32 %v445, 0.70710677
    %v451 = vand.u32 2147483647, %v449
    %v452 = vand.u32 2147483647, %v450
    %v453 = vmul.f32 %v451, 0.3275911
    %v454 = vmul.f32 %v452, 0.3275911
    %v455 = vadd.f32 %v453, 1.0
    %v456 = vadd.f32 %v454, 1.0
    %v457 = vrcp.pop %v455
    %v458 = vmul.f32 %v455, %v457
    %v459 = vsub.f32 1.0, %v458
    %v460 = vmul.f32 %v457, %v459
    %v461 = vadd.f32 %v457, %v460
    %vm462 = vweird.f32 %v455
    %vm463 = vweird.f32 %v457
    %vm464 = vmor %vm462, %vm463
    %v465 = vsel %vm464, %v457, %v461
    %v466 = vand.u32 2147483647, %v455
    %vm467 = vcmp.eq.f32.partialorder %v466, 8.507059e+37
    %v468 = vand.u32 %v455, 2147483648
    %v469 = vor.u32 1.1754944e-38, %v468
    %v470 = vsel %vm467, %v469, %v465
    %v471 = vmul.f32 1.0, %v470
    %v472 = vrcp.pop %v456
    %v473 = vmul.f32 %v456, %v472
    %v474 = vsub.f32 1.0, %v473
    %v475 = vmul.f32 %v472, %v474
    %v476 = vadd.f32 %v472, %v475
    %vm477 = vweird.f32 %v456
    %vm478 = vweird.f32 %v472
    %vm479 = vmor %vm477, %vm478
    %v480 = vsel %vm479, %v472, %v476
    %v481 = vand.u32 2147483647, %v456
    %vm482 = vcmp.eq.f32.partialorder %v481, 8.507059e+37
    %v483 = vand.u32 %v456, 2147483648
    %v484 = vor.u32 1.1754944e-38, %v483
    %v485 = vsel %vm482, %v484, %v480
    %v486 = vmul.f32 1.0, %v485
    %v487 = vmul.f32 %v471, 1.0614054
    %v488 = vmul.f32 %v486, 1.0614054
    %v489 = vadd.f32 %v487, -1.4531521
    %v490 = vadd.f32 %v488, -1.4531521
    %v491 = vmul.f32 %v489, %v471
    %v492 = vmul.f32 %v490, %v486
    %v493 = vadd.f32 %v491, 1.4214138
    %v494 = vadd.f32 %v492, 1.4214138
    %v495 = vmul.f32 %v493, %v471
    %v496 = vmul.f32 %v494, %v486
    %v497 = vadd.f32 %v495, -0.28449672
    %v498 = vadd.f32 %v496, -0.28449672
    %v499 = vmul.f32 %v497, %v471
    %v500 = vmul.f32 %v498, %v486
    %v501 = vadd.f32 %v499, 0.2548296
    %v502 = vadd.f32 %v500, 0.2548296
    %v503 = vmul.f32 %v501, %v471
    %v504 = vmul.f32 %v502, %v486
    %v505 = vsub.f32 0.0, %v451
    %v506 = vsub.f32 0.0, %v452
    %v507 = vmul.f32 %v505, %v451
    %v508 = vmul.f32 %v506, %v452
    %v509 = vmul.f32 %v507, 1.442695
    %v510 = vpow.pop %v509
    %v511 = vmul.f32 %v508, 1.442695
    %v512 = vpow.pop %v511
    %v513 = vmul.f32 %v503, %v510
    %v514 = vmul.f32 %v504, %v512
    %v515 = vsub.f32 1.0, %v513
    %v516 = vsub.f32 1.0, %v514
    %vm517 = vcmp.ge.f32.partialorder %v449, 0.0
    %vm518 = vcmp.ge.f32.partialorder %v450, 0.0
    %v519 = vsub.f32 0.0, %v515
    %v520 = vsub.f32 0.0, %v516
    %v521 = vsel %vm517, %v515, %v519
    %v522 = vsel %vm518, %v516, %v520
    %v523 = vadd.f32 %v521, 1.0
    %v524 = vadd.f32 %v522, 1.0
    %v525 = vmul.f32 %v447, %v523
    %v526 = vmul.f32 %v448, %v524
    %v527 = vld [vmem:[%s15] sm:$0x1]
    %v528 = vld [vmem:[%s16] sm:$0x1]
    %v529 = vsel %vm80, %v525, 0.0
    %530 = vadd.xlane.f32.xlu0 %v529
    %v531 = vpop.xlane.xlu0 %530
    %v532 = vsel %vm80, %v526, 0.0
    %533 = vadd.xlane.f32.xlu0 %v532
    %v534 = vpop.xlane.xlu0 %533
    %v535 = vmul.f32 %v531, %v93
    %v536 = vmul.f32 %v534, %v93
    %v537 = vsub.f32 %v525, %v535
    %v538 = vsub.f32 %v526, %v536
    %v539 = vmul.f32 %v537, %v537
    %v540 = vmul.f32 %v538, %v538
    %v541 = vsel %vm80, %v539, 0.0
    %542 = vadd.xlane.f32.xlu0 %v541
    %v543 = vpop.xlane.xlu0 %542
    %v544 = vsel %vm80, %v540, 0.0
    %545 = vadd.xlane.f32.xlu0 %v544
    %v546 = vpop.xlane.xlu0 %545
    %v547 = vmul.f32 %v543, %v93
    %v548 = vmul.f32 %v546, %v93
    %v549 = vadd.f32 %v547, 1e-05
    %v550 = vadd.f32 %v548, 1e-05
    %v551 = vrsqrt.pop %v549
    %v552 = vmul.f32 %v551, %v549
    %v553 = vmul.f32 %v552, %v551
    %v554 = vmul.f32 0.5, %v553
    %v555 = vsub.f32 1.5, %v554
    %v556 = vmul.f32 %v551, %v555
    %vm557 = vweird.f32 %v549
    %vm558 = vweird.f32 %v551
    %vm559 = vmor %vm557, %vm558
    %v560 = vsel %vm559, %v551, %v556
    %v561 = vrsqrt.pop %v550
    %v562 = vmul.f32 %v561, %v550
    %v563 = vmul.f32 %v562, %v561
    %v564 = vmul.f32 0.5, %v563
    %v565 = vsub.f32 1.5, %v564
    %v566 = vmul.f32 %v561, %v565
    %vm567 = vweird.f32 %v550
    %vm568 = vweird.f32 %v561
    %vm569 = vmor %vm567, %vm568
    %v570 = vsel %vm569, %v561, %v566
    %v571 = vmul.f32 %v537, %v560
    %v572 = vmul.f32 %v538, %v570
    %v574 = vperm.slane %v527, 0
    %v576 = vmul.f32 %v571, %v574
    %v577 = vmul.f32 %v572, %v574
    %v579 = vperm.slane %v528, 0
    %v581 = vadd.f32 %v576, %v579
    %v582 = vadd.f32 %v577, %v579
    %v583 = vld [vmem:[%s17] sm:$0xff]
    %v584 = vld [vmem:[%s17 + $0x8] sm:$0xff]
    %v585 = vld [vmem:[%s17 + $0x10] sm:$0xff]
    %v586 = vld [vmem:[%s17 + $0x18] sm:$0xff]
    %v587 = vld [vmem:[%s18] sm:$0x1]
    %v589 = vperm.slane %v587, 0
    %v592 = vsel %vm80, %v581, 0
    %v595 = vsel %vm80, %v582, 0
    %597 = vmatpush.msra.mxu0 0.0
    %598 = vmatpush.msra.mxu0 0.0
    %599 = vmatpush.msra.mxu0 0.0
    %600 = vmatpush.msra.mxu0 0.0
    %601 = vmatpush.msra.mxu0 0.0
    %602 = vmatpush.msra.mxu0 0.0
    %603 = vmatpush.msra.mxu0 0.0
    %604 = vmatpush.msra.mxu0 0.0
    %605 = vmatpush.msra.mxu0 0.0
    %606 = vmatpush.msra.mxu0 0.0
    %607 = vmatpush.msra.mxu0 0.0
    %608 = vmatpush.msra.mxu0 0.0
    %609 = vmatpush.msra.mxu0 %v586
    %610 = vmatpush.msra.mxu0 %v585
    %611 = vmatpush.msra.mxu0 %v584
    %612 = vmatpush.msra.mxu0 %v583
    %613 = vmatmul.f32.gmra.mxu0 %v592
    %v614 = vpop.f32.mrf.mxu0
    %v615 = vadd.f32 %v589, %v614
    %616 = vmatmul.f32.gmra.mxu0 %v595
    %v617 = vpop.f32.mrf.mxu0
    %v618 = vadd.f32 %v589, %v617
    %619 = vdwg.mxu0
    %v620 = vld [vmem:[%s19] sm:$0xff]
    %v621 = vld [vmem:[%s19 + $0x8] sm:$0xff]
    %v622 = vld [vmem:[%s19 + $0x10] sm:$0xff]
    %v623 = vld [vmem:[%s19 + $0x18] sm:$0xff]
    %v624 = vld [vmem:[%s19 + $0x20] sm:$0xff]
    %v625 = vld [vmem:[%s19 + $0x28] sm:$0xff]
    %v626 = vld [vmem:[%s19 + $0x30] sm:$0xff]
    %v627 = vld [vmem:[%s19 + $0x38] sm:$0xff]
    %v628 = vld [vmem:[%s19 + $0x40] sm:$0xff]
    %v629 = vld [vmem:[%s19 + $0x48] sm:$0xff]
    %v630 = vld [vmem:[%s19 + $0x50] sm:$0xff]
    %v631 = vld [vmem:[%s19 + $0x58] sm:$0xff]
    %v632 = vld [vmem:[%s19 + $0x60] sm:$0xff]
    %v633 = vld [vmem:[%s19 + $0x68] sm:$0xff]
    %v634 = vld [vmem:[%s19 + $0x70] sm:$0xff]
    %v635 = vld [vmem:[%s19 + $0x78] sm:$0xff]
    %v636 = vld [vmem:[%s19 + $0x80] sm:$0xff]
    %v637 = vld [vmem:[%s19 + $0x88] sm:$0xff]
    %v638 = vld [vmem:[%s19 + $0x90] sm:$0xff]
    %v639 = vld [vmem:[%s19 + $0x98] sm:$0xff]
    %v640 = vld [vmem:[%s19 + $0xa0] sm:$0xff]
    %v641 = vld [vmem:[%s19 + $0xa8] sm:$0xff]
    %v642 = vld [vmem:[%s19 + $0xb0] sm:$0xff]
    %v643 = vld [vmem:[%s19 + $0xb8] sm:$0xff]
    %v644 = vld [vmem:[%s19 + $0xc0] sm:$0xff]
    %v645 = vld [vmem:[%s19 + $0xc8] sm:$0xff]
    %v646 = vld [vmem:[%s19 + $0xd0] sm:$0xff]
    %v647 = vld [vmem:[%s19 + $0xd8] sm:$0xff]
    %v648 = vld [vmem:[%s19 + $0xe0] sm:$0xff]
    %v649 = vld [vmem:[%s19 + $0xe8] sm:$0xff]
    %v650 = vld [vmem:[%s19 + $0xf0] sm:$0xff]
    %v651 = vld [vmem:[%s19 + $0xf8] sm:$0xff]
    %v652 = vld [vmem:[%s19 + $0x100] sm:$0xff]
    %v653 = vld [vmem:[%s19 + $0x108] sm:$0xff]
    %v654 = vld [vmem:[%s19 + $0x110] sm:$0xff]
    %v655 = vld [vmem:[%s19 + $0x118] sm:$0xff]
    %v656 = vld [vmem:[%s19 + $0x120] sm:$0xff]
    %v657 = vld [vmem:[%s19 + $0x128] sm:$0xff]
    %v658 = vld [vmem:[%s19 + $0x130] sm:$0xff]
    %v659 = vld [vmem:[%s19 + $0x138] sm:$0xff]
    %v660 = vld [vmem:[%s19 + $0x140] sm:$0xff]
    %v661 = vld [vmem:[%s19 + $0x148] sm:$0xff]
    %v662 = vld [vmem:[%s19 + $0x150] sm:$0xff]
    %v663 = vld [vmem:[%s19 + $0x158] sm:$0xff]
    %v664 = vld [vmem:[%s19 + $0x160] sm:$0xff]
    %v665 = vld [vmem:[%s19 + $0x168] sm:$0xff]
    %v666 = vld [vmem:[%s19 + $0x170] sm:$0xff]
    %v667 = vld [vmem:[%s19 + $0x178] sm:$0xff]
    %v668 = vld [vmem:[%s19 + $0x180] sm:$0xff]
    %v669 = vld [vmem:[%s19 + $0x188] sm:$0xff]
    %v670 = vld [vmem:[%s19 + $0x190] sm:$0xff]
    %v671 = vld [vmem:[%s19 + $0x198] sm:$0xff]
    %v672 = vld [vmem:[%s19 + $0x1a0] sm:$0xff]
    %v673 = vld [vmem:[%s19 + $0x1a8] sm:$0xff]
    %v674 = vld [vmem:[%s19 + $0x1b0] sm:$0xff]
    %v675 = vld [vmem:[%s19 + $0x1b8] sm:$0xff]
    %v676 = vld [vmem:[%s19 + $0x1c0] sm:$0xff]
    %v677 = vld [vmem:[%s19 + $0x1c8] sm:$0xff]
    %v678 = vld [vmem:[%s19 + $0x1d0] sm:$0xff]
    %v679 = vld [vmem:[%s19 + $0x1d8] sm:$0xff]
    %v680 = vld [vmem:[%s19 + $0x1e0] sm:$0xff]
    %v681 = vld [vmem:[%s19 + $0x1e8] sm:$0xff]
    %v682 = vld [vmem:[%s19 + $0x1f0] sm:$0xff]
    %v683 = vld [vmem:[%s19 + $0x1f8] sm:$0xff]
    %v684 = vld [vmem:[%s19 + $0x200] sm:$0xff]
    %v685 = vld [vmem:[%s19 + $0x208] sm:$0xff]
    %v686 = vld [vmem:[%s19 + $0x210] sm:$0xff]
    %v687 = vld [vmem:[%s19 + $0x218] sm:$0xff]
    %v688 = vld [vmem:[%s19 + $0x220] sm:$0xff]
    %v689 = vld [vmem:[%s19 + $0x228] sm:$0xff]
    %v690 = vld [vmem:[%s19 + $0x230] sm:$0xff]
    %v691 = vld [vmem:[%s19 + $0x238] sm:$0xff]
    %v692 = vld [vmem:[%s19 + $0x240] sm:$0xff]
    %v693 = vld [vmem:[%s19 + $0x248] sm:$0xff]
    %v694 = vld [vmem:[%s19 + $0x250] sm:$0xff]
    %v695 = vld [vmem:[%s19 + $0x258] sm:$0xff]
    %v696 = vld [vmem:[%s19 + $0x260] sm:$0xff]
    %v697 = vld [vmem:[%s19 + $0x268] sm:$0xff]
    %v698 = vld [vmem:[%s19 + $0x270] sm:$0xff]
    %v699 = vld [vmem:[%s19 + $0x278] sm:$0xff]
    %v700 = vld [vmem:[%s19 + $0x280] sm:$0xff]
    %v701 = vld [vmem:[%s19 + $0x288] sm:$0xff]
    %v702 = vld [vmem:[%s19 + $0x290] sm:$0xff]
    %v703 = vld [vmem:[%s19 + $0x298] sm:$0xff]
    %v704 = vld [vmem:[%s19 + $0x2a0] sm:$0xff]
    %v705 = vld [vmem:[%s19 + $0x2a8] sm:$0xff]
    %v706 = vld [vmem:[%s19 + $0x2b0] sm:$0xff]
    %v707 = vld [vmem:[%s19 + $0x2b8] sm:$0xff]
    %v708 = vld [vmem:[%s19 + $0x2c0] sm:$0xff]
    %v709 = vld [vmem:[%s19 + $0x2c8] sm:$0xff]
    %v710 = vld [vmem:[%s19 + $0x2d0] sm:$0xff]
    %v711 = vld [vmem:[%s19 + $0x2d8] sm:$0xff]
    %v712 = vld [vmem:[%s19 + $0x2e0] sm:$0xff]
    %v713 = vld [vmem:[%s19 + $0x2e8] sm:$0xff]
    %v714 = vld [vmem:[%s19 + $0x2f0] sm:$0xff]
    %v715 = vld [vmem:[%s19 + $0x2f8] sm:$0xff]
    %v716 = vld [vmem:[%s19 + $0x300] sm:$0xff]
    %v717 = vld [vmem:[%s19 + $0x308] sm:$0xff]
    %v718 = vld [vmem:[%s19 + $0x310] sm:$0xff]
    %v719 = vld [vmem:[%s19 + $0x318] sm:$0xff]
    %v720 = vld [vmem:[%s19 + $0x320] sm:$0xff]
    %v721 = vld [vmem:[%s19 + $0x328] sm:$0xff]
    %v722 = vld [vmem:[%s19 + $0x330] sm:$0xff]
    %v723 = vld [vmem:[%s19 + $0x338] sm:$0xff]
    %v724 = vld [vmem:[%s19 + $0x340] sm:$0xff]
    %v725 = vld [vmem:[%s19 + $0x348] sm:$0xff]
    %v726 = vld [vmem:[%s19 + $0x350] sm:$0xff]
    %v727 = vld [vmem:[%s19 + $0x358] sm:$0xff]
    %v728 = vld [vmem:[%s19 + $0x360] sm:$0xff]
    %v729 = vld [vmem:[%s19 + $0x368] sm:$0xff]
    %v730 = vld [vmem:[%s19 + $0x370] sm:$0xff]
    %v731 = vld [vmem:[%s19 + $0x378] sm:$0xff]
    %v732 = vld [vmem:[%s19 + $0x380] sm:$0xff]
    %v733 = vld [vmem:[%s19 + $0x388] sm:$0xff]
    %v734 = vld [vmem:[%s19 + $0x390] sm:$0xff]
    %v735 = vld [vmem:[%s19 + $0x398] sm:$0xff]
    %v736 = vld [vmem:[%s19 + $0x3a0] sm:$0xff]
    %v737 = vld [vmem:[%s19 + $0x3a8] sm:$0xff]
    %v738 = vld [vmem:[%s19 + $0x3b0] sm:$0xff]
    %v739 = vld [vmem:[%s19 + $0x3b8] sm:$0xff]
    %v740 = vld [vmem:[%s19 + $0x3c0] sm:$0xff]
    %v741 = vld [vmem:[%s19 + $0x3c8] sm:$0xff]
    %v742 = vld [vmem:[%s19 + $0x3d0] sm:$0xff]
    %v743 = vld [vmem:[%s19 + $0x3d8] sm:$0xff]
    %v744 = vld [vmem:[%s19 + $0x3e0] sm:$0xff]
    %v745 = vld [vmem:[%s19 + $0x3e8] sm:$0xff]
    %v746 = vld [vmem:[%s19 + $0x3f0] sm:$0xff]
    %v747 = vld [vmem:[%s19 + $0x3f8] sm:$0xff]
    %v749 = vsel %vm80, %v347, 0
    %v752 = vsel %vm80, %v350, 0
    %754 = vmatpush.msra.mxu0 0.0
    %755 = vmatpush.msra.mxu0 0.0
    %756 = vmatpush.msra.mxu0 0.0
    %757 = vmatpush.msra.mxu0 0.0
    %758 = vmatpush.msra.mxu0 0.0
    %759 = vmatpush.msra.mxu0 0.0
    %760 = vmatpush.msra.mxu0 0.0
    %761 = vmatpush.msra.mxu0 0.0
    %762 = vmatpush.msra.mxu0 0.0
    %763 = vmatpush.msra.mxu0 0.0
    %764 = vmatpush.msra.mxu0 0.0
    %765 = vmatpush.msra.mxu0 0.0
    %766 = vmatpush.msra.mxu0 %v716
    %767 = vmatpush.msra.mxu0 %v684
    %768 = vmatpush.msra.mxu0 %v652
    %769 = vmatpush.msra.mxu0 %v620
    %770 = vmatmul.f32.gmra.mxu0 %v749
    %v771 = vpop.f32.mrf.mxu0
    %v772 = vadd.f32 0.0, %v771
    %773 = vmatmul.f32.gmra.mxu0 %v752
    %v774 = vpop.f32.mrf.mxu0
    %v775 = vadd.f32 0.0, %v774
    %776 = vdwg.mxu0
    %777 = vmatpush.msra.mxu0 0.0
    %778 = vmatpush.msra.mxu0 0.0
    %779 = vmatpush.msra.mxu0 0.0
    %780 = vmatpush.msra.mxu0 0.0
    %781 = vmatpush.msra.mxu0 0.0
    %782 = vmatpush.msra.mxu0 0.0
    %783 = vmatpush.msra.mxu0 0.0
    %784 = vmatpush.msra.mxu0 0.0
    %785 = vmatpush.msra.mxu0 0.0
    %786 = vmatpush.msra.mxu0 0.0
    %787 = vmatpush.msra.mxu0 0.0
    %788 = vmatpush.msra.mxu0 0.0
    %789 = vmatpush.msra.mxu0 %v717
    %790 = vmatpush.msra.mxu0 %v685
    %791 = vmatpush.msra.mxu0 %v653
    %792 = vmatpush.msra.mxu0 %v621
    %793 = vmatmul.f32.gmra.mxu0 %v749
    %v794 = vpop.f32.mrf.mxu0
    %v795 = vadd.f32 0.0, %v794
    %796 = vmatmul.f32.gmra.mxu0 %v752
    %v797 = vpop.f32.mrf.mxu0
    %v798 = vadd.f32 0.0, %v797
    %799 = vdwg.mxu0
    %800 = vmatpush.msra.mxu0 0.0
    %801 = vmatpush.msra.mxu0 0.0
    %802 = vmatpush.msra.mxu0 0.0
    %803 = vmatpush.msra.mxu0 0.0
    %804 = vmatpush.msra.mxu0 0.0
    %805 = vmatpush.msra.mxu0 0.0
    %806 = vmatpush.msra.mxu0 0.0
    %807 = vmatpush.msra.mxu0 0.0
    %808 = vmatpush.msra.mxu0 0.0
    %809 = vmatpush.msra.mxu0 0.0
    %810 = vmatpush.msra.mxu0 0.0
    %811 = vmatpush.msra.mxu0 0.0
    %812 = vmatpush.msra.mxu0 %v718
    %813 = vmatpush.msra.mxu0 %v686
    %814 = vmatpush.msra.mxu0 %v654
    %815 = vmatpush.msra.mxu0 %v622
    %816 = vmatmul.f32.gmra.mxu0 %v749
    %v817 = vpop.f32.mrf.mxu0
    %v818 = vadd.f32 0.0, %v817
    %819 = vmatmul.f32.gmra.mxu0 %v752
    %v820 = vpop.f32.mrf.mxu0
    %v821 = vadd.f32 0.0, %v820
    %822 = vdwg.mxu0
    %823 = vmatpush.msra.mxu0 0.0
    %824 = vmatpush.msra.mxu0 0.0
    %825 = vmatpush.msra.mxu0 0.0
    %826 = vmatpush.msra.mxu0 0.0
    %827 = vmatpush.msra.mxu0 0.0
    %828 = vmatpush.msra.mxu0 0.0
    %829 = vmatpush.msra.mxu0 0.0
    %830 = vmatpush.msra.mxu0 0.0
    %831 = vmatpush.msra.mxu0 0.0
    %832 = vmatpush.msra.mxu0 0.0
    %833 = vmatpush.msra.mxu0 0.0
    %834 = vmatpush.msra.mxu0 0.0
    %835 = vmatpush.msra.mxu0 %v719
    %836 = vmatpush.msra.mxu0 %v687
    %837 = vmatpush.msra.mxu0 %v655
    %838 = vmatpush.msra.mxu0 %v623
    %839 = vmatmul.f32.gmra.mxu0 %v749
    %v840 = vpop.f32.mrf.mxu0
    %v841 = vadd.f32 0.0, %v840
    %842 = vmatmul.f32.gmra.mxu0 %v752
    %v843 = vpop.f32.mrf.mxu0
    %v844 = vadd.f32 0.0, %v843
    %845 = vdwg.mxu0
    %846 = vmatpush.msra.mxu0 0.0
    %847 = vmatpush.msra.mxu0 0.0
    %848 = vmatpush.msra.mxu0 0.0
    %849 = vmatpush.msra.mxu0 0.0
    %850 = vmatpush.msra.mxu0 0.0
    %851 = vmatpush.msra.mxu0 0.0
    %852 = vmatpush.msra.mxu0 0.0
    %853 = vmatpush.msra.mxu0 0.0
    %854 = vmatpush.msra.mxu0 0.0
    %855 = vmatpush.msra.mxu0 0.0
    %856 = vmatpush.msra.mxu0 0.0
    %857 = vmatpush.msra.mxu0 0.0
    %858 = vmatpush.msra.mxu0 %v720
    %859 = vmatpush.msra.mxu0 %v688
    %860 = vmatpush.msra.mxu0 %v656
    %861 = vmatpush.msra.mxu0 %v624
    %862 = vmatmul.f32.gmra.mxu0 %v749
    %v863 = vpop.f32.mrf.mxu0
    %v864 = vadd.f32 0.0, %v863
    %865 = vmatmul.f32.gmra.mxu0 %v752
    %v866 = vpop.f32.mrf.mxu0
    %v867 = vadd.f32 0.0, %v866
    %868 = vdwg.mxu0
    %869 = vmatpush.msra.mxu0 0.0
    %870 = vmatpush.msra.mxu0 0.0
    %871 = vmatpush.msra.mxu0 0.0
    %872 = vmatpush.msra.mxu0 0.0
    %873 = vmatpush.msra.mxu0 0.0
    %874 = vmatpush.msra.mxu0 0.0
    %875 = vmatpush.msra.mxu0 0.0
    %876 = vmatpush.msra.mxu0 0.0
    %877 = vmatpush.msra.mxu0 0.0
    %878 = vmatpush.msra.mxu0 0.0
    %879 = vmatpush.msra.mxu0 0.0
    %880 = vmatpush.msra.mxu0 0.0
    %881 = vmatpush.msra.mxu0 %v721
    %882 = vmatpush.msra.mxu0 %v689
    %883 = vmatpush.msra.mxu0 %v657
    %884 = vmatpush.msra.mxu0 %v625
    %885 = vmatmul.f32.gmra.mxu0 %v749
    %v886 = vpop.f32.mrf.mxu0
    %v887 = vadd.f32 0.0, %v886
    %888 = vmatmul.f32.gmra.mxu0 %v752
    %v889 = vpop.f32.mrf.mxu0
    %v890 = vadd.f32 0.0, %v889
    %891 = vdwg.mxu0
    %892 = vmatpush.msra.mxu0 0.0
    %893 = vmatpush.msra.mxu0 0.0
    %894 = vmatpush.msra.mxu0 0.0
    %895 = vmatpush.msra.mxu0 0.0
    %896 = vmatpush.msra.mxu0 0.0
    %897 = vmatpush.msra.mxu0 0.0
    %898 = vmatpush.msra.mxu0 0.0
    %899 = vmatpush.msra.mxu0 0.0
    %900 = vmatpush.msra.mxu0 0.0
    %901 = vmatpush.msra.mxu0 0.0
    %902 = vmatpush.msra.mxu0 0.0
    %903 = vmatpush.msra.mxu0 0.0
    %904 = vmatpush.msra.mxu0 %v722
    %905 = vmatpush.msra.mxu0 %v690
    %906 = vmatpush.msra.mxu0 %v658
    %907 = vmatpush.msra.mxu0 %v626
    %908 = vmatmul.f32.gmra.mxu0 %v749
    %v909 = vpop.f32.mrf.mxu0
    %v910 = vadd.f32 0.0, %v909
    %911 = vmatmul.f32.gmra.mxu0 %v752
    %v912 = vpop.f32.mrf.mxu0
    %v913 = vadd.f32 0.0, %v912
    %914 = vdwg.mxu0
    %915 = vmatpush.msra.mxu0 0.0
    %916 = vmatpush.msra.mxu0 0.0
    %917 = vmatpush.msra.mxu0 0.0
    %918 = vmatpush.msra.mxu0 0.0
    %919 = vmatpush.msra.mxu0 0.0
    %920 = vmatpush.msra.mxu0 0.0
    %921 = vmatpush.msra.mxu0 0.0
    %922 = vmatpush.msra.mxu0 0.0
    %923 = vmatpush.msra.mxu0 0.0
    %924 = vmatpush.msra.mxu0 0.0
    %925 = vmatpush.msra.mxu0 0.0
    %926 = vmatpush.msra.mxu0 0.0
    %927 = vmatpush.msra.mxu0 %v723
    %928 = vmatpush.msra.mxu0 %v691
    %929 = vmatpush.msra.mxu0 %v659
    %930 = vmatpush.msra.mxu0 %v627
    %931 = vmatmul.f32.gmra.mxu0 %v749
    %v932 = vpop.f32.mrf.mxu0
    %v933 = vadd.f32 0.0, %v932
    %934 = vmatmul.f32.gmra.mxu0 %v752
    %v935 = vpop.f32.mrf.mxu0
    %v936 = vadd.f32 0.0, %v935
    %937 = vdwg.mxu0
    %938 = vmatpush.msra.mxu0 0.0
    %939 = vmatpush.msra.mxu0 0.0
    %940 = vmatpush.msra.mxu0 0.0
    %941 = vmatpush.msra.mxu0 0.0
    %942 = vmatpush.msra.mxu0 0.0
    %943 = vmatpush.msra.mxu0 0.0
    %944 = vmatpush.msra.mxu0 0.0
    %945 = vmatpush.msra.mxu0 0.0
    %946 = vmatpush.msra.mxu0 0.0
    %947 = vmatpush.msra.mxu0 0.0
    %948 = vmatpush.msra.mxu0 0.0
    %949 = vmatpush.msra.mxu0 0.0
    %950 = vmatpush.msra.mxu0 %v724
    %951 = vmatpush.msra.mxu0 %v692
    %952 = vmatpush.msra.mxu0 %v660
    %953 = vmatpush.msra.mxu0 %v628
    %954 = vmatmul.f32.gmra.mxu0 %v749
    %v955 = vpop.f32.mrf.mxu0
    %v956 = vadd.f32 0.0, %v955
    %957 = vmatmul.f32.gmra.mxu0 %v752
    %v958 = vpop.f32.mrf.mxu0
    %v959 = vadd.f32 0.0, %v958
    %960 = vdwg.mxu0
    %961 = vmatpush.msra.mxu0 0.0
    %962 = vmatpush.msra.mxu0 0.0
    %963 = vmatpush.msra.mxu0 0.0
    %964 = vmatpush.msra.mxu0 0.0
    %965 = vmatpush.msra.mxu0 0.0
    %966 = vmatpush.msra.mxu0 0.0
    %967 = vmatpush.msra.mxu0 0.0
    %968 = vmatpush.msra.mxu0 0.0
    %969 = vmatpush.msra.mxu0 0.0
    %970 = vmatpush.msra.mxu0 0.0
    %971 = vmatpush.msra.mxu0 0.0
    %972 = vmatpush.msra.mxu0 0.0
    %973 = vmatpush.msra.mxu0 %v725
    %974 = vmatpush.msra.mxu0 %v693
    %975 = vmatpush.msra.mxu0 %v661
    %976 = vmatpush.msra.mxu0 %v629
    %977 = vmatmul.f32.gmra.mxu0 %v749
    %v978 = vpop.f32.mrf.mxu0
    %v979 = vadd.f32 0.0, %v978
    %980 = vmatmul.f32.gmra.mxu0 %v752
    %v981 = vpop.f32.mrf.mxu0
    %v982 = vadd.f32 0.0, %v981
    %983 = vdwg.mxu0
    %984 = vmatpush.msra.mxu0 0.0
    %985 = vmatpush.msra.mxu0 0.0
    %986 = vmatpush.msra.mxu0 0.0
    %987 = vmatpush.msra.mxu0 0.0
    %988 = vmatpush.msra.mxu0 0.0
    %989 = vmatpush.msra.mxu0 0.0
    %990 = vmatpush.msra.mxu0 0.0
    %991 = vmatpush.msra.mxu0 0.0
    %992 = vmatpush.msra.mxu0 0.0
    %993 = vmatpush.msra.mxu0 0.0
    %994 = vmatpush.msra.mxu0 0.0
    %995 = vmatpush.msra.mxu0 0.0
    %996 = vmatpush.msra.mxu0 %v726
    %997 = vmatpush.msra.mxu0 %v694
    %998 = vmatpush.msra.mxu0 %v662
    %999 = vmatpush.msra.mxu0 %v630
    %1000 = vmatmul.f32.gmra.mxu0 %v749
    %v1001 = vpop.f32.mrf.mxu0
    %v1002 = vadd.f32 0.0, %v1001
    %1003 = vmatmul.f32.gmra.mxu0 %v752
    %v1004 = vpop.f32.mrf.mxu0
    %v1005 = vadd.f32 0.0, %v1004
    %1006 = vdwg.mxu0
    %1007 = vmatpush.msra.mxu0 0.0
    %1008 = vmatpush.msra.mxu0 0.0
    %1009 = vmatpush.msra.mxu0 0.0
    %1010 = vmatpush.msra.mxu0 0.0
    %1011 = vmatpush.msra.mxu0 0.0
    %1012 = vmatpush.msra.mxu0 0.0
    %1013 = vmatpush.msra.mxu0 0.0
    %1014 = vmatpush.msra.mxu0 0.0
    %1015 = vmatpush.msra.mxu0 0.0
    %1016 = vmatpush.msra.mxu0 0.0
    %1017 = vmatpush.msra.mxu0 0.0
    %1018 = vmatpush.msra.mxu0 0.0
    %1019 = vmatpush.msra.mxu0 %v727
    %1020 = vmatpush.msra.mxu0 %v695
    %1021 = vmatpush.msra.mxu0 %v663
    %1022 = vmatpush.msra.mxu0 %v631
    %1023 = vmatmul.f32.gmra.mxu0 %v749
    %v1024 = vpop.f32.mrf.mxu0
    %v1025 = vadd.f32 0.0, %v1024
    %1026 = vmatmul.f32.gmra.mxu0 %v752
    %v1027 = vpop.f32.mrf.mxu0
    %v1028 = vadd.f32 0.0, %v1027
    %1029 = vdwg.mxu0
    %1030 = vmatpush.msra.mxu0 0.0
    %1031 = vmatpush.msra.mxu0 0.0
    %1032 = vmatpush.msra.mxu0 0.0
    %1033 = vmatpush.msra.mxu0 0.0
    %1034 = vmatpush.msra.mxu0 0.0
    %1035 = vmatpush.msra.mxu0 0.0
    %1036 = vmatpush.msra.mxu0 0.0
    %1037 = vmatpush.msra.mxu0 0.0
    %1038 = vmatpush.msra.mxu0 0.0
    %1039 = vmatpush.msra.mxu0 0.0
    %1040 = vmatpush.msra.mxu0 0.0
    %1041 = vmatpush.msra.mxu0 0.0
    %1042 = vmatpush.msra.mxu0 %v728
    %1043 = vmatpush.msra.mxu0 %v696
    %1044 = vmatpush.msra.mxu0 %v664
    %1045 = vmatpush.msra.mxu0 %v632
    %1046 = vmatmul.f32.gmra.mxu0 %v749
    %v1047 = vpop.f32.mrf.mxu0
    %v1048 = vadd.f32 0.0, %v1047
    %1049 = vmatmul.f32.gmra.mxu0 %v752
    %v1050 = vpop.f32.mrf.mxu0
    %v1051 = vadd.f32 0.0, %v1050
    %1052 = vdwg.mxu0
    %1053 = vmatpush.msra.mxu0 0.0
    %1054 = vmatpush.msra.mxu0 0.0
    %1055 = vmatpush.msra.mxu0 0.0
    %1056 = vmatpush.msra.mxu0 0.0
    %1057 = vmatpush.msra.mxu0 0.0
    %1058 = vmatpush.msra.mxu0 0.0
    %1059 = vmatpush.msra.mxu0 0.0
    %1060 = vmatpush.msra.mxu0 0.0
    %1061 = vmatpush.msra.mxu0 0.0
    %1062 = vmatpush.msra.mxu0 0.0
    %1063 = vmatpush.msra.mxu0 0.0
    %1064 = vmatpush.msra.mxu0 0.0
    %1065 = vmatpush.msra.mxu0 %v729
    %1066 = vmatpush.msra.mxu0 %v697
    %1067 = vmatpush.msra.mxu0 %v665
    %1068 = vmatpush.msra.mxu0 %v633
    %1069 = vmatmul.f32.gmra.mxu0 %v749
    %v1070 = vpop.f32.mrf.mxu0
    %v1071 = vadd.f32 0.0, %v1070
    %1072 = vmatmul.f32.gmra.mxu0 %v752
    %v1073 = vpop.f32.mrf.mxu0
    %v1074 = vadd.f32 0.0, %v1073
    %1075 = vdwg.mxu0
    %1076 = vmatpush.msra.mxu0 0.0
    %1077 = vmatpush.msra.mxu0 0.0
    %1078 = vmatpush.msra.mxu0 0.0
    %1079 = vmatpush.msra.mxu0 0.0
    %1080 = vmatpush.msra.mxu0 0.0
    %1081 = vmatpush.msra.mxu0 0.0
    %1082 = vmatpush.msra.mxu0 0.0
    %1083 = vmatpush.msra.mxu0 0.0
    %1084 = vmatpush.msra.mxu0 0.0
    %1085 = vmatpush.msra.mxu0 0.0
    %1086 = vmatpush.msra.mxu0 0.0
    %1087 = vmatpush.msra.mxu0 0.0
    %1088 = vmatpush.msra.mxu0 %v730
    %1089 = vmatpush.msra.mxu0 %v698
    %1090 = vmatpush.msra.mxu0 %v666
    %1091 = vmatpush.msra.mxu0 %v634
    %1092 = vmatmul.f32.gmra.mxu0 %v749
    %v1093 = vpop.f32.mrf.mxu0
    %v1094 = vadd.f32 0.0, %v1093
    %1095 = vmatmul.f32.gmra.mxu0 %v752
    %v1096 = vpop.f32.mrf.mxu0
    %v1097 = vadd.f32 0.0, %v1096
    %1098 = vdwg.mxu0
    %1099 = vmatpush.msra.mxu0 0.0
    %1100 = vmatpush.msra.mxu0 0.0
    %1101 = vmatpush.msra.mxu0 0.0
    %1102 = vmatpush.msra.mxu0 0.0
    %1103 = vmatpush.msra.mxu0 0.0
    %1104 = vmatpush.msra.mxu0 0.0
    %1105 = vmatpush.msra.mxu0 0.0
    %1106 = vmatpush.msra.mxu0 0.0
    %1107 = vmatpush.msra.mxu0 0.0
    %1108 = vmatpush.msra.mxu0 0.0
    %1109 = vmatpush.msra.mxu0 0.0
    %1110 = vmatpush.msra.mxu0 0.0
    %1111 = vmatpush.msra.mxu0 %v731
    %1112 = vmatpush.msra.mxu0 %v699
    %1113 = vmatpush.msra.mxu0 %v667
    %1114 = vmatpush.msra.mxu0 %v635
    %1115 = vmatmul.f32.gmra.mxu0 %v749
    %v1116 = vpop.f32.mrf.mxu0
    %v1117 = vadd.f32 0.0, %v1116
    %1118 = vmatmul.f32.gmra.mxu0 %v752
    %v1119 = vpop.f32.mrf.mxu0
    %v1120 = vadd.f32 0.0, %v1119
    %1121 = vdwg.mxu0
    %1122 = vmatpush.msra.mxu0 0.0
    %1123 = vmatpush.msra.mxu0 0.0
    %1124 = vmatpush.msra.mxu0 0.0
    %1125 = vmatpush.msra.mxu0 0.0
    %1126 = vmatpush.msra.mxu0 0.0
    %1127 = vmatpush.msra.mxu0 0.0
    %1128 = vmatpush.msra.mxu0 0.0
    %1129 = vmatpush.msra.mxu0 0.0
    %1130 = vmatpush.msra.mxu0 0.0
    %1131 = vmatpush.msra.mxu0 0.0
    %1132 = vmatpush.msra.mxu0 0.0
    %1133 = vmatpush.msra.mxu0 0.0
    %1134 = vmatpush.msra.mxu0 %v732
    %1135 = vmatpush.msra.mxu0 %v700
    %1136 = vmatpush.msra.mxu0 %v668
    %1137 = vmatpush.msra.mxu0 %v636
    %1138 = vmatmul.f32.gmra.mxu0 %v749
    %v1139 = vpop.f32.mrf.mxu0
    %v1140 = vadd.f32 0.0, %v1139
    %1141 = vmatmul.f32.gmra.mxu0 %v752
    %v1142 = vpop.f32.mrf.mxu0
    %v1143 = vadd.f32 0.0, %v1142
    %1144 = vdwg.mxu0
    %1145 = vmatpush.msra.mxu0 0.0
    %1146 = vmatpush.msra.mxu0 0.0
    %1147 = vmatpush.msra.mxu0 0.0
    %1148 = vmatpush.msra.mxu0 0.0
    %1149 = vmatpush.msra.mxu0 0.0
    %1150 = vmatpush.msra.mxu0 0.0
    %1151 = vmatpush.msra.mxu0 0.0
    %1152 = vmatpush.msra.mxu0 0.0
    %1153 = vmatpush.msra.mxu0 0.0
    %1154 = vmatpush.msra.mxu0 0.0
    %1155 = vmatpush.msra.mxu0 0.0
    %1156 = vmatpush.msra.mxu0 0.0
    %1157 = vmatpush.msra.mxu0 %v733
    %1158 = vmatpush.msra.mxu0 %v701
    %1159 = vmatpush.msra.mxu0 %v669
    %1160 = vmatpush.msra.mxu0 %v637
    %1161 = vmatmul.f32.gmra.mxu0 %v749
    %v1162 = vpop.f32.mrf.mxu0
    %v1163 = vadd.f32 0.0, %v1162
    %1164 = vmatmul.f32.gmra.mxu0 %v752
    %v1165 = vpop.f32.mrf.mxu0
    %v1166 = vadd.f32 0.0, %v1165
    %1167 = vdwg.mxu0
    %1168 = vmatpush.msra.mxu0 0.0
    %1169 = vmatpush.msra.mxu0 0.0
    %1170 = vmatpush.msra.mxu0 0.0
    %1171 = vmatpush.msra.mxu0 0.0
    %1172 = vmatpush.msra.mxu0 0.0
    %1173 = vmatpush.msra.mxu0 0.0
    %1174 = vmatpush.msra.mxu0 0.0
    %1175 = vmatpush.msra.mxu0 0.0
    %1176 = vmatpush.msra.mxu0 0.0
    %1177 = vmatpush.msra.mxu0 0.0
    %1178 = vmatpush.msra.mxu0 0.0
    %1179 = vmatpush.msra.mxu0 0.0
    %1180 = vmatpush.msra.mxu0 %v734
    %1181 = vmatpush.msra.mxu0 %v702
    %1182 = vmatpush.msra.mxu0 %v670
    %1183 = vmatpush.msra.mxu0 %v638
    %1184 = vmatmul.f32.gmra.mxu0 %v749
    %v1185 = vpop.f32.mrf.mxu0
    %v1186 = vadd.f32 0.0, %v1185
    %1187 = vmatmul.f32.gmra.mxu0 %v752
    %v1188 = vpop.f32.mrf.mxu0
    %v1189 = vadd.f32 0.0, %v1188
    %1190 = vdwg.mxu0
    %1191 = vmatpush.msra.mxu0 0.0
    %1192 = vmatpush.msra.mxu0 0.0
    %1193 = vmatpush.msra.mxu0 0.0
    %1194 = vmatpush.msra.mxu0 0.0
    %1195 = vmatpush.msra.mxu0 0.0
    %1196 = vmatpush.msra.mxu0 0.0
    %1197 = vmatpush.msra.mxu0 0.0
    %1198 = vmatpush.msra.mxu0 0.0
    %1199 = vmatpush.msra.mxu0 0.0
    %1200 = vmatpush.msra.mxu0 0.0
    %1201 = vmatpush.msra.mxu0 0.0
    %1202 = vmatpush.msra.mxu0 0.0
    %1203 = vmatpush.msra.mxu0 %v735
    %1204 = vmatpush.msra.mxu0 %v703
    %1205 = vmatpush.msra.mxu0 %v671
    %1206 = vmatpush.msra.mxu0 %v639
    %1207 = vmatmul.f32.gmra.mxu0 %v749
    %v1208 = vpop.f32.mrf.mxu0
    %v1209 = vadd.f32 0.0, %v1208
    %1210 = vmatmul.f32.gmra.mxu0 %v752
    %v1211 = vpop.f32.mrf.mxu0
    %v1212 = vadd.f32 0.0, %v1211
    %1213 = vdwg.mxu0
    %1214 = vmatpush.msra.mxu0 0.0
    %1215 = vmatpush.msra.mxu0 0.0
    %1216 = vmatpush.msra.mxu0 0.0
    %1217 = vmatpush.msra.mxu0 0.0
    %1218 = vmatpush.msra.mxu0 0.0
    %1219 = vmatpush.msra.mxu0 0.0
    %1220 = vmatpush.msra.mxu0 0.0
    %1221 = vmatpush.msra.mxu0 0.0
    %1222 = vmatpush.msra.mxu0 0.0
    %1223 = vmatpush.msra.mxu0 0.0
    %1224 = vmatpush.msra.mxu0 0.0
    %1225 = vmatpush.msra.mxu0 0.0
    %1226 = vmatpush.msra.mxu0 %v736
    %1227 = vmatpush.msra.mxu0 %v704
    %1228 = vmatpush.msra.mxu0 %v672
    %1229 = vmatpush.msra.mxu0 %v640
    %1230 = vmatmul.f32.gmra.mxu0 %v749
    %v1231 = vpop.f32.mrf.mxu0
    %v1232 = vadd.f32 0.0, %v1231
    %1233 = vmatmul.f32.gmra.mxu0 %v752
    %v1234 = vpop.f32.mrf.mxu0
    %v1235 = vadd.f32 0.0, %v1234
    %1236 = vdwg.mxu0
    %1237 = vmatpush.msra.mxu0 0.0
    %1238 = vmatpush.msra.mxu0 0.0
    %1239 = vmatpush.msra.mxu0 0.0
    %1240 = vmatpush.msra.mxu0 0.0
    %1241 = vmatpush.msra.mxu0 0.0
    %1242 = vmatpush.msra.mxu0 0.0
    %1243 = vmatpush.msra.mxu0 0.0
    %1244 = vmatpush.msra.mxu0 0.0
    %1245 = vmatpush.msra.mxu0 0.0
    %1246 = vmatpush.msra.mxu0 0.0
    %1247 = vmatpush.msra.mxu0 0.0
    %1248 = vmatpush.msra.mxu0 0.0
    %1249 = vmatpush.msra.mxu0 %v737
    %1250 = vmatpush.msra.mxu0 %v705
    %1251 = vmatpush.msra.mxu0 %v673
    %1252 = vmatpush.msra.mxu0 %v641
    %1253 = vmatmul.f32.gmra.mxu0 %v749
    %v1254 = vpop.f32.mrf.mxu0
    %v1255 = vadd.f32 0.0, %v1254
    %1256 = vmatmul.f32.gmra.mxu0 %v752
    %v1257 = vpop.f32.mrf.mxu0
    %v1258 = vadd.f32 0.0, %v1257
    %1259 = vdwg.mxu0
    %1260 = vmatpush.msra.mxu0 0.0
    %1261 = vmatpush.msra.mxu0 0.0
    %1262 = vmatpush.msra.mxu0 0.0
    %1263 = vmatpush.msra.mxu0 0.0
    %1264 = vmatpush.msra.mxu0 0.0
    %1265 = vmatpush.msra.mxu0 0.0
    %1266 = vmatpush.msra.mxu0 0.0
    %1267 = vmatpush.msra.mxu0 0.0
    %1268 = vmatpush.msra.mxu0 0.0
    %1269 = vmatpush.msra.mxu0 0.0
    %1270 = vmatpush.msra.mxu0 0.0
    %1271 = vmatpush.msra.mxu0 0.0
    %1272 = vmatpush.msra.mxu0 %v738
    %1273 = vmatpush.msra.mxu0 %v706
    %1274 = vmatpush.msra.mxu0 %v674
    %1275 = vmatpush.msra.mxu0 %v642
    %1276 = vmatmul.f32.gmra.mxu0 %v749
    %v1277 = vpop.f32.mrf.mxu0
    %v1278 = vadd.f32 0.0, %v1277
    %1279 = vmatmul.f32.gmra.mxu0 %v752
    %v1280 = vpop.f32.mrf.mxu0
    %v1281 = vadd.f32 0.0, %v1280
    %1282 = vdwg.mxu0
    %1283 = vmatpush.msra.mxu0 0.0
    %1284 = vmatpush.msra.mxu0 0.0
    %1285 = vmatpush.msra.mxu0 0.0
    %1286 = vmatpush.msra.mxu0 0.0
    %1287 = vmatpush.msra.mxu0 0.0
    %1288 = vmatpush.msra.mxu0 0.0
    %1289 = vmatpush.msra.mxu0 0.0
    %1290 = vmatpush.msra.mxu0 0.0
    %1291 = vmatpush.msra.mxu0 0.0
    %1292 = vmatpush.msra.mxu0 0.0
    %1293 = vmatpush.msra.mxu0 0.0
    %1294 = vmatpush.msra.mxu0 0.0
    %1295 = vmatpush.msra.mxu0 %v739
    %1296 = vmatpush.msra.mxu0 %v707
    %1297 = vmatpush.msra.mxu0 %v675
    %1298 = vmatpush.msra.mxu0 %v643
    %1299 = vmatmul.f32.gmra.mxu0 %v749
    %v1300 = vpop.f32.mrf.mxu0
    %v1301 = vadd.f32 0.0, %v1300
    %1302 = vmatmul.f32.gmra.mxu0 %v752
    %v1303 = vpop.f32.mrf.mxu0
    %v1304 = vadd.f32 0.0, %v1303
    %1305 = vdwg.mxu0
    %1306 = vmatpush.msra.mxu0 0.0
    %1307 = vmatpush.msra.mxu0 0.0
    %1308 = vmatpush.msra.mxu0 0.0
    %1309 = vmatpush.msra.mxu0 0.0
    %1310 = vmatpush.msra.mxu0 0.0
    %1311 = vmatpush.msra.mxu0 0.0
    %1312 = vmatpush.msra.mxu0 0.0
    %1313 = vmatpush.msra.mxu0 0.0
    %1314 = vmatpush.msra.mxu0 0.0
    %1315 = vmatpush.msra.mxu0 0.0
    %1316 = vmatpush.msra.mxu0 0.0
    %1317 = vmatpush.msra.mxu0 0.0
    %1318 = vmatpush.msra.mxu0 %v740
    %1319 = vmatpush.msra.mxu0 %v708
    %1320 = vmatpush.msra.mxu0 %v676
    %1321 = vmatpush.msra.mxu0 %v644
    %1322 = vmatmul.f32.gmra.mxu0 %v749
    %v1323 = vpop.f32.mrf.mxu0
    %v1324 = vadd.f32 0.0, %v1323
    %1325 = vmatmul.f32.gmra.mxu0 %v752
    %v1326 = vpop.f32.mrf.mxu0
    %v1327 = vadd.f32 0.0, %v1326
    %1328 = vdwg.mxu0
    %1329 = vmatpush.msra.mxu0 0.0
    %1330 = vmatpush.msra.mxu0 0.0
    %1331 = vmatpush.msra.mxu0 0.0
    %1332 = vmatpush.msra.mxu0 0.0
    %1333 = vmatpush.msra.mxu0 0.0
    %1334 = vmatpush.msra.mxu0 0.0
    %1335 = vmatpush.msra.mxu0 0.0
    %1336 = vmatpush.msra.mxu0 0.0
    %1337 = vmatpush.msra.mxu0 0.0
    %1338 = vmatpush.msra.mxu0 0.0
    %1339 = vmatpush.msra.mxu0 0.0
    %1340 = vmatpush.msra.mxu0 0.0
    %1341 = vmatpush.msra.mxu0 %v741
    %1342 = vmatpush.msra.mxu0 %v709
    %1343 = vmatpush.msra.mxu0 %v677
    %1344 = vmatpush.msra.mxu0 %v645
    %1345 = vmatmul.f32.gmra.mxu0 %v749
    %v1346 = vpop.f32.mrf.mxu0
    %v1347 = vadd.f32 0.0, %v1346
    %1348 = vmatmul.f32.gmra.mxu0 %v752
    %v1349 = vpop.f32.mrf.mxu0
    %v1350 = vadd.f32 0.0, %v1349
    %1351 = vdwg.mxu0
    %1352 = vmatpush.msra.mxu0 0.0
    %1353 = vmatpush.msra.mxu0 0.0
    %1354 = vmatpush.msra.mxu0 0.0
    %1355 = vmatpush.msra.mxu0 0.0
    %1356 = vmatpush.msra.mxu0 0.0
    %1357 = vmatpush.msra.mxu0 0.0
    %1358 = vmatpush.msra.mxu0 0.0
    %1359 = vmatpush.msra.mxu0 0.0
    %1360 = vmatpush.msra.mxu0 0.0
    %1361 = vmatpush.msra.mxu0 0.0
    %1362 = vmatpush.msra.mxu0 0.0
    %1363 = vmatpush.msra.mxu0 0.0
    %1364 = vmatpush.msra.mxu0 %v742
    %1365 = vmatpush.msra.mxu0 %v710
    %1366 = vmatpush.msra.mxu0 %v678
    %1367 = vmatpush.msra.mxu0 %v646
    %1368 = vmatmul.f32.gmra.mxu0 %v749
    %v1369 = vpop.f32.mrf.mxu0
    %v1370 = vadd.f32 0.0, %v1369
    %1371 = vmatmul.f32.gmra.mxu0 %v752
    %v1372 = vpop.f32.mrf.mxu0
    %v1373 = vadd.f32 0.0, %v1372
    %1374 = vdwg.mxu0
    %1375 = vmatpush.msra.mxu0 0.0
    %1376 = vmatpush.msra.mxu0 0.0
    %1377 = vmatpush.msra.mxu0 0.0
    %1378 = vmatpush.msra.mxu0 0.0
    %1379 = vmatpush.msra.mxu0 0.0
    %1380 = vmatpush.msra.mxu0 0.0
    %1381 = vmatpush.msra.mxu0 0.0
    %1382 = vmatpush.msra.mxu0 0.0
    %1383 = vmatpush.msra.mxu0 0.0
    %1384 = vmatpush.msra.mxu0 0.0
    %1385 = vmatpush.msra.mxu0 0.0
    %1386 = vmatpush.msra.mxu0 0.0
    %1387 = vmatpush.msra.mxu0 %v743
    %1388 = vmatpush.msra.mxu0 %v711
    %1389 = vmatpush.msra.mxu0 %v679
    %1390 = vmatpush.msra.mxu0 %v647
    %1391 = vmatmul.f32.gmra.mxu0 %v749
    %v1392 = vpop.f32.mrf.mxu0
    %v1393 = vadd.f32 0.0, %v1392
    %1394 = vmatmul.f32.gmra.mxu0 %v752
    %v1395 = vpop.f32.mrf.mxu0
    %v1396 = vadd.f32 0.0, %v1395
    %1397 = vdwg.mxu0
    %1398 = vmatpush.msra.mxu0 0.0
    %1399 = vmatpush.msra.mxu0 0.0
    %1400 = vmatpush.msra.mxu0 0.0
    %1401 = vmatpush.msra.mxu0 0.0
    %1402 = vmatpush.msra.mxu0 0.0
    %1403 = vmatpush.msra.mxu0 0.0
    %1404 = vmatpush.msra.mxu0 0.0
    %1405 = vmatpush.msra.mxu0 0.0
    %1406 = vmatpush.msra.mxu0 0.0
    %1407 = vmatpush.msra.mxu0 0.0
    %1408 = vmatpush.msra.mxu0 0.0
    %1409 = vmatpush.msra.mxu0 0.0
    %1410 = vmatpush.msra.mxu0 %v744
    %1411 = vmatpush.msra.mxu0 %v712
    %1412 = vmatpush.msra.mxu0 %v680
    %1413 = vmatpush.msra.mxu0 %v648
    %1414 = vmatmul.f32.gmra.mxu0 %v749
    %v1415 = vpop.f32.mrf.mxu0
    %v1416 = vadd.f32 0.0, %v1415
    %1417 = vmatmul.f32.gmra.mxu0 %v752
    %v1418 = vpop.f32.mrf.mxu0
    %v1419 = vadd.f32 0.0, %v1418
    %1420 = vdwg.mxu0
    %1421 = vmatpush.msra.mxu0 0.0
    %1422 = vmatpush.msra.mxu0 0.0
    %1423 = vmatpush.msra.mxu0 0.0
    %1424 = vmatpush.msra.mxu0 0.0
    %1425 = vmatpush.msra.mxu0 0.0
    %1426 = vmatpush.msra.mxu0 0.0
    %1427 = vmatpush.msra.mxu0 0.0
    %1428 = vmatpush.msra.mxu0 0.0
    %1429 = vmatpush.msra.mxu0 0.0
    %1430 = vmatpush.msra.mxu0 0.0
    %1431 = vmatpush.msra.mxu0 0.0
    %1432 = vmatpush.msra.mxu0 0.0
    %1433 = vmatpush.msra.mxu0 %v745
    %1434 = vmatpush.msra.mxu0 %v713
    %1435 = vmatpush.msra.mxu0 %v681
    %1436 = vmatpush.msra.mxu0 %v649
    %1437 = vmatmul.f32.gmra.mxu0 %v749
    %v1438 = vpop.f32.mrf.mxu0
    %v1439 = vadd.f32 0.0, %v1438
    %1440 = vmatmul.f32.gmra.mxu0 %v752
    %v1441 = vpop.f32.mrf.mxu0
    %v1442 = vadd.f32 0.0, %v1441
    %1443 = vdwg.mxu0
    %1444 = vmatpush.msra.mxu0 0.0
    %1445 = vmatpush.msra.mxu0 0.0
    %1446 = vmatpush.msra.mxu0 0.0
    %1447 = vmatpush.msra.mxu0 0.0
    %1448 = vmatpush.msra.mxu0 0.0
    %1449 = vmatpush.msra.mxu0 0.0
    %1450 = vmatpush.msra.mxu0 0.0
    %1451 = vmatpush.msra.mxu0 0.0
    %1452 = vmatpush.msra.mxu0 0.0
    %1453 = vmatpush.msra.mxu0 0.0
    %1454 = vmatpush.msra.mxu0 0.0
    %1455 = vmatpush.msra.mxu0 0.0
    %1456 = vmatpush.msra.mxu0 %v746
    %1457 = vmatpush.msra.mxu0 %v714
    %1458 = vmatpush.msra.mxu0 %v682
    %1459 = vmatpush.msra.mxu0 %v650
    %1460 = vmatmul.f32.gmra.mxu0 %v749
    %v1461 = vpop.f32.mrf.mxu0
    %v1462 = vadd.f32 0.0, %v1461
    %1463 = vmatmul.f32.gmra.mxu0 %v752
    %v1464 = vpop.f32.mrf.mxu0
    %v1465 = vadd.f32 0.0, %v1464
    %1466 = vdwg.mxu0
    %1467 = vmatpush.msra.mxu0 0.0
    %1468 = vmatpush.msra.mxu0 0.0
    %1469 = vmatpush.msra.mxu0 0.0
    %1470 = vmatpush.msra.mxu0 0.0
    %1471 = vmatpush.msra.mxu0 0.0
    %1472 = vmatpush.msra.mxu0 0.0
    %1473 = vmatpush.msra.mxu0 0.0
    %1474 = vmatpush.msra.mxu0 0.0
    %1475 = vmatpush.msra.mxu0 0.0
    %1476 = vmatpush.msra.mxu0 0.0
    %1477 = vmatpush.msra.mxu0 0.0
    %1478 = vmatpush.msra.mxu0 0.0
    %1479 = vmatpush.msra.mxu0 %v747
    %1480 = vmatpush.msra.mxu0 %v715
    %1481 = vmatpush.msra.mxu0 %v683
    %1482 = vmatpush.msra.mxu0 %v651
    %1483 = vmatmul.f32.gmra.mxu0 %v749
    %v1484 = vpop.f32.mrf.mxu0
    %v1485 = vadd.f32 0.0, %v1484
    %1486 = vmatmul.f32.gmra.mxu0 %v752
    %v1487 = vpop.f32.mrf.mxu0
    %v1488 = vadd.f32 0.0, %v1487
    %1489 = vdwg.mxu0
    %v1490 = vrcp.pop 5.656854
    %v1491 = vmul.f32 5.656854, %v1490
    %v1492 = vsub.f32 1.0, %v1491
    %v1493 = vmul.f32 %v1490, %v1492
    %v1494 = vadd.f32 %v1490, %v1493
    %vm1495 = vweird.f32 %v1490
    %v1496 = vsel %vm1495, %v1490, %v1494
    %v1497 = vmul.f32 %v772, %v1496
    %v1498 = vmul.f32 %v795, %v1496
    %v1499 = vmul.f32 %v818, %v1496
    %v1500 = vmul.f32 %v841, %v1496
    %v1501 = vmul.f32 %v864, %v1496
    %v1502 = vmul.f32 %v887, %v1496
    %v1503 = vmul.f32 %v910, %v1496
    %v1504 = vmul.f32 %v933, %v1496
    %v1505 = vmul.f32 %v956, %v1496
    %v1506 = vmul.f32 %v979, %v1496
    %v1507 = vmul.f32 %v1002, %v1496
    %v1508 = vmul.f32 %v1025, %v1496
    %v1509 = vmul.f32 %v1048, %v1496
    %v1510 = vmul.f32 %v1071, %v1496
    %v1511 = vmul.f32 %v1094, %v1496
    %v1512 = vmul.f32 %v1117, %v1496
    %v1513 = vmul.f32 %v1140, %v1496
    %v1514 = vmul.f32 %v1163, %v1496
    %v1515 = vmul.f32 %v1186, %v1496
    %v1516 = vmul.f32 %v1209, %v1496
    %v1517 = vmul.f32 %v1232, %v1496
    %v1518 = vmul.f32 %v1255, %v1496
    %v1519 = vmul.f32 %v1278, %v1496
    %v1520 = vmul.f32 %v1301, %v1496
    %v1521 = vmul.f32 %v1324, %v1496
    %v1522 = vmul.f32 %v1347, %v1496
    %v1523 = vmul.f32 %v1370, %v1496
    %v1524 = vmul.f32 %v1393, %v1496
    %v1525 = vmul.f32 %v1416, %v1496
    %v1526 = vmul.f32 %v1439, %v1496
    %v1527 = vmul.f32 %v1462, %v1496
    %v1528 = vmul.f32 %v1485, %v1496
    %v1529 = vmul.f32 %v775, %v1496
    %v1530 = vmul.f32 %v798, %v1496
    %v1531 = vmul.f32 %v821, %v1496
    %v1532 = vmul.f32 %v844, %v1496
    %v1533 = vmul.f32 %v867, %v1496
    %v1534 = vmul.f32 %v890, %v1496
    %v1535 = vmul.f32 %v913, %v1496
    %v1536 = vmul.f32 %v936, %v1496
    %v1537 = vmul.f32 %v959, %v1496
    %v1538 = vmul.f32 %v982, %v1496
    %v1539 = vmul.f32 %v1005, %v1496
    %v1540 = vmul.f32 %v1028, %v1496
    %v1541 = vmul.f32 %v1051, %v1496
    %v1542 = vmul.f32 %v1074, %v1496
    %v1543 = vmul.f32 %v1097, %v1496
    %v1544 = vmul.f32 %v1120, %v1496
    %v1545 = vmul.f32 %v1143, %v1496
    %v1546 = vmul.f32 %v1166, %v1496
    %v1547 = vmul.f32 %v1189, %v1496
    %v1548 = vmul.f32 %v1212, %v1496
    %v1549 = vmul.f32 %v1235, %v1496
    %v1550 = vmul.f32 %v1258, %v1496
    %v1551 = vmul.f32 %v1281, %v1496
    %v1552 = vmul.f32 %v1304, %v1496
    %v1553 = vmul.f32 %v1327, %v1496
    %v1554 = vmul.f32 %v1350, %v1496
    %v1555 = vmul.f32 %v1373, %v1496
    %v1556 = vmul.f32 %v1396, %v1496
    %v1557 = vmul.f32 %v1419, %v1496
    %v1558 = vmul.f32 %v1442, %v1496
    %v1559 = vmul.f32 %v1465, %v1496
    %v1560 = vmul.f32 %v1488, %v1496
    %v1561 = vrcp.pop 1000.0
    %v1562 = vmul.f32 1000.0, %v1561
    %v1563 = vsub.f32 1.0, %v1562
    %v1564 = vmul.f32 %v1561, %v1563
    %v1565 = vadd.f32 %v1561, %v1564
    %vm1566 = vweird.f32 %v1561
    %v1567 = vsel %vm1566, %v1561, %v1565
    %v1568 = vmul.f32 %v1497, %v1567
    %v1569 = vmul.f32 %v1498, %v1567
    %v1570 = vmul.f32 %v1499, %v1567
    %v1571 = vmul.f32 %v1500, %v1567
    %v1572 = vmul.f32 %v1501, %v1567
    %v1573 = vmul.f32 %v1502, %v1567
    %v1574 = vmul.f32 %v1503, %v1567
    %v1575 = vmul.f32 %v1504, %v1567
    %v1576 = vmul.f32 %v1505, %v1567
    %v1577 = vmul.f32 %v1506, %v1567
    %v1578 = vmul.f32 %v1507, %v1567
    %v1579 = vmul.f32 %v1508, %v1567
    %v1580 = vmul.f32 %v1509, %v1567
    %v1581 = vmul.f32 %v1510, %v1567
    %v1582 = vmul.f32 %v1511, %v1567
    %v1583 = vmul.f32 %v1512, %v1567
    %v1584 = vmul.f32 %v1513, %v1567
    %v1585 = vmul.f32 %v1514, %v1567
    %v1586 = vmul.f32 %v1515, %v1567
    %v1587 = vmul.f32 %v1516, %v1567
    %v1588 = vmul.f32 %v1517, %v1567
    %v1589 = vmul.f32 %v1518, %v1567
    %v1590 = vmul.f32 %v1519, %v1567
    %v1591 = vmul.f32 %v1520, %v1567
    %v1592 = vmul.f32 %v1521, %v1567
    %v1593 = vmul.f32 %v1522, %v1567
    %v1594 = vmul.f32 %v1523, %v1567
    %v1595 = vmul.f32 %v1524, %v1567
    %v1596 = vmul.f32 %v1525, %v1567
    %v1597 = vmul.f32 %v1526, %v1567
    %v1598 = vmul.f32 %v1527, %v1567
    %v1599 = vmul.f32 %v1528, %v1567
    %v1600 = vmul.f32 %v1529, %v1567
    %v1601 = vmul.f32 %v1530, %v1567
    %v1602 = vmul.f32 %v1531, %v1567
    %v1603 = vmul.f32 %v1532, %v1567
    %v1604 = vmul.f32 %v1533, %v1567
    %v1605 = vmul.f32 %v1534, %v1567
    %v1606 = vmul.f32 %v1535, %v1567
    %v1607 = vmul.f32 %v1536, %v1567
    %v1608 = vmul.f32 %v1537, %v1567
    %v1609 = vmul.f32 %v1538, %v1567
    %v1610 = vmul.f32 %v1539, %v1567
    %v1611 = vmul.f32 %v1540, %v1567
    %v1612 = vmul.f32 %v1541, %v1567
    %v1613 = vmul.f32 %v1542, %v1567
    %v1614 = vmul.f32 %v1543, %v1567
    %v1615 = vmul.f32 %v1544, %v1567
    %v1616 = vmul.f32 %v1545, %v1567
    %v1617 = vmul.f32 %v1546, %v1567
    %v1618 = vmul.f32 %v1547, %v1567
    %v1619 = vmul.f32 %v1548, %v1567
    %v1620 = vmul.f32 %v1549, %v1567
    %v1621 = vmul.f32 %v1550, %v1567
    %v1622 = vmul.f32 %v1551, %v1567
    %v1623 = vmul.f32 %v1552, %v1567
    %v1624 = vmul.f32 %v1553, %v1567
    %v1625 = vmul.f32 %v1554, %v1567
    %v1626 = vmul.f32 %v1555, %v1567
    %v1627 = vmul.f32 %v1556, %v1567
    %v1628 = vmul.f32 %v1557, %v1567
    %v1629 = vmul.f32 %v1558, %v1567
    %v1630 = vmul.f32 %v1559, %v1567
    %v1631 = vmul.f32 %v1560, %v1567
    %v1633 = vsel %vm80, %v615, 0
    %v1636 = vsel %vm80, %v618, 0
    %1638 = vmatpush.msra.mxu0 0.0
    %1639 = vmatpush.msra.mxu0 0.0
    %1640 = vmatpush.msra.mxu0 0.0
    %1641 = vmatpush.msra.mxu0 0.0
    %1642 = vmatpush.msra.mxu0 0.0
    %1643 = vmatpush.msra.mxu0 0.0
    %1644 = vmatpush.msra.mxu0 0.0
    %1645 = vmatpush.msra.mxu0 0.0
    %1646 = vmatpush.msra.mxu0 0.0
    %1647 = vmatpush.msra.mxu0 0.0
    %1648 = vmatpush.msra.mxu0 0.0
    %1649 = vmatpush.msra.mxu0 0.0
    %1650 = vmatpush.msra.mxu0 %v716
    %1651 = vmatpush.msra.mxu0 %v684
    %1652 = vmatpush.msra.mxu0 %v652
    %1653 = vmatpush.msra.mxu0 %v620
    %1654 = vmatmul.f32.gmra.mxu0 %v1633
    %v1655 = vpop.f32.mrf.mxu0
    %v1656 = vadd.f32 0.0, %v1655
    %1657 = vmatmul.f32.gmra.mxu0 %v1636
    %v1658 = vpop.f32.mrf.mxu0
    %v1659 = vadd.f32 0.0, %v1658
    %1660 = vdwg.mxu0
    %1661 = vmatpush.msra.mxu0 0.0
    %1662 = vmatpush.msra.mxu0 0.0
    %1663 = vmatpush.msra.mxu0 0.0
    %1664 = vmatpush.msra.mxu0 0.0
    %1665 = vmatpush.msra.mxu0 0.0
    %1666 = vmatpush.msra.mxu0 0.0
    %1667 = vmatpush.msra.mxu0 0.0
    %1668 = vmatpush.msra.mxu0 0.0
    %1669 = vmatpush.msra.mxu0 0.0
    %1670 = vmatpush.msra.mxu0 0.0
    %1671 = vmatpush.msra.mxu0 0.0
    %1672 = vmatpush.msra.mxu0 0.0
    %1673 = vmatpush.msra.mxu0 %v717
    %1674 = vmatpush.msra.mxu0 %v685
    %1675 = vmatpush.msra.mxu0 %v653
    %1676 = vmatpush.msra.mxu0 %v621
    %1677 = vmatmul.f32.gmra.mxu0 %v1633
    %v1678 = vpop.f32.mrf.mxu0
    %v1679 = vadd.f32 0.0, %v1678
    %1680 = vmatmul.f32.gmra.mxu0 %v1636
    %v1681 = vpop.f32.mrf.mxu0
    %v1682 = vadd.f32 0.0, %v1681
    %1683 = vdwg.mxu0
    %1684 = vmatpush.msra.mxu0 0.0
    %1685 = vmatpush.msra.mxu0 0.0
    %1686 = vmatpush.msra.mxu0 0.0
    %1687 = vmatpush.msra.mxu0 0.0
    %1688 = vmatpush.msra.mxu0 0.0
    %1689 = vmatpush.msra.mxu0 0.0
    %1690 = vmatpush.msra.mxu0 0.0
    %1691 = vmatpush.msra.mxu0 0.0
    %1692 = vmatpush.msra.mxu0 0.0
    %1693 = vmatpush.msra.mxu0 0.0
    %1694 = vmatpush.msra.mxu0 0.0
    %1695 = vmatpush.msra.mxu0 0.0
    %1696 = vmatpush.msra.mxu0 %v718
    %1697 = vmatpush.msra.mxu0 %v686
    %1698 = vmatpush.msra.mxu0 %v654
    %1699 = vmatpush.msra.mxu0 %v622
    %1700 = vmatmul.f32.gmra.mxu0 %v1633
    %v1701 = vpop.f32.mrf.mxu0
    %v1702 = vadd.f32 0.0, %v1701
    %1703 = vmatmul.f32.gmra.mxu0 %v1636
    %v1704 = vpop.f32.mrf.mxu0
    %v1705 = vadd.f32 0.0, %v1704
    %1706 = vdwg.mxu0
    %1707 = vmatpush.msra.mxu0 0.0
    %1708 = vmatpush.msra.mxu0 0.0
    %1709 = vmatpush.msra.mxu0 0.0
    %1710 = vmatpush.msra.mxu0 0.0
    %1711 = vmatpush.msra.mxu0 0.0
    %1712 = vmatpush.msra.mxu0 0.0
    %1713 = vmatpush.msra.mxu0 0.0
    %1714 = vmatpush.msra.mxu0 0.0
    %1715 = vmatpush.msra.mxu0 0.0
    %1716 = vmatpush.msra.mxu0 0.0
    %1717 = vmatpush.msra.mxu0 0.0
    %1718 = vmatpush.msra.mxu0 0.0
    %1719 = vmatpush.msra.mxu0 %v719
    %1720 = vmatpush.msra.mxu0 %v687
    %1721 = vmatpush.msra.mxu0 %v655
    %1722 = vmatpush.msra.mxu0 %v623
    %1723 = vmatmul.f32.gmra.mxu0 %v1633
    %v1724 = vpop.f32.mrf.mxu0
    %v1725 = vadd.f32 0.0, %v1724
    %1726 = vmatmul.f32.gmra.mxu0 %v1636
    %v1727 = vpop.f32.mrf.mxu0
    %v1728 = vadd.f32 0.0, %v1727
    %1729 = vdwg.mxu0
    %1730 = vmatpush.msra.mxu0 0.0
    %1731 = vmatpush.msra.mxu0 0.0
    %1732 = vmatpush.msra.mxu0 0.0
    %1733 = vmatpush.msra.mxu0 0.0
    %1734 = vmatpush.msra.mxu0 0.0
    %1735 = vmatpush.msra.mxu0 0.0
    %1736 = vmatpush.msra.mxu0 0.0
    %1737 = vmatpush.msra.mxu0 0.0
    %1738 = vmatpush.msra.mxu0 0.0
    %1739 = vmatpush.msra.mxu0 0.0
    %1740 = vmatpush.msra.mxu0 0.0
    %1741 = vmatpush.msra.mxu0 0.0
    %1742 = vmatpush.msra.mxu0 %v720
    %1743 = vmatpush.msra.mxu0 %v688
    %1744 = vmatpush.msra.mxu0 %v656
    %1745 = vmatpush.msra.mxu0 %v624
    %1746 = vmatmul.f32.gmra.mxu0 %v1633
    %v1747 = vpop.f32.mrf.mxu0
    %v1748 = vadd.f32 0.0, %v1747
    %1749 = vmatmul.f32.gmra.mxu0 %v1636
    %v1750 = vpop.f32.mrf.mxu0
    %v1751 = vadd.f32 0.0, %v1750
    %1752 = vdwg.mxu0
    %1753 = vmatpush.msra.mxu0 0.0
    %1754 = vmatpush.msra.mxu0 0.0
    %1755 = vmatpush.msra.mxu0 0.0
    %1756 = vmatpush.msra.mxu0 0.0
    %1757 = vmatpush.msra.mxu0 0.0
    %1758 = vmatpush.msra.mxu0 0.0
    %1759 = vmatpush.msra.mxu0 0.0
    %1760 = vmatpush.msra.mxu0 0.0
    %1761 = vmatpush.msra.mxu0 0.0
    %1762 = vmatpush.msra.mxu0 0.0
    %1763 = vmatpush.msra.mxu0 0.0
    %1764 = vmatpush.msra.mxu0 0.0
    %1765 = vmatpush.msra.mxu0 %v721
    %1766 = vmatpush.msra.mxu0 %v689
    %1767 = vmatpush.msra.mxu0 %v657
    %1768 = vmatpush.msra.mxu0 %v625
    %1769 = vmatmul.f32.gmra.mxu0 %v1633
    %v1770 = vpop.f32.mrf.mxu0
    %v1771 = vadd.f32 0.0, %v1770
    %1772 = vmatmul.f32.gmra.mxu0 %v1636
    %v1773 = vpop.f32.mrf.mxu0
    %v1774 = vadd.f32 0.0, %v1773
    %1775 = vdwg.mxu0
    %1776 = vmatpush.msra.mxu0 0.0
    %1777 = vmatpush.msra.mxu0 0.0
    %1778 = vmatpush.msra.mxu0 0.0
    %1779 = vmatpush.msra.mxu0 0.0
    %1780 = vmatpush.msra.mxu0 0.0
    %1781 = vmatpush.msra.mxu0 0.0
    %1782 = vmatpush.msra.mxu0 0.0
    %1783 = vmatpush.msra.mxu0 0.0
    %1784 = vmatpush.msra.mxu0 0.0
    %1785 = vmatpush.msra.mxu0 0.0
    %1786 = vmatpush.msra.mxu0 0.0
    %1787 = vmatpush.msra.mxu0 0.0
    %1788 = vmatpush.msra.mxu0 %v722
    %1789 = vmatpush.msra.mxu0 %v690
    %1790 = vmatpush.msra.mxu0 %v658
    %1791 = vmatpush.msra.mxu0 %v626
    %1792 = vmatmul.f32.gmra.mxu0 %v1633
    %v1793 = vpop.f32.mrf.mxu0
    %v1794 = vadd.f32 0.0, %v1793
    %1795 = vmatmul.f32.gmra.mxu0 %v1636
    %v1796 = vpop.f32.mrf.mxu0
    %v1797 = vadd.f32 0.0, %v1796
    %1798 = vdwg.mxu0
    %1799 = vmatpush.msra.mxu0 0.0
    %1800 = vmatpush.msra.mxu0 0.0
    %1801 = vmatpush.msra.mxu0 0.0
    %1802 = vmatpush.msra.mxu0 0.0
    %1803 = vmatpush.msra.mxu0 0.0
    %1804 = vmatpush.msra.mxu0 0.0
    %1805 = vmatpush.msra.mxu0 0.0
    %1806 = vmatpush.msra.mxu0 0.0
    %1807 = vmatpush.msra.mxu0 0.0
    %1808 = vmatpush.msra.mxu0 0.0
    %1809 = vmatpush.msra.mxu0 0.0
    %1810 = vmatpush.msra.mxu0 0.0
    %1811 = vmatpush.msra.mxu0 %v723
    %1812 = vmatpush.msra.mxu0 %v691
    %1813 = vmatpush.msra.mxu0 %v659
    %1814 = vmatpush.msra.mxu0 %v627
    %1815 = vmatmul.f32.gmra.mxu0 %v1633
    %v1816 = vpop.f32.mrf.mxu0
    %v1817 = vadd.f32 0.0, %v1816
    %1818 = vmatmul.f32.gmra.mxu0 %v1636
    %v1819 = vpop.f32.mrf.mxu0
    %v1820 = vadd.f32 0.0, %v1819
    %1821 = vdwg.mxu0
    %1822 = vmatpush.msra.mxu0 0.0
    %1823 = vmatpush.msra.mxu0 0.0
    %1824 = vmatpush.msra.mxu0 0.0
    %1825 = vmatpush.msra.mxu0 0.0
    %1826 = vmatpush.msra.mxu0 0.0
    %1827 = vmatpush.msra.mxu0 0.0
    %1828 = vmatpush.msra.mxu0 0.0
    %1829 = vmatpush.msra.mxu0 0.0
    %1830 = vmatpush.msra.mxu0 0.0
    %1831 = vmatpush.msra.mxu0 0.0
    %1832 = vmatpush.msra.mxu0 0.0
    %1833 = vmatpush.msra.mxu0 0.0
    %1834 = vmatpush.msra.mxu0 %v724
    %1835 = vmatpush.msra.mxu0 %v692
    %1836 = vmatpush.msra.mxu0 %v660
    %1837 = vmatpush.msra.mxu0 %v628
    %1838 = vmatmul.f32.gmra.mxu0 %v1633
    %v1839 = vpop.f32.mrf.mxu0
    %v1840 = vadd.f32 0.0, %v1839
    %1841 = vmatmul.f32.gmra.mxu0 %v1636
    %v1842 = vpop.f32.mrf.mxu0
    %v1843 = vadd.f32 0.0, %v1842
    %1844 = vdwg.mxu0
    %1845 = vmatpush.msra.mxu0 0.0
    %1846 = vmatpush.msra.mxu0 0.0
    %1847 = vmatpush.msra.mxu0 0.0
    %1848 = vmatpush.msra.mxu0 0.0
    %1849 = vmatpush.msra.mxu0 0.0
    %1850 = vmatpush.msra.mxu0 0.0
    %1851 = vmatpush.msra.mxu0 0.0
    %1852 = vmatpush.msra.mxu0 0.0
    %1853 = vmatpush.msra.mxu0 0.0
    %1854 = vmatpush.msra.mxu0 0.0
    %1855 = vmatpush.msra.mxu0 0.0
    %1856 = vmatpush.msra.mxu0 0.0
    %1857 = vmatpush.msra.mxu0 %v725
    %1858 = vmatpush.msra.mxu0 %v693
    %1859 = vmatpush.msra.mxu0 %v661
    %1860 = vmatpush.msra.mxu0 %v629
    %1861 = vmatmul.f32.gmra.mxu0 %v1633
    %v1862 = vpop.f32.mrf.mxu0
    %v1863 = vadd.f32 0.0, %v1862
    %1864 = vmatmul.f32.gmra.mxu0 %v1636
    %v1865 = vpop.f32.mrf.mxu0
    %v1866 = vadd.f32 0.0, %v1865
    %1867 = vdwg.mxu0
    %1868 = vmatpush.msra.mxu0 0.0
    %1869 = vmatpush.msra.mxu0 0.0
    %1870 = vmatpush.msra.mxu0 0.0
    %1871 = vmatpush.msra.mxu0 0.0
    %1872 = vmatpush.msra.mxu0 0.0
    %1873 = vmatpush.msra.mxu0 0.0
    %1874 = vmatpush.msra.mxu0 0.0
    %1875 = vmatpush.msra.mxu0 0.0
    %1876 = vmatpush.msra.mxu0 0.0
    %1877 = vmatpush.msra.mxu0 0.0
    %1878 = vmatpush.msra.mxu0 0.0
    %1879 = vmatpush.msra.mxu0 0.0
    %1880 = vmatpush.msra.mxu0 %v726
    %1881 = vmatpush.msra.mxu0 %v694
    %1882 = vmatpush.msra.mxu0 %v662
    %1883 = vmatpush.msra.mxu0 %v630
    %1884 = vmatmul.f32.gmra.mxu0 %v1633
    %v1885 = vpop.f32.mrf.mxu0
    %v1886 = vadd.f32 0.0, %v1885
    %1887 = vmatmul.f32.gmra.mxu0 %v1636
    %v1888 = vpop.f32.mrf.mxu0
    %v1889 = vadd.f32 0.0, %v1888
    %1890 = vdwg.mxu0
    %1891 = vmatpush.msra.mxu0 0.0
    %1892 = vmatpush.msra.mxu0 0.0
    %1893 = vmatpush.msra.mxu0 0.0
    %1894 = vmatpush.msra.mxu0 0.0
    %1895 = vmatpush.msra.mxu0 0.0
    %1896 = vmatpush.msra.mxu0 0.0
    %1897 = vmatpush.msra.mxu0 0.0
    %1898 = vmatpush.msra.mxu0 0.0
    %1899 = vmatpush.msra.mxu0 0.0
    %1900 = vmatpush.msra.mxu0 0.0
    %1901 = vmatpush.msra.mxu0 0.0
    %1902 = vmatpush.msra.mxu0 0.0
    %1903 = vmatpush.msra.mxu0 %v727
    %1904 = vmatpush.msra.mxu0 %v695
    %1905 = vmatpush.msra.mxu0 %v663
    %1906 = vmatpush.msra.mxu0 %v631
    %1907 = vmatmul.f32.gmra.mxu0 %v1633
    %v1908 = vpop.f32.mrf.mxu0
    %v1909 = vadd.f32 0.0, %v1908
    %1910 = vmatmul.f32.gmra.mxu0 %v1636
    %v1911 = vpop.f32.mrf.mxu0
    %v1912 = vadd.f32 0.0, %v1911
    %1913 = vdwg.mxu0
    %1914 = vmatpush.msra.mxu0 0.0
    %1915 = vmatpush.msra.mxu0 0.0
    %1916 = vmatpush.msra.mxu0 0.0
    %1917 = vmatpush.msra.mxu0 0.0
    %1918 = vmatpush.msra.mxu0 0.0
    %1919 = vmatpush.msra.mxu0 0.0
    %1920 = vmatpush.msra.mxu0 0.0
    %1921 = vmatpush.msra.mxu0 0.0
    %1922 = vmatpush.msra.mxu0 0.0
    %1923 = vmatpush.msra.mxu0 0.0
    %1924 = vmatpush.msra.mxu0 0.0
    %1925 = vmatpush.msra.mxu0 0.0
    %1926 = vmatpush.msra.mxu0 %v728
    %1927 = vmatpush.msra.mxu0 %v696
    %1928 = vmatpush.msra.mxu0 %v664
    %1929 = vmatpush.msra.mxu0 %v632
    %1930 = vmatmul.f32.gmra.mxu0 %v1633
    %v1931 = vpop.f32.mrf.mxu0
    %v1932 = vadd.f32 0.0, %v1931
    %1933 = vmatmul.f32.gmra.mxu0 %v1636
    %v1934 = vpop.f32.mrf.mxu0
    %v1935 = vadd.f32 0.0, %v1934
    %1936 = vdwg.mxu0
    %1937 = vmatpush.msra.mxu0 0.0
    %1938 = vmatpush.msra.mxu0 0.0
    %1939 = vmatpush.msra.mxu0 0.0
    %1940 = vmatpush.msra.mxu0 0.0
    %1941 = vmatpush.msra.mxu0 0.0
    %1942 = vmatpush.msra.mxu0 0.0
    %1943 = vmatpush.msra.mxu0 0.0
    %1944 = vmatpush.msra.mxu0 0.0
    %1945 = vmatpush.msra.mxu0 0.0
    %1946 = vmatpush.msra.mxu0 0.0
    %1947 = vmatpush.msra.mxu0 0.0
    %1948 = vmatpush.msra.mxu0 0.0
    %1949 = vmatpush.msra.mxu0 %v729
    %1950 = vmatpush.msra.mxu0 %v697
    %1951 = vmatpush.msra.mxu0 %v665
    %1952 = vmatpush.msra.mxu0 %v633
    %1953 = vmatmul.f32.gmra.mxu0 %v1633
    %v1954 = vpop.f32.mrf.mxu0
    %v1955 = vadd.f32 0.0, %v1954
    %1956 = vmatmul.f32.gmra.mxu0 %v1636
    %v1957 = vpop.f32.mrf.mxu0
    %v1958 = vadd.f32 0.0, %v1957
    %1959 = vdwg.mxu0
    %1960 = vmatpush.msra.mxu0 0.0
    %1961 = vmatpush.msra.mxu0 0.0
    %1962 = vmatpush.msra.mxu0 0.0
    %1963 = vmatpush.msra.mxu0 0.0
    %1964 = vmatpush.msra.mxu0 0.0
    %1965 = vmatpush.msra.mxu0 0.0
    %1966 = vmatpush.msra.mxu0 0.0
    %1967 = vmatpush.msra.mxu0 0.0
    %1968 = vmatpush.msra.mxu0 0.0
    %1969 = vmatpush.msra.mxu0 0.0
    %1970 = vmatpush.msra.mxu0 0.0
    %1971 = vmatpush.msra.mxu0 0.0
    %1972 = vmatpush.msra.mxu0 %v730
    %1973 = vmatpush.msra.mxu0 %v698
    %1974 = vmatpush.msra.mxu0 %v666
    %1975 = vmatpush.msra.mxu0 %v634
    %1976 = vmatmul.f32.gmra.mxu0 %v1633
    %v1977 = vpop.f32.mrf.mxu0
    %v1978 = vadd.f32 0.0, %v1977
    %1979 = vmatmul.f32.gmra.mxu0 %v1636
    %v1980 = vpop.f32.mrf.mxu0
    %v1981 = vadd.f32 0.0, %v1980
    %1982 = vdwg.mxu0
    %1983 = vmatpush.msra.mxu0 0.0
    %1984 = vmatpush.msra.mxu0 0.0
    %1985 = vmatpush.msra.mxu0 0.0
    %1986 = vmatpush.msra.mxu0 0.0
    %1987 = vmatpush.msra.mxu0 0.0
    %1988 = vmatpush.msra.mxu0 0.0
    %1989 = vmatpush.msra.mxu0 0.0
    %1990 = vmatpush.msra.mxu0 0.0
    %1991 = vmatpush.msra.mxu0 0.0
    %1992 = vmatpush.msra.mxu0 0.0
    %1993 = vmatpush.msra.mxu0 0.0
    %1994 = vmatpush.msra.mxu0 0.0
    %1995 = vmatpush.msra.mxu0 %v731
    %1996 = vmatpush.msra.mxu0 %v699
    %1997 = vmatpush.msra.mxu0 %v667
    %1998 = vmatpush.msra.mxu0 %v635
    %1999 = vmatmul.f32.gmra.mxu0 %v1633
    %v2000 = vpop.f32.mrf.mxu0
    %v2001 = vadd.f32 0.0, %v2000
    %2002 = vmatmul.f32.gmra.mxu0 %v1636
    %v2003 = vpop.f32.mrf.mxu0
    %v2004 = vadd.f32 0.0, %v2003
    %2005 = vdwg.mxu0
    %2006 = vmatpush.msra.mxu0 0.0
    %2007 = vmatpush.msra.mxu0 0.0
    %2008 = vmatpush.msra.mxu0 0.0
    %2009 = vmatpush.msra.mxu0 0.0
    %2010 = vmatpush.msra.mxu0 0.0
    %2011 = vmatpush.msra.mxu0 0.0
    %2012 = vmatpush.msra.mxu0 0.0
    %2013 = vmatpush.msra.mxu0 0.0
    %2014 = vmatpush.msra.mxu0 0.0
    %2015 = vmatpush.msra.mxu0 0.0
    %2016 = vmatpush.msra.mxu0 0.0
    %2017 = vmatpush.msra.mxu0 0.0
    %2018 = vmatpush.msra.mxu0 %v732
    %2019 = vmatpush.msra.mxu0 %v700
    %2020 = vmatpush.msra.mxu0 %v668
    %2021 = vmatpush.msra.mxu0 %v636
    %2022 = vmatmul.f32.gmra.mxu0 %v1633
    %v2023 = vpop.f32.mrf.mxu0
    %v2024 = vadd.f32 0.0, %v2023
    %2025 = vmatmul.f32.gmra.mxu0 %v1636
    %v2026 = vpop.f32.mrf.mxu0
    %v2027 = vadd.f32 0.0, %v2026
    %2028 = vdwg.mxu0
    %2029 = vmatpush.msra.mxu0 0.0
    %2030 = vmatpush.msra.mxu0 0.0
    %2031 = vmatpush.msra.mxu0 0.0
    %2032 = vmatpush.msra.mxu0 0.0
    %2033 = vmatpush.msra.mxu0 0.0
    %2034 = vmatpush.msra.mxu0 0.0
    %2035 = vmatpush.msra.mxu0 0.0
    %2036 = vmatpush.msra.mxu0 0.0
    %2037 = vmatpush.msra.mxu0 0.0
    %2038 = vmatpush.msra.mxu0 0.0
    %2039 = vmatpush.msra.mxu0 0.0
    %2040 = vmatpush.msra.mxu0 0.0
    %2041 = vmatpush.msra.mxu0 %v733
    %2042 = vmatpush.msra.mxu0 %v701
    %2043 = vmatpush.msra.mxu0 %v669
    %2044 = vmatpush.msra.mxu0 %v637
    %2045 = vmatmul.f32.gmra.mxu0 %v1633
    %v2046 = vpop.f32.mrf.mxu0
    %v2047 = vadd.f32 0.0, %v2046
    %2048 = vmatmul.f32.gmra.mxu0 %v1636
    %v2049 = vpop.f32.mrf.mxu0
    %v2050 = vadd.f32 0.0, %v2049
    %2051 = vdwg.mxu0
    %2052 = vmatpush.msra.mxu0 0.0
    %2053 = vmatpush.msra.mxu0 0.0
    %2054 = vmatpush.msra.mxu0 0.0
    %2055 = vmatpush.msra.mxu0 0.0
    %2056 = vmatpush.msra.mxu0 0.0
    %2057 = vmatpush.msra.mxu0 0.0
    %2058 = vmatpush.msra.mxu0 0.0
    %2059 = vmatpush.msra.mxu0 0.0
    %2060 = vmatpush.msra.mxu0 0.0
    %2061 = vmatpush.msra.mxu0 0.0
    %2062 = vmatpush.msra.mxu0 0.0
    %2063 = vmatpush.msra.mxu0 0.0
    %2064 = vmatpush.msra.mxu0 %v734
    %2065 = vmatpush.msra.mxu0 %v702
    %2066 = vmatpush.msra.mxu0 %v670
    %2067 = vmatpush.msra.mxu0 %v638
    %2068 = vmatmul.f32.gmra.mxu0 %v1633
    %v2069 = vpop.f32.mrf.mxu0
    %v2070 = vadd.f32 0.0, %v2069
    %2071 = vmatmul.f32.gmra.mxu0 %v1636
    %v2072 = vpop.f32.mrf.mxu0
    %v2073 = vadd.f32 0.0, %v2072
    %2074 = vdwg.mxu0
    %2075 = vmatpush.msra.mxu0 0.0
    %2076 = vmatpush.msra.mxu0 0.0
    %2077 = vmatpush.msra.mxu0 0.0
    %2078 = vmatpush.msra.mxu0 0.0
    %2079 = vmatpush.msra.mxu0 0.0
    %2080 = vmatpush.msra.mxu0 0.0
    %2081 = vmatpush.msra.mxu0 0.0
    %2082 = vmatpush.msra.mxu0 0.0
    %2083 = vmatpush.msra.mxu0 0.0
    %2084 = vmatpush.msra.mxu0 0.0
    %2085 = vmatpush.msra.mxu0 0.0
    %2086 = vmatpush.msra.mxu0 0.0
    %2087 = vmatpush.msra.mxu0 %v735
    %2088 = vmatpush.msra.mxu0 %v703
    %2089 = vmatpush.msra.mxu0 %v671
    %2090 = vmatpush.msra.mxu0 %v639
    %2091 = vmatmul.f32.gmra.mxu0 %v1633
    %v2092 = vpop.f32.mrf.mxu0
    %v2093 = vadd.f32 0.0, %v2092
    %2094 = vmatmul.f32.gmra.mxu0 %v1636
    %v2095 = vpop.f32.mrf.mxu0
    %v2096 = vadd.f32 0.0, %v2095
    %2097 = vdwg.mxu0
    %2098 = vmatpush.msra.mxu0 0.0
    %2099 = vmatpush.msra.mxu0 0.0
    %2100 = vmatpush.msra.mxu0 0.0
    %2101 = vmatpush.msra.mxu0 0.0
    %2102 = vmatpush.msra.mxu0 0.0
    %2103 = vmatpush.msra.mxu0 0.0
    %2104 = vmatpush.msra.mxu0 0.0
    %2105 = vmatpush.msra.mxu0 0.0
    %2106 = vmatpush.msra.mxu0 0.0
    %2107 = vmatpush.msra.mxu0 0.0
    %2108 = vmatpush.msra.mxu0 0.0
    %2109 = vmatpush.msra.mxu0 0.0
    %2110 = vmatpush.msra.mxu0 %v736
    %2111 = vmatpush.msra.mxu0 %v704
    %2112 = vmatpush.msra.mxu0 %v672
    %2113 = vmatpush.msra.mxu0 %v640
    %2114 = vmatmul.f32.gmra.mxu0 %v1633
    %v2115 = vpop.f32.mrf.mxu0
    %v2116 = vadd.f32 0.0, %v2115
    %2117 = vmatmul.f32.gmra.mxu0 %v1636
    %v2118 = vpop.f32.mrf.mxu0
    %v2119 = vadd.f32 0.0, %v2118
    %2120 = vdwg.mxu0
    %2121 = vmatpush.msra.mxu0 0.0
    %2122 = vmatpush.msra.mxu0 0.0
    %2123 = vmatpush.msra.mxu0 0.0
    %2124 = vmatpush.msra.mxu0 0.0
    %2125 = vmatpush.msra.mxu0 0.0
    %2126 = vmatpush.msra.mxu0 0.0
    %2127 = vmatpush.msra.mxu0 0.0
    %2128 = vmatpush.msra.mxu0 0.0
    %2129 = vmatpush.msra.mxu0 0.0
    %2130 = vmatpush.msra.mxu0 0.0
    %2131 = vmatpush.msra.mxu0 0.0
    %2132 = vmatpush.msra.mxu0 0.0
    %2133 = vmatpush.msra.mxu0 %v737
    %2134 = vmatpush.msra.mxu0 %v705
    %2135 = vmatpush.msra.mxu0 %v673
    %2136 = vmatpush.msra.mxu0 %v641
    %2137 = vmatmul.f32.gmra.mxu0 %v1633
    %v2138 = vpop.f32.mrf.mxu0
    %v2139 = vadd.f32 0.0, %v2138
    %2140 = vmatmul.f32.gmra.mxu0 %v1636
    %v2141 = vpop.f32.mrf.mxu0
    %v2142 = vadd.f32 0.0, %v2141
    %2143 = vdwg.mxu0
    %2144 = vmatpush.msra.mxu0 0.0
    %2145 = vmatpush.msra.mxu0 0.0
    %2146 = vmatpush.msra.mxu0 0.0
    %2147 = vmatpush.msra.mxu0 0.0
    %2148 = vmatpush.msra.mxu0 0.0
    %2149 = vmatpush.msra.mxu0 0.0
    %2150 = vmatpush.msra.mxu0 0.0
    %2151 = vmatpush.msra.mxu0 0.0
    %2152 = vmatpush.msra.mxu0 0.0
    %2153 = vmatpush.msra.mxu0 0.0
    %2154 = vmatpush.msra.mxu0 0.0
    %2155 = vmatpush.msra.mxu0 0.0
    %2156 = vmatpush.msra.mxu0 %v738
    %2157 = vmatpush.msra.mxu0 %v706
    %2158 = vmatpush.msra.mxu0 %v674
    %2159 = vmatpush.msra.mxu0 %v642
    %2160 = vmatmul.f32.gmra.mxu0 %v1633
    %v2161 = vpop.f32.mrf.mxu0
    %v2162 = vadd.f32 0.0, %v2161
    %2163 = vmatmul.f32.gmra.mxu0 %v1636
    %v2164 = vpop.f32.mrf.mxu0
    %v2165 = vadd.f32 0.0, %v2164
    %2166 = vdwg.mxu0
    %2167 = vmatpush.msra.mxu0 0.0
    %2168 = vmatpush.msra.mxu0 0.0
    %2169 = vmatpush.msra.mxu0 0.0
    %2170 = vmatpush.msra.mxu0 0.0
    %2171 = vmatpush.msra.mxu0 0.0
    %2172 = vmatpush.msra.mxu0 0.0
    %2173 = vmatpush.msra.mxu0 0.0
    %2174 = vmatpush.msra.mxu0 0.0
    %2175 = vmatpush.msra.mxu0 0.0
    %2176 = vmatpush.msra.mxu0 0.0
    %2177 = vmatpush.msra.mxu0 0.0
    %2178 = vmatpush.msra.mxu0 0.0
    %2179 = vmatpush.msra.mxu0 %v739
    %2180 = vmatpush.msra.mxu0 %v707
    %2181 = vmatpush.msra.mxu0 %v675
    %2182 = vmatpush.msra.mxu0 %v643
    %2183 = vmatmul.f32.gmra.mxu0 %v1633
    %v2184 = vpop.f32.mrf.mxu0
    %v2185 = vadd.f32 0.0, %v2184
    %2186 = vmatmul.f32.gmra.mxu0 %v1636
    %v2187 = vpop.f32.mrf.mxu0
    %v2188 = vadd.f32 0.0, %v2187
    %2189 = vdwg.mxu0
    %2190 = vmatpush.msra.mxu0 0.0
    %2191 = vmatpush.msra.mxu0 0.0
    %2192 = vmatpush.msra.mxu0 0.0
    %2193 = vmatpush.msra.mxu0 0.0
    %2194 = vmatpush.msra.mxu0 0.0
    %2195 = vmatpush.msra.mxu0 0.0
    %2196 = vmatpush.msra.mxu0 0.0
    %2197 = vmatpush.msra.mxu0 0.0
    %2198 = vmatpush.msra.mxu0 0.0
    %2199 = vmatpush.msra.mxu0 0.0
    %2200 = vmatpush.msra.mxu0 0.0
    %2201 = vmatpush.msra.mxu0 0.0
    %2202 = vmatpush.msra.mxu0 %v740
    %2203 = vmatpush.msra.mxu0 %v708
    %2204 = vmatpush.msra.mxu0 %v676
    %2205 = vmatpush.msra.mxu0 %v644
    %2206 = vmatmul.f32.gmra.mxu0 %v1633
    %v2207 = vpop.f32.mrf.mxu0
    %v2208 = vadd.f32 0.0, %v2207
    %2209 = vmatmul.f32.gmra.mxu0 %v1636
    %v2210 = vpop.f32.mrf.mxu0
    %v2211 = vadd.f32 0.0, %v2210
    %2212 = vdwg.mxu0
    %2213 = vmatpush.msra.mxu0 0.0
    %2214 = vmatpush.msra.mxu0 0.0
    %2215 = vmatpush.msra.mxu0 0.0
    %2216 = vmatpush.msra.mxu0 0.0
    %2217 = vmatpush.msra.mxu0 0.0
    %2218 = vmatpush.msra.mxu0 0.0
    %2219 = vmatpush.msra.mxu0 0.0
    %2220 = vmatpush.msra.mxu0 0.0
    %2221 = vmatpush.msra.mxu0 0.0
    %2222 = vmatpush.msra.mxu0 0.0
    %2223 = vmatpush.msra.mxu0 0.0
    %2224 = vmatpush.msra.mxu0 0.0
    %2225 = vmatpush.msra.mxu0 %v741
    %2226 = vmatpush.msra.mxu0 %v709
    %2227 = vmatpush.msra.mxu0 %v677
    %2228 = vmatpush.msra.mxu0 %v645
    %2229 = vmatmul.f32.gmra.mxu0 %v1633
    %v2230 = vpop.f32.mrf.mxu0
    %v2231 = vadd.f32 0.0, %v2230
    %2232 = vmatmul.f32.gmra.mxu0 %v1636
    %v2233 = vpop.f32.mrf.mxu0
    %v2234 = vadd.f32 0.0, %v2233
    %2235 = vdwg.mxu0
    %2236 = vmatpush.msra.mxu0 0.0
    %2237 = vmatpush.msra.mxu0 0.0
    %2238 = vmatpush.msra.mxu0 0.0
    %2239 = vmatpush.msra.mxu0 0.0
    %2240 = vmatpush.msra.mxu0 0.0
    %2241 = vmatpush.msra.mxu0 0.0
    %2242 = vmatpush.msra.mxu0 0.0
    %2243 = vmatpush.msra.mxu0 0.0
    %2244 = vmatpush.msra.mxu0 0.0
    %2245 = vmatpush.msra.mxu0 0.0
    %2246 = vmatpush.msra.mxu0 0.0
    %2247 = vmatpush.msra.mxu0 0.0
    %2248 = vmatpush.msra.mxu0 %v742
    %2249 = vmatpush.msra.mxu0 %v710
    %2250 = vmatpush.msra.mxu0 %v678
    %2251 = vmatpush.msra.mxu0 %v646
    %2252 = vmatmul.f32.gmra.mxu0 %v1633
    %v2253 = vpop.f32.mrf.mxu0
    %v2254 = vadd.f32 0.0, %v2253
    %2255 = vmatmul.f32.gmra.mxu0 %v1636
    %v2256 = vpop.f32.mrf.mxu0
    %v2257 = vadd.f32 0.0, %v2256
    %2258 = vdwg.mxu0
    %2259 = vmatpush.msra.mxu0 0.0
    %2260 = vmatpush.msra.mxu0 0.0
    %2261 = vmatpush.msra.mxu0 0.0
    %2262 = vmatpush.msra.mxu0 0.0
    %2263 = vmatpush.msra.mxu0 0.0
    %2264 = vmatpush.msra.mxu0 0.0
    %2265 = vmatpush.msra.mxu0 0.0
    %2266 = vmatpush.msra.mxu0 0.0
    %2267 = vmatpush.msra.mxu0 0.0
    %2268 = vmatpush.msra.mxu0 0.0
    %2269 = vmatpush.msra.mxu0 0.0
    %2270 = vmatpush.msra.mxu0 0.0
    %2271 = vmatpush.msra.mxu0 %v743
    %2272 = vmatpush.msra.mxu0 %v711
    %2273 = vmatpush.msra.mxu0 %v679
    %2274 = vmatpush.msra.mxu0 %v647
    %2275 = vmatmul.f32.gmra.mxu0 %v1633
    %v2276 = vpop.f32.mrf.mxu0
    %v2277 = vadd.f32 0.0, %v2276
    %2278 = vmatmul.f32.gmra.mxu0 %v1636
    %v2279 = vpop.f32.mrf.mxu0
    %v2280 = vadd.f32 0.0, %v2279
    %2281 = vdwg.mxu0
    %2282 = vmatpush.msra.mxu0 0.0
    %2283 = vmatpush.msra.mxu0 0.0
    %2284 = vmatpush.msra.mxu0 0.0
    %2285 = vmatpush.msra.mxu0 0.0
    %2286 = vmatpush.msra.mxu0 0.0
    %2287 = vmatpush.msra.mxu0 0.0
    %2288 = vmatpush.msra.mxu0 0.0
    %2289 = vmatpush.msra.mxu0 0.0
    %2290 = vmatpush.msra.mxu0 0.0
    %2291 = vmatpush.msra.mxu0 0.0
    %2292 = vmatpush.msra.mxu0 0.0
    %2293 = vmatpush.msra.mxu0 0.0
    %2294 = vmatpush.msra.mxu0 %v744
    %2295 = vmatpush.msra.mxu0 %v712
    %2296 = vmatpush.msra.mxu0 %v680
    %2297 = vmatpush.msra.mxu0 %v648
    %2298 = vmatmul.f32.gmra.mxu0 %v1633
    %v2299 = vpop.f32.mrf.mxu0
    %v2300 = vadd.f32 0.0, %v2299
    %2301 = vmatmul.f32.gmra.mxu0 %v1636
    %v2302 = vpop.f32.mrf.mxu0
    %v2303 = vadd.f32 0.0, %v2302
    %2304 = vdwg.mxu0
    %2305 = vmatpush.msra.mxu0 0.0
    %2306 = vmatpush.msra.mxu0 0.0
    %2307 = vmatpush.msra.mxu0 0.0
    %2308 = vmatpush.msra.mxu0 0.0
    %2309 = vmatpush.msra.mxu0 0.0
    %2310 = vmatpush.msra.mxu0 0.0
    %2311 = vmatpush.msra.mxu0 0.0
    %2312 = vmatpush.msra.mxu0 0.0
    %2313 = vmatpush.msra.mxu0 0.0
    %2314 = vmatpush.msra.mxu0 0.0
    %2315 = vmatpush.msra.mxu0 0.0
    %2316 = vmatpush.msra.mxu0 0.0
    %2317 = vmatpush.msra.mxu0 %v745
    %2318 = vmatpush.msra.mxu0 %v713
    %2319 = vmatpush.msra.mxu0 %v681
    %2320 = vmatpush.msra.mxu0 %v649
    %2321 = vmatmul.f32.gmra.mxu0 %v1633
    %v2322 = vpop.f32.mrf.mxu0
    %v2323 = vadd.f32 0.0, %v2322
    %2324 = vmatmul.f32.gmra.mxu0 %v1636
    %v2325 = vpop.f32.mrf.mxu0
    %v2326 = vadd.f32 0.0, %v2325
    %2327 = vdwg.mxu0
    %2328 = vmatpush.msra.mxu0 0.0
    %2329 = vmatpush.msra.mxu0 0.0
    %2330 = vmatpush.msra.mxu0 0.0
    %2331 = vmatpush.msra.mxu0 0.0
    %2332 = vmatpush.msra.mxu0 0.0
    %2333 = vmatpush.msra.mxu0 0.0
    %2334 = vmatpush.msra.mxu0 0.0
    %2335 = vmatpush.msra.mxu0 0.0
    %2336 = vmatpush.msra.mxu0 0.0
    %2337 = vmatpush.msra.mxu0 0.0
    %2338 = vmatpush.msra.mxu0 0.0
    %2339 = vmatpush.msra.mxu0 0.0
    %2340 = vmatpush.msra.mxu0 %v746
    %2341 = vmatpush.msra.mxu0 %v714
    %2342 = vmatpush.msra.mxu0 %v682
    %2343 = vmatpush.msra.mxu0 %v650
    %2344 = vmatmul.f32.gmra.mxu0 %v1633
    %v2345 = vpop.f32.mrf.mxu0
    %v2346 = vadd.f32 0.0, %v2345
    %2347 = vmatmul.f32.gmra.mxu0 %v1636
    %v2348 = vpop.f32.mrf.mxu0
    %v2349 = vadd.f32 0.0, %v2348
    %2350 = vdwg.mxu0
    %2351 = vmatpush.msra.mxu0 0.0
    %2352 = vmatpush.msra.mxu0 0.0
    %2353 = vmatpush.msra.mxu0 0.0
    %2354 = vmatpush.msra.mxu0 0.0
    %2355 = vmatpush.msra.mxu0 0.0
    %2356 = vmatpush.msra.mxu0 0.0
    %2357 = vmatpush.msra.mxu0 0.0
    %2358 = vmatpush.msra.mxu0 0.0
    %2359 = vmatpush.msra.mxu0 0.0
    %2360 = vmatpush.msra.mxu0 0.0
    %2361 = vmatpush.msra.mxu0 0.0
    %2362 = vmatpush.msra.mxu0 0.0
    %2363 = vmatpush.msra.mxu0 %v747
    %2364 = vmatpush.msra.mxu0 %v715
    %2365 = vmatpush.msra.mxu0 %v683
    %2366 = vmatpush.msra.mxu0 %v651
    %2367 = vmatmul.f32.gmra.mxu0 %v1633
    %v2368 = vpop.f32.mrf.mxu0
    %v2369 = vadd.f32 0.0, %v2368
    %2370 = vmatmul.f32.gmra.mxu0 %v1636
    %v2371 = vpop.f32.mrf.mxu0
    %v2372 = vadd.f32 0.0, %v2371
    %2373 = vdwg.mxu0
    %v2374 = vmul.f32 %v1656, %v1496
    %v2375 = vmul.f32 %v1679, %v1496
    %v2376 = vmul.f32 %v1702, %v1496
    %v2377 = vmul.f32 %v1725, %v1496
    %v2378 = vmul.f32 %v1748, %v1496
    %v2379 = vmul.f32 %v1771, %v1496
    %v2380 = vmul.f32 %v1794, %v1496
    %v2381 = vmul.f32 %v1817, %v1496
    %v2382 = vmul.f32 %v1840, %v1496
    %v2383 = vmul.f32 %v1863, %v1496
    %v2384 = vmul.f32 %v1886, %v1496
    %v2385 = vmul.f32 %v1909, %v1496
    %v2386 = vmul.f32 %v1932, %v1496
    %v2387 = vmul.f32 %v1955, %v1496
    %v2388 = vmul.f32 %v1978, %v1496
    %v2389 = vmul.f32 %v2001, %v1496
    %v2390 = vmul.f32 %v2024, %v1496
    %v2391 = vmul.f32 %v2047, %v1496
    %v2392 = vmul.f32 %v2070, %v1496
    %v2393 = vmul.f32 %v2093, %v1496
    %v2394 = vmul.f32 %v2116, %v1496
    %v2395 = vmul.f32 %v2139, %v1496
    %v2396 = vmul.f32 %v2162, %v1496
    %v2397 = vmul.f32 %v2185, %v1496
    %v2398 = vmul.f32 %v2208, %v1496
    %v2399 = vmul.f32 %v2231, %v1496
    %v2400 = vmul.f32 %v2254, %v1496
    %v2401 = vmul.f32 %v2277, %v1496
    %v2402 = vmul.f32 %v2300, %v1496
    %v2403 = vmul.f32 %v2323, %v1496
    %v2404 = vmul.f32 %v2346, %v1496
    %v2405 = vmul.f32 %v2369, %v1496
    %v2406 = vmul.f32 %v1659, %v1496
    %v2407 = vmul.f32 %v1682, %v1496
    %v2408 = vmul.f32 %v1705, %v1496
    %v2409 = vmul.f32 %v1728, %v1496
    %v2410 = vmul.f32 %v1751, %v1496
    %v2411 = vmul.f32 %v1774, %v1496
    %v2412 = vmul.f32 %v1797, %v1496
    %v2413 = vmul.f32 %v1820, %v1496
    %v2414 = vmul.f32 %v1843, %v1496
    %v2415 = vmul.f32 %v1866, %v1496
    %v2416 = vmul.f32 %v1889, %v1496
    %v2417 = vmul.f32 %v1912, %v1496
    %v2418 = vmul.f32 %v1935, %v1496
    %v2419 = vmul.f32 %v1958, %v1496
    %v2420 = vmul.f32 %v1981, %v1496
    %v2421 = vmul.f32 %v2004, %v1496
    %v2422 = vmul.f32 %v2027, %v1496
    %v2423 = vmul.f32 %v2050, %v1496
    %v2424 = vmul.f32 %v2073, %v1496
    %v2425 = vmul.f32 %v2096, %v1496
    %v2426 = vmul.f32 %v2119, %v1496
    %v2427 = vmul.f32 %v2142, %v1496
    %v2428 = vmul.f32 %v2165, %v1496
    %v2429 = vmul.f32 %v2188, %v1496
    %v2430 = vmul.f32 %v2211, %v1496
    %v2431 = vmul.f32 %v2234, %v1496
    %v2432 = vmul.f32 %v2257, %v1496
    %v2433 = vmul.f32 %v2280, %v1496
    %v2434 = vmul.f32 %v2303, %v1496
    %v2435 = vmul.f32 %v2326, %v1496
    %v2436 = vmul.f32 %v2349, %v1496
    %v2437 = vmul.f32 %v2372, %v1496
    %v2438 = vld [vmem:[%s2] sm:$0xff]
    %v2439 = vld [vmem:[%s2 + $0x8] sm:$0xff]
    %2441 = vset.pattern.permute.xlu0 0
    %2442 = vperm.xlu0 %2441, %v2438
    %v2443 = vpop.permute.xlu0 %2442
    %2446 = vset.pattern.permute.xlu0 0
    %2447 = vperm.xlu0 %2446, %v2439
    %v2448 = vpop.permute.xlu0 %2447
    %v2450 = vmul.f32 %v2374, %v2443
    %v2451 = vmul.f32 %v2375, %v2443
    %v2452 = vmul.f32 %v2376, %v2443
    %v2453 = vmul.f32 %v2377, %v2443
    %v2454 = vmul.f32 %v2378, %v2443
    %v2455 = vmul.f32 %v2379, %v2443
    %v2456 = vmul.f32 %v2380, %v2443
    %v2457 = vmul.f32 %v2381, %v2443
    %v2458 = vmul.f32 %v2382, %v2443
    %v2459 = vmul.f32 %v2383, %v2443
    %v2460 = vmul.f32 %v2384, %v2443
    %v2461 = vmul.f32 %v2385, %v2443
    %v2462 = vmul.f32 %v2386, %v2443
    %v2463 = vmul.f32 %v2387, %v2443
    %v2464 = vmul.f32 %v2388, %v2443
    %v2465 = vmul.f32 %v2389, %v2443
    %v2466 = vmul.f32 %v2390, %v2443
    %v2467 = vmul.f32 %v2391, %v2443
    %v2468 = vmul.f32 %v2392, %v2443
    %v2469 = vmul.f32 %v2393, %v2443
    %v2470 = vmul.f32 %v2394, %v2443
    %v2471 = vmul.f32 %v2395, %v2443
    %v2472 = vmul.f32 %v2396, %v2443
    %v2473 = vmul.f32 %v2397, %v2443
    %v2474 = vmul.f32 %v2398, %v2443
    %v2475 = vmul.f32 %v2399, %v2443
    %v2476 = vmul.f32 %v2400, %v2443
    %v2477 = vmul.f32 %v2401, %v2443
    %v2478 = vmul.f32 %v2402, %v2443
    %v2479 = vmul.f32 %v2403, %v2443
    %v2480 = vmul.f32 %v2404, %v2443
    %v2481 = vmul.f32 %v2405, %v2443
    %v2482 = vmul.f32 %v2406, %v2448
    %v2483 = vmul.f32 %v2407, %v2448
    %v2484 = vmul.f32 %v2408, %v2448
    %v2485 = vmul.f32 %v2409, %v2448
    %v2486 = vmul.f32 %v2410, %v2448
    %v2487 = vmul.f32 %v2411, %v2448
    %v2488 = vmul.f32 %v2412, %v2448
    %v2489 = vmul.f32 %v2413, %v2448
    %v2490 = vmul.f32 %v2414, %v2448
    %v2491 = vmul.f32 %v2415, %v2448
    %v2492 = vmul.f32 %v2416, %v2448
    %v2493 = vmul.f32 %v2417, %v2448
    %v2494 = vmul.f32 %v2418, %v2448
    %v2495 = vmul.f32 %v2419, %v2448
    %v2496 = vmul.f32 %v2420, %v2448
    %v2497 = vmul.f32 %v2421, %v2448
    %v2498 = vmul.f32 %v2422, %v2448
    %v2499 = vmul.f32 %v2423, %v2448
    %v2500 = vmul.f32 %v2424, %v2448
    %v2501 = vmul.f32 %v2425, %v2448
    %v2502 = vmul.f32 %v2426, %v2448
    %v2503 = vmul.f32 %v2427, %v2448
    %v2504 = vmul.f32 %v2428, %v2448
    %v2505 = vmul.f32 %v2429, %v2448
    %v2506 = vmul.f32 %v2430, %v2448
    %v2507 = vmul.f32 %v2431, %v2448
    %v2508 = vmul.f32 %v2432, %v2448
    %v2509 = vmul.f32 %v2433, %v2448
    %v2510 = vmul.f32 %v2434, %v2448
    %v2511 = vmul.f32 %v2435, %v2448
    %v2512 = vmul.f32 %v2436, %v2448
    %v2513 = vmul.f32 %v2437, %v2448
    %v2514 = vmul.f32 %v2450, %v1567
    %v2515 = vmul.f32 %v2451, %v1567
    %v2516 = vmul.f32 %v2452, %v1567
    %v2517 = vmul.f32 %v2453, %v1567
    %v2518 = vmul.f32 %v2454, %v1567
    %v2519 = vmul.f32 %v2455, %v1567
    %v2520 = vmul.f32 %v2456, %v1567
    %v2521 = vmul.f32 %v2457, %v1567
    %v2522 = vmul.f32 %v2458, %v1567
    %v2523 = vmul.f32 %v2459, %v1567
    %v2524 = vmul.f32 %v2460, %v1567
    %v2525 = vmul.f32 %v2461, %v1567
    %v2526 = vmul.f32 %v2462, %v1567
    %v2527 = vmul.f32 %v2463, %v1567
    %v2528 = vmul.f32 %v2464, %v1567
    %v2529 = vmul.f32 %v2465, %v1567
    %v2530 = vmul.f32 %v2466, %v1567
    %v2531 = vmul.f32 %v2467, %v1567
    %v2532 = vmul.f32 %v2468, %v1567
    %v2533 = vmul.f32 %v2469, %v1567
    %v2534 = vmul.f32 %v2470, %v1567
    %v2535 = vmul.f32 %v2471, %v1567
    %v2536 = vmul.f32 %v2472, %v1567
    %v2537 = vmul.f32 %v2473, %v1567
    %v2538 = vmul.f32 %v2474, %v1567
    %v2539 = vmul.f32 %v2475, %v1567
    %v2540 = vmul.f32 %v2476, %v1567
    %v2541 = vmul.f32 %v2477, %v1567
    %v2542 = vmul.f32 %v2478, %v1567
    %v2543 = vmul.f32 %v2479, %v1567
    %v2544 = vmul.f32 %v2480, %v1567
    %v2545 = vmul.f32 %v2481, %v1567
    %v2546 = vmul.f32 %v2482, %v1567
    %v2547 = vmul.f32 %v2483, %v1567
    %v2548 = vmul.f32 %v2484, %v1567
    %v2549 = vmul.f32 %v2485, %v1567
    %v2550 = vmul.f32 %v2486, %v1567
    %v2551 = vmul.f32 %v2487, %v1567
    %v2552 = vmul.f32 %v2488, %v1567
    %v2553 = vmul.f32 %v2489, %v1567
    %v2554 = vmul.f32 %v2490, %v1567
    %v2555 = vmul.f32 %v2491, %v1567
    %v2556 = vmul.f32 %v2492, %v1567
    %v2557 = vmul.f32 %v2493, %v1567
    %v2558 = vmul.f32 %v2494, %v1567
    %v2559 = vmul.f32 %v2495, %v1567
    %v2560 = vmul.f32 %v2496, %v1567
    %v2561 = vmul.f32 %v2497, %v1567
    %v2562 = vmul.f32 %v2498, %v1567
    %v2563 = vmul.f32 %v2499, %v1567
    %v2564 = vmul.f32 %v2500, %v1567
    %v2565 = vmul.f32 %v2501, %v1567
    %v2566 = vmul.f32 %v2502, %v1567
    %v2567 = vmul.f32 %v2503, %v1567
    %v2568 = vmul.f32 %v2504, %v1567
    %v2569 = vmul.f32 %v2505, %v1567
    %v2570 = vmul.f32 %v2506, %v1567
    %v2571 = vmul.f32 %v2507, %v1567
    %v2572 = vmul.f32 %v2508, %v1567
    %v2573 = vmul.f32 %v2509, %v1567
    %v2574 = vmul.f32 %v2510, %v1567
    %v2575 = vmul.f32 %v2511, %v1567
    %v2576 = vmul.f32 %v2512, %v1567
    %v2577 = vmul.f32 %v2513, %v1567
    %v2578 = vrot.slane %v1568, 4
    %v2579 = vmax.f32 %v1568, %v2578
    %v2580 = vrot.slane %v2579, 2
    %v2581 = vmax.f32 %v2579, %v2580
    %v2582 = vrot.slane %v2581, 1
    %v2583 = vmax.f32 %v2581, %v2582
    %v2584 = vrot.slane %v1569, 4
    %v2585 = vmax.f32 %v1569, %v2584
    %v2586 = vrot.slane %v2585, 2
    %v2587 = vmax.f32 %v2585, %v2586
    %v2588 = vrot.slane %v2587, 1
    %v2589 = vmax.f32 %v2587, %v2588
    %v2590 = vrot.slane %v1570, 4
    %v2591 = vmax.f32 %v1570, %v2590
    %v2592 = vrot.slane %v2591, 2
    %v2593 = vmax.f32 %v2591, %v2592
    %v2594 = vrot.slane %v2593, 1
    %v2595 = vmax.f32 %v2593, %v2594
    %v2596 = vrot.slane %v1571, 4
    %v2597 = vmax.f32 %v1571, %v2596
    %v2598 = vrot.slane %v2597, 2
    %v2599 = vmax.f32 %v2597, %v2598
    %v2600 = vrot.slane %v2599, 1
    %v2601 = vmax.f32 %v2599, %v2600
    %v2602 = vrot.slane %v1572, 4
    %v2603 = vmax.f32 %v1572, %v2602
    %v2604 = vrot.slane %v2603, 2
    %v2605 = vmax.f32 %v2603, %v2604
    %v2606 = vrot.slane %v2605, 1
    %v2607 = vmax.f32 %v2605, %v2606
    %v2608 = vrot.slane %v1573, 4
    %v2609 = vmax.f32 %v1573, %v2608
    %v2610 = vrot.slane %v2609, 2
    %v2611 = vmax.f32 %v2609, %v2610
    %v2612 = vrot.slane %v2611, 1
    %v2613 = vmax.f32 %v2611, %v2612
    %v2614 = vrot.slane %v1574, 4
    %v2615 = vmax.f32 %v1574, %v2614
    %v2616 = vrot.slane %v2615, 2
    %v2617 = vmax.f32 %v2615, %v2616
    %v2618 = vrot.slane %v2617, 1
    %v2619 = vmax.f32 %v2617, %v2618
    %v2620 = vrot.slane %v1575, 4
    %v2621 = vmax.f32 %v1575, %v2620
    %v2622 = vrot.slane %v2621, 2
    %v2623 = vmax.f32 %v2621, %v2622
    %v2624 = vrot.slane %v2623, 1
    %v2625 = vmax.f32 %v2623, %v2624
    %v2626 = vrot.slane %v1576, 4
    %v2627 = vmax.f32 %v1576, %v2626
    %v2628 = vrot.slane %v2627, 2
    %v2629 = vmax.f32 %v2627, %v2628
    %v2630 = vrot.slane %v2629, 1
    %v2631 = vmax.f32 %v2629, %v2630
    %v2632 = vrot.slane %v1577, 4
    %v2633 = vmax.f32 %v1577, %v2632
    %v2634 = vrot.slane %v2633, 2
    %v2635 = vmax.f32 %v2633, %v2634
    %v2636 = vrot.slane %v2635, 1
    %v2637 = vmax.f32 %v2635, %v2636
    %v2638 = vrot.slane %v1578, 4
    %v2639 = vmax.f32 %v1578, %v2638
    %v2640 = vrot.slane %v2639, 2
    %v2641 = vmax.f32 %v2639, %v2640
    %v2642 = vrot.slane %v2641, 1
    %v2643 = vmax.f32 %v2641, %v2642
    %v2644 = vrot.slane %v1579, 4
    %v2645 = vmax.f32 %v1579, %v2644
    %v2646 = vrot.slane %v2645, 2
    %v2647 = vmax.f32 %v2645, %v2646
    %v2648 = vrot.slane %v2647, 1
    %v2649 = vmax.f32 %v2647, %v2648
    %v2650 = vrot.slane %v1580, 4
    %v2651 = vmax.f32 %v1580, %v2650
    %v2652 = vrot.slane %v2651, 2
    %v2653 = vmax.f32 %v2651, %v2652
    %v2654 = vrot.slane %v2653, 1
    %v2655 = vmax.f32 %v2653, %v2654
    %v2656 = vrot.slane %v1581, 4
    %v2657 = vmax.f32 %v1581, %v2656
    %v2658 = vrot.slane %v2657, 2
    %v2659 = vmax.f32 %v2657, %v2658
    %v2660 = vrot.slane %v2659, 1
    %v2661 = vmax.f32 %v2659, %v2660
    %v2662 = vrot.slane %v1582, 4
    %v2663 = vmax.f32 %v1582, %v2662
    %v2664 = vrot.slane %v2663, 2
    %v2665 = vmax.f32 %v2663, %v2664
    %v2666 = vrot.slane %v2665, 1
    %v2667 = vmax.f32 %v2665, %v2666
    %v2668 = vrot.slane %v1583, 4
    %v2669 = vmax.f32 %v1583, %v2668
    %v2670 = vrot.slane %v2669, 2
    %v2671 = vmax.f32 %v2669, %v2670
    %v2672 = vrot.slane %v2671, 1
    %v2673 = vmax.f32 %v2671, %v2672
    %v2674 = vrot.slane %v1584, 4
    %v2675 = vmax.f32 %v1584, %v2674
    %v2676 = vrot.slane %v2675, 2
    %v2677 = vmax.f32 %v2675, %v2676
    %v2678 = vrot.slane %v2677, 1
    %v2679 = vmax.f32 %v2677, %v2678
    %v2680 = vrot.slane %v1585, 4
    %v2681 = vmax.f32 %v1585, %v2680
    %v2682 = vrot.slane %v2681, 2
    %v2683 = vmax.f32 %v2681, %v2682
    %v2684 = vrot.slane %v2683, 1
    %v2685 = vmax.f32 %v2683, %v2684
    %v2686 = vrot.slane %v1586, 4
    %v2687 = vmax.f32 %v1586, %v2686
    %v2688 = vrot.slane %v2687, 2
    %v2689 = vmax.f32 %v2687, %v2688
    %v2690 = vrot.slane %v2689, 1
    %v2691 = vmax.f32 %v2689, %v2690
    %v2692 = vrot.slane %v1587, 4
    %v2693 = vmax.f32 %v1587, %v2692
    %v2694 = vrot.slane %v2693, 2
    %v2695 = vmax.f32 %v2693, %v2694
    %v2696 = vrot.slane %v2695, 1
    %v2697 = vmax.f32 %v2695, %v2696
    %v2698 = vrot.slane %v1588, 4
    %v2699 = vmax.f32 %v1588, %v2698
    %v2700 = vrot.slane %v2699, 2
    %v2701 = vmax.f32 %v2699, %v2700
    %v2702 = vrot.slane %v2701, 1
    %v2703 = vmax.f32 %v2701, %v2702
    %v2704 = vrot.slane %v1589, 4
    %v2705 = vmax.f32 %v1589, %v2704
    %v2706 = vrot.slane %v2705, 2
    %v2707 = vmax.f32 %v2705, %v2706
    %v2708 = vrot.slane %v2707, 1
    %v2709 = vmax.f32 %v2707, %v2708
    %v2710 = vrot.slane %v1590, 4
    %v2711 = vmax.f32 %v1590, %v2710
    %v2712 = vrot.slane %v2711, 2
    %v2713 = vmax.f32 %v2711, %v2712
    %v2714 = vrot.slane %v2713, 1
    %v2715 = vmax.f32 %v2713, %v2714
    %v2716 = vrot.slane %v1591, 4
    %v2717 = vmax.f32 %v1591, %v2716
    %v2718 = vrot.slane %v2717, 2
    %v2719 = vmax.f32 %v2717, %v2718
    %v2720 = vrot.slane %v2719, 1
    %v2721 = vmax.f32 %v2719, %v2720
    %v2722 = vrot.slane %v1592, 4
    %v2723 = vmax.f32 %v1592, %v2722
    %v2724 = vrot.slane %v2723, 2
    %v2725 = vmax.f32 %v2723, %v2724
    %v2726 = vrot.slane %v2725, 1
    %v2727 = vmax.f32 %v2725, %v2726
    %v2728 = vrot.slane %v1593, 4
    %v2729 = vmax.f32 %v1593, %v2728
    %v2730 = vrot.slane %v2729, 2
    %v2731 = vmax.f32 %v2729, %v2730
    %v2732 = vrot.slane %v2731, 1
    %v2733 = vmax.f32 %v2731, %v2732
    %v2734 = vrot.slane %v1594, 4
    %v2735 = vmax.f32 %v1594, %v2734
    %v2736 = vrot.slane %v2735, 2
    %v2737 = vmax.f32 %v2735, %v2736
    %v2738 = vrot.slane %v2737, 1
    %v2739 = vmax.f32 %v2737, %v2738
    %v2740 = vrot.slane %v1595, 4
    %v2741 = vmax.f32 %v1595, %v2740
    %v2742 = vrot.slane %v2741, 2
    %v2743 = vmax.f32 %v2741, %v2742
    %v2744 = vrot.slane %v2743, 1
    %v2745 = vmax.f32 %v2743, %v2744
    %v2746 = vrot.slane %v1596, 4
    %v2747 = vmax.f32 %v1596, %v2746
    %v2748 = vrot.slane %v2747, 2
    %v2749 = vmax.f32 %v2747, %v2748
    %v2750 = vrot.slane %v2749, 1
    %v2751 = vmax.f32 %v2749, %v2750
    %v2752 = vrot.slane %v1597, 4
    %v2753 = vmax.f32 %v1597, %v2752
    %v2754 = vrot.slane %v2753, 2
    %v2755 = vmax.f32 %v2753, %v2754
    %v2756 = vrot.slane %v2755, 1
    %v2757 = vmax.f32 %v2755, %v2756
    %v2758 = vrot.slane %v1598, 4
    %v2759 = vmax.f32 %v1598, %v2758
    %v2760 = vrot.slane %v2759, 2
    %v2761 = vmax.f32 %v2759, %v2760
    %v2762 = vrot.slane %v2761, 1
    %v2763 = vmax.f32 %v2761, %v2762
    %v2764 = vrot.slane %v1599, 4
    %v2765 = vmax.f32 %v1599, %v2764
    %v2766 = vrot.slane %v2765, 2
    %v2767 = vmax.f32 %v2765, %v2766
    %v2768 = vrot.slane %v2767, 1
    %v2769 = vmax.f32 %v2767, %v2768
    %v2770 = vrot.slane %v1600, 4
    %v2771 = vmax.f32 %v1600, %v2770
    %v2772 = vrot.slane %v2771, 2
    %v2773 = vmax.f32 %v2771, %v2772
    %v2774 = vrot.slane %v2773, 1
    %v2775 = vmax.f32 %v2773, %v2774
    %v2776 = vrot.slane %v1601, 4
    %v2777 = vmax.f32 %v1601, %v2776
    %v2778 = vrot.slane %v2777, 2
    %v2779 = vmax.f32 %v2777, %v2778
    %v2780 = vrot.slane %v2779, 1
    %v2781 = vmax.f32 %v2779, %v2780
    %v2782 = vrot.slane %v1602, 4
    %v2783 = vmax.f32 %v1602, %v2782
    %v2784 = vrot.slane %v2783, 2
    %v2785 = vmax.f32 %v2783, %v2784
    %v2786 = vrot.slane %v2785, 1
    %v2787 = vmax.f32 %v2785, %v2786
    %v2788 = vrot.slane %v1603, 4
    %v2789 = vmax.f32 %v1603, %v2788
    %v2790 = vrot.slane %v2789, 2
    %v2791 = vmax.f32 %v2789, %v2790
    %v2792 = vrot.slane %v2791, 1
    %v2793 = vmax.f32 %v2791, %v2792
    %v2794 = vrot.slane %v1604, 4
    %v2795 = vmax.f32 %v1604, %v2794
    %v2796 = vrot.slane %v2795, 2
    %v2797 = vmax.f32 %v2795, %v2796
    %v2798 = vrot.slane %v2797, 1
    %v2799 = vmax.f32 %v2797, %v2798
    %v2800 = vrot.slane %v1605, 4
    %v2801 = vmax.f32 %v1605, %v2800
    %v2802 = vrot.slane %v2801, 2
    %v2803 = vmax.f32 %v2801, %v2802
    %v2804 = vrot.slane %v2803, 1
    %v2805 = vmax.f32 %v2803, %v2804
    %v2806 = vrot.slane %v1606, 4
    %v2807 = vmax.f32 %v1606, %v2806
    %v2808 = vrot.slane %v2807, 2
    %v2809 = vmax.f32 %v2807, %v2808
    %v2810 = vrot.slane %v2809, 1
    %v2811 = vmax.f32 %v2809, %v2810
    %v2812 = vrot.slane %v1607, 4
    %v2813 = vmax.f32 %v1607, %v2812
    %v2814 = vrot.slane %v2813, 2
    %v2815 = vmax.f32 %v2813, %v2814
    %v2816 = vrot.slane %v2815, 1
    %v2817 = vmax.f32 %v2815, %v2816
    %v2818 = vrot.slane %v1608, 4
    %v2819 = vmax.f32 %v1608, %v2818
    %v2820 = vrot.slane %v2819, 2
    %v2821 = vmax.f32 %v2819, %v2820
    %v2822 = vrot.slane %v2821, 1
    %v2823 = vmax.f32 %v2821, %v2822
    %v2824 = vrot.slane %v1609, 4
    %v2825 = vmax.f32 %v1609, %v2824
    %v2826 = vrot.slane %v2825, 2
    %v2827 = vmax.f32 %v2825, %v2826
    %v2828 = vrot.slane %v2827, 1
    %v2829 = vmax.f32 %v2827, %v2828
    %v2830 = vrot.slane %v1610, 4
    %v2831 = vmax.f32 %v1610, %v2830
    %v2832 = vrot.slane %v2831, 2
    %v2833 = vmax.f32 %v2831, %v2832
    %v2834 = vrot.slane %v2833, 1
    %v2835 = vmax.f32 %v2833, %v2834
    %v2836 = vrot.slane %v1611, 4
    %v2837 = vmax.f32 %v1611, %v2836
    %v2838 = vrot.slane %v2837, 2
    %v2839 = vmax.f32 %v2837, %v2838
    %v2840 = vrot.slane %v2839, 1
    %v2841 = vmax.f32 %v2839, %v2840
    %v2842 = vrot.slane %v1612, 4
    %v2843 = vmax.f32 %v1612, %v2842
    %v2844 = vrot.slane %v2843, 2
    %v2845 = vmax.f32 %v2843, %v2844
    %v2846 = vrot.slane %v2845, 1
    %v2847 = vmax.f32 %v2845, %v2846
    %v2848 = vrot.slane %v1613, 4
    %v2849 = vmax.f32 %v1613, %v2848
    %v2850 = vrot.slane %v2849, 2
    %v2851 = vmax.f32 %v2849, %v2850
    %v2852 = vrot.slane %v2851, 1
    %v2853 = vmax.f32 %v2851, %v2852
    %v2854 = vrot.slane %v1614, 4
    %v2855 = vmax.f32 %v1614, %v2854
    %v2856 = vrot.slane %v2855, 2
    %v2857 = vmax.f32 %v2855, %v2856
    %v2858 = vrot.slane %v2857, 1
    %v2859 = vmax.f32 %v2857, %v2858
    %v2860 = vrot.slane %v1615, 4
    %v2861 = vmax.f32 %v1615, %v2860
    %v2862 = vrot.slane %v2861, 2
    %v2863 = vmax.f32 %v2861, %v2862
    %v2864 = vrot.slane %v2863, 1
    %v2865 = vmax.f32 %v2863, %v2864
    %v2866 = vrot.slane %v1616, 4
    %v2867 = vmax.f32 %v1616, %v2866
    %v2868 = vrot.slane %v2867, 2
    %v2869 = vmax.f32 %v2867, %v2868
    %v2870 = vrot.slane %v2869, 1
    %v2871 = vmax.f32 %v2869, %v2870
    %v2872 = vrot.slane %v1617, 4
    %v2873 = vmax.f32 %v1617, %v2872
    %v2874 = vrot.slane %v2873, 2
    %v2875 = vmax.f32 %v2873, %v2874
    %v2876 = vrot.slane %v2875, 1
    %v2877 = vmax.f32 %v2875, %v2876
    %v2878 = vrot.slane %v1618, 4
    %v2879 = vmax.f32 %v1618, %v2878
    %v2880 = vrot.slane %v2879, 2
    %v2881 = vmax.f32 %v2879, %v2880
    %v2882 = vrot.slane %v2881, 1
    %v2883 = vmax.f32 %v2881, %v2882
    %v2884 = vrot.slane %v1619, 4
    %v2885 = vmax.f32 %v1619, %v2884
    %v2886 = vrot.slane %v2885, 2
    %v2887 = vmax.f32 %v2885, %v2886
    %v2888 = vrot.slane %v2887, 1
    %v2889 = vmax.f32 %v2887, %v2888
    %v2890 = vrot.slane %v1620, 4
    %v2891 = vmax.f32 %v1620, %v2890
    %v2892 = vrot.slane %v2891, 2
    %v2893 = vmax.f32 %v2891, %v2892
    %v2894 = vrot.slane %v2893, 1
    %v2895 = vmax.f32 %v2893, %v2894
    %v2896 = vrot.slane %v1621, 4
    %v2897 = vmax.f32 %v1621, %v2896
    %v2898 = vrot.slane %v2897, 2
    %v2899 = vmax.f32 %v2897, %v2898
    %v2900 = vrot.slane %v2899, 1
    %v2901 = vmax.f32 %v2899, %v2900
    %v2902 = vrot.slane %v1622, 4
    %v2903 = vmax.f32 %v1622, %v2902
    %v2904 = vrot.slane %v2903, 2
    %v2905 = vmax.f32 %v2903, %v2904
    %v2906 = vrot.slane %v2905, 1
    %v2907 = vmax.f32 %v2905, %v2906
    %v2908 = vrot.slane %v1623, 4
    %v2909 = vmax.f32 %v1623, %v2908
    %v2910 = vrot.slane %v2909, 2
    %v2911 = vmax.f32 %v2909, %v2910
    %v2912 = vrot.slane %v2911, 1
    %v2913 = vmax.f32 %v2911, %v2912
    %v2914 = vrot.slane %v1624, 4
    %v2915 = vmax.f32 %v1624, %v2914
    %v2916 = vrot.slane %v2915, 2
    %v2917 = vmax.f32 %v2915, %v2916
    %v2918 = vrot.slane %v2917, 1
    %v2919 = vmax.f32 %v2917, %v2918
    %v2920 = vrot.slane %v1625, 4
    %v2921 = vmax.f32 %v1625, %v2920
    %v2922 = vrot.slane %v2921, 2
    %v2923 = vmax.f32 %v2921, %v2922
    %v2924 = vrot.slane %v2923, 1
    %v2925 = vmax.f32 %v2923, %v2924
    %v2926 = vrot.slane %v1626, 4
    %v2927 = vmax.f32 %v1626, %v2926
    %v2928 = vrot.slane %v2927, 2
    %v2929 = vmax.f32 %v2927, %v2928
    %v2930 = vrot.slane %v2929, 1
    %v2931 = vmax.f32 %v2929, %v2930
    %v2932 = vrot.slane %v1627, 4
    %v2933 = vmax.f32 %v1627, %v2932
    %v2934 = vrot.slane %v2933, 2
    %v2935 = vmax.f32 %v2933, %v2934
    %v2936 = vrot.slane %v2935, 1
    %v2937 = vmax.f32 %v2935, %v2936
    %v2938 = vrot.slane %v1628, 4
    %v2939 = vmax.f32 %v1628, %v2938
    %v2940 = vrot.slane %v2939, 2
    %v2941 = vmax.f32 %v2939, %v2940
    %v2942 = vrot.slane %v2941, 1
    %v2943 = vmax.f32 %v2941, %v2942
    %v2944 = vrot.slane %v1629, 4
    %v2945 = vmax.f32 %v1629, %v2944
    %v2946 = vrot.slane %v2945, 2
    %v2947 = vmax.f32 %v2945, %v2946
    %v2948 = vrot.slane %v2947, 1
    %v2949 = vmax.f32 %v2947, %v2948
    %v2950 = vrot.slane %v1630, 4
    %v2951 = vmax.f32 %v1630, %v2950
    %v2952 = vrot.slane %v2951, 2
    %v2953 = vmax.f32 %v2951, %v2952
    %v2954 = vrot.slane %v2953, 1
    %v2955 = vmax.f32 %v2953, %v2954
    %v2956 = vrot.slane %v1631, 4
    %v2957 = vmax.f32 %v1631, %v2956
    %v2958 = vrot.slane %v2957, 2
    %v2959 = vmax.f32 %v2957, %v2958
    %v2960 = vrot.slane %v2959, 1
    %v2961 = vmax.f32 %v2959, %v2960
    %v2962 = vrot.slane %v2514, 4
    %v2963 = vmax.f32 %v2514, %v2962
    %v2964 = vrot.slane %v2963, 2
    %v2965 = vmax.f32 %v2963, %v2964
    %v2966 = vrot.slane %v2965, 1
    %v2967 = vmax.f32 %v2965, %v2966
    %v2968 = vrot.slane %v2515, 4
    %v2969 = vmax.f32 %v2515, %v2968
    %v2970 = vrot.slane %v2969, 2
    %v2971 = vmax.f32 %v2969, %v2970
    %v2972 = vrot.slane %v2971, 1
    %v2973 = vmax.f32 %v2971, %v2972
    %v2974 = vrot.slane %v2516, 4
    %v2975 = vmax.f32 %v2516, %v2974
    %v2976 = vrot.slane %v2975, 2
    %v2977 = vmax.f32 %v2975, %v2976
    %v2978 = vrot.slane %v2977, 1
    %v2979 = vmax.f32 %v2977, %v2978
    %v2980 = vrot.slane %v2517, 4
    %v2981 = vmax.f32 %v2517, %v2980
    %v2982 = vrot.slane %v2981, 2
    %v2983 = vmax.f32 %v2981, %v2982
    %v2984 = vrot.slane %v2983, 1
    %v2985 = vmax.f32 %v2983, %v2984
    %v2986 = vrot.slane %v2518, 4
    %v2987 = vmax.f32 %v2518, %v2986
    %v2988 = vrot.slane %v2987, 2
    %v2989 = vmax.f32 %v2987, %v2988
    %v2990 = vrot.slane %v2989, 1
    %v2991 = vmax.f32 %v2989, %v2990
    %v2992 = vrot.slane %v2519, 4
    %v2993 = vmax.f32 %v2519, %v2992
    %v2994 = vrot.slane %v2993, 2
    %v2995 = vmax.f32 %v2993, %v2994
    %v2996 = vrot.slane %v2995, 1
    %v2997 = vmax.f32 %v2995, %v2996
    %v2998 = vrot.slane %v2520, 4
    %v2999 = vmax.f32 %v2520, %v2998
    %v3000 = vrot.slane %v2999, 2
    %v3001 = vmax.f32 %v2999, %v3000
    %v3002 = vrot.slane %v3001, 1
    %v3003 = vmax.f32 %v3001, %v3002
    %v3004 = vrot.slane %v2521, 4
    %v3005 = vmax.f32 %v2521, %v3004
    %v3006 = vrot.slane %v3005, 2
    %v3007 = vmax.f32 %v3005, %v3006
    %v3008 = vrot.slane %v3007, 1
    %v3009 = vmax.f32 %v3007, %v3008
    %v3010 = vrot.slane %v2522, 4
    %v3011 = vmax.f32 %v2522, %v3010
    %v3012 = vrot.slane %v3011, 2
    %v3013 = vmax.f32 %v3011, %v3012
    %v3014 = vrot.slane %v3013, 1
    %v3015 = vmax.f32 %v3013, %v3014
    %v3016 = vrot.slane %v2523, 4
    %v3017 = vmax.f32 %v2523, %v3016
    %v3018 = vrot.slane %v3017, 2
    %v3019 = vmax.f32 %v3017, %v3018
    %v3020 = vrot.slane %v3019, 1
    %v3021 = vmax.f32 %v3019, %v3020
    %v3022 = vrot.slane %v2524, 4
    %v3023 = vmax.f32 %v2524, %v3022
    %v3024 = vrot.slane %v3023, 2
    %v3025 = vmax.f32 %v3023, %v3024
    %v3026 = vrot.slane %v3025, 1
    %v3027 = vmax.f32 %v3025, %v3026
    %v3028 = vrot.slane %v2525, 4
    %v3029 = vmax.f32 %v2525, %v3028
    %v3030 = vrot.slane %v3029, 2
    %v3031 = vmax.f32 %v3029, %v3030
    %v3032 = vrot.slane %v3031, 1
    %v3033 = vmax.f32 %v3031, %v3032
    %v3034 = vrot.slane %v2526, 4
    %v3035 = vmax.f32 %v2526, %v3034
    %v3036 = vrot.slane %v3035, 2
    %v3037 = vmax.f32 %v3035, %v3036
    %v3038 = vrot.slane %v3037, 1
    %v3039 = vmax.f32 %v3037, %v3038
    %v3040 = vrot.slane %v2527, 4
    %v3041 = vmax.f32 %v2527, %v3040
    %v3042 = vrot.slane %v3041, 2
    %v3043 = vmax.f32 %v3041, %v3042
    %v3044 = vrot.slane %v3043, 1
    %v3045 = vmax.f32 %v3043, %v3044
    %v3046 = vrot.slane %v2528, 4
    %v3047 = vmax.f32 %v2528, %v3046
    %v3048 = vrot.slane %v3047, 2
    %v3049 = vmax.f32 %v3047, %v3048
    %v3050 = vrot.slane %v3049, 1
    %v3051 = vmax.f32 %v3049, %v3050
    %v3052 = vrot.slane %v2529, 4
    %v3053 = vmax.f32 %v2529, %v3052
    %v3054 = vrot.slane %v3053, 2
    %v3055 = vmax.f32 %v3053, %v3054
    %v3056 = vrot.slane %v3055, 1
    %v3057 = vmax.f32 %v3055, %v3056
    %v3058 = vrot.slane %v2530, 4
    %v3059 = vmax.f32 %v2530, %v3058
    %v3060 = vrot.slane %v3059, 2
    %v3061 = vmax.f32 %v3059, %v3060
    %v3062 = vrot.slane %v3061, 1
    %v3063 = vmax.f32 %v3061, %v3062
    %v3064 = vrot.slane %v2531, 4
    %v3065 = vmax.f32 %v2531, %v3064
    %v3066 = vrot.slane %v3065, 2
    %v3067 = vmax.f32 %v3065, %v3066
    %v3068 = vrot.slane %v3067, 1
    %v3069 = vmax.f32 %v3067, %v3068
    %v3070 = vrot.slane %v2532, 4
    %v3071 = vmax.f32 %v2532, %v3070
    %v3072 = vrot.slane %v3071, 2
    %v3073 = vmax.f32 %v3071, %v3072
    %v3074 = vrot.slane %v3073, 1
    %v3075 = vmax.f32 %v3073, %v3074
    %v3076 = vrot.slane %v2533, 4
    %v3077 = vmax.f32 %v2533, %v3076
    %v3078 = vrot.slane %v3077, 2
    %v3079 = vmax.f32 %v3077, %v3078
    %v3080 = vrot.slane %v3079, 1
    %v3081 = vmax.f32 %v3079, %v3080
    %v3082 = vrot.slane %v2534, 4
    %v3083 = vmax.f32 %v2534, %v3082
    %v3084 = vrot.slane %v3083, 2
    %v3085 = vmax.f32 %v3083, %v3084
    %v3086 = vrot.slane %v3085, 1
    %v3087 = vmax.f32 %v3085, %v3086
    %v3088 = vrot.slane %v2535, 4
    %v3089 = vmax.f32 %v2535, %v3088
    %v3090 = vrot.slane %v3089, 2
    %v3091 = vmax.f32 %v3089, %v3090
    %v3092 = vrot.slane %v3091, 1
    %v3093 = vmax.f32 %v3091, %v3092
    %v3094 = vrot.slane %v2536, 4
    %v3095 = vmax.f32 %v2536, %v3094
    %v3096 = vrot.slane %v3095, 2
    %v3097 = vmax.f32 %v3095, %v3096
    %v3098 = vrot.slane %v3097, 1
    %v3099 = vmax.f32 %v3097, %v3098
    %v3100 = vrot.slane %v2537, 4
    %v3101 = vmax.f32 %v2537, %v3100
    %v3102 = vrot.slane %v3101, 2
    %v3103 = vmax.f32 %v3101, %v3102
    %v3104 = vrot.slane %v3103, 1
    %v3105 = vmax.f32 %v3103, %v3104
    %v3106 = vrot.slane %v2538, 4
    %v3107 = vmax.f32 %v2538, %v3106
    %v3108 = vrot.slane %v3107, 2
    %v3109 = vmax.f32 %v3107, %v3108
    %v3110 = vrot.slane %v3109, 1
    %v3111 = vmax.f32 %v3109, %v3110
    %v3112 = vrot.slane %v2539, 4
    %v3113 = vmax.f32 %v2539, %v3112
    %v3114 = vrot.slane %v3113, 2
    %v3115 = vmax.f32 %v3113, %v3114
    %v3116 = vrot.slane %v3115, 1
    %v3117 = vmax.f32 %v3115, %v3116
    %v3118 = vrot.slane %v2540, 4
    %v3119 = vmax.f32 %v2540, %v3118
    %v3120 = vrot.slane %v3119, 2
    %v3121 = vmax.f32 %v3119, %v3120
    %v3122 = vrot.slane %v3121, 1
    %v3123 = vmax.f32 %v3121, %v3122
    %v3124 = vrot.slane %v2541, 4
    %v3125 = vmax.f32 %v2541, %v3124
    %v3126 = vrot.slane %v3125, 2
    %v3127 = vmax.f32 %v3125, %v3126
    %v3128 = vrot.slane %v3127, 1
    %v3129 = vmax.f32 %v3127, %v3128
    %v3130 = vrot.slane %v2542, 4
    %v3131 = vmax.f32 %v2542, %v3130
    %v3132 = vrot.slane %v3131, 2
    %v3133 = vmax.f32 %v3131, %v3132
    %v3134 = vrot.slane %v3133, 1
    %v3135 = vmax.f32 %v3133, %v3134
    %v3136 = vrot.slane %v2543, 4
    %v3137 = vmax.f32 %v2543, %v3136
    %v3138 = vrot.slane %v3137, 2
    %v3139 = vmax.f32 %v3137, %v3138
    %v3140 = vrot.slane %v3139, 1
    %v3141 = vmax.f32 %v3139, %v3140
    %v3142 = vrot.slane %v2544, 4
    %v3143 = vmax.f32 %v2544, %v3142
    %v3144 = vrot.slane %v3143, 2
    %v3145 = vmax.f32 %v3143, %v3144
    %v3146 = vrot.slane %v3145, 1
    %v3147 = vmax.f32 %v3145, %v3146
    %v3148 = vrot.slane %v2545, 4
    %v3149 = vmax.f32 %v2545, %v3148
    %v3150 = vrot.slane %v3149, 2
    %v3151 = vmax.f32 %v3149, %v3150
    %v3152 = vrot.slane %v3151, 1
    %v3153 = vmax.f32 %v3151, %v3152
    %v3154 = vrot.slane %v2546, 4
    %v3155 = vmax.f32 %v2546, %v3154
    %v3156 = vrot.slane %v3155, 2
    %v3157 = vmax.f32 %v3155, %v3156
    %v3158 = vrot.slane %v3157, 1
    %v3159 = vmax.f32 %v3157, %v3158
    %v3160 = vrot.slane %v2547, 4
    %v3161 = vmax.f32 %v2547, %v3160
    %v3162 = vrot.slane %v3161, 2
    %v3163 = vmax.f32 %v3161, %v3162
    %v3164 = vrot.slane %v3163, 1
    %v3165 = vmax.f32 %v3163, %v3164
    %v3166 = vrot.slane %v2548, 4
    %v3167 = vmax.f32 %v2548, %v3166
    %v3168 = vrot.slane %v3167, 2
    %v3169 = vmax.f32 %v3167, %v3168
    %v3170 = vrot.slane %v3169, 1
    %v3171 = vmax.f32 %v3169, %v3170
    %v3172 = vrot.slane %v2549, 4
    %v3173 = vmax.f32 %v2549, %v3172
    %v3174 = vrot.slane %v3173, 2
    %v3175 = vmax.f32 %v3173, %v3174
    %v3176 = vrot.slane %v3175, 1
    %v3177 = vmax.f32 %v3175, %v3176
    %v3178 = vrot.slane %v2550, 4
    %v3179 = vmax.f32 %v2550, %v3178
    %v3180 = vrot.slane %v3179, 2
    %v3181 = vmax.f32 %v3179, %v3180
    %v3182 = vrot.slane %v3181, 1
    %v3183 = vmax.f32 %v3181, %v3182
    %v3184 = vrot.slane %v2551, 4
    %v3185 = vmax.f32 %v2551, %v3184
    %v3186 = vrot.slane %v3185, 2
    %v3187 = vmax.f32 %v3185, %v3186
    %v3188 = vrot.slane %v3187, 1
    %v3189 = vmax.f32 %v3187, %v3188
    %v3190 = vrot.slane %v2552, 4
    %v3191 = vmax.f32 %v2552, %v3190
    %v3192 = vrot.slane %v3191, 2
    %v3193 = vmax.f32 %v3191, %v3192
    %v3194 = vrot.slane %v3193, 1
    %v3195 = vmax.f32 %v3193, %v3194
    %v3196 = vrot.slane %v2553, 4
    %v3197 = vmax.f32 %v2553, %v3196
    %v3198 = vrot.slane %v3197, 2
    %v3199 = vmax.f32 %v3197, %v3198
    %v3200 = vrot.slane %v3199, 1
    %v3201 = vmax.f32 %v3199, %v3200
    %v3202 = vrot.slane %v2554, 4
    %v3203 = vmax.f32 %v2554, %v3202
    %v3204 = vrot.slane %v3203, 2
    %v3205 = vmax.f32 %v3203, %v3204
    %v3206 = vrot.slane %v3205, 1
    %v3207 = vmax.f32 %v3205, %v3206
    %v3208 = vrot.slane %v2555, 4
    %v3209 = vmax.f32 %v2555, %v3208
    %v3210 = vrot.slane %v3209, 2
    %v3211 = vmax.f32 %v3209, %v3210
    %v3212 = vrot.slane %v3211, 1
    %v3213 = vmax.f32 %v3211, %v3212
    %v3214 = vrot.slane %v2556, 4
    %v3215 = vmax.f32 %v2556, %v3214
    %v3216 = vrot.slane %v3215, 2
    %v3217 = vmax.f32 %v3215, %v3216
    %v3218 = vrot.slane %v3217, 1
    %v3219 = vmax.f32 %v3217, %v3218
    %v3220 = vrot.slane %v2557, 4
    %v3221 = vmax.f32 %v2557, %v3220
    %v3222 = vrot.slane %v3221, 2
    %v3223 = vmax.f32 %v3221, %v3222
    %v3224 = vrot.slane %v3223, 1
    %v3225 = vmax.f32 %v3223, %v3224
    %v3226 = vrot.slane %v2558, 4
    %v3227 = vmax.f32 %v2558, %v3226
    %v3228 = vrot.slane %v3227, 2
    %v3229 = vmax.f32 %v3227, %v3228
    %v3230 = vrot.slane %v3229, 1
    %v3231 = vmax.f32 %v3229, %v3230
    %v3232 = vrot.slane %v2559, 4
    %v3233 = vmax.f32 %v2559, %v3232
    %v3234 = vrot.slane %v3233, 2
    %v3235 = vmax.f32 %v3233, %v3234
    %v3236 = vrot.slane %v3235, 1
    %v3237 = vmax.f32 %v3235, %v3236
    %v3238 = vrot.slane %v2560, 4
    %v3239 = vmax.f32 %v2560, %v3238
    %v3240 = vrot.slane %v3239, 2
    %v3241 = vmax.f32 %v3239, %v3240
    %v3242 = vrot.slane %v3241, 1
    %v3243 = vmax.f32 %v3241, %v3242
    %v3244 = vrot.slane %v2561, 4
    %v3245 = vmax.f32 %v2561, %v3244
    %v3246 = vrot.slane %v3245, 2
    %v3247 = vmax.f32 %v3245, %v3246
    %v3248 = vrot.slane %v3247, 1
    %v3249 = vmax.f32 %v3247, %v3248
    %v3250 = vrot.slane %v2562, 4
    %v3251 = vmax.f32 %v2562, %v3250
    %v3252 = vrot.slane %v3251, 2
    %v3253 = vmax.f32 %v3251, %v3252
    %v3254 = vrot.slane %v3253, 1
    %v3255 = vmax.f32 %v3253, %v3254
    %v3256 = vrot.slane %v2563, 4
    %v3257 = vmax.f32 %v2563, %v3256
    %v3258 = vrot.slane %v3257, 2
    %v3259 = vmax.f32 %v3257, %v3258
    %v3260 = vrot.slane %v3259, 1
    %v3261 = vmax.f32 %v3259, %v3260
    %v3262 = vrot.slane %v2564, 4
    %v3263 = vmax.f32 %v2564, %v3262
    %v3264 = vrot.slane %v3263, 2
    %v3265 = vmax.f32 %v3263, %v3264
    %v3266 = vrot.slane %v3265, 1
    %v3267 = vmax.f32 %v3265, %v3266
    %v3268 = vrot.slane %v2565, 4
    %v3269 = vmax.f32 %v2565, %v3268
    %v3270 = vrot.slane %v3269, 2
    %v3271 = vmax.f32 %v3269, %v3270
    %v3272 = vrot.slane %v3271, 1
    %v3273 = vmax.f32 %v3271, %v3272
    %v3274 = vrot.slane %v2566, 4
    %v3275 = vmax.f32 %v2566, %v3274
    %v3276 = vrot.slane %v3275, 2
    %v3277 = vmax.f32 %v3275, %v3276
    %v3278 = vrot.slane %v3277, 1
    %v3279 = vmax.f32 %v3277, %v3278
    %v3280 = vrot.slane %v2567, 4
    %v3281 = vmax.f32 %v2567, %v3280
    %v3282 = vrot.slane %v3281, 2
    %v3283 = vmax.f32 %v3281, %v3282
    %v3284 = vrot.slane %v3283, 1
    %v3285 = vmax.f32 %v3283, %v3284
    %v3286 = vrot.slane %v2568, 4
    %v3287 = vmax.f32 %v2568, %v3286
    %v3288 = vrot.slane %v3287, 2
    %v3289 = vmax.f32 %v3287, %v3288
    %v3290 = vrot.slane %v3289, 1
    %v3291 = vmax.f32 %v3289, %v3290
    %v3292 = vrot.slane %v2569, 4
    %v3293 = vmax.f32 %v2569, %v3292
    %v3294 = vrot.slane %v3293, 2
    %v3295 = vmax.f32 %v3293, %v3294
    %v3296 = vrot.slane %v3295, 1
    %v3297 = vmax.f32 %v3295, %v3296
    %v3298 = vrot.slane %v2570, 4
    %v3299 = vmax.f32 %v2570, %v3298
    %v3300 = vrot.slane %v3299, 2
    %v3301 = vmax.f32 %v3299, %v3300
    %v3302 = vrot.slane %v3301, 1
    %v3303 = vmax.f32 %v3301, %v3302
    %v3304 = vrot.slane %v2571, 4
    %v3305 = vmax.f32 %v2571, %v3304
    %v3306 = vrot.slane %v3305, 2
    %v3307 = vmax.f32 %v3305, %v3306
    %v3308 = vrot.slane %v3307, 1
    %v3309 = vmax.f32 %v3307, %v3308
    %v3310 = vrot.slane %v2572, 4
    %v3311 = vmax.f32 %v2572, %v3310
    %v3312 = vrot.slane %v3311, 2
    %v3313 = vmax.f32 %v3311, %v3312
    %v3314 = vrot.slane %v3313, 1
    %v3315 = vmax.f32 %v3313, %v3314
    %v3316 = vrot.slane %v2573, 4
    %v3317 = vmax.f32 %v2573, %v3316
    %v3318 = vrot.slane %v3317, 2
    %v3319 = vmax.f32 %v3317, %v3318
    %v3320 = vrot.slane %v3319, 1
    %v3321 = vmax.f32 %v3319, %v3320
    %v3322 = vrot.slane %v2574, 4
    %v3323 = vmax.f32 %v2574, %v3322
    %v3324 = vrot.slane %v3323, 2
    %v3325 = vmax.f32 %v3323, %v3324
    %v3326 = vrot.slane %v3325, 1
    %v3327 = vmax.f32 %v3325, %v3326
    %v3328 = vrot.slane %v2575, 4
    %v3329 = vmax.f32 %v2575, %v3328
    %v3330 = vrot.slane %v3329, 2
    %v3331 = vmax.f32 %v3329, %v3330
    %v3332 = vrot.slane %v3331, 1
    %v3333 = vmax.f32 %v3331, %v3332
    %v3334 = vrot.slane %v2576, 4
    %v3335 = vmax.f32 %v2576, %v3334
    %v3336 = vrot.slane %v3335, 2
    %v3337 = vmax.f32 %v3335, %v3336
    %v3338 = vrot.slane %v3337, 1
    %v3339 = vmax.f32 %v3337, %v3338
    %v3340 = vrot.slane %v2577, 4
    %v3341 = vmax.f32 %v2577, %v3340
    %v3342 = vrot.slane %v3341, 2
    %v3343 = vmax.f32 %v3341, %v3342
    %v3344 = vrot.slane %v3343, 1
    %v3345 = vmax.f32 %v3343, %v3344
    %vm3410 = vcmask 1041409
    %v3411 = vsel %vm3410, %v2775, %v2583
    %v3412 = vsel %vm3410, %v2781, %v2589
    %v3413 = vsel %vm3410, %v2787, %v2595
    %v3414 = vsel %vm3410, %v2793, %v2601
    %v3415 = vsel %vm3410, %v2799, %v2607
    %v3416 = vsel %vm3410, %v2805, %v2613
    %v3417 = vsel %vm3410, %v2811, %v2619
    %v3418 = vsel %vm3410, %v2817, %v2625
    %v3419 = vsel %vm3410, %v2823, %v2631
    %v3420 = vsel %vm3410, %v2829, %v2637
    %v3421 = vsel %vm3410, %v2835, %v2643
    %v3422 = vsel %vm3410, %v2841, %v2649
    %v3423 = vsel %vm3410, %v2847, %v2655
    %v3424 = vsel %vm3410, %v2853, %v2661
    %v3425 = vsel %vm3410, %v2859, %v2667
    %v3426 = vsel %vm3410, %v2865, %v2673
    %v3427 = vsel %vm3410, %v2871, %v2679
    %v3428 = vsel %vm3410, %v2877, %v2685
    %v3429 = vsel %vm3410, %v2883, %v2691
    %v3430 = vsel %vm3410, %v2889, %v2697
    %v3431 = vsel %vm3410, %v2895, %v2703
    %v3432 = vsel %vm3410, %v2901, %v2709
    %v3433 = vsel %vm3410, %v2907, %v2715
    %v3434 = vsel %vm3410, %v2913, %v2721
    %v3435 = vsel %vm3410, %v2919, %v2727
    %v3436 = vsel %vm3410, %v2925, %v2733
    %v3437 = vsel %vm3410, %v2931, %v2739
    %v3438 = vsel %vm3410, %v2937, %v2745
    %v3439 = vsel %vm3410, %v2943, %v2751
    %v3440 = vsel %vm3410, %v2949, %v2757
    %v3441 = vsel %vm3410, %v2955, %v2763
    %v3442 = vsel %vm3410, %v2961, %v2769
    %vm3539 = vcmask 1043459
    %v3540 = vsel %vm3539, %v3159, %v2967
    %v3541 = vsel %vm3539, %v3165, %v2973
    %v3542 = vsel %vm3539, %v3171, %v2979
    %v3543 = vsel %vm3539, %v3177, %v2985
    %v3544 = vsel %vm3539, %v3183, %v2991
    %v3545 = vsel %vm3539, %v3189, %v2997
    %v3546 = vsel %vm3539, %v3195, %v3003
    %v3547 = vsel %vm3539, %v3201, %v3009
    %v3548 = vsel %vm3539, %v3207, %v3015
    %v3549 = vsel %vm3539, %v3213, %v3021
    %v3550 = vsel %vm3539, %v3219, %v3027
    %v3551 = vsel %vm3539, %v3225, %v3033
    %v3552 = vsel %vm3539, %v3231, %v3039
    %v3553 = vsel %vm3539, %v3237, %v3045
    %v3554 = vsel %vm3539, %v3243, %v3051
    %v3555 = vsel %vm3539, %v3249, %v3057
    %v3556 = vsel %vm3539, %v3255, %v3063
    %v3557 = vsel %vm3539, %v3261, %v3069
    %v3558 = vsel %vm3539, %v3267, %v3075
    %v3559 = vsel %vm3539, %v3273, %v3081
    %v3560 = vsel %vm3539, %v3279, %v3087
    %v3561 = vsel %vm3539, %v3285, %v3093
    %v3562 = vsel %vm3539, %v3291, %v3099
    %v3563 = vsel %vm3539, %v3297, %v3105
    %v3564 = vsel %vm3539, %v3303, %v3111
    %v3565 = vsel %vm3539, %v3309, %v3117
    %v3566 = vsel %vm3539, %v3315, %v3123
    %v3567 = vsel %vm3539, %v3321, %v3129
    %v3568 = vsel %vm3539, %v3327, %v3135
    %v3569 = vsel %vm3539, %v3333, %v3141
    %v3570 = vsel %vm3539, %v3339, %v3147
    %v3571 = vsel %vm3539, %v3345, %v3153
    %vm3604 = vcmask 1041408
    %v3605 = vsel %vm3604, %v3411, %v3540
    %v3606 = vsel %vm3604, %v3412, %v3541
    %v3607 = vsel %vm3604, %v3413, %v3542
    %v3608 = vsel %vm3604, %v3414, %v3543
    %v3609 = vsel %vm3604, %v3415, %v3544
    %v3610 = vsel %vm3604, %v3416, %v3545
    %v3611 = vsel %vm3604, %v3417, %v3546
    %v3612 = vsel %vm3604, %v3418, %v3547
    %v3613 = vsel %vm3604, %v3419, %v3548
    %v3614 = vsel %vm3604, %v3420, %v3549
    %v3615 = vsel %vm3604, %v3421, %v3550
    %v3616 = vsel %vm3604, %v3422, %v3551
    %v3617 = vsel %vm3604, %v3423, %v3552
    %v3618 = vsel %vm3604, %v3424, %v3553
    %v3619 = vsel %vm3604, %v3425, %v3554
    %v3620 = vsel %vm3604, %v3426, %v3555
    %v3621 = vsel %vm3604, %v3427, %v3556
    %v3622 = vsel %vm3604, %v3428, %v3557
    %v3623 = vsel %vm3604, %v3429, %v3558
    %v3624 = vsel %vm3604, %v3430, %v3559
    %v3625 = vsel %vm3604, %v3431, %v3560
    %v3626 = vsel %vm3604, %v3432, %v3561
    %v3627 = vsel %vm3604, %v3433, %v3562
    %v3628 = vsel %vm3604, %v3434, %v3563
    %v3629 = vsel %vm3604, %v3435, %v3564
    %v3630 = vsel %vm3604, %v3436, %v3565
    %v3631 = vsel %vm3604, %v3437, %v3566
    %v3632 = vsel %vm3604, %v3438, %v3567
    %v3633 = vsel %vm3604, %v3439, %v3568
    %v3634 = vsel %vm3604, %v3440, %v3569
    %v3635 = vsel %vm3604, %v3441, %v3570
    %v3636 = vsel %vm3604, %v3442, %v3571
    %vm3637 = vcmask 1043456
    %v3638 = vsel %vm3637, %v3605, -inf
    %v3639 = vsel %vm3637, %v3606, -inf
    %v3640 = vsel %vm3637, %v3607, -inf
    %v3641 = vsel %vm3637, %v3608, -inf
    %v3642 = vsel %vm3637, %v3609, -inf
    %v3643 = vmax.f32 %v3638, %v3642
    %v3644 = vsel %vm3637, %v3610, -inf
    %v3645 = vmax.f32 %v3639, %v3644
    %v3646 = vsel %vm3637, %v3611, -inf
    %v3647 = vmax.f32 %v3640, %v3646
    %v3648 = vsel %vm3637, %v3612, -inf
    %v3649 = vmax.f32 %v3641, %v3648
    %v3650 = vsel %vm3637, %v3613, -inf
    %v3651 = vmax.f32 %v3643, %v3650
    %v3652 = vsel %vm3637, %v3614, -inf
    %v3653 = vmax.f32 %v3645, %v3652
    %v3654 = vsel %vm3637, %v3615, -inf
    %v3655 = vmax.f32 %v3647, %v3654
    %v3656 = vsel %vm3637, %v3616, -inf
    %v3657 = vmax.f32 %v3649, %v3656
    %v3658 = vsel %vm3637, %v3617, -inf
    %v3659 = vmax.f32 %v3651, %v3658
    %v3660 = vsel %vm3637, %v3618, -inf
    %v3661 = vmax.f32 %v3653, %v3660
    %v3662 = vsel %vm3637, %v3619, -inf
    %v3663 = vmax.f32 %v3655, %v3662
    %v3664 = vsel %vm3637, %v3620, -inf
    %v3665 = vmax.f32 %v3657, %v3664
    %v3666 = vsel %vm3637, %v3621, -inf
    %v3667 = vmax.f32 %v3659, %v3666
    %v3668 = vsel %vm3637, %v3622, -inf
    %v3669 = vmax.f32 %v3661, %v3668
    %v3670 = vsel %vm3637, %v3623, -inf
    %v3671 = vmax.f32 %v3663, %v3670
    %v3672 = vsel %vm3637, %v3624, -inf
    %v3673 = vmax.f32 %v3665, %v3672
    %v3674 = vsel %vm3637, %v3625, -inf
    %v3675 = vmax.f32 %v3667, %v3674
    %v3676 = vsel %vm3637, %v3626, -inf
    %v3677 = vmax.f32 %v3669, %v3676
    %v3678 = vsel %vm3637, %v3627, -inf
    %v3679 = vmax.f32 %v3671, %v3678
    %v3680 = vsel %vm3637, %v3628, -inf
    %v3681 = vmax.f32 %v3673, %v3680
    %v3682 = vsel %vm3637, %v3629, -inf
    %v3683 = vmax.f32 %v3675, %v3682
    %v3684 = vsel %vm3637, %v3630, -inf
    %v3685 = vmax.f32 %v3677, %v3684
    %v3686 = vsel %vm3637, %v3631, -inf
    %v3687 = vmax.f32 %v3679, %v3686
    %v3688 = vsel %vm3637, %v3632, -inf
    %v3689 = vmax.f32 %v3681, %v3688
    %v3690 = vsel %vm3637, %v3633, -inf
    %v3691 = vmax.f32 %v3683, %v3690
    %v3692 = vsel %vm3637, %v3634, -inf
    %v3693 = vmax.f32 %v3685, %v3692
    %v3694 = vsel %vm3637, %v3635, -inf
    %v3695 = vmax.f32 %v3687, %v3694
    %v3696 = vsel %vm3637, %v3636, -inf
    %v3697 = vmax.f32 %v3689, %v3696
    %v3698 = vmax.f32 %v3691, %v3693
    %v3699 = vmax.f32 %v3695, %v3697
    %v3700 = vmax.f32 %v3698, %v3699
    %3701 = vmax.xlane.f32.xlu0 %v3700
    %v3702 = vpop.xlane.xlu0 %3701
    %v3703 = vsub.f32 %v3605, %v3702
    %v3704 = vsub.f32 %v3606, %v3702
    %v3705 = vsub.f32 %v3607, %v3702
    %v3706 = vsub.f32 %v3608, %v3702
    %v3707 = vsub.f32 %v3609, %v3702
    %v3708 = vsub.f32 %v3610, %v3702
    %v3709 = vsub.f32 %v3611, %v3702
    %v3710 = vsub.f32 %v3612, %v3702
    %v3711 = vsub.f32 %v3613, %v3702
    %v3712 = vsub.f32 %v3614, %v3702
    %v3713 = vsub.f32 %v3615, %v3702
    %v3714 = vsub.f32 %v3616, %v3702
    %v3715 = vsub.f32 %v3617, %v3702
    %v3716 = vsub.f32 %v3618, %v3702
    %v3717 = vsub.f32 %v3619, %v3702
    %v3718 = vsub.f32 %v3620, %v3702
    %v3719 = vsub.f32 %v3621, %v3702
    %v3720 = vsub.f32 %v3622, %v3702
    %v3721 = vsub.f32 %v3623, %v3702
    %v3722 = vsub.f32 %v3624, %v3702
    %v3723 = vsub.f32 %v3625, %v3702
    %v3724 = vsub.f32 %v3626, %v3702
    %v3725 = vsub.f32 %v3627, %v3702
    %v3726 = vsub.f32 %v3628, %v3702
    %v3727 = vsub.f32 %v3629, %v3702
    %v3728 = vsub.f32 %v3630, %v3702
    %v3729 = vsub.f32 %v3631, %v3702
    %v3730 = vsub.f32 %v3632, %v3702
    %v3731 = vsub.f32 %v3633, %v3702
    %v3732 = vsub.f32 %v3634, %v3702
    %v3733 = vsub.f32 %v3635, %v3702
    %v3734 = vsub.f32 %v3636, %v3702
    %v3735 = vsub.f32 %v3703, -0.5
    %v3736 = vsub.f32 %v3704, -0.5
    %v3737 = vsub.f32 %v3705, -0.5
    %v3738 = vsub.f32 %v3706, -0.5
    %v3739 = vsub.f32 %v3707, -0.5
    %v3740 = vsub.f32 %v3708, -0.5
    %v3741 = vsub.f32 %v3709, -0.5
    %v3742 = vsub.f32 %v3710, -0.5
    %v3743 = vsub.f32 %v3711, -0.5
    %v3744 = vsub.f32 %v3712, -0.5
    %v3745 = vsub.f32 %v3713, -0.5
    %v3746 = vsub.f32 %v3714, -0.5
    %v3747 = vsub.f32 %v3715, -0.5
    %v3748 = vsub.f32 %v3716, -0.5
    %v3749 = vsub.f32 %v3717, -0.5
    %v3750 = vsub.f32 %v3718, -0.5
    %v3751 = vsub.f32 %v3719, -0.5
    %v3752 = vsub.f32 %v3720, -0.5
    %v3753 = vsub.f32 %v3721, -0.5
    %v3754 = vsub.f32 %v3722, -0.5
    %v3755 = vsub.f32 %v3723, -0.5
    %v3756 = vsub.f32 %v3724, -0.5
    %v3757 = vsub.f32 %v3725, -0.5
    %v3758 = vsub.f32 %v3726, -0.5
    %v3759 = vsub.f32 %v3727, -0.5
    %v3760 = vsub.f32 %v3728, -0.5
    %v3761 = vsub.f32 %v3729, -0.5
    %v3762 = vsub.f32 %v3730, -0.5
    %v3763 = vsub.f32 %v3731, -0.5
    %v3764 = vsub.f32 %v3732, -0.5
    %v3765 = vsub.f32 %v3733, -0.5
    %v3766 = vsub.f32 %v3734, -0.5
    %v3767 = vmax.f32 %v3735, 0.0
    %v3768 = vmax.f32 %v3736, 0.0
    %v3769 = vmax.f32 %v3737, 0.0
    %v3770 = vmax.f32 %v3738, 0.0
    %v3771 = vmax.f32 %v3739, 0.0
    %v3772 = vmax.f32 %v3740, 0.0
    %v3773 = vmax.f32 %v3741, 0.0
    %v3774 = vmax.f32 %v3742, 0.0
    %v3775 = vmax.f32 %v3743, 0.0
    %v3776 = vmax.f32 %v3744, 0.0
    %v3777 = vmax.f32 %v3745, 0.0
    %v3778 = vmax.f32 %v3746, 0.0
    %v3779 = vmax.f32 %v3747, 0.0
    %v3780 = vmax.f32 %v3748, 0.0
    %v3781 = vmax.f32 %v3749, 0.0
    %v3782 = vmax.f32 %v3750, 0.0
    %v3783 = vmax.f32 %v3751, 0.0
    %v3784 = vmax.f32 %v3752, 0.0
    %v3785 = vmax.f32 %v3753, 0.0
    %v3786 = vmax.f32 %v3754, 0.0
    %v3787 = vmax.f32 %v3755, 0.0
    %v3788 = vmax.f32 %v3756, 0.0
    %v3789 = vmax.f32 %v3757, 0.0
    %v3790 = vmax.f32 %v3758, 0.0
    %v3791 = vmax.f32 %v3759, 0.0
    %v3792 = vmax.f32 %v3760, 0.0
    %v3793 = vmax.f32 %v3761, 0.0
    %v3794 = vmax.f32 %v3762, 0.0
    %v3795 = vmax.f32 %v3763, 0.0
    %v3796 = vmax.f32 %v3764, 0.0
    %v3797 = vmax.f32 %v3765, 0.0
    %v3798 = vmax.f32 %v3766, 0.0
    %v3799 = vsel %vm3637, %v3767, 0.0
    %v3800 = vsel %vm3637, %v3768, 0.0
    %v3801 = vadd.f32 %v3799, %v3800
    %v3802 = vsel %vm3637, %v3769, 0.0
    %v3803 = vadd.f32 %v3801, %v3802
    %v3804 = vsel %vm3637, %v3770, 0.0
    %v3805 = vadd.f32 %v3803, %v3804
    %v3806 = vsel %vm3637, %v3771, 0.0
    %v3807 = vadd.f32 %v3805, %v3806
    %v3808 = vsel %vm3637, %v3772, 0.0
    %v3809 = vadd.f32 %v3807, %v3808
    %v3810 = vsel %vm3637, %v3773, 0.0
    %v3811 = vadd.f32 %v3809, %v3810
    %v3812 = vsel %vm3637, %v3774, 0.0
    %v3813 = vadd.f32 %v3811, %v3812
    %v3814 = vsel %vm3637, %v3775, 0.0
    %v3815 = vadd.f32 %v3813, %v3814
    %v3816 = vsel %vm3637, %v3776, 0.0
    %v3817 = vadd.f32 %v3815, %v3816
    %v3818 = vsel %vm3637, %v3777, 0.0
    %v3819 = vadd.f32 %v3817, %v3818
    %v3820 = vsel %vm3637, %v3778, 0.0
    %v3821 = vadd.f32 %v3819, %v3820
    %v3822 = vsel %vm3637, %v3779, 0.0
    %v3823 = vadd.f32 %v3821, %v3822
    %v3824 = vsel %vm3637, %v3780, 0.0
    %v3825 = vadd.f32 %v3823, %v3824
    %v3826 = vsel %vm3637, %v3781, 0.0
    %v3827 = vadd.f32 %v3825, %v3826
    %v3828 = vsel %vm3637, %v3782, 0.0
    %v3829 = vadd.f32 %v3827, %v3828
    %v3830 = vsel %vm3637, %v3783, 0.0
    %v3831 = vadd.f32 %v3829, %v3830
    %v3832 = vsel %vm3637, %v3784, 0.0
    %v3833 = vadd.f32 %v3831, %v3832
    %v3834 = vsel %vm3637, %v3785, 0.0
    %v3835 = vadd.f32 %v3833, %v3834
    %v3836 = vsel %vm3637, %v3786, 0.0
    %v3837 = vadd.f32 %v3835, %v3836
    %v3838 = vsel %vm3637, %v3787, 0.0
    %v3839 = vadd.f32 %v3837, %v3838
    %v3840 = vsel %vm3637, %v3788, 0.0
    %v3841 = vadd.f32 %v3839, %v3840
    %v3842 = vsel %vm3637, %v3789, 0.0
    %v3843 = vadd.f32 %v3841, %v3842
    %v3844 = vsel %vm3637, %v3790, 0.0
    %v3845 = vadd.f32 %v3843, %v3844
    %v3846 = vsel %vm3637, %v3791, 0.0
    %v3847 = vadd.f32 %v3845, %v3846
    %v3848 = vsel %vm3637, %v3792, 0.0
    %v3849 = vadd.f32 %v3847, %v3848
    %v3850 = vsel %vm3637, %v3793, 0.0
    %v3851 = vadd.f32 %v3849, %v3850
    %v3852 = vsel %vm3637, %v3794, 0.0
    %v3853 = vadd.f32 %v3851, %v3852
    %v3854 = vsel %vm3637, %v3795, 0.0
    %v3855 = vadd.f32 %v3853, %v3854
    %v3856 = vsel %vm3637, %v3796, 0.0
    %v3857 = vadd.f32 %v3855, %v3856
    %v3858 = vsel %vm3637, %v3797, 0.0
    %v3859 = vadd.f32 %v3857, %v3858
    %v3860 = vsel %vm3637, %v3798, 0.0
    %v3861 = vadd.f32 %v3859, %v3860
    %3862 = vadd.xlane.f32.xlu0 %v3861
    %v3863 = vpop.xlane.xlu0 %3862
    %vm3864 = vcmp.ge.f32.partialorder %v3863, 1.0
    %v3865 = vsel %vm3864, -0.5, -1.0
    %v3866 = vsel %vm3864, 0.0, -0.5
    %v3867 = vadd.f32 %v3865, %v3866
    %v3868 = vmul.f32 %v3867, 0.5
    %v3869 = vsub.f32 %v3703, %v3868
    %v3870 = vsub.f32 %v3704, %v3868
    %v3871 = vsub.f32 %v3705, %v3868
    %v3872 = vsub.f32 %v3706, %v3868
    %v3873 = vsub.f32 %v3707, %v3868
    %v3874 = vsub.f32 %v3708, %v3868
    %v3875 = vsub.f32 %v3709, %v3868
    %v3876 = vsub.f32 %v3710, %v3868
    %v3877 = vsub.f32 %v3711, %v3868
    %v3878 = vsub.f32 %v3712, %v3868
    %v3879 = vsub.f32 %v3713, %v3868
    %v3880 = vsub.f32 %v3714, %v3868
    %v3881 = vsub.f32 %v3715, %v3868
    %v3882 = vsub.f32 %v3716, %v3868
    %v3883 = vsub.f32 %v3717, %v3868
    %v3884 = vsub.f32 %v3718, %v3868
    %v3885 = vsub.f32 %v3719, %v3868
    %v3886 = vsub.f32 %v3720, %v3868
    %v3887 = vsub.f32 %v3721, %v3868
    %v3888 = vsub.f32 %v3722, %v3868
    %v3889 = vsub.f32 %v3723, %v3868
    %v3890 = vsub.f32 %v3724, %v3868
    %v3891 = vsub.f32 %v3725, %v3868
    %v3892 = vsub.f32 %v3726, %v3868
    %v3893 = vsub.f32 %v3727, %v3868
    %v3894 = vsub.f32 %v3728, %v3868
    %v3895 = vsub.f32 %v3729, %v3868
    %v3896 = vsub.f32 %v3730, %v3868
    %v3897 = vsub.f32 %v3731, %v3868
    %v3898 = vsub.f32 %v3732, %v3868
    %v3899 = vsub.f32 %v3733, %v3868
    %v3900 = vsub.f32 %v3734, %v3868
    %v3901 = vmax.f32 %v3869, 0.0
    %v3902 = vmax.f32 %v3870, 0.0
    %v3903 = vmax.f32 %v3871, 0.0
    %v3904 = vmax.f32 %v3872, 0.0
    %v3905 = vmax.f32 %v3873, 0.0
    %v3906 = vmax.f32 %v3874, 0.0
    %v3907 = vmax.f32 %v3875, 0.0
    %v3908 = vmax.f32 %v3876, 0.0
    %v3909 = vmax.f32 %v3877, 0.0
    %v3910 = vmax.f32 %v3878, 0.0
    %v3911 = vmax.f32 %v3879, 0.0
    %v3912 = vmax.f32 %v3880, 0.0
    %v3913 = vmax.f32 %v3881, 0.0
    %v3914 = vmax.f32 %v3882, 0.0
    %v3915 = vmax.f32 %v3883, 0.0
    %v3916 = vmax.f32 %v3884, 0.0
    %v3917 = vmax.f32 %v3885, 0.0
    %v3918 = vmax.f32 %v3886, 0.0
    %v3919 = vmax.f32 %v3887, 0.0
    %v3920 = vmax.f32 %v3888, 0.0
    %v3921 = vmax.f32 %v3889, 0.0
    %v3922 = vmax.f32 %v3890, 0.0
    %v3923 = vmax.f32 %v3891, 0.0
    %v3924 = vmax.f32 %v3892, 0.0
    %v3925 = vmax.f32 %v3893, 0.0
    %v3926 = vmax.f32 %v3894, 0.0
    %v3927 = vmax.f32 %v3895, 0.0
    %v3928 = vmax.f32 %v3896, 0.0
    %v3929 = vmax.f32 %v3897, 0.0
    %v3930 = vmax.f32 %v3898, 0.0
    %v3931 = vmax.f32 %v3899, 0.0
    %v3932 = vmax.f32 %v3900, 0.0
    %v3933 = vsel %vm3637, %v3901, 0.0
    %v3934 = vsel %vm3637, %v3902, 0.0
    %v3935 = vadd.f32 %v3933, %v3934
    %v3936 = vsel %vm3637, %v3903, 0.0
    %v3937 = vadd.f32 %v3935, %v3936
    %v3938 = vsel %vm3637, %v3904, 0.0
    %v3939 = vadd.f32 %v3937, %v3938
    %v3940 = vsel %vm3637, %v3905, 0.0
    %v3941 = vadd.f32 %v3939, %v3940
    %v3942 = vsel %vm3637, %v3906, 0.0
    %v3943 = vadd.f32 %v3941, %v3942
    %v3944 = vsel %vm3637, %v3907, 0.0
    %v3945 = vadd.f32 %v3943, %v3944
    %v3946 = vsel %vm3637, %v3908, 0.0
    %v3947 = vadd.f32 %v3945, %v3946
    %v3948 = vsel %vm3637, %v3909, 0.0
    %v3949 = vadd.f32 %v3947, %v3948
    %v3950 = vsel %vm3637, %v3910, 0.0
    %v3951 = vadd.f32 %v3949, %v3950
    %v3952 = vsel %vm3637, %v3911, 0.0
    %v3953 = vadd.f32 %v3951, %v3952
    %v3954 = vsel %vm3637, %v3912, 0.0
    %v3955 = vadd.f32 %v3953, %v3954
    %v3956 = vsel %vm3637, %v3913, 0.0
    %v3957 = vadd.f32 %v3955, %v3956
    %v3958 = vsel %vm3637, %v3914, 0.0
    %v3959 = vadd.f32 %v3957, %v3958
    %v3960 = vsel %vm3637, %v3915, 0.0
    %v3961 = vadd.f32 %v3959, %v3960
    %v3962 = vsel %vm3637, %v3916, 0.0
    %v3963 = vadd.f32 %v3961, %v3962
    %v3964 = vsel %vm3637, %v3917, 0.0
    %v3965 = vadd.f32 %v3963, %v3964
    %v3966 = vsel %vm3637, %v3918, 0.0
    %v3967 = vadd.f32 %v3965, %v3966
    %v3968 = vsel %vm3637, %v3919, 0.0
    %v3969 = vadd.f32 %v3967, %v3968
    %v3970 = vsel %vm3637, %v3920, 0.0
    %v3971 = vadd.f32 %v3969, %v3970
    %v3972 = vsel %vm3637, %v3921, 0.0
    %v3973 = vadd.f32 %v3971, %v3972
    %v3974 = vsel %vm3637, %v3922, 0.0
    %v3975 = vadd.f32 %v3973, %v3974
    %v3976 = vsel %vm3637, %v3923, 0.0
    %v3977 = vadd.f32 %v3975, %v3976
    %v3978 = vsel %vm3637, %v3924, 0.0
    %v3979 = vadd.f32 %v3977, %v3978
    %v3980 = vsel %vm3637, %v3925, 0.0
    %v3981 = vadd.f32 %v3979, %v3980
    %v3982 = vsel %vm3637, %v3926, 0.0
    %v3983 = vadd.f32 %v3981, %v3982
    %v3984 = vsel %vm3637, %v3927, 0.0
    %v3985 = vadd.f32 %v3983, %v3984
    %v3986 = vsel %vm3637, %v3928, 0.0
    %v3987 = vadd.f32 %v3985, %v3986
    %v3988 = vsel %vm3637, %v3929, 0.0
    %v3989 = vadd.f32 %v3987, %v3988
    %v3990 = vsel %vm3637, %v3930, 0.0
    %v3991 = vadd.f32 %v3989, %v3990
    %v3992 = vsel %vm3637, %v3931, 0.0
    %v3993 = vadd.f32 %v3991, %v3992
    %v3994 = vsel %vm3637, %v3932, 0.0
    %v3995 = vadd.f32 %v3993, %v3994
    %3996 = vadd.xlane.f32.xlu0 %v3995
    %v3997 = vpop.xlane.xlu0 %3996
    %vm3998 = vcmp.ge.f32.partialorder %v3997, 1.0
    %v3999 = vsel %vm3998, %v3868, %v3865
    %v4000 = vsel %vm3998, %v3866, %v3868
    %v4001 = vadd.f32 %v3999, %v4000
    %v4002 = vmul.f32 %v4001, 0.5
    %v4003 = vsub.f32 %v3703, %v4002
    %v4004 = vsub.f32 %v3704, %v4002
    %v4005 = vsub.f32 %v3705, %v4002
    %v4006 = vsub.f32 %v3706, %v4002
    %v4007 = vsub.f32 %v3707, %v4002
    %v4008 = vsub.f32 %v3708, %v4002
    %v4009 = vsub.f32 %v3709, %v4002
    %v4010 = vsub.f32 %v3710, %v4002
    %v4011 = vsub.f32 %v3711, %v4002
    %v4012 = vsub.f32 %v3712, %v4002
    %v4013 = vsub.f32 %v3713, %v4002
    %v4014 = vsub.f32 %v3714, %v4002
    %v4015 = vsub.f32 %v3715, %v4002
    %v4016 = vsub.f32 %v3716, %v4002
    %v4017 = vsub.f32 %v3717, %v4002
    %v4018 = vsub.f32 %v3718, %v4002
    %v4019 = vsub.f32 %v3719, %v4002
    %v4020 = vsub.f32 %v3720, %v4002
    %v4021 = vsub.f32 %v3721, %v4002
    %v4022 = vsub.f32 %v3722, %v4002
    %v4023 = vsub.f32 %v3723, %v4002
    %v4024 = vsub.f32 %v3724, %v4002
    %v4025 = vsub.f32 %v3725, %v4002
    %v4026 = vsub.f32 %v3726, %v4002
    %v4027 = vsub.f32 %v3727, %v4002
    %v4028 = vsub.f32 %v3728, %v4002
    %v4029 = vsub.f32 %v3729, %v4002
    %v4030 = vsub.f32 %v3730, %v4002
    %v4031 = vsub.f32 %v3731, %v4002
    %v4032 = vsub.f32 %v3732, %v4002
    %v4033 = vsub.f32 %v3733, %v4002
    %v4034 = vsub.f32 %v3734, %v4002
    %v4035 = vmax.f32 %v4003, 0.0
    %v4036 = vmax.f32 %v4004, 0.0
    %v4037 = vmax.f32 %v4005, 0.0
    %v4038 = vmax.f32 %v4006, 0.0
    %v4039 = vmax.f32 %v4007, 0.0
    %v4040 = vmax.f32 %v4008, 0.0
    %v4041 = vmax.f32 %v4009, 0.0
    %v4042 = vmax.f32 %v4010, 0.0
    %v4043 = vmax.f32 %v4011, 0.0
    %v4044 = vmax.f32 %v4012, 0.0
    %v4045 = vmax.f32 %v4013, 0.0
    %v4046 = vmax.f32 %v4014, 0.0
    %v4047 = vmax.f32 %v4015, 0.0
    %v4048 = vmax.f32 %v4016, 0.0
    %v4049 = vmax.f32 %v4017, 0.0
    %v4050 = vmax.f32 %v4018, 0.0
    %v4051 = vmax.f32 %v4019, 0.0
    %v4052 = vmax.f32 %v4020, 0.0
    %v4053 = vmax.f32 %v4021, 0.0
    %v4054 = vmax.f32 %v4022, 0.0
    %v4055 = vmax.f32 %v4023, 0.0
    %v4056 = vmax.f32 %v4024, 0.0
    %v4057 = vmax.f32 %v4025, 0.0
    %v4058 = vmax.f32 %v4026, 0.0
    %v4059 = vmax.f32 %v4027, 0.0
    %v4060 = vmax.f32 %v4028, 0.0
    %v4061 = vmax.f32 %v4029, 0.0
    %v4062 = vmax.f32 %v4030, 0.0
    %v4063 = vmax.f32 %v4031, 0.0
    %v4064 = vmax.f32 %v4032, 0.0
    %v4065 = vmax.f32 %v4033, 0.0
    %v4066 = vmax.f32 %v4034, 0.0
    %v4067 = vsel %vm3637, %v4035, 0.0
    %v4068 = vsel %vm3637, %v4036, 0.0
    %v4069 = vadd.f32 %v4067, %v4068
    %v4070 = vsel %vm3637, %v4037, 0.0
    %v4071 = vadd.f32 %v4069, %v4070
    %v4072 = vsel %vm3637, %v4038, 0.0
    %v4073 = vadd.f32 %v4071, %v4072
    %v4074 = vsel %vm3637, %v4039, 0.0
    %v4075 = vadd.f32 %v4073, %v4074
    %v4076 = vsel %vm3637, %v4040, 0.0
    %v4077 = vadd.f32 %v4075, %v4076
    %v4078 = vsel %vm3637, %v4041, 0.0
    %v4079 = vadd.f32 %v4077, %v4078
    %v4080 = vsel %vm3637, %v4042, 0.0
    %v4081 = vadd.f32 %v4079, %v4080
    %v4082 = vsel %vm3637, %v4043, 0.0
    %v4083 = vadd.f32 %v4081, %v4082
    %v4084 = vsel %vm3637, %v4044, 0.0
    %v4085 = vadd.f32 %v4083, %v4084
    %v4086 = vsel %vm3637, %v4045, 0.0
    %v4087 = vadd.f32 %v4085, %v4086
    %v4088 = vsel %vm3637, %v4046, 0.0
    %v4089 = vadd.f32 %v4087, %v4088
    %v4090 = vsel %vm3637, %v4047, 0.0
    %v4091 = vadd.f32 %v4089, %v4090
    %v4092 = vsel %vm3637, %v4048, 0.0
    %v4093 = vadd.f32 %v4091, %v4092
    %v4094 = vsel %vm3637, %v4049, 0.0
    %v4095 = vadd.f32 %v4093, %v4094
    %v4096 = vsel %vm3637, %v4050, 0.0
    %v4097 = vadd.f32 %v4095, %v4096
    %v4098 = vsel %vm3637, %v4051, 0.0
    %v4099 = vadd.f32 %v4097, %v4098
    %v4100 = vsel %vm3637, %v4052, 0.0
    %v4101 = vadd.f32 %v4099, %v4100
    %v4102 = vsel %vm3637, %v4053, 0.0
    %v4103 = vadd.f32 %v4101, %v4102
    %v4104 = vsel %vm3637, %v4054, 0.0
    %v4105 = vadd.f32 %v4103, %v4104
    %v4106 = vsel %vm3637, %v4055, 0.0
    %v4107 = vadd.f32 %v4105, %v4106
    %v4108 = vsel %vm3637, %v4056, 0.0
    %v4109 = vadd.f32 %v4107, %v4108
    %v4110 = vsel %vm3637, %v4057, 0.0
    %v4111 = vadd.f32 %v4109, %v4110
    %v4112 = vsel %vm3637, %v4058, 0.0
    %v4113 = vadd.f32 %v4111, %v4112
    %v4114 = vsel %vm3637, %v4059, 0.0
    %v4115 = vadd.f32 %v4113, %v4114
    %v4116 = vsel %vm3637, %v4060, 0.0
    %v4117 = vadd.f32 %v4115, %v4116
    %v4118 = vsel %vm3637, %v4061, 0.0
    %v4119 = vadd.f32 %v4117, %v4118
    %v4120 = vsel %vm3637, %v4062, 0.0
    %v4121 = vadd.f32 %v4119, %v4120
    %v4122 = vsel %vm3637, %v4063, 0.0
    %v4123 = vadd.f32 %v4121, %v4122
    %v4124 = vsel %vm3637, %v4064, 0.0
    %v4125 = vadd.f32 %v4123, %v4124
    %v4126 = vsel %vm3637, %v4065, 0.0
    %v4127 = vadd.f32 %v4125, %v4126
    %v4128 = vsel %vm3637, %v4066, 0.0
    %v4129 = vadd.f32 %v4127, %v4128
    %4130 = vadd.xlane.f32.xlu0 %v4129
    %v4131 = vpop.xlane.xlu0 %4130
    %vm4132 = vcmp.ge.f32.partialorder %v4131, 1.0
    %v4133 = vsel %vm4132, %v4002, %v3999
    %v4134 = vsel %vm4132, %v4000, %v4002
    %v4135 = vadd.f32 %v4133, %v4134
    %v4136 = vmul.f32 %v4135, 0.5
    %v4137 = vsub.f32 %v3703, %v4136
    %v4138 = vsub.f32 %v3704, %v4136
    %v4139 = vsub.f32 %v3705, %v4136
    %v4140 = vsub.f32 %v3706, %v4136
    %v4141 = vsub.f32 %v3707, %v4136
    %v4142 = vsub.f32 %v3708, %v4136
    %v4143 = vsub.f32 %v3709, %v4136
    %v4144 = vsub.f32 %v3710, %v4136
    %v4145 = vsub.f32 %v3711, %v4136
    %v4146 = vsub.f32 %v3712, %v4136
    %v4147 = vsub.f32 %v3713, %v4136
    %v4148 = vsub.f32 %v3714, %v4136
    %v4149 = vsub.f32 %v3715, %v4136
    %v4150 = vsub.f32 %v3716, %v4136
    %v4151 = vsub.f32 %v3717, %v4136
    %v4152 = vsub.f32 %v3718, %v4136
    %v4153 = vsub.f32 %v3719, %v4136
    %v4154 = vsub.f32 %v3720, %v4136
    %v4155 = vsub.f32 %v3721, %v4136
    %v4156 = vsub.f32 %v3722, %v4136
    %v4157 = vsub.f32 %v3723, %v4136
    %v4158 = vsub.f32 %v3724, %v4136
    %v4159 = vsub.f32 %v3725, %v4136
    %v4160 = vsub.f32 %v3726, %v4136
    %v4161 = vsub.f32 %v3727, %v4136
    %v4162 = vsub.f32 %v3728, %v4136
    %v4163 = vsub.f32 %v3729, %v4136
    %v4164 = vsub.f32 %v3730, %v4136
    %v4165 = vsub.f32 %v3731, %v4136
    %v4166 = vsub.f32 %v3732, %v4136
    %v4167 = vsub.f32 %v3733, %v4136
    %v4168 = vsub.f32 %v3734, %v4136
    %v4169 = vmax.f32 %v4137, 0.0
    %v4170 = vmax.f32 %v4138, 0.0
    %v4171 = vmax.f32 %v4139, 0.0
    %v4172 = vmax.f32 %v4140, 0.0
    %v4173 = vmax.f32 %v4141, 0.0
    %v4174 = vmax.f32 %v4142, 0.0
    %v4175 = vmax.f32 %v4143, 0.0
    %v4176 = vmax.f32 %v4144, 0.0
    %v4177 = vmax.f32 %v4145, 0.0
    %v4178 = vmax.f32 %v4146, 0.0
    %v4179 = vmax.f32 %v4147, 0.0
    %v4180 = vmax.f32 %v4148, 0.0
    %v4181 = vmax.f32 %v4149, 0.0
    %v4182 = vmax.f32 %v4150, 0.0
    %v4183 = vmax.f32 %v4151, 0.0
    %v4184 = vmax.f32 %v4152, 0.0
    %v4185 = vmax.f32 %v4153, 0.0
    %v4186 = vmax.f32 %v4154, 0.0
    %v4187 = vmax.f32 %v4155, 0.0
    %v4188 = vmax.f32 %v4156, 0.0
    %v4189 = vmax.f32 %v4157, 0.0
    %v4190 = vmax.f32 %v4158, 0.0
    %v4191 = vmax.f32 %v4159, 0.0
    %v4192 = vmax.f32 %v4160, 0.0
    %v4193 = vmax.f32 %v4161, 0.0
    %v4194 = vmax.f32 %v4162, 0.0
    %v4195 = vmax.f32 %v4163, 0.0
    %v4196 = vmax.f32 %v4164, 0.0
    %v4197 = vmax.f32 %v4165, 0.0
    %v4198 = vmax.f32 %v4166, 0.0
    %v4199 = vmax.f32 %v4167, 0.0
    %v4200 = vmax.f32 %v4168, 0.0
    %v4201 = vsel %vm3637, %v4169, 0.0
    %v4202 = vsel %vm3637, %v4170, 0.0
    %v4203 = vadd.f32 %v4201, %v4202
    %v4204 = vsel %vm3637, %v4171, 0.0
    %v4205 = vadd.f32 %v4203, %v4204
    %v4206 = vsel %vm3637, %v4172, 0.0
    %v4207 = vadd.f32 %v4205, %v4206
    %v4208 = vsel %vm3637, %v4173, 0.0
    %v4209 = vadd.f32 %v4207, %v4208
    %v4210 = vsel %vm3637, %v4174, 0.0
    %v4211 = vadd.f32 %v4209, %v4210
    %v4212 = vsel %vm3637, %v4175, 0.0
    %v4213 = vadd.f32 %v4211, %v4212
    %v4214 = vsel %vm3637, %v4176, 0.0
    %v4215 = vadd.f32 %v4213, %v4214
    %v4216 = vsel %vm3637, %v4177, 0.0
    %v4217 = vadd.f32 %v4215, %v4216
    %v4218 = vsel %vm3637, %v4178, 0.0
    %v4219 = vadd.f32 %v4217, %v4218
    %v4220 = vsel %vm3637, %v4179, 0.0
    %v4221 = vadd.f32 %v4219, %v4220
    %v4222 = vsel %vm3637, %v4180, 0.0
    %v4223 = vadd.f32 %v4221, %v4222
    %v4224 = vsel %vm3637, %v4181, 0.0
    %v4225 = vadd.f32 %v4223, %v4224
    %v4226 = vsel %vm3637, %v4182, 0.0
    %v4227 = vadd.f32 %v4225, %v4226
    %v4228 = vsel %vm3637, %v4183, 0.0
    %v4229 = vadd.f32 %v4227, %v4228
    %v4230 = vsel %vm3637, %v4184, 0.0
    %v4231 = vadd.f32 %v4229, %v4230
    %v4232 = vsel %vm3637, %v4185, 0.0
    %v4233 = vadd.f32 %v4231, %v4232
    %v4234 = vsel %vm3637, %v4186, 0.0
    %v4235 = vadd.f32 %v4233, %v4234
    %v4236 = vsel %vm3637, %v4187, 0.0
    %v4237 = vadd.f32 %v4235, %v4236
    %v4238 = vsel %vm3637, %v4188, 0.0
    %v4239 = vadd.f32 %v4237, %v4238
    %v4240 = vsel %vm3637, %v4189, 0.0
    %v4241 = vadd.f32 %v4239, %v4240
    %v4242 = vsel %vm3637, %v4190, 0.0
    %v4243 = vadd.f32 %v4241, %v4242
    %v4244 = vsel %vm3637, %v4191, 0.0
    %v4245 = vadd.f32 %v4243, %v4244
    %v4246 = vsel %vm3637, %v4192, 0.0
    %v4247 = vadd.f32 %v4245, %v4246
    %v4248 = vsel %vm3637, %v4193, 0.0
    %v4249 = vadd.f32 %v4247, %v4248
    %v4250 = vsel %vm3637, %v4194, 0.0
    %v4251 = vadd.f32 %v4249, %v4250
    %v4252 = vsel %vm3637, %v4195, 0.0
    %v4253 = vadd.f32 %v4251, %v4252
    %v4254 = vsel %vm3637, %v4196, 0.0
    %v4255 = vadd.f32 %v4253, %v4254
    %v4256 = vsel %vm3637, %v4197, 0.0
    %v4257 = vadd.f32 %v4255, %v4256
    %v4258 = vsel %vm3637, %v4198, 0.0
    %v4259 = vadd.f32 %v4257, %v4258
    %v4260 = vsel %vm3637, %v4199, 0.0
    %v4261 = vadd.f32 %v4259, %v4260
    %v4262 = vsel %vm3637, %v4200, 0.0
    %v4263 = vadd.f32 %v4261, %v4262
    %4264 = vadd.xlane.f32.xlu0 %v4263
    %v4265 = vpop.xlane.xlu0 %4264
    %vm4266 = vcmp.ge.f32.partialorder %v4265, 1.0
    %v4267 = vsel %vm4266, %v4136, %v4133
    %v4268 = vsel %vm4266, %v4134, %v4136
    %v4269 = vadd.f32 %v4267, %v4268
    %v4270 = vmul.f32 %v4269, 0.5
    %v4271 = vsub.f32 %v3703, %v4270
    %v4272 = vsub.f32 %v3704, %v4270
    %v4273 = vsub.f32 %v3705, %v4270
    %v4274 = vsub.f32 %v3706, %v4270
    %v4275 = vsub.f32 %v3707, %v4270
    %v4276 = vsub.f32 %v3708, %v4270
    %v4277 = vsub.f32 %v3709, %v4270
    %v4278 = vsub.f32 %v3710, %v4270
    %v4279 = vsub.f32 %v3711, %v4270
    %v4280 = vsub.f32 %v3712, %v4270
    %v4281 = vsub.f32 %v3713, %v4270
    %v4282 = vsub.f32 %v3714, %v4270
    %v4283 = vsub.f32 %v3715, %v4270
    %v4284 = vsub.f32 %v3716, %v4270
    %v4285 = vsub.f32 %v3717, %v4270
    %v4286 = vsub.f32 %v3718, %v4270
    %v4287 = vsub.f32 %v3719, %v4270
    %v4288 = vsub.f32 %v3720, %v4270
    %v4289 = vsub.f32 %v3721, %v4270
    %v4290 = vsub.f32 %v3722, %v4270
    %v4291 = vsub.f32 %v3723, %v4270
    %v4292 = vsub.f32 %v3724, %v4270
    %v4293 = vsub.f32 %v3725, %v4270
    %v4294 = vsub.f32 %v3726, %v4270
    %v4295 = vsub.f32 %v3727, %v4270
    %v4296 = vsub.f32 %v3728, %v4270
    %v4297 = vsub.f32 %v3729, %v4270
    %v4298 = vsub.f32 %v3730, %v4270
    %v4299 = vsub.f32 %v3731, %v4270
    %v4300 = vsub.f32 %v3732, %v4270
    %v4301 = vsub.f32 %v3733, %v4270
    %v4302 = vsub.f32 %v3734, %v4270
    %v4303 = vmax.f32 %v4271, 0.0
    %v4304 = vmax.f32 %v4272, 0.0
    %v4305 = vmax.f32 %v4273, 0.0
    %v4306 = vmax.f32 %v4274, 0.0
    %v4307 = vmax.f32 %v4275, 0.0
    %v4308 = vmax.f32 %v4276, 0.0
    %v4309 = vmax.f32 %v4277, 0.0
    %v4310 = vmax.f32 %v4278, 0.0
    %v4311 = vmax.f32 %v4279, 0.0
    %v4312 = vmax.f32 %v4280, 0.0
    %v4313 = vmax.f32 %v4281, 0.0
    %v4314 = vmax.f32 %v4282, 0.0
    %v4315 = vmax.f32 %v4283, 0.0
    %v4316 = vmax.f32 %v4284, 0.0
    %v4317 = vmax.f32 %v4285, 0.0
    %v4318 = vmax.f32 %v4286, 0.0
    %v4319 = vmax.f32 %v4287, 0.0
    %v4320 = vmax.f32 %v4288, 0.0
    %v4321 = vmax.f32 %v4289, 0.0
    %v4322 = vmax.f32 %v4290, 0.0
    %v4323 = vmax.f32 %v4291, 0.0
    %v4324 = vmax.f32 %v4292, 0.0
    %v4325 = vmax.f32 %v4293, 0.0
    %v4326 = vmax.f32 %v4294, 0.0
    %v4327 = vmax.f32 %v4295, 0.0
    %v4328 = vmax.f32 %v4296, 0.0
    %v4329 = vmax.f32 %v4297, 0.0
    %v4330 = vmax.f32 %v4298, 0.0
    %v4331 = vmax.f32 %v4299, 0.0
    %v4332 = vmax.f32 %v4300, 0.0
    %v4333 = vmax.f32 %v4301, 0.0
    %v4334 = vmax.f32 %v4302, 0.0
    %v4335 = vsel %vm3637, %v4303, 0.0
    %v4336 = vsel %vm3637, %v4304, 0.0
    %v4337 = vadd.f32 %v4335, %v4336
    %v4338 = vsel %vm3637, %v4305, 0.0
    %v4339 = vadd.f32 %v4337, %v4338
    %v4340 = vsel %vm3637, %v4306, 0.0
    %v4341 = vadd.f32 %v4339, %v4340
    %v4342 = vsel %vm3637, %v4307, 0.0
    %v4343 = vadd.f32 %v4341, %v4342
    %v4344 = vsel %vm3637, %v4308, 0.0
    %v4345 = vadd.f32 %v4343, %v4344
    %v4346 = vsel %vm3637, %v4309, 0.0
    %v4347 = vadd.f32 %v4345, %v4346
    %v4348 = vsel %vm3637, %v4310, 0.0
    %v4349 = vadd.f32 %v4347, %v4348
    %v4350 = vsel %vm3637, %v4311, 0.0
    %v4351 = vadd.f32 %v4349, %v4350
    %v4352 = vsel %vm3637, %v4312, 0.0
    %v4353 = vadd.f32 %v4351, %v4352
    %v4354 = vsel %vm3637, %v4313, 0.0
    %v4355 = vadd.f32 %v4353, %v4354
    %v4356 = vsel %vm3637, %v4314, 0.0
    %v4357 = vadd.f32 %v4355, %v4356
    %v4358 = vsel %vm3637, %v4315, 0.0
    %v4359 = vadd.f32 %v4357, %v4358
    %v4360 = vsel %vm3637, %v4316, 0.0
    %v4361 = vadd.f32 %v4359, %v4360
    %v4362 = vsel %vm3637, %v4317, 0.0
    %v4363 = vadd.f32 %v4361, %v4362
    %v4364 = vsel %vm3637, %v4318, 0.0
    %v4365 = vadd.f32 %v4363, %v4364
    %v4366 = vsel %vm3637, %v4319, 0.0
    %v4367 = vadd.f32 %v4365, %v4366
    %v4368 = vsel %vm3637, %v4320, 0.0
    %v4369 = vadd.f32 %v4367, %v4368
    %v4370 = vsel %vm3637, %v4321, 0.0
    %v4371 = vadd.f32 %v4369, %v4370
    %v4372 = vsel %vm3637, %v4322, 0.0
    %v4373 = vadd.f32 %v4371, %v4372
    %v4374 = vsel %vm3637, %v4323, 0.0
    %v4375 = vadd.f32 %v4373, %v4374
    %v4376 = vsel %vm3637, %v4324, 0.0
    %v4377 = vadd.f32 %v4375, %v4376
    %v4378 = vsel %vm3637, %v4325, 0.0
    %v4379 = vadd.f32 %v4377, %v4378
    %v4380 = vsel %vm3637, %v4326, 0.0
    %v4381 = vadd.f32 %v4379, %v4380
    %v4382 = vsel %vm3637, %v4327, 0.0
    %v4383 = vadd.f32 %v4381, %v4382
    %v4384 = vsel %vm3637, %v4328, 0.0
    %v4385 = vadd.f32 %v4383, %v4384
    %v4386 = vsel %vm3637, %v4329, 0.0
    %v4387 = vadd.f32 %v4385, %v4386
    %v4388 = vsel %vm3637, %v4330, 0.0
    %v4389 = vadd.f32 %v4387, %v4388
    %v4390 = vsel %vm3637, %v4331, 0.0
    %v4391 = vadd.f32 %v4389, %v4390
    %v4392 = vsel %vm3637, %v4332, 0.0
    %v4393 = vadd.f32 %v4391, %v4392
    %v4394 = vsel %vm3637, %v4333, 0.0
    %v4395 = vadd.f32 %v4393, %v4394
    %v4396 = vsel %vm3637, %v4334, 0.0
    %v4397 = vadd.f32 %v4395, %v4396
    %4398 = vadd.xlane.f32.xlu0 %v4397
    %v4399 = vpop.xlane.xlu0 %4398
    %vm4400 = vcmp.ge.f32.partialorder %v4399, 1.0
    %v4401 = vsel %vm4400, %v4270, %v4267
    %v4402 = vsel %vm4400, %v4268, %v4270
    %v4403 = vadd.f32 %v4401, %v4402
    %v4404 = vmul.f32 %v4403, 0.5
    %v4405 = vsub.f32 %v3703, %v4404
    %v4406 = vsub.f32 %v3704, %v4404
    %v4407 = vsub.f32 %v3705, %v4404
    %v4408 = vsub.f32 %v3706, %v4404
    %v4409 = vsub.f32 %v3707, %v4404
    %v4410 = vsub.f32 %v3708, %v4404
    %v4411 = vsub.f32 %v3709, %v4404
    %v4412 = vsub.f32 %v3710, %v4404
    %v4413 = vsub.f32 %v3711, %v4404
    %v4414 = vsub.f32 %v3712, %v4404
    %v4415 = vsub.f32 %v3713, %v4404
    %v4416 = vsub.f32 %v3714, %v4404
    %v4417 = vsub.f32 %v3715, %v4404
    %v4418 = vsub.f32 %v3716, %v4404
    %v4419 = vsub.f32 %v3717, %v4404
    %v4420 = vsub.f32 %v3718, %v4404
    %v4421 = vsub.f32 %v3719, %v4404
    %v4422 = vsub.f32 %v3720, %v4404
    %v4423 = vsub.f32 %v3721, %v4404
    %v4424 = vsub.f32 %v3722, %v4404
    %v4425 = vsub.f32 %v3723, %v4404
    %v4426 = vsub.f32 %v3724, %v4404
    %v4427 = vsub.f32 %v3725, %v4404
    %v4428 = vsub.f32 %v3726, %v4404
    %v4429 = vsub.f32 %v3727, %v4404
    %v4430 = vsub.f32 %v3728, %v4404
    %v4431 = vsub.f32 %v3729, %v4404
    %v4432 = vsub.f32 %v3730, %v4404
    %v4433 = vsub.f32 %v3731, %v4404
    %v4434 = vsub.f32 %v3732, %v4404
    %v4435 = vsub.f32 %v3733, %v4404
    %v4436 = vsub.f32 %v3734, %v4404
    %v4437 = vmax.f32 %v4405, 0.0
    %v4438 = vmax.f32 %v4406, 0.0
    %v4439 = vmax.f32 %v4407, 0.0
    %v4440 = vmax.f32 %v4408, 0.0
    %v4441 = vmax.f32 %v4409, 0.0
    %v4442 = vmax.f32 %v4410, 0.0
    %v4443 = vmax.f32 %v4411, 0.0
    %v4444 = vmax.f32 %v4412, 0.0
    %v4445 = vmax.f32 %v4413, 0.0
    %v4446 = vmax.f32 %v4414, 0.0
    %v4447 = vmax.f32 %v4415, 0.0
    %v4448 = vmax.f32 %v4416, 0.0
    %v4449 = vmax.f32 %v4417, 0.0
    %v4450 = vmax.f32 %v4418, 0.0
    %v4451 = vmax.f32 %v4419, 0.0
    %v4452 = vmax.f32 %v4420, 0.0
    %v4453 = vmax.f32 %v4421, 0.0
    %v4454 = vmax.f32 %v4422, 0.0
    %v4455 = vmax.f32 %v4423, 0.0
    %v4456 = vmax.f32 %v4424, 0.0
    %v4457 = vmax.f32 %v4425, 0.0
    %v4458 = vmax.f32 %v4426, 0.0
    %v4459 = vmax.f32 %v4427, 0.0
    %v4460 = vmax.f32 %v4428, 0.0
    %v4461 = vmax.f32 %v4429, 0.0
    %v4462 = vmax.f32 %v4430, 0.0
    %v4463 = vmax.f32 %v4431, 0.0
    %v4464 = vmax.f32 %v4432, 0.0
    %v4465 = vmax.f32 %v4433, 0.0
    %v4466 = vmax.f32 %v4434, 0.0
    %v4467 = vmax.f32 %v4435, 0.0
    %v4468 = vmax.f32 %v4436, 0.0
    %v4469 = vsel %vm3637, %v4437, 0.0
    %v4470 = vsel %vm3637, %v4438, 0.0
    %v4471 = vadd.f32 %v4469, %v4470
    %v4472 = vsel %vm3637, %v4439, 0.0
    %v4473 = vadd.f32 %v4471, %v4472
    %v4474 = vsel %vm3637, %v4440, 0.0
    %v4475 = vadd.f32 %v4473, %v4474
    %v4476 = vsel %vm3637, %v4441, 0.0
    %v4477 = vadd.f32 %v4475, %v4476
    %v4478 = vsel %vm3637, %v4442, 0.0
    %v4479 = vadd.f32 %v4477, %v4478
    %v4480 = vsel %vm3637, %v4443, 0.0
    %v4481 = vadd.f32 %v4479, %v4480
    %v4482 = vsel %vm3637, %v4444, 0.0
    %v4483 = vadd.f32 %v4481, %v4482
    %v4484 = vsel %vm3637, %v4445, 0.0
    %v4485 = vadd.f32 %v4483, %v4484
    %v4486 = vsel %vm3637, %v4446, 0.0
    %v4487 = vadd.f32 %v4485, %v4486
    %v4488 = vsel %vm3637, %v4447, 0.0
    %v4489 = vadd.f32 %v4487, %v4488
    %v4490 = vsel %vm3637, %v4448, 0.0
    %v4491 = vadd.f32 %v4489, %v4490
    %v4492 = vsel %vm3637, %v4449, 0.0
    %v4493 = vadd.f32 %v4491, %v4492
    %v4494 = vsel %vm3637, %v4450, 0.0
    %v4495 = vadd.f32 %v4493, %v4494
    %v4496 = vsel %vm3637, %v4451, 0.0
    %v4497 = vadd.f32 %v4495, %v4496
    %v4498 = vsel %vm3637, %v4452, 0.0
    %v4499 = vadd.f32 %v4497, %v4498
    %v4500 = vsel %vm3637, %v4453, 0.0
    %v4501 = vadd.f32 %v4499, %v4500
    %v4502 = vsel %vm3637, %v4454, 0.0
    %v4503 = vadd.f32 %v4501, %v4502
    %v4504 = vsel %vm3637, %v4455, 0.0
    %v4505 = vadd.f32 %v4503, %v4504
    %v4506 = vsel %vm3637, %v4456, 0.0
    %v4507 = vadd.f32 %v4505, %v4506
    %v4508 = vsel %vm3637, %v4457, 0.0
    %v4509 = vadd.f32 %v4507, %v4508
    %v4510 = vsel %vm3637, %v4458, 0.0
    %v4511 = vadd.f32 %v4509, %v4510
    %v4512 = vsel %vm3637, %v4459, 0.0
    %v4513 = vadd.f32 %v4511, %v4512
    %v4514 = vsel %vm3637, %v4460, 0.0
    %v4515 = vadd.f32 %v4513, %v4514
    %v4516 = vsel %vm3637, %v4461, 0.0
    %v4517 = vadd.f32 %v4515, %v4516
    %v4518 = vsel %vm3637, %v4462, 0.0
    %v4519 = vadd.f32 %v4517, %v4518
    %v4520 = vsel %vm3637, %v4463, 0.0
    %v4521 = vadd.f32 %v4519, %v4520
    %v4522 = vsel %vm3637, %v4464, 0.0
    %v4523 = vadd.f32 %v4521, %v4522
    %v4524 = vsel %vm3637, %v4465, 0.0
    %v4525 = vadd.f32 %v4523, %v4524
    %v4526 = vsel %vm3637, %v4466, 0.0
    %v4527 = vadd.f32 %v4525, %v4526
    %v4528 = vsel %vm3637, %v4467, 0.0
    %v4529 = vadd.f32 %v4527, %v4528
    %v4530 = vsel %vm3637, %v4468, 0.0
    %v4531 = vadd.f32 %v4529, %v4530
    %4532 = vadd.xlane.f32.xlu0 %v4531
    %v4533 = vpop.xlane.xlu0 %4532
    %vm4534 = vcmp.ge.f32.partialorder %v4533, 1.0
    %v4535 = vsel %vm4534, %v4404, %v4401
    %v4536 = vsel %vm4534, %v4402, %v4404
    %v4537 = vadd.f32 %v4535, %v4536
    %v4538 = vmul.f32 %v4537, 0.5
    %v4539 = vsub.f32 %v3703, %v4538
    %v4540 = vsub.f32 %v3704, %v4538
    %v4541 = vsub.f32 %v3705, %v4538
    %v4542 = vsub.f32 %v3706, %v4538
    %v4543 = vsub.f32 %v3707, %v4538
    %v4544 = vsub.f32 %v3708, %v4538
    %v4545 = vsub.f32 %v3709, %v4538
    %v4546 = vsub.f32 %v3710, %v4538
    %v4547 = vsub.f32 %v3711, %v4538
    %v4548 = vsub.f32 %v3712, %v4538
    %v4549 = vsub.f32 %v3713, %v4538
    %v4550 = vsub.f32 %v3714, %v4538
    %v4551 = vsub.f32 %v3715, %v4538
    %v4552 = vsub.f32 %v3716, %v4538
    %v4553 = vsub.f32 %v3717, %v4538
    %v4554 = vsub.f32 %v3718, %v4538
    %v4555 = vsub.f32 %v3719, %v4538
    %v4556 = vsub.f32 %v3720, %v4538
    %v4557 = vsub.f32 %v3721, %v4538
    %v4558 = vsub.f32 %v3722, %v4538
    %v4559 = vsub.f32 %v3723, %v4538
    %v4560 = vsub.f32 %v3724, %v4538
    %v4561 = vsub.f32 %v3725, %v4538
    %v4562 = vsub.f32 %v3726, %v4538
    %v4563 = vsub.f32 %v3727, %v4538
    %v4564 = vsub.f32 %v3728, %v4538
    %v4565 = vsub.f32 %v3729, %v4538
    %v4566 = vsub.f32 %v3730, %v4538
    %v4567 = vsub.f32 %v3731, %v4538
    %v4568 = vsub.f32 %v3732, %v4538
    %v4569 = vsub.f32 %v3733, %v4538
    %v4570 = vsub.f32 %v3734, %v4538
    %v4571 = vmax.f32 %v4539, 0.0
    %v4572 = vmax.f32 %v4540, 0.0
    %v4573 = vmax.f32 %v4541, 0.0
    %v4574 = vmax.f32 %v4542, 0.0
    %v4575 = vmax.f32 %v4543, 0.0
    %v4576 = vmax.f32 %v4544, 0.0
    %v4577 = vmax.f32 %v4545, 0.0
    %v4578 = vmax.f32 %v4546, 0.0
    %v4579 = vmax.f32 %v4547, 0.0
    %v4580 = vmax.f32 %v4548, 0.0
    %v4581 = vmax.f32 %v4549, 0.0
    %v4582 = vmax.f32 %v4550, 0.0
    %v4583 = vmax.f32 %v4551, 0.0
    %v4584 = vmax.f32 %v4552, 0.0
    %v4585 = vmax.f32 %v4553, 0.0
    %v4586 = vmax.f32 %v4554, 0.0
    %v4587 = vmax.f32 %v4555, 0.0
    %v4588 = vmax.f32 %v4556, 0.0
    %v4589 = vmax.f32 %v4557, 0.0
    %v4590 = vmax.f32 %v4558, 0.0
    %v4591 = vmax.f32 %v4559, 0.0
    %v4592 = vmax.f32 %v4560, 0.0
    %v4593 = vmax.f32 %v4561, 0.0
    %v4594 = vmax.f32 %v4562, 0.0
    %v4595 = vmax.f32 %v4563, 0.0
    %v4596 = vmax.f32 %v4564, 0.0
    %v4597 = vmax.f32 %v4565, 0.0
    %v4598 = vmax.f32 %v4566, 0.0
    %v4599 = vmax.f32 %v4567, 0.0
    %v4600 = vmax.f32 %v4568, 0.0
    %v4601 = vmax.f32 %v4569, 0.0
    %v4602 = vmax.f32 %v4570, 0.0
    %v4603 = vsel %vm3637, %v4571, 0.0
    %v4604 = vsel %vm3637, %v4572, 0.0
    %v4605 = vadd.f32 %v4603, %v4604
    %v4606 = vsel %vm3637, %v4573, 0.0
    %v4607 = vadd.f32 %v4605, %v4606
    %v4608 = vsel %vm3637, %v4574, 0.0
    %v4609 = vadd.f32 %v4607, %v4608
    %v4610 = vsel %vm3637, %v4575, 0.0
    %v4611 = vadd.f32 %v4609, %v4610
    %v4612 = vsel %vm3637, %v4576, 0.0
    %v4613 = vadd.f32 %v4611, %v4612
    %v4614 = vsel %vm3637, %v4577, 0.0
    %v4615 = vadd.f32 %v4613, %v4614
    %v4616 = vsel %vm3637, %v4578, 0.0
    %v4617 = vadd.f32 %v4615, %v4616
    %v4618 = vsel %vm3637, %v4579, 0.0
    %v4619 = vadd.f32 %v4617, %v4618
    %v4620 = vsel %vm3637, %v4580, 0.0
    %v4621 = vadd.f32 %v4619, %v4620
    %v4622 = vsel %vm3637, %v4581, 0.0
    %v4623 = vadd.f32 %v4621, %v4622
    %v4624 = vsel %vm3637, %v4582, 0.0
    %v4625 = vadd.f32 %v4623, %v4624
    %v4626 = vsel %vm3637, %v4583, 0.0
    %v4627 = vadd.f32 %v4625, %v4626
    %v4628 = vsel %vm3637, %v4584, 0.0
    %v4629 = vadd.f32 %v4627, %v4628
    %v4630 = vsel %vm3637, %v4585, 0.0
    %v4631 = vadd.f32 %v4629, %v4630
    %v4632 = vsel %vm3637, %v4586, 0.0
    %v4633 = vadd.f32 %v4631, %v4632
    %v4634 = vsel %vm3637, %v4587, 0.0
    %v4635 = vadd.f32 %v4633, %v4634
    %v4636 = vsel %vm3637, %v4588, 0.0
    %v4637 = vadd.f32 %v4635, %v4636
    %v4638 = vsel %vm3637, %v4589, 0.0
    %v4639 = vadd.f32 %v4637, %v4638
    %v4640 = vsel %vm3637, %v4590, 0.0
    %v4641 = vadd.f32 %v4639, %v4640
    %v4642 = vsel %vm3637, %v4591, 0.0
    %v4643 = vadd.f32 %v4641, %v4642
    %v4644 = vsel %vm3637, %v4592, 0.0
    %v4645 = vadd.f32 %v4643, %v4644
    %v4646 = vsel %vm3637, %v4593, 0.0
    %v4647 = vadd.f32 %v4645, %v4646
    %v4648 = vsel %vm3637, %v4594, 0.0
    %v4649 = vadd.f32 %v4647, %v4648
    %v4650 = vsel %vm3637, %v4595, 0.0
    %v4651 = vadd.f32 %v4649, %v4650
    %v4652 = vsel %vm3637, %v4596, 0.0
    %v4653 = vadd.f32 %v4651, %v4652
    %v4654 = vsel %vm3637, %v4597, 0.0
    %v4655 = vadd.f32 %v4653, %v4654
    %v4656 = vsel %vm3637, %v4598, 0.0
    %v4657 = vadd.f32 %v4655, %v4656
    %v4658 = vsel %vm3637, %v4599, 0.0
    %v4659 = vadd.f32 %v4657, %v4658
    %v4660 = vsel %vm3637, %v4600, 0.0
    %v4661 = vadd.f32 %v4659, %v4660
    %v4662 = vsel %vm3637, %v4601, 0.0
    %v4663 = vadd.f32 %v4661, %v4662
    %v4664 = vsel %vm3637, %v4602, 0.0
    %v4665 = vadd.f32 %v4663, %v4664
    %4666 = vadd.xlane.f32.xlu0 %v4665
    %v4667 = vpop.xlane.xlu0 %4666
    %vm4668 = vcmp.ge.f32.partialorder %v4667, 1.0
    %v4669 = vsel %vm4668, %v4538, %v4535
    %v4670 = vsel %vm4668, %v4536, %v4538
    %v4671 = vadd.f32 %v4669, %v4670
    %v4672 = vmul.f32 %v4671, 0.5
    %v4673 = vsub.f32 %v3703, %v4672
    %v4674 = vsub.f32 %v3704, %v4672
    %v4675 = vsub.f32 %v3705, %v4672
    %v4676 = vsub.f32 %v3706, %v4672
    %v4677 = vsub.f32 %v3707, %v4672
    %v4678 = vsub.f32 %v3708, %v4672
    %v4679 = vsub.f32 %v3709, %v4672
    %v4680 = vsub.f32 %v3710, %v4672
    %v4681 = vsub.f32 %v3711, %v4672
    %v4682 = vsub.f32 %v3712, %v4672
    %v4683 = vsub.f32 %v3713, %v4672
    %v4684 = vsub.f32 %v3714, %v4672
    %v4685 = vsub.f32 %v3715, %v4672
    %v4686 = vsub.f32 %v3716, %v4672
    %v4687 = vsub.f32 %v3717, %v4672
    %v4688 = vsub.f32 %v3718, %v4672
    %v4689 = vsub.f32 %v3719, %v4672
    %v4690 = vsub.f32 %v3720, %v4672
    %v4691 = vsub.f32 %v3721, %v4672
    %v4692 = vsub.f32 %v3722, %v4672
    %v4693 = vsub.f32 %v3723, %v4672
    %v4694 = vsub.f32 %v3724, %v4672
    %v4695 = vsub.f32 %v3725, %v4672
    %v4696 = vsub.f32 %v3726, %v4672
    %v4697 = vsub.f32 %v3727, %v4672
    %v4698 = vsub.f32 %v3728, %v4672
    %v4699 = vsub.f32 %v3729, %v4672
    %v4700 = vsub.f32 %v3730, %v4672
    %v4701 = vsub.f32 %v3731, %v4672
    %v4702 = vsub.f32 %v3732, %v4672
    %v4703 = vsub.f32 %v3733, %v4672
    %v4704 = vsub.f32 %v3734, %v4672
    %v4705 = vmax.f32 %v4673, 0.0
    %v4706 = vmax.f32 %v4674, 0.0
    %v4707 = vmax.f32 %v4675, 0.0
    %v4708 = vmax.f32 %v4676, 0.0
    %v4709 = vmax.f32 %v4677, 0.0
    %v4710 = vmax.f32 %v4678, 0.0
    %v4711 = vmax.f32 %v4679, 0.0
    %v4712 = vmax.f32 %v4680, 0.0
    %v4713 = vmax.f32 %v4681, 0.0
    %v4714 = vmax.f32 %v4682, 0.0
    %v4715 = vmax.f32 %v4683, 0.0
    %v4716 = vmax.f32 %v4684, 0.0
    %v4717 = vmax.f32 %v4685, 0.0
    %v4718 = vmax.f32 %v4686, 0.0
    %v4719 = vmax.f32 %v4687, 0.0
    %v4720 = vmax.f32 %v4688, 0.0
    %v4721 = vmax.f32 %v4689, 0.0
    %v4722 = vmax.f32 %v4690, 0.0
    %v4723 = vmax.f32 %v4691, 0.0
    %v4724 = vmax.f32 %v4692, 0.0
    %v4725 = vmax.f32 %v4693, 0.0
    %v4726 = vmax.f32 %v4694, 0.0
    %v4727 = vmax.f32 %v4695, 0.0
    %v4728 = vmax.f32 %v4696, 0.0
    %v4729 = vmax.f32 %v4697, 0.0
    %v4730 = vmax.f32 %v4698, 0.0
    %v4731 = vmax.f32 %v4699, 0.0
    %v4732 = vmax.f32 %v4700, 0.0
    %v4733 = vmax.f32 %v4701, 0.0
    %v4734 = vmax.f32 %v4702, 0.0
    %v4735 = vmax.f32 %v4703, 0.0
    %v4736 = vmax.f32 %v4704, 0.0
    %v4737 = vsel %vm3637, %v4705, 0.0
    %v4738 = vsel %vm3637, %v4706, 0.0
    %v4739 = vadd.f32 %v4737, %v4738
    %v4740 = vsel %vm3637, %v4707, 0.0
    %v4741 = vadd.f32 %v4739, %v4740
    %v4742 = vsel %vm3637, %v4708, 0.0
    %v4743 = vadd.f32 %v4741, %v4742
    %v4744 = vsel %vm3637, %v4709, 0.0
    %v4745 = vadd.f32 %v4743, %v4744
    %v4746 = vsel %vm3637, %v4710, 0.0
    %v4747 = vadd.f32 %v4745, %v4746
    %v4748 = vsel %vm3637, %v4711, 0.0
    %v4749 = vadd.f32 %v4747, %v4748
    %v4750 = vsel %vm3637, %v4712, 0.0
    %v4751 = vadd.f32 %v4749, %v4750
    %v4752 = vsel %vm3637, %v4713, 0.0
    %v4753 = vadd.f32 %v4751, %v4752
    %v4754 = vsel %vm3637, %v4714, 0.0
    %v4755 = vadd.f32 %v4753, %v4754
    %v4756 = vsel %vm3637, %v4715, 0.0
    %v4757 = vadd.f32 %v4755, %v4756
    %v4758 = vsel %vm3637, %v4716, 0.0
    %v4759 = vadd.f32 %v4757, %v4758
    %v4760 = vsel %vm3637, %v4717, 0.0
    %v4761 = vadd.f32 %v4759, %v4760
    %v4762 = vsel %vm3637, %v4718, 0.0
    %v4763 = vadd.f32 %v4761, %v4762
    %v4764 = vsel %vm3637, %v4719, 0.0
    %v4765 = vadd.f32 %v4763, %v4764
    %v4766 = vsel %vm3637, %v4720, 0.0
    %v4767 = vadd.f32 %v4765, %v4766
    %v4768 = vsel %vm3637, %v4721, 0.0
    %v4769 = vadd.f32 %v4767, %v4768
    %v4770 = vsel %vm3637, %v4722, 0.0
    %v4771 = vadd.f32 %v4769, %v4770
    %v4772 = vsel %vm3637, %v4723, 0.0
    %v4773 = vadd.f32 %v4771, %v4772
    %v4774 = vsel %vm3637, %v4724, 0.0
    %v4775 = vadd.f32 %v4773, %v4774
    %v4776 = vsel %vm3637, %v4725, 0.0
    %v4777 = vadd.f32 %v4775, %v4776
    %v4778 = vsel %vm3637, %v4726, 0.0
    %v4779 = vadd.f32 %v4777, %v4778
    %v4780 = vsel %vm3637, %v4727, 0.0
    %v4781 = vadd.f32 %v4779, %v4780
    %v4782 = vsel %vm3637, %v4728, 0.0
    %v4783 = vadd.f32 %v4781, %v4782
    %v4784 = vsel %vm3637, %v4729, 0.0
    %v4785 = vadd.f32 %v4783, %v4784
    %v4786 = vsel %vm3637, %v4730, 0.0
    %v4787 = vadd.f32 %v4785, %v4786
    %v4788 = vsel %vm3637, %v4731, 0.0
    %v4789 = vadd.f32 %v4787, %v4788
    %v4790 = vsel %vm3637, %v4732, 0.0
    %v4791 = vadd.f32 %v4789, %v4790
    %v4792 = vsel %vm3637, %v4733, 0.0
    %v4793 = vadd.f32 %v4791, %v4792
    %v4794 = vsel %vm3637, %v4734, 0.0
    %v4795 = vadd.f32 %v4793, %v4794
    %v4796 = vsel %vm3637, %v4735, 0.0
    %v4797 = vadd.f32 %v4795, %v4796
    %v4798 = vsel %vm3637, %v4736, 0.0
    %v4799 = vadd.f32 %v4797, %v4798
    %4800 = vadd.xlane.f32.xlu0 %v4799
    %v4801 = vpop.xlane.xlu0 %4800
    %vm4802 = vcmp.ge.f32.partialorder %v4801, 1.0
    %v4803 = vsel %vm4802, %v4672, %v4669
    %v4804 = vsel %vm4802, %v4670, %v4672
    %v4805 = vadd.f32 %v4803, %v4804
    %v4806 = vmul.f32 %v4805, 0.5
    %v4807 = vsub.f32 %v3703, %v4806
    %v4808 = vsub.f32 %v3704, %v4806
    %v4809 = vsub.f32 %v3705, %v4806
    %v4810 = vsub.f32 %v3706, %v4806
    %v4811 = vsub.f32 %v3707, %v4806
    %v4812 = vsub.f32 %v3708, %v4806
    %v4813 = vsub.f32 %v3709, %v4806
    %v4814 = vsub.f32 %v3710, %v4806
    %v4815 = vsub.f32 %v3711, %v4806
    %v4816 = vsub.f32 %v3712, %v4806
    %v4817 = vsub.f32 %v3713, %v4806
    %v4818 = vsub.f32 %v3714, %v4806
    %v4819 = vsub.f32 %v3715, %v4806
    %v4820 = vsub.f32 %v3716, %v4806
    %v4821 = vsub.f32 %v3717, %v4806
    %v4822 = vsub.f32 %v3718, %v4806
    %v4823 = vsub.f32 %v3719, %v4806
    %v4824 = vsub.f32 %v3720, %v4806
    %v4825 = vsub.f32 %v3721, %v4806
    %v4826 = vsub.f32 %v3722, %v4806
    %v4827 = vsub.f32 %v3723, %v4806
    %v4828 = vsub.f32 %v3724, %v4806
    %v4829 = vsub.f32 %v3725, %v4806
    %v4830 = vsub.f32 %v3726, %v4806
    %v4831 = vsub.f32 %v3727, %v4806
    %v4832 = vsub.f32 %v3728, %v4806
    %v4833 = vsub.f32 %v3729, %v4806
    %v4834 = vsub.f32 %v3730, %v4806
    %v4835 = vsub.f32 %v3731, %v4806
    %v4836 = vsub.f32 %v3732, %v4806
    %v4837 = vsub.f32 %v3733, %v4806
    %v4838 = vsub.f32 %v3734, %v4806
    %v4839 = vmax.f32 %v4807, 0.0
    %v4840 = vmax.f32 %v4808, 0.0
    %v4841 = vmax.f32 %v4809, 0.0
    %v4842 = vmax.f32 %v4810, 0.0
    %v4843 = vmax.f32 %v4811, 0.0
    %v4844 = vmax.f32 %v4812, 0.0
    %v4845 = vmax.f32 %v4813, 0.0
    %v4846 = vmax.f32 %v4814, 0.0
    %v4847 = vmax.f32 %v4815, 0.0
    %v4848 = vmax.f32 %v4816, 0.0
    %v4849 = vmax.f32 %v4817, 0.0
    %v4850 = vmax.f32 %v4818, 0.0
    %v4851 = vmax.f32 %v4819, 0.0
    %v4852 = vmax.f32 %v4820, 0.0
    %v4853 = vmax.f32 %v4821, 0.0
    %v4854 = vmax.f32 %v4822, 0.0
    %v4855 = vmax.f32 %v4823, 0.0
    %v4856 = vmax.f32 %v4824, 0.0
    %v4857 = vmax.f32 %v4825, 0.0
    %v4858 = vmax.f32 %v4826, 0.0
    %v4859 = vmax.f32 %v4827, 0.0
    %v4860 = vmax.f32 %v4828, 0.0
    %v4861 = vmax.f32 %v4829, 0.0
    %v4862 = vmax.f32 %v4830, 0.0
    %v4863 = vmax.f32 %v4831, 0.0
    %v4864 = vmax.f32 %v4832, 0.0
    %v4865 = vmax.f32 %v4833, 0.0
    %v4866 = vmax.f32 %v4834, 0.0
    %v4867 = vmax.f32 %v4835, 0.0
    %v4868 = vmax.f32 %v4836, 0.0
    %v4869 = vmax.f32 %v4837, 0.0
    %v4870 = vmax.f32 %v4838, 0.0
    %v4871 = vsel %vm3637, %v4839, 0.0
    %v4872 = vsel %vm3637, %v4840, 0.0
    %v4873 = vadd.f32 %v4871, %v4872
    %v4874 = vsel %vm3637, %v4841, 0.0
    %v4875 = vadd.f32 %v4873, %v4874
    %v4876 = vsel %vm3637, %v4842, 0.0
    %v4877 = vadd.f32 %v4875, %v4876
    %v4878 = vsel %vm3637, %v4843, 0.0
    %v4879 = vadd.f32 %v4877, %v4878
    %v4880 = vsel %vm3637, %v4844, 0.0
    %v4881 = vadd.f32 %v4879, %v4880
    %v4882 = vsel %vm3637, %v4845, 0.0
    %v4883 = vadd.f32 %v4881, %v4882
    %v4884 = vsel %vm3637, %v4846, 0.0
    %v4885 = vadd.f32 %v4883, %v4884
    %v4886 = vsel %vm3637, %v4847, 0.0
    %v4887 = vadd.f32 %v4885, %v4886
    %v4888 = vsel %vm3637, %v4848, 0.0
    %v4889 = vadd.f32 %v4887, %v4888
    %v4890 = vsel %vm3637, %v4849, 0.0
    %v4891 = vadd.f32 %v4889, %v4890
    %v4892 = vsel %vm3637, %v4850, 0.0
    %v4893 = vadd.f32 %v4891, %v4892
    %v4894 = vsel %vm3637, %v4851, 0.0
    %v4895 = vadd.f32 %v4893, %v4894
    %v4896 = vsel %vm3637, %v4852, 0.0
    %v4897 = vadd.f32 %v4895, %v4896
    %v4898 = vsel %vm3637, %v4853, 0.0
    %v4899 = vadd.f32 %v4897, %v4898
    %v4900 = vsel %vm3637, %v4854, 0.0
    %v4901 = vadd.f32 %v4899, %v4900
    %v4902 = vsel %vm3637, %v4855, 0.0
    %v4903 = vadd.f32 %v4901, %v4902
    %v4904 = vsel %vm3637, %v4856, 0.0
    %v4905 = vadd.f32 %v4903, %v4904
    %v4906 = vsel %vm3637, %v4857, 0.0
    %v4907 = vadd.f32 %v4905, %v4906
    %v4908 = vsel %vm3637, %v4858, 0.0
    %v4909 = vadd.f32 %v4907, %v4908
    %v4910 = vsel %vm3637, %v4859, 0.0
    %v4911 = vadd.f32 %v4909, %v4910
    %v4912 = vsel %vm3637, %v4860, 0.0
    %v4913 = vadd.f32 %v4911, %v4912
    %v4914 = vsel %vm3637, %v4861, 0.0
    %v4915 = vadd.f32 %v4913, %v4914
    %v4916 = vsel %vm3637, %v4862, 0.0
    %v4917 = vadd.f32 %v4915, %v4916
    %v4918 = vsel %vm3637, %v4863, 0.0
    %v4919 = vadd.f32 %v4917, %v4918
    %v4920 = vsel %vm3637, %v4864, 0.0
    %v4921 = vadd.f32 %v4919, %v4920
    %v4922 = vsel %vm3637, %v4865, 0.0
    %v4923 = vadd.f32 %v4921, %v4922
    %v4924 = vsel %vm3637, %v4866, 0.0
    %v4925 = vadd.f32 %v4923, %v4924
    %v4926 = vsel %vm3637, %v4867, 0.0
    %v4927 = vadd.f32 %v4925, %v4926
    %v4928 = vsel %vm3637, %v4868, 0.0
    %v4929 = vadd.f32 %v4927, %v4928
    %v4930 = vsel %vm3637, %v4869, 0.0
    %v4931 = vadd.f32 %v4929, %v4930
    %v4932 = vsel %vm3637, %v4870, 0.0
    %v4933 = vadd.f32 %v4931, %v4932
    %4934 = vadd.xlane.f32.xlu0 %v4933
    %v4935 = vpop.xlane.xlu0 %4934
    %vm4936 = vcmp.ge.f32.partialorder %v4935, 1.0
    %v4937 = vsel %vm4936, %v4806, %v4803
    %v4938 = vsel %vm4936, %v4804, %v4806
    %v4939 = vadd.f32 %v4937, %v4938
    %v4940 = vmul.f32 %v4939, 0.5
    %v4941 = vsub.f32 %v3703, %v4940
    %v4942 = vsub.f32 %v3704, %v4940
    %v4943 = vsub.f32 %v3705, %v4940
    %v4944 = vsub.f32 %v3706, %v4940
    %v4945 = vsub.f32 %v3707, %v4940
    %v4946 = vsub.f32 %v3708, %v4940
    %v4947 = vsub.f32 %v3709, %v4940
    %v4948 = vsub.f32 %v3710, %v4940
    %v4949 = vsub.f32 %v3711, %v4940
    %v4950 = vsub.f32 %v3712, %v4940
    %v4951 = vsub.f32 %v3713, %v4940
    %v4952 = vsub.f32 %v3714, %v4940
    %v4953 = vsub.f32 %v3715, %v4940
    %v4954 = vsub.f32 %v3716, %v4940
    %v4955 = vsub.f32 %v3717, %v4940
    %v4956 = vsub.f32 %v3718, %v4940
    %v4957 = vsub.f32 %v3719, %v4940
    %v4958 = vsub.f32 %v3720, %v4940
    %v4959 = vsub.f32 %v3721, %v4940
    %v4960 = vsub.f32 %v3722, %v4940
    %v4961 = vsub.f32 %v3723, %v4940
    %v4962 = vsub.f32 %v3724, %v4940
    %v4963 = vsub.f32 %v3725, %v4940
    %v4964 = vsub.f32 %v3726, %v4940
    %v4965 = vsub.f32 %v3727, %v4940
    %v4966 = vsub.f32 %v3728, %v4940
    %v4967 = vsub.f32 %v3729, %v4940
    %v4968 = vsub.f32 %v3730, %v4940
    %v4969 = vsub.f32 %v3731, %v4940
    %v4970 = vsub.f32 %v3732, %v4940
    %v4971 = vsub.f32 %v3733, %v4940
    %v4972 = vsub.f32 %v3734, %v4940
    %v4973 = vmax.f32 %v4941, 0.0
    %v4974 = vmax.f32 %v4942, 0.0
    %v4975 = vmax.f32 %v4943, 0.0
    %v4976 = vmax.f32 %v4944, 0.0
    %v4977 = vmax.f32 %v4945, 0.0
    %v4978 = vmax.f32 %v4946, 0.0
    %v4979 = vmax.f32 %v4947, 0.0
    %v4980 = vmax.f32 %v4948, 0.0
    %v4981 = vmax.f32 %v4949, 0.0
    %v4982 = vmax.f32 %v4950, 0.0
    %v4983 = vmax.f32 %v4951, 0.0
    %v4984 = vmax.f32 %v4952, 0.0
    %v4985 = vmax.f32 %v4953, 0.0
    %v4986 = vmax.f32 %v4954, 0.0
    %v4987 = vmax.f32 %v4955, 0.0
    %v4988 = vmax.f32 %v4956, 0.0
    %v4989 = vmax.f32 %v4957, 0.0
    %v4990 = vmax.f32 %v4958, 0.0
    %v4991 = vmax.f32 %v4959, 0.0
    %v4992 = vmax.f32 %v4960, 0.0
    %v4993 = vmax.f32 %v4961, 0.0
    %v4994 = vmax.f32 %v4962, 0.0
    %v4995 = vmax.f32 %v4963, 0.0
    %v4996 = vmax.f32 %v4964, 0.0
    %v4997 = vmax.f32 %v4965, 0.0
    %v4998 = vmax.f32 %v4966, 0.0
    %v4999 = vmax.f32 %v4967, 0.0
    %v5000 = vmax.f32 %v4968, 0.0
    %v5001 = vmax.f32 %v4969, 0.0
    %v5002 = vmax.f32 %v4970, 0.0
    %v5003 = vmax.f32 %v4971, 0.0
    %v5004 = vmax.f32 %v4972, 0.0
    %v5005 = vsel %vm3637, %v4973, 0.0
    %v5006 = vsel %vm3637, %v4974, 0.0
    %v5007 = vadd.f32 %v5005, %v5006
    %v5008 = vsel %vm3637, %v4975, 0.0
    %v5009 = vadd.f32 %v5007, %v5008
    %v5010 = vsel %vm3637, %v4976, 0.0
    %v5011 = vadd.f32 %v5009, %v5010
    %v5012 = vsel %vm3637, %v4977, 0.0
    %v5013 = vadd.f32 %v5011, %v5012
    %v5014 = vsel %vm3637, %v4978, 0.0
    %v5015 = vadd.f32 %v5013, %v5014
    %v5016 = vsel %vm3637, %v4979, 0.0
    %v5017 = vadd.f32 %v5015, %v5016
    %v5018 = vsel %vm3637, %v4980, 0.0
    %v5019 = vadd.f32 %v5017, %v5018
    %v5020 = vsel %vm3637, %v4981, 0.0
    %v5021 = vadd.f32 %v5019, %v5020
    %v5022 = vsel %vm3637, %v4982, 0.0
    %v5023 = vadd.f32 %v5021, %v5022
    %v5024 = vsel %vm3637, %v4983, 0.0
    %v5025 = vadd.f32 %v5023, %v5024
    %v5026 = vsel %vm3637, %v4984, 0.0
    %v5027 = vadd.f32 %v5025, %v5026
    %v5028 = vsel %vm3637, %v4985, 0.0
    %v5029 = vadd.f32 %v5027, %v5028
    %v5030 = vsel %vm3637, %v4986, 0.0
    %v5031 = vadd.f32 %v5029, %v5030
    %v5032 = vsel %vm3637, %v4987, 0.0
    %v5033 = vadd.f32 %v5031, %v5032
    %v5034 = vsel %vm3637, %v4988, 0.0
    %v5035 = vadd.f32 %v5033, %v5034
    %v5036 = vsel %vm3637, %v4989, 0.0
    %v5037 = vadd.f32 %v5035, %v5036
    %v5038 = vsel %vm3637, %v4990, 0.0
    %v5039 = vadd.f32 %v5037, %v5038
    %v5040 = vsel %vm3637, %v4991, 0.0
    %v5041 = vadd.f32 %v5039, %v5040
    %v5042 = vsel %vm3637, %v4992, 0.0
    %v5043 = vadd.f32 %v5041, %v5042
    %v5044 = vsel %vm3637, %v4993, 0.0
    %v5045 = vadd.f32 %v5043, %v5044
    %v5046 = vsel %vm3637, %v4994, 0.0
    %v5047 = vadd.f32 %v5045, %v5046
    %v5048 = vsel %vm3637, %v4995, 0.0
    %v5049 = vadd.f32 %v5047, %v5048
    %v5050 = vsel %vm3637, %v4996, 0.0
    %v5051 = vadd.f32 %v5049, %v5050
    %v5052 = vsel %vm3637, %v4997, 0.0
    %v5053 = vadd.f32 %v5051, %v5052
    %v5054 = vsel %vm3637, %v4998, 0.0
    %v5055 = vadd.f32 %v5053, %v5054
    %v5056 = vsel %vm3637, %v4999, 0.0
    %v5057 = vadd.f32 %v5055, %v5056
    %v5058 = vsel %vm3637, %v5000, 0.0
    %v5059 = vadd.f32 %v5057, %v5058
    %v5060 = vsel %vm3637, %v5001, 0.0
    %v5061 = vadd.f32 %v5059, %v5060
    %v5062 = vsel %vm3637, %v5002, 0.0
    %v5063 = vadd.f32 %v5061, %v5062
    %v5064 = vsel %vm3637, %v5003, 0.0
    %v5065 = vadd.f32 %v5063, %v5064
    %v5066 = vsel %vm3637, %v5004, 0.0
    %v5067 = vadd.f32 %v5065, %v5066
    %5068 = vadd.xlane.f32.xlu0 %v5067
    %v5069 = vpop.xlane.xlu0 %5068
    %vm5070 = vcmp.ge.f32.partialorder %v5069, 1.0
    %v5071 = vsel %vm5070, %v4940, %v4937
    %v5072 = vsel %vm5070, %v4938, %v4940
    %v5073 = vadd.f32 %v5071, %v5072
    %v5074 = vmul.f32 %v5073, 0.5
    %v5075 = vsub.f32 %v3703, %v5074
    %v5076 = vsub.f32 %v3704, %v5074
    %v5077 = vsub.f32 %v3705, %v5074
    %v5078 = vsub.f32 %v3706, %v5074
    %v5079 = vsub.f32 %v3707, %v5074
    %v5080 = vsub.f32 %v3708, %v5074
    %v5081 = vsub.f32 %v3709, %v5074
    %v5082 = vsub.f32 %v3710, %v5074
    %v5083 = vsub.f32 %v3711, %v5074
    %v5084 = vsub.f32 %v3712, %v5074
    %v5085 = vsub.f32 %v3713, %v5074
    %v5086 = vsub.f32 %v3714, %v5074
    %v5087 = vsub.f32 %v3715, %v5074
    %v5088 = vsub.f32 %v3716, %v5074
    %v5089 = vsub.f32 %v3717, %v5074
    %v5090 = vsub.f32 %v3718, %v5074
    %v5091 = vsub.f32 %v3719, %v5074
    %v5092 = vsub.f32 %v3720, %v5074
    %v5093 = vsub.f32 %v3721, %v5074
    %v5094 = vsub.f32 %v3722, %v5074
    %v5095 = vsub.f32 %v3723, %v5074
    %v5096 = vsub.f32 %v3724, %v5074
    %v5097 = vsub.f32 %v3725, %v5074
    %v5098 = vsub.f32 %v3726, %v5074
    %v5099 = vsub.f32 %v3727, %v5074
    %v5100 = vsub.f32 %v3728, %v5074
    %v5101 = vsub.f32 %v3729, %v5074
    %v5102 = vsub.f32 %v3730, %v5074
    %v5103 = vsub.f32 %v3731, %v5074
    %v5104 = vsub.f32 %v3732, %v5074
    %v5105 = vsub.f32 %v3733, %v5074
    %v5106 = vsub.f32 %v3734, %v5074
    %v5107 = vmax.f32 %v5075, 0.0
    %v5108 = vmax.f32 %v5076, 0.0
    %v5109 = vmax.f32 %v5077, 0.0
    %v5110 = vmax.f32 %v5078, 0.0
    %v5111 = vmax.f32 %v5079, 0.0
    %v5112 = vmax.f32 %v5080, 0.0
    %v5113 = vmax.f32 %v5081, 0.0
    %v5114 = vmax.f32 %v5082, 0.0
    %v5115 = vmax.f32 %v5083, 0.0
    %v5116 = vmax.f32 %v5084, 0.0
    %v5117 = vmax.f32 %v5085, 0.0
    %v5118 = vmax.f32 %v5086, 0.0
    %v5119 = vmax.f32 %v5087, 0.0
    %v5120 = vmax.f32 %v5088, 0.0
    %v5121 = vmax.f32 %v5089, 0.0
    %v5122 = vmax.f32 %v5090, 0.0
    %v5123 = vmax.f32 %v5091, 0.0
    %v5124 = vmax.f32 %v5092, 0.0
    %v5125 = vmax.f32 %v5093, 0.0
    %v5126 = vmax.f32 %v5094, 0.0
    %v5127 = vmax.f32 %v5095, 0.0
    %v5128 = vmax.f32 %v5096, 0.0
    %v5129 = vmax.f32 %v5097, 0.0
    %v5130 = vmax.f32 %v5098, 0.0
    %v5131 = vmax.f32 %v5099, 0.0
    %v5132 = vmax.f32 %v5100, 0.0
    %v5133 = vmax.f32 %v5101, 0.0
    %v5134 = vmax.f32 %v5102, 0.0
    %v5135 = vmax.f32 %v5103, 0.0
    %v5136 = vmax.f32 %v5104, 0.0
    %v5137 = vmax.f32 %v5105, 0.0
    %v5138 = vmax.f32 %v5106, 0.0
    %v5139 = vsel %vm3637, %v5107, 0.0
    %v5140 = vsel %vm3637, %v5108, 0.0
    %v5141 = vadd.f32 %v5139, %v5140
    %v5142 = vsel %vm3637, %v5109, 0.0
    %v5143 = vadd.f32 %v5141, %v5142
    %v5144 = vsel %vm3637, %v5110, 0.0
    %v5145 = vadd.f32 %v5143, %v5144
    %v5146 = vsel %vm3637, %v5111, 0.0
    %v5147 = vadd.f32 %v5145, %v5146
    %v5148 = vsel %vm3637, %v5112, 0.0
    %v5149 = vadd.f32 %v5147, %v5148
    %v5150 = vsel %vm3637, %v5113, 0.0
    %v5151 = vadd.f32 %v5149, %v5150
    %v5152 = vsel %vm3637, %v5114, 0.0
    %v5153 = vadd.f32 %v5151, %v5152
    %v5154 = vsel %vm3637, %v5115, 0.0
    %v5155 = vadd.f32 %v5153, %v5154
    %v5156 = vsel %vm3637, %v5116, 0.0
    %v5157 = vadd.f32 %v5155, %v5156
    %v5158 = vsel %vm3637, %v5117, 0.0
    %v5159 = vadd.f32 %v5157, %v5158
    %v5160 = vsel %vm3637, %v5118, 0.0
    %v5161 = vadd.f32 %v5159, %v5160
    %v5162 = vsel %vm3637, %v5119, 0.0
    %v5163 = vadd.f32 %v5161, %v5162
    %v5164 = vsel %vm3637, %v5120, 0.0
    %v5165 = vadd.f32 %v5163, %v5164
    %v5166 = vsel %vm3637, %v5121, 0.0
    %v5167 = vadd.f32 %v5165, %v5166
    %v5168 = vsel %vm3637, %v5122, 0.0
    %v5169 = vadd.f32 %v5167, %v5168
    %v5170 = vsel %vm3637, %v5123, 0.0
    %v5171 = vadd.f32 %v5169, %v5170
    %v5172 = vsel %vm3637, %v5124, 0.0
    %v5173 = vadd.f32 %v5171, %v5172
    %v5174 = vsel %vm3637, %v5125, 0.0
    %v5175 = vadd.f32 %v5173, %v5174
    %v5176 = vsel %vm3637, %v5126, 0.0
    %v5177 = vadd.f32 %v5175, %v5176
    %v5178 = vsel %vm3637, %v5127, 0.0
    %v5179 = vadd.f32 %v5177, %v5178
    %v5180 = vsel %vm3637, %v5128, 0.0
    %v5181 = vadd.f32 %v5179, %v5180
    %v5182 = vsel %vm3637, %v5129, 0.0
    %v5183 = vadd.f32 %v5181, %v5182
    %v5184 = vsel %vm3637, %v5130, 0.0
    %v5185 = vadd.f32 %v5183, %v5184
    %v5186 = vsel %vm3637, %v5131, 0.0
    %v5187 = vadd.f32 %v5185, %v5186
    %v5188 = vsel %vm3637, %v5132, 0.0
    %v5189 = vadd.f32 %v5187, %v5188
    %v5190 = vsel %vm3637, %v5133, 0.0
    %v5191 = vadd.f32 %v5189, %v5190
    %v5192 = vsel %vm3637, %v5134, 0.0
    %v5193 = vadd.f32 %v5191, %v5192
    %v5194 = vsel %vm3637, %v5135, 0.0
    %v5195 = vadd.f32 %v5193, %v5194
    %v5196 = vsel %vm3637, %v5136, 0.0
    %v5197 = vadd.f32 %v5195, %v5196
    %v5198 = vsel %vm3637, %v5137, 0.0
    %v5199 = vadd.f32 %v5197, %v5198
    %v5200 = vsel %vm3637, %v5138, 0.0
    %v5201 = vadd.f32 %v5199, %v5200
    %5202 = vadd.xlane.f32.xlu0 %v5201
    %v5203 = vpop.xlane.xlu0 %5202
    %vm5204 = vcmp.ge.f32.partialorder %v5203, 1.0
    %v5205 = vsel %vm5204, %v5074, %v5071
    %v5206 = vsel %vm5204, %v5072, %v5074
    %v5207 = vadd.f32 %v5205, %v5206
    %v5208 = vmul.f32 %v5207, 0.5
    %v5209 = vsub.f32 %v3703, %v5208
    %v5210 = vsub.f32 %v3704, %v5208
    %v5211 = vsub.f32 %v3705, %v5208
    %v5212 = vsub.f32 %v3706, %v5208
    %v5213 = vsub.f32 %v3707, %v5208
    %v5214 = vsub.f32 %v3708, %v5208
    %v5215 = vsub.f32 %v3709, %v5208
    %v5216 = vsub.f32 %v3710, %v5208
    %v5217 = vsub.f32 %v3711, %v5208
    %v5218 = vsub.f32 %v3712, %v5208
    %v5219 = vsub.f32 %v3713, %v5208
    %v5220 = vsub.f32 %v3714, %v5208
    %v5221 = vsub.f32 %v3715, %v5208
    %v5222 = vsub.f32 %v3716, %v5208
    %v5223 = vsub.f32 %v3717, %v5208
    %v5224 = vsub.f32 %v3718, %v5208
    %v5225 = vsub.f32 %v3719, %v5208
    %v5226 = vsub.f32 %v3720, %v5208
    %v5227 = vsub.f32 %v3721, %v5208
    %v5228 = vsub.f32 %v3722, %v5208
    %v5229 = vsub.f32 %v3723, %v5208
    %v5230 = vsub.f32 %v3724, %v5208
    %v5231 = vsub.f32 %v3725, %v5208
    %v5232 = vsub.f32 %v3726, %v5208
    %v5233 = vsub.f32 %v3727, %v5208
    %v5234 = vsub.f32 %v3728, %v5208
    %v5235 = vsub.f32 %v3729, %v5208
    %v5236 = vsub.f32 %v3730, %v5208
    %v5237 = vsub.f32 %v3731, %v5208
    %v5238 = vsub.f32 %v3732, %v5208
    %v5239 = vsub.f32 %v3733, %v5208
    %v5240 = vsub.f32 %v3734, %v5208
    %v5241 = vmax.f32 %v5209, 0.0
    %v5242 = vmax.f32 %v5210, 0.0
    %v5243 = vmax.f32 %v5211, 0.0
    %v5244 = vmax.f32 %v5212, 0.0
    %v5245 = vmax.f32 %v5213, 0.0
    %v5246 = vmax.f32 %v5214, 0.0
    %v5247 = vmax.f32 %v5215, 0.0
    %v5248 = vmax.f32 %v5216, 0.0
    %v5249 = vmax.f32 %v5217, 0.0
    %v5250 = vmax.f32 %v5218, 0.0
    %v5251 = vmax.f32 %v5219, 0.0
    %v5252 = vmax.f32 %v5220, 0.0
    %v5253 = vmax.f32 %v5221, 0.0
    %v5254 = vmax.f32 %v5222, 0.0
    %v5255 = vmax.f32 %v5223, 0.0
    %v5256 = vmax.f32 %v5224, 0.0
    %v5257 = vmax.f32 %v5225, 0.0
    %v5258 = vmax.f32 %v5226, 0.0
    %v5259 = vmax.f32 %v5227, 0.0
    %v5260 = vmax.f32 %v5228, 0.0
    %v5261 = vmax.f32 %v5229, 0.0
    %v5262 = vmax.f32 %v5230, 0.0
    %v5263 = vmax.f32 %v5231, 0.0
    %v5264 = vmax.f32 %v5232, 0.0
    %v5265 = vmax.f32 %v5233, 0.0
    %v5266 = vmax.f32 %v5234, 0.0
    %v5267 = vmax.f32 %v5235, 0.0
    %v5268 = vmax.f32 %v5236, 0.0
    %v5269 = vmax.f32 %v5237, 0.0
    %v5270 = vmax.f32 %v5238, 0.0
    %v5271 = vmax.f32 %v5239, 0.0
    %v5272 = vmax.f32 %v5240, 0.0
    %v5273 = vsel %vm3637, %v5241, 0.0
    %v5274 = vsel %vm3637, %v5242, 0.0
    %v5275 = vadd.f32 %v5273, %v5274
    %v5276 = vsel %vm3637, %v5243, 0.0
    %v5277 = vadd.f32 %v5275, %v5276
    %v5278 = vsel %vm3637, %v5244, 0.0
    %v5279 = vadd.f32 %v5277, %v5278
    %v5280 = vsel %vm3637, %v5245, 0.0
    %v5281 = vadd.f32 %v5279, %v5280
    %v5282 = vsel %vm3637, %v5246, 0.0
    %v5283 = vadd.f32 %v5281, %v5282
    %v5284 = vsel %vm3637, %v5247, 0.0
    %v5285 = vadd.f32 %v5283, %v5284
    %v5286 = vsel %vm3637, %v5248, 0.0
    %v5287 = vadd.f32 %v5285, %v5286
    %v5288 = vsel %vm3637, %v5249, 0.0
    %v5289 = vadd.f32 %v5287, %v5288
    %v5290 = vsel %vm3637, %v5250, 0.0
    %v5291 = vadd.f32 %v5289, %v5290
    %v5292 = vsel %vm3637, %v5251, 0.0
    %v5293 = vadd.f32 %v5291, %v5292
    %v5294 = vsel %vm3637, %v5252, 0.0
    %v5295 = vadd.f32 %v5293, %v5294
    %v5296 = vsel %vm3637, %v5253, 0.0
    %v5297 = vadd.f32 %v5295, %v5296
    %v5298 = vsel %vm3637, %v5254, 0.0
    %v5299 = vadd.f32 %v5297, %v5298
    %v5300 = vsel %vm3637, %v5255, 0.0
    %v5301 = vadd.f32 %v5299, %v5300
    %v5302 = vsel %vm3637, %v5256, 0.0
    %v5303 = vadd.f32 %v5301, %v5302
    %v5304 = vsel %vm3637, %v5257, 0.0
    %v5305 = vadd.f32 %v5303, %v5304
    %v5306 = vsel %vm3637, %v5258, 0.0
    %v5307 = vadd.f32 %v5305, %v5306
    %v5308 = vsel %vm3637, %v5259, 0.0
    %v5309 = vadd.f32 %v5307, %v5308
    %v5310 = vsel %vm3637, %v5260, 0.0
    %v5311 = vadd.f32 %v5309, %v5310
    %v5312 = vsel %vm3637, %v5261, 0.0
    %v5313 = vadd.f32 %v5311, %v5312
    %v5314 = vsel %vm3637, %v5262, 0.0
    %v5315 = vadd.f32 %v5313, %v5314
    %v5316 = vsel %vm3637, %v5263, 0.0
    %v5317 = vadd.f32 %v5315, %v5316
    %v5318 = vsel %vm3637, %v5264, 0.0
    %v5319 = vadd.f32 %v5317, %v5318
    %v5320 = vsel %vm3637, %v5265, 0.0
    %v5321 = vadd.f32 %v5319, %v5320
    %v5322 = vsel %vm3637, %v5266, 0.0
    %v5323 = vadd.f32 %v5321, %v5322
    %v5324 = vsel %vm3637, %v5267, 0.0
    %v5325 = vadd.f32 %v5323, %v5324
    %v5326 = vsel %vm3637, %v5268, 0.0
    %v5327 = vadd.f32 %v5325, %v5326
    %v5328 = vsel %vm3637, %v5269, 0.0
    %v5329 = vadd.f32 %v5327, %v5328
    %v5330 = vsel %vm3637, %v5270, 0.0
    %v5331 = vadd.f32 %v5329, %v5330
    %v5332 = vsel %vm3637, %v5271, 0.0
    %v5333 = vadd.f32 %v5331, %v5332
    %v5334 = vsel %vm3637, %v5272, 0.0
    %v5335 = vadd.f32 %v5333, %v5334
    %5336 = vadd.xlane.f32.xlu0 %v5335
    %v5337 = vpop.xlane.xlu0 %5336
    %vm5338 = vcmp.ge.f32.partialorder %v5337, 1.0
    %v5339 = vsel %vm5338, %v5208, %v5205
    %v5340 = vsel %vm5338, %v5206, %v5208
    %v5341 = vadd.f32 %v5339, %v5340
    %v5342 = vmul.f32 %v5341, 0.5
    %v5343 = vsub.f32 %v3703, %v5342
    %v5344 = vsub.f32 %v3704, %v5342
    %v5345 = vsub.f32 %v3705, %v5342
    %v5346 = vsub.f32 %v3706, %v5342
    %v5347 = vsub.f32 %v3707, %v5342
    %v5348 = vsub.f32 %v3708, %v5342
    %v5349 = vsub.f32 %v3709, %v5342
    %v5350 = vsub.f32 %v3710, %v5342
    %v5351 = vsub.f32 %v3711, %v5342
    %v5352 = vsub.f32 %v3712, %v5342
    %v5353 = vsub.f32 %v3713, %v5342
    %v5354 = vsub.f32 %v3714, %v5342
    %v5355 = vsub.f32 %v3715, %v5342
    %v5356 = vsub.f32 %v3716, %v5342
    %v5357 = vsub.f32 %v3717, %v5342
    %v5358 = vsub.f32 %v3718, %v5342
    %v5359 = vsub.f32 %v3719, %v5342
    %v5360 = vsub.f32 %v3720, %v5342
    %v5361 = vsub.f32 %v3721, %v5342
    %v5362 = vsub.f32 %v3722, %v5342
    %v5363 = vsub.f32 %v3723, %v5342
    %v5364 = vsub.f32 %v3724, %v5342
    %v5365 = vsub.f32 %v3725, %v5342
    %v5366 = vsub.f32 %v3726, %v5342
    %v5367 = vsub.f32 %v3727, %v5342
    %v5368 = vsub.f32 %v3728, %v5342
    %v5369 = vsub.f32 %v3729, %v5342
    %v5370 = vsub.f32 %v3730, %v5342
    %v5371 = vsub.f32 %v3731, %v5342
    %v5372 = vsub.f32 %v3732, %v5342
    %v5373 = vsub.f32 %v3733, %v5342
    %v5374 = vsub.f32 %v3734, %v5342
    %v5375 = vmax.f32 %v5343, 0.0
    %v5376 = vmax.f32 %v5344, 0.0
    %v5377 = vmax.f32 %v5345, 0.0
    %v5378 = vmax.f32 %v5346, 0.0
    %v5379 = vmax.f32 %v5347, 0.0
    %v5380 = vmax.f32 %v5348, 0.0
    %v5381 = vmax.f32 %v5349, 0.0
    %v5382 = vmax.f32 %v5350, 0.0
    %v5383 = vmax.f32 %v5351, 0.0
    %v5384 = vmax.f32 %v5352, 0.0
    %v5385 = vmax.f32 %v5353, 0.0
    %v5386 = vmax.f32 %v5354, 0.0
    %v5387 = vmax.f32 %v5355, 0.0
    %v5388 = vmax.f32 %v5356, 0.0
    %v5389 = vmax.f32 %v5357, 0.0
    %v5390 = vmax.f32 %v5358, 0.0
    %v5391 = vmax.f32 %v5359, 0.0
    %v5392 = vmax.f32 %v5360, 0.0
    %v5393 = vmax.f32 %v5361, 0.0
    %v5394 = vmax.f32 %v5362, 0.0
    %v5395 = vmax.f32 %v5363, 0.0
    %v5396 = vmax.f32 %v5364, 0.0
    %v5397 = vmax.f32 %v5365, 0.0
    %v5398 = vmax.f32 %v5366, 0.0
    %v5399 = vmax.f32 %v5367, 0.0
    %v5400 = vmax.f32 %v5368, 0.0
    %v5401 = vmax.f32 %v5369, 0.0
    %v5402 = vmax.f32 %v5370, 0.0
    %v5403 = vmax.f32 %v5371, 0.0
    %v5404 = vmax.f32 %v5372, 0.0
    %v5405 = vmax.f32 %v5373, 0.0
    %v5406 = vmax.f32 %v5374, 0.0
    %v5407 = vsel %vm3637, %v5375, 0.0
    %v5408 = vsel %vm3637, %v5376, 0.0
    %v5409 = vadd.f32 %v5407, %v5408
    %v5410 = vsel %vm3637, %v5377, 0.0
    %v5411 = vadd.f32 %v5409, %v5410
    %v5412 = vsel %vm3637, %v5378, 0.0
    %v5413 = vadd.f32 %v5411, %v5412
    %v5414 = vsel %vm3637, %v5379, 0.0
    %v5415 = vadd.f32 %v5413, %v5414
    %v5416 = vsel %vm3637, %v5380, 0.0
    %v5417 = vadd.f32 %v5415, %v5416
    %v5418 = vsel %vm3637, %v5381, 0.0
    %v5419 = vadd.f32 %v5417, %v5418
    %v5420 = vsel %vm3637, %v5382, 0.0
    %v5421 = vadd.f32 %v5419, %v5420
    %v5422 = vsel %vm3637, %v5383, 0.0
    %v5423 = vadd.f32 %v5421, %v5422
    %v5424 = vsel %vm3637, %v5384, 0.0
    %v5425 = vadd.f32 %v5423, %v5424
    %v5426 = vsel %vm3637, %v5385, 0.0
    %v5427 = vadd.f32 %v5425, %v5426
    %v5428 = vsel %vm3637, %v5386, 0.0
    %v5429 = vadd.f32 %v5427, %v5428
    %v5430 = vsel %vm3637, %v5387, 0.0
    %v5431 = vadd.f32 %v5429, %v5430
    %v5432 = vsel %vm3637, %v5388, 0.0
    %v5433 = vadd.f32 %v5431, %v5432
    %v5434 = vsel %vm3637, %v5389, 0.0
    %v5435 = vadd.f32 %v5433, %v5434
    %v5436 = vsel %vm3637, %v5390, 0.0
    %v5437 = vadd.f32 %v5435, %v5436
    %v5438 = vsel %vm3637, %v5391, 0.0
    %v5439 = vadd.f32 %v5437, %v5438
    %v5440 = vsel %vm3637, %v5392, 0.0
    %v5441 = vadd.f32 %v5439, %v5440
    %v5442 = vsel %vm3637, %v5393, 0.0
    %v5443 = vadd.f32 %v5441, %v5442
    %v5444 = vsel %vm3637, %v5394, 0.0
    %v5445 = vadd.f32 %v5443, %v5444
    %v5446 = vsel %vm3637, %v5395, 0.0
    %v5447 = vadd.f32 %v5445, %v5446
    %v5448 = vsel %vm3637, %v5396, 0.0
    %v5449 = vadd.f32 %v5447, %v5448
    %v5450 = vsel %vm3637, %v5397, 0.0
    %v5451 = vadd.f32 %v5449, %v5450
    %v5452 = vsel %vm3637, %v5398, 0.0
    %v5453 = vadd.f32 %v5451, %v5452
    %v5454 = vsel %vm3637, %v5399, 0.0
    %v5455 = vadd.f32 %v5453, %v5454
    %v5456 = vsel %vm3637, %v5400, 0.0
    %v5457 = vadd.f32 %v5455, %v5456
    %v5458 = vsel %vm3637, %v5401, 0.0
    %v5459 = vadd.f32 %v5457, %v5458
    %v5460 = vsel %vm3637, %v5402, 0.0
    %v5461 = vadd.f32 %v5459, %v5460
    %v5462 = vsel %vm3637, %v5403, 0.0
    %v5463 = vadd.f32 %v5461, %v5462
    %v5464 = vsel %vm3637, %v5404, 0.0
    %v5465 = vadd.f32 %v5463, %v5464
    %v5466 = vsel %vm3637, %v5405, 0.0
    %v5467 = vadd.f32 %v5465, %v5466
    %v5468 = vsel %vm3637, %v5406, 0.0
    %v5469 = vadd.f32 %v5467, %v5468
    %5470 = vadd.xlane.f32.xlu0 %v5469
    %v5471 = vpop.xlane.xlu0 %5470
    %vm5472 = vcmp.ge.f32.partialorder %v5471, 1.0
    %v5473 = vsel %vm5472, %v5342, %v5339
    %v5474 = vsel %vm5472, %v5340, %v5342
    %v5475 = vadd.f32 %v5473, %v5474
    %v5476 = vmul.f32 %v5475, 0.5
    %v5477 = vsub.f32 %v3703, %v5476
    %v5478 = vsub.f32 %v3704, %v5476
    %v5479 = vsub.f32 %v3705, %v5476
    %v5480 = vsub.f32 %v3706, %v5476
    %v5481 = vsub.f32 %v3707, %v5476
    %v5482 = vsub.f32 %v3708, %v5476
    %v5483 = vsub.f32 %v3709, %v5476
    %v5484 = vsub.f32 %v3710, %v5476
    %v5485 = vsub.f32 %v3711, %v5476
    %v5486 = vsub.f32 %v3712, %v5476
    %v5487 = vsub.f32 %v3713, %v5476
    %v5488 = vsub.f32 %v3714, %v5476
    %v5489 = vsub.f32 %v3715, %v5476
    %v5490 = vsub.f32 %v3716, %v5476
    %v5491 = vsub.f32 %v3717, %v5476
    %v5492 = vsub.f32 %v3718, %v5476
    %v5493 = vsub.f32 %v3719, %v5476
    %v5494 = vsub.f32 %v3720, %v5476
    %v5495 = vsub.f32 %v3721, %v5476
    %v5496 = vsub.f32 %v3722, %v5476
    %v5497 = vsub.f32 %v3723, %v5476
    %v5498 = vsub.f32 %v3724, %v5476
    %v5499 = vsub.f32 %v3725, %v5476
    %v5500 = vsub.f32 %v3726, %v5476
    %v5501 = vsub.f32 %v3727, %v5476
    %v5502 = vsub.f32 %v3728, %v5476
    %v5503 = vsub.f32 %v3729, %v5476
    %v5504 = vsub.f32 %v3730, %v5476
    %v5505 = vsub.f32 %v3731, %v5476
    %v5506 = vsub.f32 %v3732, %v5476
    %v5507 = vsub.f32 %v3733, %v5476
    %v5508 = vsub.f32 %v3734, %v5476
    %v5509 = vmax.f32 %v5477, 0.0
    %v5510 = vmax.f32 %v5478, 0.0
    %v5511 = vmax.f32 %v5479, 0.0
    %v5512 = vmax.f32 %v5480, 0.0
    %v5513 = vmax.f32 %v5481, 0.0
    %v5514 = vmax.f32 %v5482, 0.0
    %v5515 = vmax.f32 %v5483, 0.0
    %v5516 = vmax.f32 %v5484, 0.0
    %v5517 = vmax.f32 %v5485, 0.0
    %v5518 = vmax.f32 %v5486, 0.0
    %v5519 = vmax.f32 %v5487, 0.0
    %v5520 = vmax.f32 %v5488, 0.0
    %v5521 = vmax.f32 %v5489, 0.0
    %v5522 = vmax.f32 %v5490, 0.0
    %v5523 = vmax.f32 %v5491, 0.0
    %v5524 = vmax.f32 %v5492, 0.0
    %v5525 = vmax.f32 %v5493, 0.0
    %v5526 = vmax.f32 %v5494, 0.0
    %v5527 = vmax.f32 %v5495, 0.0
    %v5528 = vmax.f32 %v5496, 0.0
    %v5529 = vmax.f32 %v5497, 0.0
    %v5530 = vmax.f32 %v5498, 0.0
    %v5531 = vmax.f32 %v5499, 0.0
    %v5532 = vmax.f32 %v5500, 0.0
    %v5533 = vmax.f32 %v5501, 0.0
    %v5534 = vmax.f32 %v5502, 0.0
    %v5535 = vmax.f32 %v5503, 0.0
    %v5536 = vmax.f32 %v5504, 0.0
    %v5537 = vmax.f32 %v5505, 0.0
    %v5538 = vmax.f32 %v5506, 0.0
    %v5539 = vmax.f32 %v5507, 0.0
    %v5540 = vmax.f32 %v5508, 0.0
    %v5541 = vsel %vm3637, %v5509, 0.0
    %v5542 = vsel %vm3637, %v5510, 0.0
    %v5543 = vadd.f32 %v5541, %v5542
    %v5544 = vsel %vm3637, %v5511, 0.0
    %v5545 = vadd.f32 %v5543, %v5544
    %v5546 = vsel %vm3637, %v5512, 0.0
    %v5547 = vadd.f32 %v5545, %v5546
    %v5548 = vsel %vm3637, %v5513, 0.0
    %v5549 = vadd.f32 %v5547, %v5548
    %v5550 = vsel %vm3637, %v5514, 0.0
    %v5551 = vadd.f32 %v5549, %v5550
    %v5552 = vsel %vm3637, %v5515, 0.0
    %v5553 = vadd.f32 %v5551, %v5552
    %v5554 = vsel %vm3637, %v5516, 0.0
    %v5555 = vadd.f32 %v5553, %v5554
    %v5556 = vsel %vm3637, %v5517, 0.0
    %v5557 = vadd.f32 %v5555, %v5556
    %v5558 = vsel %vm3637, %v5518, 0.0
    %v5559 = vadd.f32 %v5557, %v5558
    %v5560 = vsel %vm3637, %v5519, 0.0
    %v5561 = vadd.f32 %v5559, %v5560
    %v5562 = vsel %vm3637, %v5520, 0.0
    %v5563 = vadd.f32 %v5561, %v5562
    %v5564 = vsel %vm3637, %v5521, 0.0
    %v5565 = vadd.f32 %v5563, %v5564
    %v5566 = vsel %vm3637, %v5522, 0.0
    %v5567 = vadd.f32 %v5565, %v5566
    %v5568 = vsel %vm3637, %v5523, 0.0
    %v5569 = vadd.f32 %v5567, %v5568
    %v5570 = vsel %vm3637, %v5524, 0.0
    %v5571 = vadd.f32 %v5569, %v5570
    %v5572 = vsel %vm3637, %v5525, 0.0
    %v5573 = vadd.f32 %v5571, %v5572
    %v5574 = vsel %vm3637, %v5526, 0.0
    %v5575 = vadd.f32 %v5573, %v5574
    %v5576 = vsel %vm3637, %v5527, 0.0
    %v5577 = vadd.f32 %v5575, %v5576
    %v5578 = vsel %vm3637, %v5528, 0.0
    %v5579 = vadd.f32 %v5577, %v5578
    %v5580 = vsel %vm3637, %v5529, 0.0
    %v5581 = vadd.f32 %v5579, %v5580
    %v5582 = vsel %vm3637, %v5530, 0.0
    %v5583 = vadd.f32 %v5581, %v5582
    %v5584 = vsel %vm3637, %v5531, 0.0
    %v5585 = vadd.f32 %v5583, %v5584
    %v5586 = vsel %vm3637, %v5532, 0.0
    %v5587 = vadd.f32 %v5585, %v5586
    %v5588 = vsel %vm3637, %v5533, 0.0
    %v5589 = vadd.f32 %v5587, %v5588
    %v5590 = vsel %vm3637, %v5534, 0.0
    %v5591 = vadd.f32 %v5589, %v5590
    %v5592 = vsel %vm3637, %v5535, 0.0
    %v5593 = vadd.f32 %v5591, %v5592
    %v5594 = vsel %vm3637, %v5536, 0.0
    %v5595 = vadd.f32 %v5593, %v5594
    %v5596 = vsel %vm3637, %v5537, 0.0
    %v5597 = vadd.f32 %v5595, %v5596
    %v5598 = vsel %vm3637, %v5538, 0.0
    %v5599 = vadd.f32 %v5597, %v5598
    %v5600 = vsel %vm3637, %v5539, 0.0
    %v5601 = vadd.f32 %v5599, %v5600
    %v5602 = vsel %vm3637, %v5540, 0.0
    %v5603 = vadd.f32 %v5601, %v5602
    %5604 = vadd.xlane.f32.xlu0 %v5603
    %v5605 = vpop.xlane.xlu0 %5604
    %vm5606 = vcmp.ge.f32.partialorder %v5605, 1.0
    %v5607 = vsel %vm5606, %v5476, %v5473
    %v5608 = vsel %vm5606, %v5474, %v5476
    %v5609 = vadd.f32 %v5607, %v5608
    %v5610 = vmul.f32 %v5609, 0.5
    %v5611 = vsub.f32 %v3703, %v5610
    %v5612 = vsub.f32 %v3704, %v5610
    %v5613 = vsub.f32 %v3705, %v5610
    %v5614 = vsub.f32 %v3706, %v5610
    %v5615 = vsub.f32 %v3707, %v5610
    %v5616 = vsub.f32 %v3708, %v5610
    %v5617 = vsub.f32 %v3709, %v5610
    %v5618 = vsub.f32 %v3710, %v5610
    %v5619 = vsub.f32 %v3711, %v5610
    %v5620 = vsub.f32 %v3712, %v5610
    %v5621 = vsub.f32 %v3713, %v5610
    %v5622 = vsub.f32 %v3714, %v5610
    %v5623 = vsub.f32 %v3715, %v5610
    %v5624 = vsub.f32 %v3716, %v5610
    %v5625 = vsub.f32 %v3717, %v5610
    %v5626 = vsub.f32 %v3718, %v5610
    %v5627 = vsub.f32 %v3719, %v5610
    %v5628 = vsub.f32 %v3720, %v5610
    %v5629 = vsub.f32 %v3721, %v5610
    %v5630 = vsub.f32 %v3722, %v5610
    %v5631 = vsub.f32 %v3723, %v5610
    %v5632 = vsub.f32 %v3724, %v5610
    %v5633 = vsub.f32 %v3725, %v5610
    %v5634 = vsub.f32 %v3726, %v5610
    %v5635 = vsub.f32 %v3727, %v5610
    %v5636 = vsub.f32 %v3728, %v5610
    %v5637 = vsub.f32 %v3729, %v5610
    %v5638 = vsub.f32 %v3730, %v5610
    %v5639 = vsub.f32 %v3731, %v5610
    %v5640 = vsub.f32 %v3732, %v5610
    %v5641 = vsub.f32 %v3733, %v5610
    %v5642 = vsub.f32 %v3734, %v5610
    %v5643 = vmax.f32 %v5611, 0.0
    %v5644 = vmax.f32 %v5612, 0.0
    %v5645 = vmax.f32 %v5613, 0.0
    %v5646 = vmax.f32 %v5614, 0.0
    %v5647 = vmax.f32 %v5615, 0.0
    %v5648 = vmax.f32 %v5616, 0.0
    %v5649 = vmax.f32 %v5617, 0.0
    %v5650 = vmax.f32 %v5618, 0.0
    %v5651 = vmax.f32 %v5619, 0.0
    %v5652 = vmax.f32 %v5620, 0.0
    %v5653 = vmax.f32 %v5621, 0.0
    %v5654 = vmax.f32 %v5622, 0.0
    %v5655 = vmax.f32 %v5623, 0.0
    %v5656 = vmax.f32 %v5624, 0.0
    %v5657 = vmax.f32 %v5625, 0.0
    %v5658 = vmax.f32 %v5626, 0.0
    %v5659 = vmax.f32 %v5627, 0.0
    %v5660 = vmax.f32 %v5628, 0.0
    %v5661 = vmax.f32 %v5629, 0.0
    %v5662 = vmax.f32 %v5630, 0.0
    %v5663 = vmax.f32 %v5631, 0.0
    %v5664 = vmax.f32 %v5632, 0.0
    %v5665 = vmax.f32 %v5633, 0.0
    %v5666 = vmax.f32 %v5634, 0.0
    %v5667 = vmax.f32 %v5635, 0.0
    %v5668 = vmax.f32 %v5636, 0.0
    %v5669 = vmax.f32 %v5637, 0.0
    %v5670 = vmax.f32 %v5638, 0.0
    %v5671 = vmax.f32 %v5639, 0.0
    %v5672 = vmax.f32 %v5640, 0.0
    %v5673 = vmax.f32 %v5641, 0.0
    %v5674 = vmax.f32 %v5642, 0.0
    %v5675 = vsel %vm3637, %v5643, 0.0
    %v5676 = vsel %vm3637, %v5644, 0.0
    %v5677 = vadd.f32 %v5675, %v5676
    %v5678 = vsel %vm3637, %v5645, 0.0
    %v5679 = vadd.f32 %v5677, %v5678
    %v5680 = vsel %vm3637, %v5646, 0.0
    %v5681 = vadd.f32 %v5679, %v5680
    %v5682 = vsel %vm3637, %v5647, 0.0
    %v5683 = vadd.f32 %v5681, %v5682
    %v5684 = vsel %vm3637, %v5648, 0.0
    %v5685 = vadd.f32 %v5683, %v5684
    %v5686 = vsel %vm3637, %v5649, 0.0
    %v5687 = vadd.f32 %v5685, %v5686
    %v5688 = vsel %vm3637, %v5650, 0.0
    %v5689 = vadd.f32 %v5687, %v5688
    %v5690 = vsel %vm3637, %v5651, 0.0
    %v5691 = vadd.f32 %v5689, %v5690
    %v5692 = vsel %vm3637, %v5652, 0.0
    %v5693 = vadd.f32 %v5691, %v5692
    %v5694 = vsel %vm3637, %v5653, 0.0
    %v5695 = vadd.f32 %v5693, %v5694
    %v5696 = vsel %vm3637, %v5654, 0.0
    %v5697 = vadd.f32 %v5695, %v5696
    %v5698 = vsel %vm3637, %v5655, 0.0
    %v5699 = vadd.f32 %v5697, %v5698
    %v5700 = vsel %vm3637, %v5656, 0.0
    %v5701 = vadd.f32 %v5699, %v5700
    %v5702 = vsel %vm3637, %v5657, 0.0
    %v5703 = vadd.f32 %v5701, %v5702
    %v5704 = vsel %vm3637, %v5658, 0.0
    %v5705 = vadd.f32 %v5703, %v5704
    %v5706 = vsel %vm3637, %v5659, 0.0
    %v5707 = vadd.f32 %v5705, %v5706
    %v5708 = vsel %vm3637, %v5660, 0.0
    %v5709 = vadd.f32 %v5707, %v5708
    %v5710 = vsel %vm3637, %v5661, 0.0
    %v5711 = vadd.f32 %v5709, %v5710
    %v5712 = vsel %vm3637, %v5662, 0.0
    %v5713 = vadd.f32 %v5711, %v5712
    %v5714 = vsel %vm3637, %v5663, 0.0
    %v5715 = vadd.f32 %v5713, %v5714
    %v5716 = vsel %vm3637, %v5664, 0.0
    %v5717 = vadd.f32 %v5715, %v5716
    %v5718 = vsel %vm3637, %v5665, 0.0
    %v5719 = vadd.f32 %v5717, %v5718
    %v5720 = vsel %vm3637, %v5666, 0.0
    %v5721 = vadd.f32 %v5719, %v5720
    %v5722 = vsel %vm3637, %v5667, 0.0
    %v5723 = vadd.f32 %v5721, %v5722
    %v5724 = vsel %vm3637, %v5668, 0.0
    %v5725 = vadd.f32 %v5723, %v5724
    %v5726 = vsel %vm3637, %v5669, 0.0
    %v5727 = vadd.f32 %v5725, %v5726
    %v5728 = vsel %vm3637, %v5670, 0.0
    %v5729 = vadd.f32 %v5727, %v5728
    %v5730 = vsel %vm3637, %v5671, 0.0
    %v5731 = vadd.f32 %v5729, %v5730
    %v5732 = vsel %vm3637, %v5672, 0.0
    %v5733 = vadd.f32 %v5731, %v5732
    %v5734 = vsel %vm3637, %v5673, 0.0
    %v5735 = vadd.f32 %v5733, %v5734
    %v5736 = vsel %vm3637, %v5674, 0.0
    %v5737 = vadd.f32 %v5735, %v5736
    %5738 = vadd.xlane.f32.xlu0 %v5737
    %v5739 = vpop.xlane.xlu0 %5738
    %vm5740 = vcmp.ge.f32.partialorder %v5739, 1.0
    %v5741 = vsel %vm5740, %v5610, %v5607
    %v5742 = vsel %vm5740, %v5608, %v5610
    %v5743 = vadd.f32 %v5741, %v5742
    %v5744 = vmul.f32 %v5743, 0.5
    %v5745 = vsub.f32 %v3703, %v5744
    %v5746 = vsub.f32 %v3704, %v5744
    %v5747 = vsub.f32 %v3705, %v5744
    %v5748 = vsub.f32 %v3706, %v5744
    %v5749 = vsub.f32 %v3707, %v5744
    %v5750 = vsub.f32 %v3708, %v5744
    %v5751 = vsub.f32 %v3709, %v5744
    %v5752 = vsub.f32 %v3710, %v5744
    %v5753 = vsub.f32 %v3711, %v5744
    %v5754 = vsub.f32 %v3712, %v5744
    %v5755 = vsub.f32 %v3713, %v5744
    %v5756 = vsub.f32 %v3714, %v5744
    %v5757 = vsub.f32 %v3715, %v5744
    %v5758 = vsub.f32 %v3716, %v5744
    %v5759 = vsub.f32 %v3717, %v5744
    %v5760 = vsub.f32 %v3718, %v5744
    %v5761 = vsub.f32 %v3719, %v5744
    %v5762 = vsub.f32 %v3720, %v5744
    %v5763 = vsub.f32 %v3721, %v5744
    %v5764 = vsub.f32 %v3722, %v5744
    %v5765 = vsub.f32 %v3723, %v5744
    %v5766 = vsub.f32 %v3724, %v5744
    %v5767 = vsub.f32 %v3725, %v5744
    %v5768 = vsub.f32 %v3726, %v5744
    %v5769 = vsub.f32 %v3727, %v5744
    %v5770 = vsub.f32 %v3728, %v5744
    %v5771 = vsub.f32 %v3729, %v5744
    %v5772 = vsub.f32 %v3730, %v5744
    %v5773 = vsub.f32 %v3731, %v5744
    %v5774 = vsub.f32 %v3732, %v5744
    %v5775 = vsub.f32 %v3733, %v5744
    %v5776 = vsub.f32 %v3734, %v5744
    %v5777 = vmax.f32 %v5745, 0.0
    %v5778 = vmax.f32 %v5746, 0.0
    %v5779 = vmax.f32 %v5747, 0.0
    %v5780 = vmax.f32 %v5748, 0.0
    %v5781 = vmax.f32 %v5749, 0.0
    %v5782 = vmax.f32 %v5750, 0.0
    %v5783 = vmax.f32 %v5751, 0.0
    %v5784 = vmax.f32 %v5752, 0.0
    %v5785 = vmax.f32 %v5753, 0.0
    %v5786 = vmax.f32 %v5754, 0.0
    %v5787 = vmax.f32 %v5755, 0.0
    %v5788 = vmax.f32 %v5756, 0.0
    %v5789 = vmax.f32 %v5757, 0.0
    %v5790 = vmax.f32 %v5758, 0.0
    %v5791 = vmax.f32 %v5759, 0.0
    %v5792 = vmax.f32 %v5760, 0.0
    %v5793 = vmax.f32 %v5761, 0.0
    %v5794 = vmax.f32 %v5762, 0.0
    %v5795 = vmax.f32 %v5763, 0.0
    %v5796 = vmax.f32 %v5764, 0.0
    %v5797 = vmax.f32 %v5765, 0.0
    %v5798 = vmax.f32 %v5766, 0.0
    %v5799 = vmax.f32 %v5767, 0.0
    %v5800 = vmax.f32 %v5768, 0.0
    %v5801 = vmax.f32 %v5769, 0.0
    %v5802 = vmax.f32 %v5770, 0.0
    %v5803 = vmax.f32 %v5771, 0.0
    %v5804 = vmax.f32 %v5772, 0.0
    %v5805 = vmax.f32 %v5773, 0.0
    %v5806 = vmax.f32 %v5774, 0.0
    %v5807 = vmax.f32 %v5775, 0.0
    %v5808 = vmax.f32 %v5776, 0.0
    %v5809 = vsel %vm3637, %v5777, 0.0
    %v5810 = vsel %vm3637, %v5778, 0.0
    %v5811 = vadd.f32 %v5809, %v5810
    %v5812 = vsel %vm3637, %v5779, 0.0
    %v5813 = vadd.f32 %v5811, %v5812
    %v5814 = vsel %vm3637, %v5780, 0.0
    %v5815 = vadd.f32 %v5813, %v5814
    %v5816 = vsel %vm3637, %v5781, 0.0
    %v5817 = vadd.f32 %v5815, %v5816
    %v5818 = vsel %vm3637, %v5782, 0.0
    %v5819 = vadd.f32 %v5817, %v5818
    %v5820 = vsel %vm3637, %v5783, 0.0
    %v5821 = vadd.f32 %v5819, %v5820
    %v5822 = vsel %vm3637, %v5784, 0.0
    %v5823 = vadd.f32 %v5821, %v5822
    %v5824 = vsel %vm3637, %v5785, 0.0
    %v5825 = vadd.f32 %v5823, %v5824
    %v5826 = vsel %vm3637, %v5786, 0.0
    %v5827 = vadd.f32 %v5825, %v5826
    %v5828 = vsel %vm3637, %v5787, 0.0
    %v5829 = vadd.f32 %v5827, %v5828
    %v5830 = vsel %vm3637, %v5788, 0.0
    %v5831 = vadd.f32 %v5829, %v5830
    %v5832 = vsel %vm3637, %v5789, 0.0
    %v5833 = vadd.f32 %v5831, %v5832
    %v5834 = vsel %vm3637, %v5790, 0.0
    %v5835 = vadd.f32 %v5833, %v5834
    %v5836 = vsel %vm3637, %v5791, 0.0
    %v5837 = vadd.f32 %v5835, %v5836
    %v5838 = vsel %vm3637, %v5792, 0.0
    %v5839 = vadd.f32 %v5837, %v5838
    %v5840 = vsel %vm3637, %v5793, 0.0
    %v5841 = vadd.f32 %v5839, %v5840
    %v5842 = vsel %vm3637, %v5794, 0.0
    %v5843 = vadd.f32 %v5841, %v5842
    %v5844 = vsel %vm3637, %v5795, 0.0
    %v5845 = vadd.f32 %v5843, %v5844
    %v5846 = vsel %vm3637, %v5796, 0.0
    %v5847 = vadd.f32 %v5845, %v5846
    %v5848 = vsel %vm3637, %v5797, 0.0
    %v5849 = vadd.f32 %v5847, %v5848
    %v5850 = vsel %vm3637, %v5798, 0.0
    %v5851 = vadd.f32 %v5849, %v5850
    %v5852 = vsel %vm3637, %v5799, 0.0
    %v5853 = vadd.f32 %v5851, %v5852
    %v5854 = vsel %vm3637, %v5800, 0.0
    %v5855 = vadd.f32 %v5853, %v5854
    %v5856 = vsel %vm3637, %v5801, 0.0
    %v5857 = vadd.f32 %v5855, %v5856
    %v5858 = vsel %vm3637, %v5802, 0.0
    %v5859 = vadd.f32 %v5857, %v5858
    %v5860 = vsel %vm3637, %v5803, 0.0
    %v5861 = vadd.f32 %v5859, %v5860
    %v5862 = vsel %vm3637, %v5804, 0.0
    %v5863 = vadd.f32 %v5861, %v5862
    %v5864 = vsel %vm3637, %v5805, 0.0
    %v5865 = vadd.f32 %v5863, %v5864
    %v5866 = vsel %vm3637, %v5806, 0.0
    %v5867 = vadd.f32 %v5865, %v5866
    %v5868 = vsel %vm3637, %v5807, 0.0
    %v5869 = vadd.f32 %v5867, %v5868
    %v5870 = vsel %vm3637, %v5808, 0.0
    %v5871 = vadd.f32 %v5869, %v5870
    %5872 = vadd.xlane.f32.xlu0 %v5871
    %v5873 = vpop.xlane.xlu0 %5872
    %vm5874 = vcmp.ge.f32.partialorder %v5873, 1.0
    %v5875 = vsel %vm5874, %v5744, %v5741
    %v5876 = vsel %vm5874, %v5742, %v5744
    %v5877 = vadd.f32 %v5875, %v5876
    %v5878 = vmul.f32 %v5877, 0.5
    %v5879 = vsub.f32 %v3703, %v5878
    %v5880 = vsub.f32 %v3704, %v5878
    %v5881 = vsub.f32 %v3705, %v5878
    %v5882 = vsub.f32 %v3706, %v5878
    %v5883 = vsub.f32 %v3707, %v5878
    %v5884 = vsub.f32 %v3708, %v5878
    %v5885 = vsub.f32 %v3709, %v5878
    %v5886 = vsub.f32 %v3710, %v5878
    %v5887 = vsub.f32 %v3711, %v5878
    %v5888 = vsub.f32 %v3712, %v5878
    %v5889 = vsub.f32 %v3713, %v5878
    %v5890 = vsub.f32 %v3714, %v5878
    %v5891 = vsub.f32 %v3715, %v5878
    %v5892 = vsub.f32 %v3716, %v5878
    %v5893 = vsub.f32 %v3717, %v5878
    %v5894 = vsub.f32 %v3718, %v5878
    %v5895 = vsub.f32 %v3719, %v5878
    %v5896 = vsub.f32 %v3720, %v5878
    %v5897 = vsub.f32 %v3721, %v5878
    %v5898 = vsub.f32 %v3722, %v5878
    %v5899 = vsub.f32 %v3723, %v5878
    %v5900 = vsub.f32 %v3724, %v5878
    %v5901 = vsub.f32 %v3725, %v5878
    %v5902 = vsub.f32 %v3726, %v5878
    %v5903 = vsub.f32 %v3727, %v5878
    %v5904 = vsub.f32 %v3728, %v5878
    %v5905 = vsub.f32 %v3729, %v5878
    %v5906 = vsub.f32 %v3730, %v5878
    %v5907 = vsub.f32 %v3731, %v5878
    %v5908 = vsub.f32 %v3732, %v5878
    %v5909 = vsub.f32 %v3733, %v5878
    %v5910 = vsub.f32 %v3734, %v5878
    %v5911 = vmax.f32 %v5879, 0.0
    %v5912 = vmax.f32 %v5880, 0.0
    %v5913 = vmax.f32 %v5881, 0.0
    %v5914 = vmax.f32 %v5882, 0.0
    %v5915 = vmax.f32 %v5883, 0.0
    %v5916 = vmax.f32 %v5884, 0.0
    %v5917 = vmax.f32 %v5885, 0.0
    %v5918 = vmax.f32 %v5886, 0.0
    %v5919 = vmax.f32 %v5887, 0.0
    %v5920 = vmax.f32 %v5888, 0.0
    %v5921 = vmax.f32 %v5889, 0.0
    %v5922 = vmax.f32 %v5890, 0.0
    %v5923 = vmax.f32 %v5891, 0.0
    %v5924 = vmax.f32 %v5892, 0.0
    %v5925 = vmax.f32 %v5893, 0.0
    %v5926 = vmax.f32 %v5894, 0.0
    %v5927 = vmax.f32 %v5895, 0.0
    %v5928 = vmax.f32 %v5896, 0.0
    %v5929 = vmax.f32 %v5897, 0.0
    %v5930 = vmax.f32 %v5898, 0.0
    %v5931 = vmax.f32 %v5899, 0.0
    %v5932 = vmax.f32 %v5900, 0.0
    %v5933 = vmax.f32 %v5901, 0.0
    %v5934 = vmax.f32 %v5902, 0.0
    %v5935 = vmax.f32 %v5903, 0.0
    %v5936 = vmax.f32 %v5904, 0.0
    %v5937 = vmax.f32 %v5905, 0.0
    %v5938 = vmax.f32 %v5906, 0.0
    %v5939 = vmax.f32 %v5907, 0.0
    %v5940 = vmax.f32 %v5908, 0.0
    %v5941 = vmax.f32 %v5909, 0.0
    %v5942 = vmax.f32 %v5910, 0.0
    %v5943 = vsel %vm3637, %v5911, 0.0
    %v5944 = vsel %vm3637, %v5912, 0.0
    %v5945 = vadd.f32 %v5943, %v5944
    %v5946 = vsel %vm3637, %v5913, 0.0
    %v5947 = vadd.f32 %v5945, %v5946
    %v5948 = vsel %vm3637, %v5914, 0.0
    %v5949 = vadd.f32 %v5947, %v5948
    %v5950 = vsel %vm3637, %v5915, 0.0
    %v5951 = vadd.f32 %v5949, %v5950
    %v5952 = vsel %vm3637, %v5916, 0.0
    %v5953 = vadd.f32 %v5951, %v5952
    %v5954 = vsel %vm3637, %v5917, 0.0
    %v5955 = vadd.f32 %v5953, %v5954
    %v5956 = vsel %vm3637, %v5918, 0.0
    %v5957 = vadd.f32 %v5955, %v5956
    %v5958 = vsel %vm3637, %v5919, 0.0
    %v5959 = vadd.f32 %v5957, %v5958
    %v5960 = vsel %vm3637, %v5920, 0.0
    %v5961 = vadd.f32 %v5959, %v5960
    %v5962 = vsel %vm3637, %v5921, 0.0
    %v5963 = vadd.f32 %v5961, %v5962
    %v5964 = vsel %vm3637, %v5922, 0.0
    %v5965 = vadd.f32 %v5963, %v5964
    %v5966 = vsel %vm3637, %v5923, 0.0
    %v5967 = vadd.f32 %v5965, %v5966
    %v5968 = vsel %vm3637, %v5924, 0.0
    %v5969 = vadd.f32 %v5967, %v5968
    %v5970 = vsel %vm3637, %v5925, 0.0
    %v5971 = vadd.f32 %v5969, %v5970
    %v5972 = vsel %vm3637, %v5926, 0.0
    %v5973 = vadd.f32 %v5971, %v5972
    %v5974 = vsel %vm3637, %v5927, 0.0
    %v5975 = vadd.f32 %v5973, %v5974
    %v5976 = vsel %vm3637, %v5928, 0.0
    %v5977 = vadd.f32 %v5975, %v5976
    %v5978 = vsel %vm3637, %v5929, 0.0
    %v5979 = vadd.f32 %v5977, %v5978
    %v5980 = vsel %vm3637, %v5930, 0.0
    %v5981 = vadd.f32 %v5979, %v5980
    %v5982 = vsel %vm3637, %v5931, 0.0
    %v5983 = vadd.f32 %v5981, %v5982
    %v5984 = vsel %vm3637, %v5932, 0.0
    %v5985 = vadd.f32 %v5983, %v5984
    %v5986 = vsel %vm3637, %v5933, 0.0
    %v5987 = vadd.f32 %v5985, %v5986
    %v5988 = vsel %vm3637, %v5934, 0.0
    %v5989 = vadd.f32 %v5987, %v5988
    %v5990 = vsel %vm3637, %v5935, 0.0
    %v5991 = vadd.f32 %v5989, %v5990
    %v5992 = vsel %vm3637, %v5936, 0.0
    %v5993 = vadd.f32 %v5991, %v5992
    %v5994 = vsel %vm3637, %v5937, 0.0
    %v5995 = vadd.f32 %v5993, %v5994
    %v5996 = vsel %vm3637, %v5938, 0.0
    %v5997 = vadd.f32 %v5995, %v5996
    %v5998 = vsel %vm3637, %v5939, 0.0
    %v5999 = vadd.f32 %v5997, %v5998
    %v6000 = vsel %vm3637, %v5940, 0.0
    %v6001 = vadd.f32 %v5999, %v6000
    %v6002 = vsel %vm3637, %v5941, 0.0
    %v6003 = vadd.f32 %v6001, %v6002
    %v6004 = vsel %vm3637, %v5942, 0.0
    %v6005 = vadd.f32 %v6003, %v6004
    %6006 = vadd.xlane.f32.xlu0 %v6005
    %v6007 = vpop.xlane.xlu0 %6006
    %vm6008 = vcmp.ge.f32.partialorder %v6007, 1.0
    %v6009 = vsel %vm6008, %v5878, %v5875
    %v6010 = vsel %vm6008, %v5876, %v5878
    %v6011 = vadd.f32 %v6009, %v6010
    %v6012 = vmul.f32 %v6011, 0.5
    %v6013 = vsub.f32 %v3703, %v6012
    %v6014 = vsub.f32 %v3704, %v6012
    %v6015 = vsub.f32 %v3705, %v6012
    %v6016 = vsub.f32 %v3706, %v6012
    %v6017 = vsub.f32 %v3707, %v6012
    %v6018 = vsub.f32 %v3708, %v6012
    %v6019 = vsub.f32 %v3709, %v6012
    %v6020 = vsub.f32 %v3710, %v6012
    %v6021 = vsub.f32 %v3711, %v6012
    %v6022 = vsub.f32 %v3712, %v6012
    %v6023 = vsub.f32 %v3713, %v6012
    %v6024 = vsub.f32 %v3714, %v6012
    %v6025 = vsub.f32 %v3715, %v6012
    %v6026 = vsub.f32 %v3716, %v6012
    %v6027 = vsub.f32 %v3717, %v6012
    %v6028 = vsub.f32 %v3718, %v6012
    %v6029 = vsub.f32 %v3719, %v6012
    %v6030 = vsub.f32 %v3720, %v6012
    %v6031 = vsub.f32 %v3721, %v6012
    %v6032 = vsub.f32 %v3722, %v6012
    %v6033 = vsub.f32 %v3723, %v6012
    %v6034 = vsub.f32 %v3724, %v6012
    %v6035 = vsub.f32 %v3725, %v6012
    %v6036 = vsub.f32 %v3726, %v6012
    %v6037 = vsub.f32 %v3727, %v6012
    %v6038 = vsub.f32 %v3728, %v6012
    %v6039 = vsub.f32 %v3729, %v6012
    %v6040 = vsub.f32 %v3730, %v6012
    %v6041 = vsub.f32 %v3731, %v6012
    %v6042 = vsub.f32 %v3732, %v6012
    %v6043 = vsub.f32 %v3733, %v6012
    %v6044 = vsub.f32 %v3734, %v6012
    %v6045 = vmax.f32 %v6013, 0.0
    %v6046 = vmax.f32 %v6014, 0.0
    %v6047 = vmax.f32 %v6015, 0.0
    %v6048 = vmax.f32 %v6016, 0.0
    %v6049 = vmax.f32 %v6017, 0.0
    %v6050 = vmax.f32 %v6018, 0.0
    %v6051 = vmax.f32 %v6019, 0.0
    %v6052 = vmax.f32 %v6020, 0.0
    %v6053 = vmax.f32 %v6021, 0.0
    %v6054 = vmax.f32 %v6022, 0.0
    %v6055 = vmax.f32 %v6023, 0.0
    %v6056 = vmax.f32 %v6024, 0.0
    %v6057 = vmax.f32 %v6025, 0.0
    %v6058 = vmax.f32 %v6026, 0.0
    %v6059 = vmax.f32 %v6027, 0.0
    %v6060 = vmax.f32 %v6028, 0.0
    %v6061 = vmax.f32 %v6029, 0.0
    %v6062 = vmax.f32 %v6030, 0.0
    %v6063 = vmax.f32 %v6031, 0.0
    %v6064 = vmax.f32 %v6032, 0.0
    %v6065 = vmax.f32 %v6033, 0.0
    %v6066 = vmax.f32 %v6034, 0.0
    %v6067 = vmax.f32 %v6035, 0.0
    %v6068 = vmax.f32 %v6036, 0.0
    %v6069 = vmax.f32 %v6037, 0.0
    %v6070 = vmax.f32 %v6038, 0.0
    %v6071 = vmax.f32 %v6039, 0.0
    %v6072 = vmax.f32 %v6040, 0.0
    %v6073 = vmax.f32 %v6041, 0.0
    %v6074 = vmax.f32 %v6042, 0.0
    %v6075 = vmax.f32 %v6043, 0.0
    %v6076 = vmax.f32 %v6044, 0.0
    %v6077 = vsel %vm3637, %v6045, 0.0
    %v6078 = vsel %vm3637, %v6046, 0.0
    %v6079 = vadd.f32 %v6077, %v6078
    %v6080 = vsel %vm3637, %v6047, 0.0
    %v6081 = vadd.f32 %v6079, %v6080
    %v6082 = vsel %vm3637, %v6048, 0.0
    %v6083 = vadd.f32 %v6081, %v6082
    %v6084 = vsel %vm3637, %v6049, 0.0
    %v6085 = vadd.f32 %v6083, %v6084
    %v6086 = vsel %vm3637, %v6050, 0.0
    %v6087 = vadd.f32 %v6085, %v6086
    %v6088 = vsel %vm3637, %v6051, 0.0
    %v6089 = vadd.f32 %v6087, %v6088
    %v6090 = vsel %vm3637, %v6052, 0.0
    %v6091 = vadd.f32 %v6089, %v6090
    %v6092 = vsel %vm3637, %v6053, 0.0
    %v6093 = vadd.f32 %v6091, %v6092
    %v6094 = vsel %vm3637, %v6054, 0.0
    %v6095 = vadd.f32 %v6093, %v6094
    %v6096 = vsel %vm3637, %v6055, 0.0
    %v6097 = vadd.f32 %v6095, %v6096
    %v6098 = vsel %vm3637, %v6056, 0.0
    %v6099 = vadd.f32 %v6097, %v6098
    %v6100 = vsel %vm3637, %v6057, 0.0
    %v6101 = vadd.f32 %v6099, %v6100
    %v6102 = vsel %vm3637, %v6058, 0.0
    %v6103 = vadd.f32 %v6101, %v6102
    %v6104 = vsel %vm3637, %v6059, 0.0
    %v6105 = vadd.f32 %v6103, %v6104
    %v6106 = vsel %vm3637, %v6060, 0.0
    %v6107 = vadd.f32 %v6105, %v6106
    %v6108 = vsel %vm3637, %v6061, 0.0
    %v6109 = vadd.f32 %v6107, %v6108
    %v6110 = vsel %vm3637, %v6062, 0.0
    %v6111 = vadd.f32 %v6109, %v6110
    %v6112 = vsel %vm3637, %v6063, 0.0
    %v6113 = vadd.f32 %v6111, %v6112
    %v6114 = vsel %vm3637, %v6064, 0.0
    %v6115 = vadd.f32 %v6113, %v6114
    %v6116 = vsel %vm3637, %v6065, 0.0
    %v6117 = vadd.f32 %v6115, %v6116
    %v6118 = vsel %vm3637, %v6066, 0.0
    %v6119 = vadd.f32 %v6117, %v6118
    %v6120 = vsel %vm3637, %v6067, 0.0
    %v6121 = vadd.f32 %v6119, %v6120
    %v6122 = vsel %vm3637, %v6068, 0.0
    %v6123 = vadd.f32 %v6121, %v6122
    %v6124 = vsel %vm3637, %v6069, 0.0
    %v6125 = vadd.f32 %v6123, %v6124
    %v6126 = vsel %vm3637, %v6070, 0.0
    %v6127 = vadd.f32 %v6125, %v6126
    %v6128 = vsel %vm3637, %v6071, 0.0
    %v6129 = vadd.f32 %v6127, %v6128
    %v6130 = vsel %vm3637, %v6072, 0.0
    %v6131 = vadd.f32 %v6129, %v6130
    %v6132 = vsel %vm3637, %v6073, 0.0
    %v6133 = vadd.f32 %v6131, %v6132
    %v6134 = vsel %vm3637, %v6074, 0.0
    %v6135 = vadd.f32 %v6133, %v6134
    %v6136 = vsel %vm3637, %v6075, 0.0
    %v6137 = vadd.f32 %v6135, %v6136
    %v6138 = vsel %vm3637, %v6076, 0.0
    %v6139 = vadd.f32 %v6137, %v6138
    %6140 = vadd.xlane.f32.xlu0 %v6139
    %v6141 = vpop.xlane.xlu0 %6140
    %vm6142 = vcmp.ge.f32.partialorder %v6141, 1.0
    %v6143 = vsel %vm6142, %v6012, %v6009
    %v6144 = vsel %vm6142, %v6010, %v6012
    %v6145 = vadd.f32 %v6143, %v6144
    %v6146 = vmul.f32 %v6145, 0.5
    %v6147 = vsub.f32 %v3703, %v6146
    %v6148 = vsub.f32 %v3704, %v6146
    %v6149 = vsub.f32 %v3705, %v6146
    %v6150 = vsub.f32 %v3706, %v6146
    %v6151 = vsub.f32 %v3707, %v6146
    %v6152 = vsub.f32 %v3708, %v6146
    %v6153 = vsub.f32 %v3709, %v6146
    %v6154 = vsub.f32 %v3710, %v6146
    %v6155 = vsub.f32 %v3711, %v6146
    %v6156 = vsub.f32 %v3712, %v6146
    %v6157 = vsub.f32 %v3713, %v6146
    %v6158 = vsub.f32 %v3714, %v6146
    %v6159 = vsub.f32 %v3715, %v6146
    %v6160 = vsub.f32 %v3716, %v6146
    %v6161 = vsub.f32 %v3717, %v6146
    %v6162 = vsub.f32 %v3718, %v6146
    %v6163 = vsub.f32 %v3719, %v6146
    %v6164 = vsub.f32 %v3720, %v6146
    %v6165 = vsub.f32 %v3721, %v6146
    %v6166 = vsub.f32 %v3722, %v6146
    %v6167 = vsub.f32 %v3723, %v6146
    %v6168 = vsub.f32 %v3724, %v6146
    %v6169 = vsub.f32 %v3725, %v6146
    %v6170 = vsub.f32 %v3726, %v6146
    %v6171 = vsub.f32 %v3727, %v6146
    %v6172 = vsub.f32 %v3728, %v6146
    %v6173 = vsub.f32 %v3729, %v6146
    %v6174 = vsub.f32 %v3730, %v6146
    %v6175 = vsub.f32 %v3731, %v6146
    %v6176 = vsub.f32 %v3732, %v6146
    %v6177 = vsub.f32 %v3733, %v6146
    %v6178 = vsub.f32 %v3734, %v6146
    %v6179 = vmax.f32 %v6147, 0.0
    %v6180 = vmax.f32 %v6148, 0.0
    %v6181 = vmax.f32 %v6149, 0.0
    %v6182 = vmax.f32 %v6150, 0.0
    %v6183 = vmax.f32 %v6151, 0.0
    %v6184 = vmax.f32 %v6152, 0.0
    %v6185 = vmax.f32 %v6153, 0.0
    %v6186 = vmax.f32 %v6154, 0.0
    %v6187 = vmax.f32 %v6155, 0.0
    %v6188 = vmax.f32 %v6156, 0.0
    %v6189 = vmax.f32 %v6157, 0.0
    %v6190 = vmax.f32 %v6158, 0.0
    %v6191 = vmax.f32 %v6159, 0.0
    %v6192 = vmax.f32 %v6160, 0.0
    %v6193 = vmax.f32 %v6161, 0.0
    %v6194 = vmax.f32 %v6162, 0.0
    %v6195 = vmax.f32 %v6163, 0.0
    %v6196 = vmax.f32 %v6164, 0.0
    %v6197 = vmax.f32 %v6165, 0.0
    %v6198 = vmax.f32 %v6166, 0.0
    %v6199 = vmax.f32 %v6167, 0.0
    %v6200 = vmax.f32 %v6168, 0.0
    %v6201 = vmax.f32 %v6169, 0.0
    %v6202 = vmax.f32 %v6170, 0.0
    %v6203 = vmax.f32 %v6171, 0.0
    %v6204 = vmax.f32 %v6172, 0.0
    %v6205 = vmax.f32 %v6173, 0.0
    %v6206 = vmax.f32 %v6174, 0.0
    %v6207 = vmax.f32 %v6175, 0.0
    %v6208 = vmax.f32 %v6176, 0.0
    %v6209 = vmax.f32 %v6177, 0.0
    %v6210 = vmax.f32 %v6178, 0.0
    %v6211 = vsel %vm3637, %v6179, 0.0
    %v6212 = vsel %vm3637, %v6180, 0.0
    %v6213 = vadd.f32 %v6211, %v6212
    %v6214 = vsel %vm3637, %v6181, 0.0
    %v6215 = vadd.f32 %v6213, %v6214
    %v6216 = vsel %vm3637, %v6182, 0.0
    %v6217 = vadd.f32 %v6215, %v6216
    %v6218 = vsel %vm3637, %v6183, 0.0
    %v6219 = vadd.f32 %v6217, %v6218
    %v6220 = vsel %vm3637, %v6184, 0.0
    %v6221 = vadd.f32 %v6219, %v6220
    %v6222 = vsel %vm3637, %v6185, 0.0
    %v6223 = vadd.f32 %v6221, %v6222
    %v6224 = vsel %vm3637, %v6186, 0.0
    %v6225 = vadd.f32 %v6223, %v6224
    %v6226 = vsel %vm3637, %v6187, 0.0
    %v6227 = vadd.f32 %v6225, %v6226
    %v6228 = vsel %vm3637, %v6188, 0.0
    %v6229 = vadd.f32 %v6227, %v6228
    %v6230 = vsel %vm3637, %v6189, 0.0
    %v6231 = vadd.f32 %v6229, %v6230
    %v6232 = vsel %vm3637, %v6190, 0.0
    %v6233 = vadd.f32 %v6231, %v6232
    %v6234 = vsel %vm3637, %v6191, 0.0
    %v6235 = vadd.f32 %v6233, %v6234
    %v6236 = vsel %vm3637, %v6192, 0.0
    %v6237 = vadd.f32 %v6235, %v6236
    %v6238 = vsel %vm3637, %v6193, 0.0
    %v6239 = vadd.f32 %v6237, %v6238
    %v6240 = vsel %vm3637, %v6194, 0.0
    %v6241 = vadd.f32 %v6239, %v6240
    %v6242 = vsel %vm3637, %v6195, 0.0
    %v6243 = vadd.f32 %v6241, %v6242
    %v6244 = vsel %vm3637, %v6196, 0.0
    %v6245 = vadd.f32 %v6243, %v6244
    %v6246 = vsel %vm3637, %v6197, 0.0
    %v6247 = vadd.f32 %v6245, %v6246
    %v6248 = vsel %vm3637, %v6198, 0.0
    %v6249 = vadd.f32 %v6247, %v6248
    %v6250 = vsel %vm3637, %v6199, 0.0
    %v6251 = vadd.f32 %v6249, %v6250
    %v6252 = vsel %vm3637, %v6200, 0.0
    %v6253 = vadd.f32 %v6251, %v6252
    %v6254 = vsel %vm3637, %v6201, 0.0
    %v6255 = vadd.f32 %v6253, %v6254
    %v6256 = vsel %vm3637, %v6202, 0.0
    %v6257 = vadd.f32 %v6255, %v6256
    %v6258 = vsel %vm3637, %v6203, 0.0
    %v6259 = vadd.f32 %v6257, %v6258
    %v6260 = vsel %vm3637, %v6204, 0.0
    %v6261 = vadd.f32 %v6259, %v6260
    %v6262 = vsel %vm3637, %v6205, 0.0
    %v6263 = vadd.f32 %v6261, %v6262
    %v6264 = vsel %vm3637, %v6206, 0.0
    %v6265 = vadd.f32 %v6263, %v6264
    %v6266 = vsel %vm3637, %v6207, 0.0
    %v6267 = vadd.f32 %v6265, %v6266
    %v6268 = vsel %vm3637, %v6208, 0.0
    %v6269 = vadd.f32 %v6267, %v6268
    %v6270 = vsel %vm3637, %v6209, 0.0
    %v6271 = vadd.f32 %v6269, %v6270
    %v6272 = vsel %vm3637, %v6210, 0.0
    %v6273 = vadd.f32 %v6271, %v6272
    %6274 = vadd.xlane.f32.xlu0 %v6273
    %v6275 = vpop.xlane.xlu0 %6274
    %vm6276 = vcmp.ge.f32.partialorder %v6275, 1.0
    %v6277 = vsel %vm6276, %v6146, %v6143
    %v6278 = vsel %vm6276, %v6144, %v6146
    %v6279 = vadd.f32 %v6277, %v6278
    %v6280 = vmul.f32 %v6279, 0.5
    %v6281 = vsub.f32 %v3703, %v6280
    %v6282 = vsub.f32 %v3704, %v6280
    %v6283 = vsub.f32 %v3705, %v6280
    %v6284 = vsub.f32 %v3706, %v6280
    %v6285 = vsub.f32 %v3707, %v6280
    %v6286 = vsub.f32 %v3708, %v6280
    %v6287 = vsub.f32 %v3709, %v6280
    %v6288 = vsub.f32 %v3710, %v6280
    %v6289 = vsub.f32 %v3711, %v6280
    %v6290 = vsub.f32 %v3712, %v6280
    %v6291 = vsub.f32 %v3713, %v6280
    %v6292 = vsub.f32 %v3714, %v6280
    %v6293 = vsub.f32 %v3715, %v6280
    %v6294 = vsub.f32 %v3716, %v6280
    %v6295 = vsub.f32 %v3717, %v6280
    %v6296 = vsub.f32 %v3718, %v6280
    %v6297 = vsub.f32 %v3719, %v6280
    %v6298 = vsub.f32 %v3720, %v6280
    %v6299 = vsub.f32 %v3721, %v6280
    %v6300 = vsub.f32 %v3722, %v6280
    %v6301 = vsub.f32 %v3723, %v6280
    %v6302 = vsub.f32 %v3724, %v6280
    %v6303 = vsub.f32 %v3725, %v6280
    %v6304 = vsub.f32 %v3726, %v6280
    %v6305 = vsub.f32 %v3727, %v6280
    %v6306 = vsub.f32 %v3728, %v6280
    %v6307 = vsub.f32 %v3729, %v6280
    %v6308 = vsub.f32 %v3730, %v6280
    %v6309 = vsub.f32 %v3731, %v6280
    %v6310 = vsub.f32 %v3732, %v6280
    %v6311 = vsub.f32 %v3733, %v6280
    %v6312 = vsub.f32 %v3734, %v6280
    %v6313 = vmax.f32 %v6281, 0.0
    %v6314 = vmax.f32 %v6282, 0.0
    %v6315 = vmax.f32 %v6283, 0.0
    %v6316 = vmax.f32 %v6284, 0.0
    %v6317 = vmax.f32 %v6285, 0.0
    %v6318 = vmax.f32 %v6286, 0.0
    %v6319 = vmax.f32 %v6287, 0.0
    %v6320 = vmax.f32 %v6288, 0.0
    %v6321 = vmax.f32 %v6289, 0.0
    %v6322 = vmax.f32 %v6290, 0.0
    %v6323 = vmax.f32 %v6291, 0.0
    %v6324 = vmax.f32 %v6292, 0.0
    %v6325 = vmax.f32 %v6293, 0.0
    %v6326 = vmax.f32 %v6294, 0.0
    %v6327 = vmax.f32 %v6295, 0.0
    %v6328 = vmax.f32 %v6296, 0.0
    %v6329 = vmax.f32 %v6297, 0.0
    %v6330 = vmax.f32 %v6298, 0.0
    %v6331 = vmax.f32 %v6299, 0.0
    %v6332 = vmax.f32 %v6300, 0.0
    %v6333 = vmax.f32 %v6301, 0.0
    %v6334 = vmax.f32 %v6302, 0.0
    %v6335 = vmax.f32 %v6303, 0.0
    %v6336 = vmax.f32 %v6304, 0.0
    %v6337 = vmax.f32 %v6305, 0.0
    %v6338 = vmax.f32 %v6306, 0.0
    %v6339 = vmax.f32 %v6307, 0.0
    %v6340 = vmax.f32 %v6308, 0.0
    %v6341 = vmax.f32 %v6309, 0.0
    %v6342 = vmax.f32 %v6310, 0.0
    %v6343 = vmax.f32 %v6311, 0.0
    %v6344 = vmax.f32 %v6312, 0.0
    %v6345 = vsel %vm3637, %v6313, 0.0
    %v6346 = vsel %vm3637, %v6314, 0.0
    %v6347 = vadd.f32 %v6345, %v6346
    %v6348 = vsel %vm3637, %v6315, 0.0
    %v6349 = vadd.f32 %v6347, %v6348
    %v6350 = vsel %vm3637, %v6316, 0.0
    %v6351 = vadd.f32 %v6349, %v6350
    %v6352 = vsel %vm3637, %v6317, 0.0
    %v6353 = vadd.f32 %v6351, %v6352
    %v6354 = vsel %vm3637, %v6318, 0.0
    %v6355 = vadd.f32 %v6353, %v6354
    %v6356 = vsel %vm3637, %v6319, 0.0
    %v6357 = vadd.f32 %v6355, %v6356
    %v6358 = vsel %vm3637, %v6320, 0.0
    %v6359 = vadd.f32 %v6357, %v6358
    %v6360 = vsel %vm3637, %v6321, 0.0
    %v6361 = vadd.f32 %v6359, %v6360
    %v6362 = vsel %vm3637, %v6322, 0.0
    %v6363 = vadd.f32 %v6361, %v6362
    %v6364 = vsel %vm3637, %v6323, 0.0
    %v6365 = vadd.f32 %v6363, %v6364
    %v6366 = vsel %vm3637, %v6324, 0.0
    %v6367 = vadd.f32 %v6365, %v6366
    %v6368 = vsel %vm3637, %v6325, 0.0
    %v6369 = vadd.f32 %v6367, %v6368
    %v6370 = vsel %vm3637, %v6326, 0.0
    %v6371 = vadd.f32 %v6369, %v6370
    %v6372 = vsel %vm3637, %v6327, 0.0
    %v6373 = vadd.f32 %v6371, %v6372
    %v6374 = vsel %vm3637, %v6328, 0.0
    %v6375 = vadd.f32 %v6373, %v6374
    %v6376 = vsel %vm3637, %v6329, 0.0
    %v6377 = vadd.f32 %v6375, %v6376
    %v6378 = vsel %vm3637, %v6330, 0.0
    %v6379 = vadd.f32 %v6377, %v6378
    %v6380 = vsel %vm3637, %v6331, 0.0
    %v6381 = vadd.f32 %v6379, %v6380
    %v6382 = vsel %vm3637, %v6332, 0.0
    %v6383 = vadd.f32 %v6381, %v6382
    %v6384 = vsel %vm3637, %v6333, 0.0
    %v6385 = vadd.f32 %v6383, %v6384
    %v6386 = vsel %vm3637, %v6334, 0.0
    %v6387 = vadd.f32 %v6385, %v6386
    %v6388 = vsel %vm3637, %v6335, 0.0
    %v6389 = vadd.f32 %v6387, %v6388
    %v6390 = vsel %vm3637, %v6336, 0.0
    %v6391 = vadd.f32 %v6389, %v6390
    %v6392 = vsel %vm3637, %v6337, 0.0
    %v6393 = vadd.f32 %v6391, %v6392
    %v6394 = vsel %vm3637, %v6338, 0.0
    %v6395 = vadd.f32 %v6393, %v6394
    %v6396 = vsel %vm3637, %v6339, 0.0
    %v6397 = vadd.f32 %v6395, %v6396
    %v6398 = vsel %vm3637, %v6340, 0.0
    %v6399 = vadd.f32 %v6397, %v6398
    %v6400 = vsel %vm3637, %v6341, 0.0
    %v6401 = vadd.f32 %v6399, %v6400
    %v6402 = vsel %vm3637, %v6342, 0.0
    %v6403 = vadd.f32 %v6401, %v6402
    %v6404 = vsel %vm3637, %v6343, 0.0
    %v6405 = vadd.f32 %v6403, %v6404
    %v6406 = vsel %vm3637, %v6344, 0.0
    %v6407 = vadd.f32 %v6405, %v6406
    %6408 = vadd.xlane.f32.xlu0 %v6407
    %v6409 = vpop.xlane.xlu0 %6408
    %vm6410 = vcmp.ge.f32.partialorder %v6409, 1.0
    %v6411 = vsel %vm6410, %v6280, %v6277
    %v6412 = vsel %vm6410, %v6278, %v6280
    %v6413 = vadd.f32 %v6411, %v6412
    %v6414 = vmul.f32 %v6413, 0.5
    %v6415 = vsub.f32 %v3703, %v6414
    %v6416 = vsub.f32 %v3704, %v6414
    %v6417 = vsub.f32 %v3705, %v6414
    %v6418 = vsub.f32 %v3706, %v6414
    %v6419 = vsub.f32 %v3707, %v6414
    %v6420 = vsub.f32 %v3708, %v6414
    %v6421 = vsub.f32 %v3709, %v6414
    %v6422 = vsub.f32 %v3710, %v6414
    %v6423 = vsub.f32 %v3711, %v6414
    %v6424 = vsub.f32 %v3712, %v6414
    %v6425 = vsub.f32 %v3713, %v6414
    %v6426 = vsub.f32 %v3714, %v6414
    %v6427 = vsub.f32 %v3715, %v6414
    %v6428 = vsub.f32 %v3716, %v6414
    %v6429 = vsub.f32 %v3717, %v6414
    %v6430 = vsub.f32 %v3718, %v6414
    %v6431 = vsub.f32 %v3719, %v6414
    %v6432 = vsub.f32 %v3720, %v6414
    %v6433 = vsub.f32 %v3721, %v6414
    %v6434 = vsub.f32 %v3722, %v6414
    %v6435 = vsub.f32 %v3723, %v6414
    %v6436 = vsub.f32 %v3724, %v6414
    %v6437 = vsub.f32 %v3725, %v6414
    %v6438 = vsub.f32 %v3726, %v6414
    %v6439 = vsub.f32 %v3727, %v6414
    %v6440 = vsub.f32 %v3728, %v6414
    %v6441 = vsub.f32 %v3729, %v6414
    %v6442 = vsub.f32 %v3730, %v6414
    %v6443 = vsub.f32 %v3731, %v6414
    %v6444 = vsub.f32 %v3732, %v6414
    %v6445 = vsub.f32 %v3733, %v6414
    %v6446 = vsub.f32 %v3734, %v6414
    %v6447 = vmax.f32 %v6415, 0.0
    %v6448 = vmax.f32 %v6416, 0.0
    %v6449 = vmax.f32 %v6417, 0.0
    %v6450 = vmax.f32 %v6418, 0.0
    %v6451 = vmax.f32 %v6419, 0.0
    %v6452 = vmax.f32 %v6420, 0.0
    %v6453 = vmax.f32 %v6421, 0.0
    %v6454 = vmax.f32 %v6422, 0.0
    %v6455 = vmax.f32 %v6423, 0.0
    %v6456 = vmax.f32 %v6424, 0.0
    %v6457 = vmax.f32 %v6425, 0.0
    %v6458 = vmax.f32 %v6426, 0.0
    %v6459 = vmax.f32 %v6427, 0.0
    %v6460 = vmax.f32 %v6428, 0.0
    %v6461 = vmax.f32 %v6429, 0.0
    %v6462 = vmax.f32 %v6430, 0.0
    %v6463 = vmax.f32 %v6431, 0.0
    %v6464 = vmax.f32 %v6432, 0.0
    %v6465 = vmax.f32 %v6433, 0.0
    %v6466 = vmax.f32 %v6434, 0.0
    %v6467 = vmax.f32 %v6435, 0.0
    %v6468 = vmax.f32 %v6436, 0.0
    %v6469 = vmax.f32 %v6437, 0.0
    %v6470 = vmax.f32 %v6438, 0.0
    %v6471 = vmax.f32 %v6439, 0.0
    %v6472 = vmax.f32 %v6440, 0.0
    %v6473 = vmax.f32 %v6441, 0.0
    %v6474 = vmax.f32 %v6442, 0.0
    %v6475 = vmax.f32 %v6443, 0.0
    %v6476 = vmax.f32 %v6444, 0.0
    %v6477 = vmax.f32 %v6445, 0.0
    %v6478 = vmax.f32 %v6446, 0.0
    %v6479 = vsel %vm3637, %v6447, 0.0
    %v6480 = vsel %vm3637, %v6448, 0.0
    %v6481 = vadd.f32 %v6479, %v6480
    %v6482 = vsel %vm3637, %v6449, 0.0
    %v6483 = vadd.f32 %v6481, %v6482
    %v6484 = vsel %vm3637, %v6450, 0.0
    %v6485 = vadd.f32 %v6483, %v6484
    %v6486 = vsel %vm3637, %v6451, 0.0
    %v6487 = vadd.f32 %v6485, %v6486
    %v6488 = vsel %vm3637, %v6452, 0.0
    %v6489 = vadd.f32 %v6487, %v6488
    %v6490 = vsel %vm3637, %v6453, 0.0
    %v6491 = vadd.f32 %v6489, %v6490
    %v6492 = vsel %vm3637, %v6454, 0.0
    %v6493 = vadd.f32 %v6491, %v6492
    %v6494 = vsel %vm3637, %v6455, 0.0
    %v6495 = vadd.f32 %v6493, %v6494
    %v6496 = vsel %vm3637, %v6456, 0.0
    %v6497 = vadd.f32 %v6495, %v6496
    %v6498 = vsel %vm3637, %v6457, 0.0
    %v6499 = vadd.f32 %v6497, %v6498
    %v6500 = vsel %vm3637, %v6458, 0.0
    %v6501 = vadd.f32 %v6499, %v6500
    %v6502 = vsel %vm3637, %v6459, 0.0
    %v6503 = vadd.f32 %v6501, %v6502
    %v6504 = vsel %vm3637, %v6460, 0.0
    %v6505 = vadd.f32 %v6503, %v6504
    %v6506 = vsel %vm3637, %v6461, 0.0
    %v6507 = vadd.f32 %v6505, %v6506
    %v6508 = vsel %vm3637, %v6462, 0.0
    %v6509 = vadd.f32 %v6507, %v6508
    %v6510 = vsel %vm3637, %v6463, 0.0
    %v6511 = vadd.f32 %v6509, %v6510
    %v6512 = vsel %vm3637, %v6464, 0.0
    %v6513 = vadd.f32 %v6511, %v6512
    %v6514 = vsel %vm3637, %v6465, 0.0
    %v6515 = vadd.f32 %v6513, %v6514
    %v6516 = vsel %vm3637, %v6466, 0.0
    %v6517 = vadd.f32 %v6515, %v6516
    %v6518 = vsel %vm3637, %v6467, 0.0
    %v6519 = vadd.f32 %v6517, %v6518
    %v6520 = vsel %vm3637, %v6468, 0.0
    %v6521 = vadd.f32 %v6519, %v6520
    %v6522 = vsel %vm3637, %v6469, 0.0
    %v6523 = vadd.f32 %v6521, %v6522
    %v6524 = vsel %vm3637, %v6470, 0.0
    %v6525 = vadd.f32 %v6523, %v6524
    %v6526 = vsel %vm3637, %v6471, 0.0
    %v6527 = vadd.f32 %v6525, %v6526
    %v6528 = vsel %vm3637, %v6472, 0.0
    %v6529 = vadd.f32 %v6527, %v6528
    %v6530 = vsel %vm3637, %v6473, 0.0
    %v6531 = vadd.f32 %v6529, %v6530
    %v6532 = vsel %vm3637, %v6474, 0.0
    %v6533 = vadd.f32 %v6531, %v6532
    %v6534 = vsel %vm3637, %v6475, 0.0
    %v6535 = vadd.f32 %v6533, %v6534
    %v6536 = vsel %vm3637, %v6476, 0.0
    %v6537 = vadd.f32 %v6535, %v6536
    %v6538 = vsel %vm3637, %v6477, 0.0
    %v6539 = vadd.f32 %v6537, %v6538
    %v6540 = vsel %vm3637, %v6478, 0.0
    %v6541 = vadd.f32 %v6539, %v6540
    %6542 = vadd.xlane.f32.xlu0 %v6541
    %v6543 = vpop.xlane.xlu0 %6542
    %vm6544 = vcmp.ge.f32.partialorder %v6543, 1.0
    %v6545 = vsel %vm6544, %v6414, %v6411
    %v6546 = vsel %vm6544, %v6412, %v6414
    %v6547 = vadd.f32 %v6545, %v6546
    %v6548 = vmul.f32 %v6547, 0.5
    %v6549 = vsub.f32 %v3703, %v6548
    %v6550 = vsub.f32 %v3704, %v6548
    %v6551 = vsub.f32 %v3705, %v6548
    %v6552 = vsub.f32 %v3706, %v6548
    %v6553 = vsub.f32 %v3707, %v6548
    %v6554 = vsub.f32 %v3708, %v6548
    %v6555 = vsub.f32 %v3709, %v6548
    %v6556 = vsub.f32 %v3710, %v6548
    %v6557 = vsub.f32 %v3711, %v6548
    %v6558 = vsub.f32 %v3712, %v6548
    %v6559 = vsub.f32 %v3713, %v6548
    %v6560 = vsub.f32 %v3714, %v6548
    %v6561 = vsub.f32 %v3715, %v6548
    %v6562 = vsub.f32 %v3716, %v6548
    %v6563 = vsub.f32 %v3717, %v6548
    %v6564 = vsub.f32 %v3718, %v6548
    %v6565 = vsub.f32 %v3719, %v6548
    %v6566 = vsub.f32 %v3720, %v6548
    %v6567 = vsub.f32 %v3721, %v6548
    %v6568 = vsub.f32 %v3722, %v6548
    %v6569 = vsub.f32 %v3723, %v6548
    %v6570 = vsub.f32 %v3724, %v6548
    %v6571 = vsub.f32 %v3725, %v6548
    %v6572 = vsub.f32 %v3726, %v6548
    %v6573 = vsub.f32 %v3727, %v6548
    %v6574 = vsub.f32 %v3728, %v6548
    %v6575 = vsub.f32 %v3729, %v6548
    %v6576 = vsub.f32 %v3730, %v6548
    %v6577 = vsub.f32 %v3731, %v6548
    %v6578 = vsub.f32 %v3732, %v6548
    %v6579 = vsub.f32 %v3733, %v6548
    %v6580 = vsub.f32 %v3734, %v6548
    %v6581 = vmax.f32 %v6549, 0.0
    %v6582 = vmax.f32 %v6550, 0.0
    %v6583 = vmax.f32 %v6551, 0.0
    %v6584 = vmax.f32 %v6552, 0.0
    %v6585 = vmax.f32 %v6553, 0.0
    %v6586 = vmax.f32 %v6554, 0.0
    %v6587 = vmax.f32 %v6555, 0.0
    %v6588 = vmax.f32 %v6556, 0.0
    %v6589 = vmax.f32 %v6557, 0.0
    %v6590 = vmax.f32 %v6558, 0.0
    %v6591 = vmax.f32 %v6559, 0.0
    %v6592 = vmax.f32 %v6560, 0.0
    %v6593 = vmax.f32 %v6561, 0.0
    %v6594 = vmax.f32 %v6562, 0.0
    %v6595 = vmax.f32 %v6563, 0.0
    %v6596 = vmax.f32 %v6564, 0.0
    %v6597 = vmax.f32 %v6565, 0.0
    %v6598 = vmax.f32 %v6566, 0.0
    %v6599 = vmax.f32 %v6567, 0.0
    %v6600 = vmax.f32 %v6568, 0.0
    %v6601 = vmax.f32 %v6569, 0.0
    %v6602 = vmax.f32 %v6570, 0.0
    %v6603 = vmax.f32 %v6571, 0.0
    %v6604 = vmax.f32 %v6572, 0.0
    %v6605 = vmax.f32 %v6573, 0.0
    %v6606 = vmax.f32 %v6574, 0.0
    %v6607 = vmax.f32 %v6575, 0.0
    %v6608 = vmax.f32 %v6576, 0.0
    %v6609 = vmax.f32 %v6577, 0.0
    %v6610 = vmax.f32 %v6578, 0.0
    %v6611 = vmax.f32 %v6579, 0.0
    %v6612 = vmax.f32 %v6580, 0.0
    %v6613 = vsel %vm3637, %v6581, 0.0
    %v6614 = vsel %vm3637, %v6582, 0.0
    %v6615 = vadd.f32 %v6613, %v6614
    %v6616 = vsel %vm3637, %v6583, 0.0
    %v6617 = vadd.f32 %v6615, %v6616
    %v6618 = vsel %vm3637, %v6584, 0.0
    %v6619 = vadd.f32 %v6617, %v6618
    %v6620 = vsel %vm3637, %v6585, 0.0
    %v6621 = vadd.f32 %v6619, %v6620
    %v6622 = vsel %vm3637, %v6586, 0.0
    %v6623 = vadd.f32 %v6621, %v6622
    %v6624 = vsel %vm3637, %v6587, 0.0
    %v6625 = vadd.f32 %v6623, %v6624
    %v6626 = vsel %vm3637, %v6588, 0.0
    %v6627 = vadd.f32 %v6625, %v6626
    %v6628 = vsel %vm3637, %v6589, 0.0
    %v6629 = vadd.f32 %v6627, %v6628
    %v6630 = vsel %vm3637, %v6590, 0.0
    %v6631 = vadd.f32 %v6629, %v6630
    %v6632 = vsel %vm3637, %v6591, 0.0
    %v6633 = vadd.f32 %v6631, %v6632
    %v6634 = vsel %vm3637, %v6592, 0.0
    %v6635 = vadd.f32 %v6633, %v6634
    %v6636 = vsel %vm3637, %v6593, 0.0
    %v6637 = vadd.f32 %v6635, %v6636
    %v6638 = vsel %vm3637, %v6594, 0.0
    %v6639 = vadd.f32 %v6637, %v6638
    %v6640 = vsel %vm3637, %v6595, 0.0
    %v6641 = vadd.f32 %v6639, %v6640
    %v6642 = vsel %vm3637, %v6596, 0.0
    %v6643 = vadd.f32 %v6641, %v6642
    %v6644 = vsel %vm3637, %v6597, 0.0
    %v6645 = vadd.f32 %v6643, %v6644
    %v6646 = vsel %vm3637, %v6598, 0.0
    %v6647 = vadd.f32 %v6645, %v6646
    %v6648 = vsel %vm3637, %v6599, 0.0
    %v6649 = vadd.f32 %v6647, %v6648
    %v6650 = vsel %vm3637, %v6600, 0.0
    %v6651 = vadd.f32 %v6649, %v6650
    %v6652 = vsel %vm3637, %v6601, 0.0
    %v6653 = vadd.f32 %v6651, %v6652
    %v6654 = vsel %vm3637, %v6602, 0.0
    %v6655 = vadd.f32 %v6653, %v6654
    %v6656 = vsel %vm3637, %v6603, 0.0
    %v6657 = vadd.f32 %v6655, %v6656
    %v6658 = vsel %vm3637, %v6604, 0.0
    %v6659 = vadd.f32 %v6657, %v6658
    %v6660 = vsel %vm3637, %v6605, 0.0
    %v6661 = vadd.f32 %v6659, %v6660
    %v6662 = vsel %vm3637, %v6606, 0.0
    %v6663 = vadd.f32 %v6661, %v6662
    %v6664 = vsel %vm3637, %v6607, 0.0
    %v6665 = vadd.f32 %v6663, %v6664
    %v6666 = vsel %vm3637, %v6608, 0.0
    %v6667 = vadd.f32 %v6665, %v6666
    %v6668 = vsel %vm3637, %v6609, 0.0
    %v6669 = vadd.f32 %v6667, %v6668
    %v6670 = vsel %vm3637, %v6610, 0.0
    %v6671 = vadd.f32 %v6669, %v6670
    %v6672 = vsel %vm3637, %v6611, 0.0
    %v6673 = vadd.f32 %v6671, %v6672
    %v6674 = vsel %vm3637, %v6612, 0.0
    %v6675 = vadd.f32 %v6673, %v6674
    %6676 = vadd.xlane.f32.xlu0 %v6675
    %v6677 = vpop.xlane.xlu0 %6676
    %vm6678 = vcmp.ge.f32.partialorder %v6677, 1.0
    %v6679 = vsel %vm6678, %v6548, %v6545
    %v6680 = vsel %vm6678, %v6546, %v6548
    %v6681 = vadd.f32 %v6679, %v6680
    %v6682 = vmul.f32 %v6681, 0.5
    %v6683 = vsub.f32 %v3703, %v6682
    %v6684 = vsub.f32 %v3704, %v6682
    %v6685 = vsub.f32 %v3705, %v6682
    %v6686 = vsub.f32 %v3706, %v6682
    %v6687 = vsub.f32 %v3707, %v6682
    %v6688 = vsub.f32 %v3708, %v6682
    %v6689 = vsub.f32 %v3709, %v6682
    %v6690 = vsub.f32 %v3710, %v6682
    %v6691 = vsub.f32 %v3711, %v6682
    %v6692 = vsub.f32 %v3712, %v6682
    %v6693 = vsub.f32 %v3713, %v6682
    %v6694 = vsub.f32 %v3714, %v6682
    %v6695 = vsub.f32 %v3715, %v6682
    %v6696 = vsub.f32 %v3716, %v6682
    %v6697 = vsub.f32 %v3717, %v6682
    %v6698 = vsub.f32 %v3718, %v6682
    %v6699 = vsub.f32 %v3719, %v6682
    %v6700 = vsub.f32 %v3720, %v6682
    %v6701 = vsub.f32 %v3721, %v6682
    %v6702 = vsub.f32 %v3722, %v6682
    %v6703 = vsub.f32 %v3723, %v6682
    %v6704 = vsub.f32 %v3724, %v6682
    %v6705 = vsub.f32 %v3725, %v6682
    %v6706 = vsub.f32 %v3726, %v6682
    %v6707 = vsub.f32 %v3727, %v6682
    %v6708 = vsub.f32 %v3728, %v6682
    %v6709 = vsub.f32 %v3729, %v6682
    %v6710 = vsub.f32 %v3730, %v6682
    %v6711 = vsub.f32 %v3731, %v6682
    %v6712 = vsub.f32 %v3732, %v6682
    %v6713 = vsub.f32 %v3733, %v6682
    %v6714 = vsub.f32 %v3734, %v6682
    %v6715 = vmax.f32 %v6683, 0.0
    %v6716 = vmax.f32 %v6684, 0.0
    %v6717 = vmax.f32 %v6685, 0.0
    %v6718 = vmax.f32 %v6686, 0.0
    %v6719 = vmax.f32 %v6687, 0.0
    %v6720 = vmax.f32 %v6688, 0.0
    %v6721 = vmax.f32 %v6689, 0.0
    %v6722 = vmax.f32 %v6690, 0.0
    %v6723 = vmax.f32 %v6691, 0.0
    %v6724 = vmax.f32 %v6692, 0.0
    %v6725 = vmax.f32 %v6693, 0.0
    %v6726 = vmax.f32 %v6694, 0.0
    %v6727 = vmax.f32 %v6695, 0.0
    %v6728 = vmax.f32 %v6696, 0.0
    %v6729 = vmax.f32 %v6697, 0.0
    %v6730 = vmax.f32 %v6698, 0.0
    %v6731 = vmax.f32 %v6699, 0.0
    %v6732 = vmax.f32 %v6700, 0.0
    %v6733 = vmax.f32 %v6701, 0.0
    %v6734 = vmax.f32 %v6702, 0.0
    %v6735 = vmax.f32 %v6703, 0.0
    %v6736 = vmax.f32 %v6704, 0.0
    %v6737 = vmax.f32 %v6705, 0.0
    %v6738 = vmax.f32 %v6706, 0.0
    %v6739 = vmax.f32 %v6707, 0.0
    %v6740 = vmax.f32 %v6708, 0.0
    %v6741 = vmax.f32 %v6709, 0.0
    %v6742 = vmax.f32 %v6710, 0.0
    %v6743 = vmax.f32 %v6711, 0.0
    %v6744 = vmax.f32 %v6712, 0.0
    %v6745 = vmax.f32 %v6713, 0.0
    %v6746 = vmax.f32 %v6714, 0.0
    %v6747 = vsel %vm3637, %v6715, 0.0
    %v6748 = vsel %vm3637, %v6716, 0.0
    %v6749 = vadd.f32 %v6747, %v6748
    %v6750 = vsel %vm3637, %v6717, 0.0
    %v6751 = vadd.f32 %v6749, %v6750
    %v6752 = vsel %vm3637, %v6718, 0.0
    %v6753 = vadd.f32 %v6751, %v6752
    %v6754 = vsel %vm3637, %v6719, 0.0
    %v6755 = vadd.f32 %v6753, %v6754
    %v6756 = vsel %vm3637, %v6720, 0.0
    %v6757 = vadd.f32 %v6755, %v6756
    %v6758 = vsel %vm3637, %v6721, 0.0
    %v6759 = vadd.f32 %v6757, %v6758
    %v6760 = vsel %vm3637, %v6722, 0.0
    %v6761 = vadd.f32 %v6759, %v6760
    %v6762 = vsel %vm3637, %v6723, 0.0
    %v6763 = vadd.f32 %v6761, %v6762
    %v6764 = vsel %vm3637, %v6724, 0.0
    %v6765 = vadd.f32 %v6763, %v6764
    %v6766 = vsel %vm3637, %v6725, 0.0
    %v6767 = vadd.f32 %v6765, %v6766
    %v6768 = vsel %vm3637, %v6726, 0.0
    %v6769 = vadd.f32 %v6767, %v6768
    %v6770 = vsel %vm3637, %v6727, 0.0
    %v6771 = vadd.f32 %v6769, %v6770
    %v6772 = vsel %vm3637, %v6728, 0.0
    %v6773 = vadd.f32 %v6771, %v6772
    %v6774 = vsel %vm3637, %v6729, 0.0
    %v6775 = vadd.f32 %v6773, %v6774
    %v6776 = vsel %vm3637, %v6730, 0.0
    %v6777 = vadd.f32 %v6775, %v6776
    %v6778 = vsel %vm3637, %v6731, 0.0
    %v6779 = vadd.f32 %v6777, %v6778
    %v6780 = vsel %vm3637, %v6732, 0.0
    %v6781 = vadd.f32 %v6779, %v6780
    %v6782 = vsel %vm3637, %v6733, 0.0
    %v6783 = vadd.f32 %v6781, %v6782
    %v6784 = vsel %vm3637, %v6734, 0.0
    %v6785 = vadd.f32 %v6783, %v6784
    %v6786 = vsel %vm3637, %v6735, 0.0
    %v6787 = vadd.f32 %v6785, %v6786
    %v6788 = vsel %vm3637, %v6736, 0.0
    %v6789 = vadd.f32 %v6787, %v6788
    %v6790 = vsel %vm3637, %v6737, 0.0
    %v6791 = vadd.f32 %v6789, %v6790
    %v6792 = vsel %vm3637, %v6738, 0.0
    %v6793 = vadd.f32 %v6791, %v6792
    %v6794 = vsel %vm3637, %v6739, 0.0
    %v6795 = vadd.f32 %v6793, %v6794
    %v6796 = vsel %vm3637, %v6740, 0.0
    %v6797 = vadd.f32 %v6795, %v6796
    %v6798 = vsel %vm3637, %v6741, 0.0
    %v6799 = vadd.f32 %v6797, %v6798
    %v6800 = vsel %vm3637, %v6742, 0.0
    %v6801 = vadd.f32 %v6799, %v6800
    %v6802 = vsel %vm3637, %v6743, 0.0
    %v6803 = vadd.f32 %v6801, %v6802
    %v6804 = vsel %vm3637, %v6744, 0.0
    %v6805 = vadd.f32 %v6803, %v6804
    %v6806 = vsel %vm3637, %v6745, 0.0
    %v6807 = vadd.f32 %v6805, %v6806
    %v6808 = vsel %vm3637, %v6746, 0.0
    %v6809 = vadd.f32 %v6807, %v6808
    %6810 = vadd.xlane.f32.xlu0 %v6809
    %v6811 = vpop.xlane.xlu0 %6810
    %vm6812 = vcmp.ge.f32.partialorder %v6811, 1.0
    %v6813 = vsel %vm6812, %v6682, %v6679
    %v6814 = vsel %vm6812, %v6680, %v6682
    %v6815 = vadd.f32 %v6813, %v6814
    %v6816 = vmul.f32 %v6815, 0.5
    %v6817 = vsub.f32 %v3703, %v6816
    %v6818 = vsub.f32 %v3704, %v6816
    %v6819 = vsub.f32 %v3705, %v6816
    %v6820 = vsub.f32 %v3706, %v6816
    %v6821 = vsub.f32 %v3707, %v6816
    %v6822 = vsub.f32 %v3708, %v6816
    %v6823 = vsub.f32 %v3709, %v6816
    %v6824 = vsub.f32 %v3710, %v6816
    %v6825 = vsub.f32 %v3711, %v6816
    %v6826 = vsub.f32 %v3712, %v6816
    %v6827 = vsub.f32 %v3713, %v6816
    %v6828 = vsub.f32 %v3714, %v6816
    %v6829 = vsub.f32 %v3715, %v6816
    %v6830 = vsub.f32 %v3716, %v6816
    %v6831 = vsub.f32 %v3717, %v6816
    %v6832 = vsub.f32 %v3718, %v6816
    %v6833 = vsub.f32 %v3719, %v6816
    %v6834 = vsub.f32 %v3720, %v6816
    %v6835 = vsub.f32 %v3721, %v6816
    %v6836 = vsub.f32 %v3722, %v6816
    %v6837 = vsub.f32 %v3723, %v6816
    %v6838 = vsub.f32 %v3724, %v6816
    %v6839 = vsub.f32 %v3725, %v6816
    %v6840 = vsub.f32 %v3726, %v6816
    %v6841 = vsub.f32 %v3727, %v6816
    %v6842 = vsub.f32 %v3728, %v6816
    %v6843 = vsub.f32 %v3729, %v6816
    %v6844 = vsub.f32 %v3730, %v6816
    %v6845 = vsub.f32 %v3731, %v6816
    %v6846 = vsub.f32 %v3732, %v6816
    %v6847 = vsub.f32 %v3733, %v6816
    %v6848 = vsub.f32 %v3734, %v6816
    %v6849 = vmax.f32 %v6817, 0.0
    %v6850 = vmax.f32 %v6818, 0.0
    %v6851 = vmax.f32 %v6819, 0.0
    %v6852 = vmax.f32 %v6820, 0.0
    %v6853 = vmax.f32 %v6821, 0.0
    %v6854 = vmax.f32 %v6822, 0.0
    %v6855 = vmax.f32 %v6823, 0.0
    %v6856 = vmax.f32 %v6824, 0.0
    %v6857 = vmax.f32 %v6825, 0.0
    %v6858 = vmax.f32 %v6826, 0.0
    %v6859 = vmax.f32 %v6827, 0.0
    %v6860 = vmax.f32 %v6828, 0.0
    %v6861 = vmax.f32 %v6829, 0.0
    %v6862 = vmax.f32 %v6830, 0.0
    %v6863 = vmax.f32 %v6831, 0.0
    %v6864 = vmax.f32 %v6832, 0.0
    %v6865 = vmax.f32 %v6833, 0.0
    %v6866 = vmax.f32 %v6834, 0.0
    %v6867 = vmax.f32 %v6835, 0.0
    %v6868 = vmax.f32 %v6836, 0.0
    %v6869 = vmax.f32 %v6837, 0.0
    %v6870 = vmax.f32 %v6838, 0.0
    %v6871 = vmax.f32 %v6839, 0.0
    %v6872 = vmax.f32 %v6840, 0.0
    %v6873 = vmax.f32 %v6841, 0.0
    %v6874 = vmax.f32 %v6842, 0.0
    %v6875 = vmax.f32 %v6843, 0.0
    %v6876 = vmax.f32 %v6844, 0.0
    %v6877 = vmax.f32 %v6845, 0.0
    %v6878 = vmax.f32 %v6846, 0.0
    %v6879 = vmax.f32 %v6847, 0.0
    %v6880 = vmax.f32 %v6848, 0.0
    %v6881 = vsel %vm3637, %v6849, 0.0
    %v6882 = vsel %vm3637, %v6850, 0.0
    %v6883 = vadd.f32 %v6881, %v6882
    %v6884 = vsel %vm3637, %v6851, 0.0
    %v6885 = vadd.f32 %v6883, %v6884
    %v6886 = vsel %vm3637, %v6852, 0.0
    %v6887 = vadd.f32 %v6885, %v6886
    %v6888 = vsel %vm3637, %v6853, 0.0
    %v6889 = vadd.f32 %v6887, %v6888
    %v6890 = vsel %vm3637, %v6854, 0.0
    %v6891 = vadd.f32 %v6889, %v6890
    %v6892 = vsel %vm3637, %v6855, 0.0
    %v6893 = vadd.f32 %v6891, %v6892
    %v6894 = vsel %vm3637, %v6856, 0.0
    %v6895 = vadd.f32 %v6893, %v6894
    %v6896 = vsel %vm3637, %v6857, 0.0
    %v6897 = vadd.f32 %v6895, %v6896
    %v6898 = vsel %vm3637, %v6858, 0.0
    %v6899 = vadd.f32 %v6897, %v6898
    %v6900 = vsel %vm3637, %v6859, 0.0
    %v6901 = vadd.f32 %v6899, %v6900
    %v6902 = vsel %vm3637, %v6860, 0.0
    %v6903 = vadd.f32 %v6901, %v6902
    %v6904 = vsel %vm3637, %v6861, 0.0
    %v6905 = vadd.f32 %v6903, %v6904
    %v6906 = vsel %vm3637, %v6862, 0.0
    %v6907 = vadd.f32 %v6905, %v6906
    %v6908 = vsel %vm3637, %v6863, 0.0
    %v6909 = vadd.f32 %v6907, %v6908
    %v6910 = vsel %vm3637, %v6864, 0.0
    %v6911 = vadd.f32 %v6909, %v6910
    %v6912 = vsel %vm3637, %v6865, 0.0
    %v6913 = vadd.f32 %v6911, %v6912
    %v6914 = vsel %vm3637, %v6866, 0.0
    %v6915 = vadd.f32 %v6913, %v6914
    %v6916 = vsel %vm3637, %v6867, 0.0
    %v6917 = vadd.f32 %v6915, %v6916
    %v6918 = vsel %vm3637, %v6868, 0.0
    %v6919 = vadd.f32 %v6917, %v6918
    %v6920 = vsel %vm3637, %v6869, 0.0
    %v6921 = vadd.f32 %v6919, %v6920
    %v6922 = vsel %vm3637, %v6870, 0.0
    %v6923 = vadd.f32 %v6921, %v6922
    %v6924 = vsel %vm3637, %v6871, 0.0
    %v6925 = vadd.f32 %v6923, %v6924
    %v6926 = vsel %vm3637, %v6872, 0.0
    %v6927 = vadd.f32 %v6925, %v6926
    %v6928 = vsel %vm3637, %v6873, 0.0
    %v6929 = vadd.f32 %v6927, %v6928
    %v6930 = vsel %vm3637, %v6874, 0.0
    %v6931 = vadd.f32 %v6929, %v6930
    %v6932 = vsel %vm3637, %v6875, 0.0
    %v6933 = vadd.f32 %v6931, %v6932
    %v6934 = vsel %vm3637, %v6876, 0.0
    %v6935 = vadd.f32 %v6933, %v6934
    %v6936 = vsel %vm3637, %v6877, 0.0
    %v6937 = vadd.f32 %v6935, %v6936
    %v6938 = vsel %vm3637, %v6878, 0.0
    %v6939 = vadd.f32 %v6937, %v6938
    %v6940 = vsel %vm3637, %v6879, 0.0
    %v6941 = vadd.f32 %v6939, %v6940
    %v6942 = vsel %vm3637, %v6880, 0.0
    %v6943 = vadd.f32 %v6941, %v6942
    %6944 = vadd.xlane.f32.xlu0 %v6943
    %v6945 = vpop.xlane.xlu0 %6944
    %vm6946 = vcmp.ge.f32.partialorder %v6945, 1.0
    %v6947 = vsel %vm6946, %v6816, %v6813
    %v6948 = vsel %vm6946, %v6814, %v6816
    %v6949 = vadd.f32 %v6947, %v6948
    %v6950 = vmul.f32 %v6949, 0.5
    %v6951 = vsub.f32 %v3703, %v6950
    %v6952 = vsub.f32 %v3704, %v6950
    %v6953 = vsub.f32 %v3705, %v6950
    %v6954 = vsub.f32 %v3706, %v6950
    %v6955 = vsub.f32 %v3707, %v6950
    %v6956 = vsub.f32 %v3708, %v6950
    %v6957 = vsub.f32 %v3709, %v6950
    %v6958 = vsub.f32 %v3710, %v6950
    %v6959 = vsub.f32 %v3711, %v6950
    %v6960 = vsub.f32 %v3712, %v6950
    %v6961 = vsub.f32 %v3713, %v6950
    %v6962 = vsub.f32 %v3714, %v6950
    %v6963 = vsub.f32 %v3715, %v6950
    %v6964 = vsub.f32 %v3716, %v6950
    %v6965 = vsub.f32 %v3717, %v6950
    %v6966 = vsub.f32 %v3718, %v6950
    %v6967 = vsub.f32 %v3719, %v6950
    %v6968 = vsub.f32 %v3720, %v6950
    %v6969 = vsub.f32 %v3721, %v6950
    %v6970 = vsub.f32 %v3722, %v6950
    %v6971 = vsub.f32 %v3723, %v6950
    %v6972 = vsub.f32 %v3724, %v6950
    %v6973 = vsub.f32 %v3725, %v6950
    %v6974 = vsub.f32 %v3726, %v6950
    %v6975 = vsub.f32 %v3727, %v6950
    %v6976 = vsub.f32 %v3728, %v6950
    %v6977 = vsub.f32 %v3729, %v6950
    %v6978 = vsub.f32 %v3730, %v6950
    %v6979 = vsub.f32 %v3731, %v6950
    %v6980 = vsub.f32 %v3732, %v6950
    %v6981 = vsub.f32 %v3733, %v6950
    %v6982 = vsub.f32 %v3734, %v6950
    %v6983 = vmax.f32 %v6951, 0.0
    %v6984 = vmax.f32 %v6952, 0.0
    %v6985 = vmax.f32 %v6953, 0.0
    %v6986 = vmax.f32 %v6954, 0.0
    %v6987 = vmax.f32 %v6955, 0.0
    %v6988 = vmax.f32 %v6956, 0.0
    %v6989 = vmax.f32 %v6957, 0.0
    %v6990 = vmax.f32 %v6958, 0.0
    %v6991 = vmax.f32 %v6959, 0.0
    %v6992 = vmax.f32 %v6960, 0.0
    %v6993 = vmax.f32 %v6961, 0.0
    %v6994 = vmax.f32 %v6962, 0.0
    %v6995 = vmax.f32 %v6963, 0.0
    %v6996 = vmax.f32 %v6964, 0.0
    %v6997 = vmax.f32 %v6965, 0.0
    %v6998 = vmax.f32 %v6966, 0.0
    %v6999 = vmax.f32 %v6967, 0.0
    %v7000 = vmax.f32 %v6968, 0.0
    %v7001 = vmax.f32 %v6969, 0.0
    %v7002 = vmax.f32 %v6970, 0.0
    %v7003 = vmax.f32 %v6971, 0.0
    %v7004 = vmax.f32 %v6972, 0.0
    %v7005 = vmax.f32 %v6973, 0.0
    %v7006 = vmax.f32 %v6974, 0.0
    %v7007 = vmax.f32 %v6975, 0.0
    %v7008 = vmax.f32 %v6976, 0.0
    %v7009 = vmax.f32 %v6977, 0.0
    %v7010 = vmax.f32 %v6978, 0.0
    %v7011 = vmax.f32 %v6979, 0.0
    %v7012 = vmax.f32 %v6980, 0.0
    %v7013 = vmax.f32 %v6981, 0.0
    %v7014 = vmax.f32 %v6982, 0.0
    %v7015 = vsel %vm3637, %v6983, 0.0
    %v7016 = vsel %vm3637, %v6984, 0.0
    %v7017 = vadd.f32 %v7015, %v7016
    %v7018 = vsel %vm3637, %v6985, 0.0
    %v7019 = vadd.f32 %v7017, %v7018
    %v7020 = vsel %vm3637, %v6986, 0.0
    %v7021 = vadd.f32 %v7019, %v7020
    %v7022 = vsel %vm3637, %v6987, 0.0
    %v7023 = vadd.f32 %v7021, %v7022
    %v7024 = vsel %vm3637, %v6988, 0.0
    %v7025 = vadd.f32 %v7023, %v7024
    %v7026 = vsel %vm3637, %v6989, 0.0
    %v7027 = vadd.f32 %v7025, %v7026
    %v7028 = vsel %vm3637, %v6990, 0.0
    %v7029 = vadd.f32 %v7027, %v7028
    %v7030 = vsel %vm3637, %v6991, 0.0
    %v7031 = vadd.f32 %v7029, %v7030
    %v7032 = vsel %vm3637, %v6992, 0.0
    %v7033 = vadd.f32 %v7031, %v7032
    %v7034 = vsel %vm3637, %v6993, 0.0
    %v7035 = vadd.f32 %v7033, %v7034
    %v7036 = vsel %vm3637, %v6994, 0.0
    %v7037 = vadd.f32 %v7035, %v7036
    %v7038 = vsel %vm3637, %v6995, 0.0
    %v7039 = vadd.f32 %v7037, %v7038
    %v7040 = vsel %vm3637, %v6996, 0.0
    %v7041 = vadd.f32 %v7039, %v7040
    %v7042 = vsel %vm3637, %v6997, 0.0
    %v7043 = vadd.f32 %v7041, %v7042
    %v7044 = vsel %vm3637, %v6998, 0.0
    %v7045 = vadd.f32 %v7043, %v7044
    %v7046 = vsel %vm3637, %v6999, 0.0
    %v7047 = vadd.f32 %v7045, %v7046
    %v7048 = vsel %vm3637, %v7000, 0.0
    %v7049 = vadd.f32 %v7047, %v7048
    %v7050 = vsel %vm3637, %v7001, 0.0
    %v7051 = vadd.f32 %v7049, %v7050
    %v7052 = vsel %vm3637, %v7002, 0.0
    %v7053 = vadd.f32 %v7051, %v7052
    %v7054 = vsel %vm3637, %v7003, 0.0
    %v7055 = vadd.f32 %v7053, %v7054
    %v7056 = vsel %vm3637, %v7004, 0.0
    %v7057 = vadd.f32 %v7055, %v7056
    %v7058 = vsel %vm3637, %v7005, 0.0
    %v7059 = vadd.f32 %v7057, %v7058
    %v7060 = vsel %vm3637, %v7006, 0.0
    %v7061 = vadd.f32 %v7059, %v7060
    %v7062 = vsel %vm3637, %v7007, 0.0
    %v7063 = vadd.f32 %v7061, %v7062
    %v7064 = vsel %vm3637, %v7008, 0.0
    %v7065 = vadd.f32 %v7063, %v7064
    %v7066 = vsel %vm3637, %v7009, 0.0
    %v7067 = vadd.f32 %v7065, %v7066
    %v7068 = vsel %vm3637, %v7010, 0.0
    %v7069 = vadd.f32 %v7067, %v7068
    %v7070 = vsel %vm3637, %v7011, 0.0
    %v7071 = vadd.f32 %v7069, %v7070
    %v7072 = vsel %vm3637, %v7012, 0.0
    %v7073 = vadd.f32 %v7071, %v7072
    %v7074 = vsel %vm3637, %v7013, 0.0
    %v7075 = vadd.f32 %v7073, %v7074
    %v7076 = vsel %vm3637, %v7014, 0.0
    %v7077 = vadd.f32 %v7075, %v7076
    %7078 = vadd.xlane.f32.xlu0 %v7077
    %v7079 = vpop.xlane.xlu0 %7078
    %vm7080 = vcmp.ge.f32.partialorder %v7079, 1.0
    %v7081 = vsel %vm7080, %v6950, %v6947
    %v7082 = vsel %vm7080, %v6948, %v6950
    %v7083 = vadd.f32 %v7081, %v7082
    %v7084 = vmul.f32 %v7083, 0.5
    %v7085 = vsub.f32 %v3703, %v7084
    %v7086 = vsub.f32 %v3704, %v7084
    %v7087 = vsub.f32 %v3705, %v7084
    %v7088 = vsub.f32 %v3706, %v7084
    %v7089 = vsub.f32 %v3707, %v7084
    %v7090 = vsub.f32 %v3708, %v7084
    %v7091 = vsub.f32 %v3709, %v7084
    %v7092 = vsub.f32 %v3710, %v7084
    %v7093 = vsub.f32 %v3711, %v7084
    %v7094 = vsub.f32 %v3712, %v7084
    %v7095 = vsub.f32 %v3713, %v7084
    %v7096 = vsub.f32 %v3714, %v7084
    %v7097 = vsub.f32 %v3715, %v7084
    %v7098 = vsub.f32 %v3716, %v7084
    %v7099 = vsub.f32 %v3717, %v7084
    %v7100 = vsub.f32 %v3718, %v7084
    %v7101 = vsub.f32 %v3719, %v7084
    %v7102 = vsub.f32 %v3720, %v7084
    %v7103 = vsub.f32 %v3721, %v7084
    %v7104 = vsub.f32 %v3722, %v7084
    %v7105 = vsub.f32 %v3723, %v7084
    %v7106 = vsub.f32 %v3724, %v7084
    %v7107 = vsub.f32 %v3725, %v7084
    %v7108 = vsub.f32 %v3726, %v7084
    %v7109 = vsub.f32 %v3727, %v7084
    %v7110 = vsub.f32 %v3728, %v7084
    %v7111 = vsub.f32 %v3729, %v7084
    %v7112 = vsub.f32 %v3730, %v7084
    %v7113 = vsub.f32 %v3731, %v7084
    %v7114 = vsub.f32 %v3732, %v7084
    %v7115 = vsub.f32 %v3733, %v7084
    %v7116 = vsub.f32 %v3734, %v7084
    %v7117 = vmax.f32 %v7085, 0.0
    %v7118 = vmax.f32 %v7086, 0.0
    %v7119 = vmax.f32 %v7087, 0.0
    %v7120 = vmax.f32 %v7088, 0.0
    %v7121 = vmax.f32 %v7089, 0.0
    %v7122 = vmax.f32 %v7090, 0.0
    %v7123 = vmax.f32 %v7091, 0.0
    %v7124 = vmax.f32 %v7092, 0.0
    %v7125 = vmax.f32 %v7093, 0.0
    %v7126 = vmax.f32 %v7094, 0.0
    %v7127 = vmax.f32 %v7095, 0.0
    %v7128 = vmax.f32 %v7096, 0.0
    %v7129 = vmax.f32 %v7097, 0.0
    %v7130 = vmax.f32 %v7098, 0.0
    %v7131 = vmax.f32 %v7099, 0.0
    %v7132 = vmax.f32 %v7100, 0.0
    %v7133 = vmax.f32 %v7101, 0.0
    %v7134 = vmax.f32 %v7102, 0.0
    %v7135 = vmax.f32 %v7103, 0.0
    %v7136 = vmax.f32 %v7104, 0.0
    %v7137 = vmax.f32 %v7105, 0.0
    %v7138 = vmax.f32 %v7106, 0.0
    %v7139 = vmax.f32 %v7107, 0.0
    %v7140 = vmax.f32 %v7108, 0.0
    %v7141 = vmax.f32 %v7109, 0.0
    %v7142 = vmax.f32 %v7110, 0.0
    %v7143 = vmax.f32 %v7111, 0.0
    %v7144 = vmax.f32 %v7112, 0.0
    %v7145 = vmax.f32 %v7113, 0.0
    %v7146 = vmax.f32 %v7114, 0.0
    %v7147 = vmax.f32 %v7115, 0.0
    %v7148 = vmax.f32 %v7116, 0.0
    %v7149 = vsel %vm3637, %v7117, 0.0
    %v7150 = vsel %vm3637, %v7118, 0.0
    %v7151 = vadd.f32 %v7149, %v7150
    %v7152 = vsel %vm3637, %v7119, 0.0
    %v7153 = vadd.f32 %v7151, %v7152
    %v7154 = vsel %vm3637, %v7120, 0.0
    %v7155 = vadd.f32 %v7153, %v7154
    %v7156 = vsel %vm3637, %v7121, 0.0
    %v7157 = vadd.f32 %v7155, %v7156
    %v7158 = vsel %vm3637, %v7122, 0.0
    %v7159 = vadd.f32 %v7157, %v7158
    %v7160 = vsel %vm3637, %v7123, 0.0
    %v7161 = vadd.f32 %v7159, %v7160
    %v7162 = vsel %vm3637, %v7124, 0.0
    %v7163 = vadd.f32 %v7161, %v7162
    %v7164 = vsel %vm3637, %v7125, 0.0
    %v7165 = vadd.f32 %v7163, %v7164
    %v7166 = vsel %vm3637, %v7126, 0.0
    %v7167 = vadd.f32 %v7165, %v7166
    %v7168 = vsel %vm3637, %v7127, 0.0
    %v7169 = vadd.f32 %v7167, %v7168
    %v7170 = vsel %vm3637, %v7128, 0.0
    %v7171 = vadd.f32 %v7169, %v7170
    %v7172 = vsel %vm3637, %v7129, 0.0
    %v7173 = vadd.f32 %v7171, %v7172
    %v7174 = vsel %vm3637, %v7130, 0.0
    %v7175 = vadd.f32 %v7173, %v7174
    %v7176 = vsel %vm3637, %v7131, 0.0
    %v7177 = vadd.f32 %v7175, %v7176
    %v7178 = vsel %vm3637, %v7132, 0.0
    %v7179 = vadd.f32 %v7177, %v7178
    %v7180 = vsel %vm3637, %v7133, 0.0
    %v7181 = vadd.f32 %v7179, %v7180
    %v7182 = vsel %vm3637, %v7134, 0.0
    %v7183 = vadd.f32 %v7181, %v7182
    %v7184 = vsel %vm3637, %v7135, 0.0
    %v7185 = vadd.f32 %v7183, %v7184
    %v7186 = vsel %vm3637, %v7136, 0.0
    %v7187 = vadd.f32 %v7185, %v7186
    %v7188 = vsel %vm3637, %v7137, 0.0
    %v7189 = vadd.f32 %v7187, %v7188
    %v7190 = vsel %vm3637, %v7138, 0.0
    %v7191 = vadd.f32 %v7189, %v7190
    %v7192 = vsel %vm3637, %v7139, 0.0
    %v7193 = vadd.f32 %v7191, %v7192
    %v7194 = vsel %vm3637, %v7140, 0.0
    %v7195 = vadd.f32 %v7193, %v7194
    %v7196 = vsel %vm3637, %v7141, 0.0
    %v7197 = vadd.f32 %v7195, %v7196
    %v7198 = vsel %vm3637, %v7142, 0.0
    %v7199 = vadd.f32 %v7197, %v7198
    %v7200 = vsel %vm3637, %v7143, 0.0
    %v7201 = vadd.f32 %v7199, %v7200
    %v7202 = vsel %vm3637, %v7144, 0.0
    %v7203 = vadd.f32 %v7201, %v7202
    %v7204 = vsel %vm3637, %v7145, 0.0
    %v7205 = vadd.f32 %v7203, %v7204
    %v7206 = vsel %vm3637, %v7146, 0.0
    %v7207 = vadd.f32 %v7205, %v7206
    %v7208 = vsel %vm3637, %v7147, 0.0
    %v7209 = vadd.f32 %v7207, %v7208
    %v7210 = vsel %vm3637, %v7148, 0.0
    %v7211 = vadd.f32 %v7209, %v7210
    %7212 = vadd.xlane.f32.xlu0 %v7211
    %v7213 = vpop.xlane.xlu0 %7212
    %vm7214 = vcmp.ge.f32.partialorder %v7213, 1.0
    %v7215 = vsel %vm7214, %v7084, %v7081
    %v7216 = vsel %vm7214, %v7082, %v7084
    %v7217 = vadd.f32 %v7215, %v7216
    %v7218 = vmul.f32 %v7217, 0.5
    %v7219 = vsub.f32 %v3703, %v7218
    %v7220 = vsub.f32 %v3704, %v7218
    %v7221 = vsub.f32 %v3705, %v7218
    %v7222 = vsub.f32 %v3706, %v7218
    %v7223 = vsub.f32 %v3707, %v7218
    %v7224 = vsub.f32 %v3708, %v7218
    %v7225 = vsub.f32 %v3709, %v7218
    %v7226 = vsub.f32 %v3710, %v7218
    %v7227 = vsub.f32 %v3711, %v7218
    %v7228 = vsub.f32 %v3712, %v7218
    %v7229 = vsub.f32 %v3713, %v7218
    %v7230 = vsub.f32 %v3714, %v7218
    %v7231 = vsub.f32 %v3715, %v7218
    %v7232 = vsub.f32 %v3716, %v7218
    %v7233 = vsub.f32 %v3717, %v7218
    %v7234 = vsub.f32 %v3718, %v7218
    %v7235 = vsub.f32 %v3719, %v7218
    %v7236 = vsub.f32 %v3720, %v7218
    %v7237 = vsub.f32 %v3721, %v7218
    %v7238 = vsub.f32 %v3722, %v7218
    %v7239 = vsub.f32 %v3723, %v7218
    %v7240 = vsub.f32 %v3724, %v7218
    %v7241 = vsub.f32 %v3725, %v7218
    %v7242 = vsub.f32 %v3726, %v7218
    %v7243 = vsub.f32 %v3727, %v7218
    %v7244 = vsub.f32 %v3728, %v7218
    %v7245 = vsub.f32 %v3729, %v7218
    %v7246 = vsub.f32 %v3730, %v7218
    %v7247 = vsub.f32 %v3731, %v7218
    %v7248 = vsub.f32 %v3732, %v7218
    %v7249 = vsub.f32 %v3733, %v7218
    %v7250 = vsub.f32 %v3734, %v7218
    %v7251 = vmax.f32 %v7219, 0.0
    %v7252 = vmax.f32 %v7220, 0.0
    %v7253 = vmax.f32 %v7221, 0.0
    %v7254 = vmax.f32 %v7222, 0.0
    %v7255 = vmax.f32 %v7223, 0.0
    %v7256 = vmax.f32 %v7224, 0.0
    %v7257 = vmax.f32 %v7225, 0.0
    %v7258 = vmax.f32 %v7226, 0.0
    %v7259 = vmax.f32 %v7227, 0.0
    %v7260 = vmax.f32 %v7228, 0.0
    %v7261 = vmax.f32 %v7229, 0.0
    %v7262 = vmax.f32 %v7230, 0.0
    %v7263 = vmax.f32 %v7231, 0.0
    %v7264 = vmax.f32 %v7232, 0.0
    %v7265 = vmax.f32 %v7233, 0.0
    %v7266 = vmax.f32 %v7234, 0.0
    %v7267 = vmax.f32 %v7235, 0.0
    %v7268 = vmax.f32 %v7236, 0.0
    %v7269 = vmax.f32 %v7237, 0.0
    %v7270 = vmax.f32 %v7238, 0.0
    %v7271 = vmax.f32 %v7239, 0.0
    %v7272 = vmax.f32 %v7240, 0.0
    %v7273 = vmax.f32 %v7241, 0.0
    %v7274 = vmax.f32 %v7242, 0.0
    %v7275 = vmax.f32 %v7243, 0.0
    %v7276 = vmax.f32 %v7244, 0.0
    %v7277 = vmax.f32 %v7245, 0.0
    %v7278 = vmax.f32 %v7246, 0.0
    %v7279 = vmax.f32 %v7247, 0.0
    %v7280 = vmax.f32 %v7248, 0.0
    %v7281 = vmax.f32 %v7249, 0.0
    %v7282 = vmax.f32 %v7250, 0.0
    %v7283 = vsel %vm3637, %v7251, 0.0
    %v7284 = vsel %vm3637, %v7252, 0.0
    %v7285 = vadd.f32 %v7283, %v7284
    %v7286 = vsel %vm3637, %v7253, 0.0
    %v7287 = vadd.f32 %v7285, %v7286
    %v7288 = vsel %vm3637, %v7254, 0.0
    %v7289 = vadd.f32 %v7287, %v7288
    %v7290 = vsel %vm3637, %v7255, 0.0
    %v7291 = vadd.f32 %v7289, %v7290
    %v7292 = vsel %vm3637, %v7256, 0.0
    %v7293 = vadd.f32 %v7291, %v7292
    %v7294 = vsel %vm3637, %v7257, 0.0
    %v7295 = vadd.f32 %v7293, %v7294
    %v7296 = vsel %vm3637, %v7258, 0.0
    %v7297 = vadd.f32 %v7295, %v7296
    %v7298 = vsel %vm3637, %v7259, 0.0
    %v7299 = vadd.f32 %v7297, %v7298
    %v7300 = vsel %vm3637, %v7260, 0.0
    %v7301 = vadd.f32 %v7299, %v7300
    %v7302 = vsel %vm3637, %v7261, 0.0
    %v7303 = vadd.f32 %v7301, %v7302
    %v7304 = vsel %vm3637, %v7262, 0.0
    %v7305 = vadd.f32 %v7303, %v7304
    %v7306 = vsel %vm3637, %v7263, 0.0
    %v7307 = vadd.f32 %v7305, %v7306
    %v7308 = vsel %vm3637, %v7264, 0.0
    %v7309 = vadd.f32 %v7307, %v7308
    %v7310 = vsel %vm3637, %v7265, 0.0
    %v7311 = vadd.f32 %v7309, %v7310
    %v7312 = vsel %vm3637, %v7266, 0.0
    %v7313 = vadd.f32 %v7311, %v7312
    %v7314 = vsel %vm3637, %v7267, 0.0
    %v7315 = vadd.f32 %v7313, %v7314
    %v7316 = vsel %vm3637, %v7268, 0.0
    %v7317 = vadd.f32 %v7315, %v7316
    %v7318 = vsel %vm3637, %v7269, 0.0
    %v7319 = vadd.f32 %v7317, %v7318
    %v7320 = vsel %vm3637, %v7270, 0.0
    %v7321 = vadd.f32 %v7319, %v7320
    %v7322 = vsel %vm3637, %v7271, 0.0
    %v7323 = vadd.f32 %v7321, %v7322
    %v7324 = vsel %vm3637, %v7272, 0.0
    %v7325 = vadd.f32 %v7323, %v7324
    %v7326 = vsel %vm3637, %v7273, 0.0
    %v7327 = vadd.f32 %v7325, %v7326
    %v7328 = vsel %vm3637, %v7274, 0.0
    %v7329 = vadd.f32 %v7327, %v7328
    %v7330 = vsel %vm3637, %v7275, 0.0
    %v7331 = vadd.f32 %v7329, %v7330
    %v7332 = vsel %vm3637, %v7276, 0.0
    %v7333 = vadd.f32 %v7331, %v7332
    %v7334 = vsel %vm3637, %v7277, 0.0
    %v7335 = vadd.f32 %v7333, %v7334
    %v7336 = vsel %vm3637, %v7278, 0.0
    %v7337 = vadd.f32 %v7335, %v7336
    %v7338 = vsel %vm3637, %v7279, 0.0
    %v7339 = vadd.f32 %v7337, %v7338
    %v7340 = vsel %vm3637, %v7280, 0.0
    %v7341 = vadd.f32 %v7339, %v7340
    %v7342 = vsel %vm3637, %v7281, 0.0
    %v7343 = vadd.f32 %v7341, %v7342
    %v7344 = vsel %vm3637, %v7282, 0.0
    %v7345 = vadd.f32 %v7343, %v7344
    %7346 = vadd.xlane.f32.xlu0 %v7345
    %v7347 = vpop.xlane.xlu0 %7346
    %vm7348 = vcmp.ge.f32.partialorder %v7347, 1.0
    %v7349 = vsel %vm7348, %v7218, %v7215
    %v7350 = vsel %vm7348, %v7216, %v7218
    %v7351 = vadd.f32 %v7349, %v7350
    %v7352 = vmul.f32 %v7351, 0.5
    %v7353 = vsub.f32 %v3703, %v7352
    %v7354 = vsub.f32 %v3704, %v7352
    %v7355 = vsub.f32 %v3705, %v7352
    %v7356 = vsub.f32 %v3706, %v7352
    %v7357 = vsub.f32 %v3707, %v7352
    %v7358 = vsub.f32 %v3708, %v7352
    %v7359 = vsub.f32 %v3709, %v7352
    %v7360 = vsub.f32 %v3710, %v7352
    %v7361 = vsub.f32 %v3711, %v7352
    %v7362 = vsub.f32 %v3712, %v7352
    %v7363 = vsub.f32 %v3713, %v7352
    %v7364 = vsub.f32 %v3714, %v7352
    %v7365 = vsub.f32 %v3715, %v7352
    %v7366 = vsub.f32 %v3716, %v7352
    %v7367 = vsub.f32 %v3717, %v7352
    %v7368 = vsub.f32 %v3718, %v7352
    %v7369 = vsub.f32 %v3719, %v7352
    %v7370 = vsub.f32 %v3720, %v7352
    %v7371 = vsub.f32 %v3721, %v7352
    %v7372 = vsub.f32 %v3722, %v7352
    %v7373 = vsub.f32 %v3723, %v7352
    %v7374 = vsub.f32 %v3724, %v7352
    %v7375 = vsub.f32 %v3725, %v7352
    %v7376 = vsub.f32 %v3726, %v7352
    %v7377 = vsub.f32 %v3727, %v7352
    %v7378 = vsub.f32 %v3728, %v7352
    %v7379 = vsub.f32 %v3729, %v7352
    %v7380 = vsub.f32 %v3730, %v7352
    %v7381 = vsub.f32 %v3731, %v7352
    %v7382 = vsub.f32 %v3732, %v7352
    %v7383 = vsub.f32 %v3733, %v7352
    %v7384 = vsub.f32 %v3734, %v7352
    %v7385 = vmax.f32 %v7353, 0.0
    %v7386 = vmax.f32 %v7354, 0.0
    %v7387 = vmax.f32 %v7355, 0.0
    %v7388 = vmax.f32 %v7356, 0.0
    %v7389 = vmax.f32 %v7357, 0.0
    %v7390 = vmax.f32 %v7358, 0.0
    %v7391 = vmax.f32 %v7359, 0.0
    %v7392 = vmax.f32 %v7360, 0.0
    %v7393 = vmax.f32 %v7361, 0.0
    %v7394 = vmax.f32 %v7362, 0.0
    %v7395 = vmax.f32 %v7363, 0.0
    %v7396 = vmax.f32 %v7364, 0.0
    %v7397 = vmax.f32 %v7365, 0.0
    %v7398 = vmax.f32 %v7366, 0.0
    %v7399 = vmax.f32 %v7367, 0.0
    %v7400 = vmax.f32 %v7368, 0.0
    %v7401 = vmax.f32 %v7369, 0.0
    %v7402 = vmax.f32 %v7370, 0.0
    %v7403 = vmax.f32 %v7371, 0.0
    %v7404 = vmax.f32 %v7372, 0.0
    %v7405 = vmax.f32 %v7373, 0.0
    %v7406 = vmax.f32 %v7374, 0.0
    %v7407 = vmax.f32 %v7375, 0.0
    %v7408 = vmax.f32 %v7376, 0.0
    %v7409 = vmax.f32 %v7377, 0.0
    %v7410 = vmax.f32 %v7378, 0.0
    %v7411 = vmax.f32 %v7379, 0.0
    %v7412 = vmax.f32 %v7380, 0.0
    %v7413 = vmax.f32 %v7381, 0.0
    %v7414 = vmax.f32 %v7382, 0.0
    %v7415 = vmax.f32 %v7383, 0.0
    %v7416 = vmax.f32 %v7384, 0.0
    %v7417 = vsel %vm3637, %v7385, 0.0
    %v7418 = vsel %vm3637, %v7386, 0.0
    %v7419 = vadd.f32 %v7417, %v7418
    %v7420 = vsel %vm3637, %v7387, 0.0
    %v7421 = vadd.f32 %v7419, %v7420
    %v7422 = vsel %vm3637, %v7388, 0.0
    %v7423 = vadd.f32 %v7421, %v7422
    %v7424 = vsel %vm3637, %v7389, 0.0
    %v7425 = vadd.f32 %v7423, %v7424
    %v7426 = vsel %vm3637, %v7390, 0.0
    %v7427 = vadd.f32 %v7425, %v7426
    %v7428 = vsel %vm3637, %v7391, 0.0
    %v7429 = vadd.f32 %v7427, %v7428
    %v7430 = vsel %vm3637, %v7392, 0.0
    %v7431 = vadd.f32 %v7429, %v7430
    %v7432 = vsel %vm3637, %v7393, 0.0
    %v7433 = vadd.f32 %v7431, %v7432
    %v7434 = vsel %vm3637, %v7394, 0.0
    %v7435 = vadd.f32 %v7433, %v7434
    %v7436 = vsel %vm3637, %v7395, 0.0
    %v7437 = vadd.f32 %v7435, %v7436
    %v7438 = vsel %vm3637, %v7396, 0.0
    %v7439 = vadd.f32 %v7437, %v7438
    %v7440 = vsel %vm3637, %v7397, 0.0
    %v7441 = vadd.f32 %v7439, %v7440
    %v7442 = vsel %vm3637, %v7398, 0.0
    %v7443 = vadd.f32 %v7441, %v7442
    %v7444 = vsel %vm3637, %v7399, 0.0
    %v7445 = vadd.f32 %v7443, %v7444
    %v7446 = vsel %vm3637, %v7400, 0.0
    %v7447 = vadd.f32 %v7445, %v7446
    %v7448 = vsel %vm3637, %v7401, 0.0
    %v7449 = vadd.f32 %v7447, %v7448
    %v7450 = vsel %vm3637, %v7402, 0.0
    %v7451 = vadd.f32 %v7449, %v7450
    %v7452 = vsel %vm3637, %v7403, 0.0
    %v7453 = vadd.f32 %v7451, %v7452
    %v7454 = vsel %vm3637, %v7404, 0.0
    %v7455 = vadd.f32 %v7453, %v7454
    %v7456 = vsel %vm3637, %v7405, 0.0
    %v7457 = vadd.f32 %v7455, %v7456
    %v7458 = vsel %vm3637, %v7406, 0.0
    %v7459 = vadd.f32 %v7457, %v7458
    %v7460 = vsel %vm3637, %v7407, 0.0
    %v7461 = vadd.f32 %v7459, %v7460
    %v7462 = vsel %vm3637, %v7408, 0.0
    %v7463 = vadd.f32 %v7461, %v7462
    %v7464 = vsel %vm3637, %v7409, 0.0
    %v7465 = vadd.f32 %v7463, %v7464
    %v7466 = vsel %vm3637, %v7410, 0.0
    %v7467 = vadd.f32 %v7465, %v7466
    %v7468 = vsel %vm3637, %v7411, 0.0
    %v7469 = vadd.f32 %v7467, %v7468
    %v7470 = vsel %vm3637, %v7412, 0.0
    %v7471 = vadd.f32 %v7469, %v7470
    %v7472 = vsel %vm3637, %v7413, 0.0
    %v7473 = vadd.f32 %v7471, %v7472
    %v7474 = vsel %vm3637, %v7414, 0.0
    %v7475 = vadd.f32 %v7473, %v7474
    %v7476 = vsel %vm3637, %v7415, 0.0
    %v7477 = vadd.f32 %v7475, %v7476
    %v7478 = vsel %vm3637, %v7416, 0.0
    %v7479 = vadd.f32 %v7477, %v7478
    %7480 = vadd.xlane.f32.xlu0 %v7479
    %v7481 = vpop.xlane.xlu0 %7480
    %vm7482 = vcmp.ge.f32.partialorder %v7481, 1.0
    %v7483 = vsel %vm7482, %v7352, %v7349
    %v7484 = vsel %vm7482, %v7350, %v7352
    %v7485 = vadd.f32 %v7483, %v7484
    %v7486 = vmul.f32 %v7485, 0.5
    %v7487 = vsub.f32 %v3703, %v7486
    %v7488 = vsub.f32 %v3704, %v7486
    %v7489 = vsub.f32 %v3705, %v7486
    %v7490 = vsub.f32 %v3706, %v7486
    %v7491 = vsub.f32 %v3707, %v7486
    %v7492 = vsub.f32 %v3708, %v7486
    %v7493 = vsub.f32 %v3709, %v7486
    %v7494 = vsub.f32 %v3710, %v7486
    %v7495 = vsub.f32 %v3711, %v7486
    %v7496 = vsub.f32 %v3712, %v7486
    %v7497 = vsub.f32 %v3713, %v7486
    %v7498 = vsub.f32 %v3714, %v7486
    %v7499 = vsub.f32 %v3715, %v7486
    %v7500 = vsub.f32 %v3716, %v7486
    %v7501 = vsub.f32 %v3717, %v7486
    %v7502 = vsub.f32 %v3718, %v7486
    %v7503 = vsub.f32 %v3719, %v7486
    %v7504 = vsub.f32 %v3720, %v7486
    %v7505 = vsub.f32 %v3721, %v7486
    %v7506 = vsub.f32 %v3722, %v7486
    %v7507 = vsub.f32 %v3723, %v7486
    %v7508 = vsub.f32 %v3724, %v7486
    %v7509 = vsub.f32 %v3725, %v7486
    %v7510 = vsub.f32 %v3726, %v7486
    %v7511 = vsub.f32 %v3727, %v7486
    %v7512 = vsub.f32 %v3728, %v7486
    %v7513 = vsub.f32 %v3729, %v7486
    %v7514 = vsub.f32 %v3730, %v7486
    %v7515 = vsub.f32 %v3731, %v7486
    %v7516 = vsub.f32 %v3732, %v7486
    %v7517 = vsub.f32 %v3733, %v7486
    %v7518 = vsub.f32 %v3734, %v7486
    %v7519 = vmax.f32 %v7487, 0.0
    %v7520 = vmax.f32 %v7488, 0.0
    %v7521 = vmax.f32 %v7489, 0.0
    %v7522 = vmax.f32 %v7490, 0.0
    %v7523 = vmax.f32 %v7491, 0.0
    %v7524 = vmax.f32 %v7492, 0.0
    %v7525 = vmax.f32 %v7493, 0.0
    %v7526 = vmax.f32 %v7494, 0.0
    %v7527 = vmax.f32 %v7495, 0.0
    %v7528 = vmax.f32 %v7496, 0.0
    %v7529 = vmax.f32 %v7497, 0.0
    %v7530 = vmax.f32 %v7498, 0.0
    %v7531 = vmax.f32 %v7499, 0.0
    %v7532 = vmax.f32 %v7500, 0.0
    %v7533 = vmax.f32 %v7501, 0.0
    %v7534 = vmax.f32 %v7502, 0.0
    %v7535 = vmax.f32 %v7503, 0.0
    %v7536 = vmax.f32 %v7504, 0.0
    %v7537 = vmax.f32 %v7505, 0.0
    %v7538 = vmax.f32 %v7506, 0.0
    %v7539 = vmax.f32 %v7507, 0.0
    %v7540 = vmax.f32 %v7508, 0.0
    %v7541 = vmax.f32 %v7509, 0.0
    %v7542 = vmax.f32 %v7510, 0.0
    %v7543 = vmax.f32 %v7511, 0.0
    %v7544 = vmax.f32 %v7512, 0.0
    %v7545 = vmax.f32 %v7513, 0.0
    %v7546 = vmax.f32 %v7514, 0.0
    %v7547 = vmax.f32 %v7515, 0.0
    %v7548 = vmax.f32 %v7516, 0.0
    %v7549 = vmax.f32 %v7517, 0.0
    %v7550 = vmax.f32 %v7518, 0.0
    %v7551 = vsel %vm3637, %v7519, 0.0
    %v7552 = vsel %vm3637, %v7520, 0.0
    %v7553 = vadd.f32 %v7551, %v7552
    %v7554 = vsel %vm3637, %v7521, 0.0
    %v7555 = vadd.f32 %v7553, %v7554
    %v7556 = vsel %vm3637, %v7522, 0.0
    %v7557 = vadd.f32 %v7555, %v7556
    %v7558 = vsel %vm3637, %v7523, 0.0
    %v7559 = vadd.f32 %v7557, %v7558
    %v7560 = vsel %vm3637, %v7524, 0.0
    %v7561 = vadd.f32 %v7559, %v7560
    %v7562 = vsel %vm3637, %v7525, 0.0
    %v7563 = vadd.f32 %v7561, %v7562
    %v7564 = vsel %vm3637, %v7526, 0.0
    %v7565 = vadd.f32 %v7563, %v7564
    %v7566 = vsel %vm3637, %v7527, 0.0
    %v7567 = vadd.f32 %v7565, %v7566
    %v7568 = vsel %vm3637, %v7528, 0.0
    %v7569 = vadd.f32 %v7567, %v7568
    %v7570 = vsel %vm3637, %v7529, 0.0
    %v7571 = vadd.f32 %v7569, %v7570
    %v7572 = vsel %vm3637, %v7530, 0.0
    %v7573 = vadd.f32 %v7571, %v7572
    %v7574 = vsel %vm3637, %v7531, 0.0
    %v7575 = vadd.f32 %v7573, %v7574
    %v7576 = vsel %vm3637, %v7532, 0.0
    %v7577 = vadd.f32 %v7575, %v7576
    %v7578 = vsel %vm3637, %v7533, 0.0
    %v7579 = vadd.f32 %v7577, %v7578
    %v7580 = vsel %vm3637, %v7534, 0.0
    %v7581 = vadd.f32 %v7579, %v7580
    %v7582 = vsel %vm3637, %v7535, 0.0
    %v7583 = vadd.f32 %v7581, %v7582
    %v7584 = vsel %vm3637, %v7536, 0.0
    %v7585 = vadd.f32 %v7583, %v7584
    %v7586 = vsel %vm3637, %v7537, 0.0
    %v7587 = vadd.f32 %v7585, %v7586
    %v7588 = vsel %vm3637, %v7538, 0.0
    %v7589 = vadd.f32 %v7587, %v7588
    %v7590 = vsel %vm3637, %v7539, 0.0
    %v7591 = vadd.f32 %v7589, %v7590
    %v7592 = vsel %vm3637, %v7540, 0.0
    %v7593 = vadd.f32 %v7591, %v7592
    %v7594 = vsel %vm3637, %v7541, 0.0
    %v7595 = vadd.f32 %v7593, %v7594
    %v7596 = vsel %vm3637, %v7542, 0.0
    %v7597 = vadd.f32 %v7595, %v7596
    %v7598 = vsel %vm3637, %v7543, 0.0
    %v7599 = vadd.f32 %v7597, %v7598
    %v7600 = vsel %vm3637, %v7544, 0.0
    %v7601 = vadd.f32 %v7599, %v7600
    %v7602 = vsel %vm3637, %v7545, 0.0
    %v7603 = vadd.f32 %v7601, %v7602
    %v7604 = vsel %vm3637, %v7546, 0.0
    %v7605 = vadd.f32 %v7603, %v7604
    %v7606 = vsel %vm3637, %v7547, 0.0
    %v7607 = vadd.f32 %v7605, %v7606
    %v7608 = vsel %vm3637, %v7548, 0.0
    %v7609 = vadd.f32 %v7607, %v7608
    %v7610 = vsel %vm3637, %v7549, 0.0
    %v7611 = vadd.f32 %v7609, %v7610
    %v7612 = vsel %vm3637, %v7550, 0.0
    %v7613 = vadd.f32 %v7611, %v7612
    %7614 = vadd.xlane.f32.xlu0 %v7613
    %v7615 = vpop.xlane.xlu0 %7614
    %vm7616 = vcmp.ge.f32.partialorder %v7615, 1.0
    %v7617 = vsel %vm7616, %v7486, %v7483
    %v7618 = vsel %vm7616, %v7484, %v7486
    %v7619 = vadd.f32 %v7617, %v7618
    %v7620 = vmul.f32 %v7619, 0.5
    %v7621 = vsub.f32 %v3703, %v7620
    %v7622 = vsub.f32 %v3704, %v7620
    %v7623 = vsub.f32 %v3705, %v7620
    %v7624 = vsub.f32 %v3706, %v7620
    %v7625 = vsub.f32 %v3707, %v7620
    %v7626 = vsub.f32 %v3708, %v7620
    %v7627 = vsub.f32 %v3709, %v7620
    %v7628 = vsub.f32 %v3710, %v7620
    %v7629 = vsub.f32 %v3711, %v7620
    %v7630 = vsub.f32 %v3712, %v7620
    %v7631 = vsub.f32 %v3713, %v7620
    %v7632 = vsub.f32 %v3714, %v7620
    %v7633 = vsub.f32 %v3715, %v7620
    %v7634 = vsub.f32 %v3716, %v7620
    %v7635 = vsub.f32 %v3717, %v7620
    %v7636 = vsub.f32 %v3718, %v7620
    %v7637 = vsub.f32 %v3719, %v7620
    %v7638 = vsub.f32 %v3720, %v7620
    %v7639 = vsub.f32 %v3721, %v7620
    %v7640 = vsub.f32 %v3722, %v7620
    %v7641 = vsub.f32 %v3723, %v7620
    %v7642 = vsub.f32 %v3724, %v7620
    %v7643 = vsub.f32 %v3725, %v7620
    %v7644 = vsub.f32 %v3726, %v7620
    %v7645 = vsub.f32 %v3727, %v7620
    %v7646 = vsub.f32 %v3728, %v7620
    %v7647 = vsub.f32 %v3729, %v7620
    %v7648 = vsub.f32 %v3730, %v7620
    %v7649 = vsub.f32 %v3731, %v7620
    %v7650 = vsub.f32 %v3732, %v7620
    %v7651 = vsub.f32 %v3733, %v7620
    %v7652 = vsub.f32 %v3734, %v7620
    %v7653 = vmax.f32 %v7621, 0.0
    %v7654 = vmax.f32 %v7622, 0.0
    %v7655 = vmax.f32 %v7623, 0.0
    %v7656 = vmax.f32 %v7624, 0.0
    %v7657 = vmax.f32 %v7625, 0.0
    %v7658 = vmax.f32 %v7626, 0.0
    %v7659 = vmax.f32 %v7627, 0.0
    %v7660 = vmax.f32 %v7628, 0.0
    %v7661 = vmax.f32 %v7629, 0.0
    %v7662 = vmax.f32 %v7630, 0.0
    %v7663 = vmax.f32 %v7631, 0.0
    %v7664 = vmax.f32 %v7632, 0.0
    %v7665 = vmax.f32 %v7633, 0.0
    %v7666 = vmax.f32 %v7634, 0.0
    %v7667 = vmax.f32 %v7635, 0.0
    %v7668 = vmax.f32 %v7636, 0.0
    %v7669 = vmax.f32 %v7637, 0.0
    %v7670 = vmax.f32 %v7638, 0.0
    %v7671 = vmax.f32 %v7639, 0.0
    %v7672 = vmax.f32 %v7640, 0.0
    %v7673 = vmax.f32 %v7641, 0.0
    %v7674 = vmax.f32 %v7642, 0.0
    %v7675 = vmax.f32 %v7643, 0.0
    %v7676 = vmax.f32 %v7644, 0.0
    %v7677 = vmax.f32 %v7645, 0.0
    %v7678 = vmax.f32 %v7646, 0.0
    %v7679 = vmax.f32 %v7647, 0.0
    %v7680 = vmax.f32 %v7648, 0.0
    %v7681 = vmax.f32 %v7649, 0.0
    %v7682 = vmax.f32 %v7650, 0.0
    %v7683 = vmax.f32 %v7651, 0.0
    %v7684 = vmax.f32 %v7652, 0.0
    %v7685 = vsel %vm3637, %v7653, 0.0
    %v7686 = vsel %vm3637, %v7654, 0.0
    %v7687 = vadd.f32 %v7685, %v7686
    %v7688 = vsel %vm3637, %v7655, 0.0
    %v7689 = vadd.f32 %v7687, %v7688
    %v7690 = vsel %vm3637, %v7656, 0.0
    %v7691 = vadd.f32 %v7689, %v7690
    %v7692 = vsel %vm3637, %v7657, 0.0
    %v7693 = vadd.f32 %v7691, %v7692
    %v7694 = vsel %vm3637, %v7658, 0.0
    %v7695 = vadd.f32 %v7693, %v7694
    %v7696 = vsel %vm3637, %v7659, 0.0
    %v7697 = vadd.f32 %v7695, %v7696
    %v7698 = vsel %vm3637, %v7660, 0.0
    %v7699 = vadd.f32 %v7697, %v7698
    %v7700 = vsel %vm3637, %v7661, 0.0
    %v7701 = vadd.f32 %v7699, %v7700
    %v7702 = vsel %vm3637, %v7662, 0.0
    %v7703 = vadd.f32 %v7701, %v7702
    %v7704 = vsel %vm3637, %v7663, 0.0
    %v7705 = vadd.f32 %v7703, %v7704
    %v7706 = vsel %vm3637, %v7664, 0.0
    %v7707 = vadd.f32 %v7705, %v7706
    %v7708 = vsel %vm3637, %v7665, 0.0
    %v7709 = vadd.f32 %v7707, %v7708
    %v7710 = vsel %vm3637, %v7666, 0.0
    %v7711 = vadd.f32 %v7709, %v7710
    %v7712 = vsel %vm3637, %v7667, 0.0
    %v7713 = vadd.f32 %v7711, %v7712
    %v7714 = vsel %vm3637, %v7668, 0.0
    %v7715 = vadd.f32 %v7713, %v7714
    %v7716 = vsel %vm3637, %v7669, 0.0
    %v7717 = vadd.f32 %v7715, %v7716
    %v7718 = vsel %vm3637, %v7670, 0.0
    %v7719 = vadd.f32 %v7717, %v7718
    %v7720 = vsel %vm3637, %v7671, 0.0
    %v7721 = vadd.f32 %v7719, %v7720
    %v7722 = vsel %vm3637, %v7672, 0.0
    %v7723 = vadd.f32 %v7721, %v7722
    %v7724 = vsel %vm3637, %v7673, 0.0
    %v7725 = vadd.f32 %v7723, %v7724
    %v7726 = vsel %vm3637, %v7674, 0.0
    %v7727 = vadd.f32 %v7725, %v7726
    %v7728 = vsel %vm3637, %v7675, 0.0
    %v7729 = vadd.f32 %v7727, %v7728
    %v7730 = vsel %vm3637, %v7676, 0.0
    %v7731 = vadd.f32 %v7729, %v7730
    %v7732 = vsel %vm3637, %v7677, 0.0
    %v7733 = vadd.f32 %v7731, %v7732
    %v7734 = vsel %vm3637, %v7678, 0.0
    %v7735 = vadd.f32 %v7733, %v7734
    %v7736 = vsel %vm3637, %v7679, 0.0
    %v7737 = vadd.f32 %v7735, %v7736
    %v7738 = vsel %vm3637, %v7680, 0.0
    %v7739 = vadd.f32 %v7737, %v7738
    %v7740 = vsel %vm3637, %v7681, 0.0
    %v7741 = vadd.f32 %v7739, %v7740
    %v7742 = vsel %vm3637, %v7682, 0.0
    %v7743 = vadd.f32 %v7741, %v7742
    %v7744 = vsel %vm3637, %v7683, 0.0
    %v7745 = vadd.f32 %v7743, %v7744
    %v7746 = vsel %vm3637, %v7684, 0.0
    %v7747 = vadd.f32 %v7745, %v7746
    %7748 = vadd.xlane.f32.xlu0 %v7747
    %v7749 = vpop.xlane.xlu0 %7748
    %vm7750 = vcmp.ge.f32.partialorder %v7749, 1.0
    %v7751 = vsel %vm7750, %v7620, %v7617
    %v7752 = vsel %vm7750, %v7618, %v7620
    %v7753 = vadd.f32 %v7751, %v7752
    %v7754 = vmul.f32 %v7753, 0.5
    %vm7755 = vcmp.gt.f32.partialorder %v3703, %v7754
    %vm7756 = vcmp.gt.f32.partialorder %v3704, %v7754
    %vm7757 = vcmp.gt.f32.partialorder %v3705, %v7754
    %vm7758 = vcmp.gt.f32.partialorder %v3706, %v7754
    %vm7759 = vcmp.gt.f32.partialorder %v3707, %v7754
    %vm7760 = vcmp.gt.f32.partialorder %v3708, %v7754
    %vm7761 = vcmp.gt.f32.partialorder %v3709, %v7754
    %vm7762 = vcmp.gt.f32.partialorder %v3710, %v7754
    %vm7763 = vcmp.gt.f32.partialorder %v3711, %v7754
    %vm7764 = vcmp.gt.f32.partialorder %v3712, %v7754
    %vm7765 = vcmp.gt.f32.partialorder %v3713, %v7754
    %vm7766 = vcmp.gt.f32.partialorder %v3714, %v7754
    %vm7767 = vcmp.gt.f32.partialorder %v3715, %v7754
    %vm7768 = vcmp.gt.f32.partialorder %v3716, %v7754
    %vm7769 = vcmp.gt.f32.partialorder %v3717, %v7754
    %vm7770 = vcmp.gt.f32.partialorder %v3718, %v7754
    %vm7771 = vcmp.gt.f32.partialorder %v3719, %v7754
    %vm7772 = vcmp.gt.f32.partialorder %v3720, %v7754
    %vm7773 = vcmp.gt.f32.partialorder %v3721, %v7754
    %vm7774 = vcmp.gt.f32.partialorder %v3722, %v7754
    %vm7775 = vcmp.gt.f32.partialorder %v3723, %v7754
    %vm7776 = vcmp.gt.f32.partialorder %v3724, %v7754
    %vm7777 = vcmp.gt.f32.partialorder %v3725, %v7754
    %vm7778 = vcmp.gt.f32.partialorder %v3726, %v7754
    %vm7779 = vcmp.gt.f32.partialorder %v3727, %v7754
    %vm7780 = vcmp.gt.f32.partialorder %v3728, %v7754
    %vm7781 = vcmp.gt.f32.partialorder %v3729, %v7754
    %vm7782 = vcmp.gt.f32.partialorder %v3730, %v7754
    %vm7783 = vcmp.gt.f32.partialorder %v3731, %v7754
    %vm7784 = vcmp.gt.f32.partialorder %v3732, %v7754
    %vm7785 = vcmp.gt.f32.partialorder %v3733, %v7754
    %vm7786 = vcmp.gt.f32.partialorder %v3734, %v7754
    %v7787 = vsel %vm7755, 1, 0
    %v7788 = vsel %vm7756, 1, 0
    %v7789 = vsel %vm7757, 1, 0
    %v7790 = vsel %vm7758, 1, 0
    %v7791 = vsel %vm7759, 1, 0
    %v7792 = vsel %vm7760, 1, 0
    %v7793 = vsel %vm7761, 1, 0
    %v7794 = vsel %vm7762, 1, 0
    %v7795 = vsel %vm7763, 1, 0
    %v7796 = vsel %vm7764, 1, 0
    %v7797 = vsel %vm7765, 1, 0
    %v7798 = vsel %vm7766, 1, 0
    %v7799 = vsel %vm7767, 1, 0
    %v7800 = vsel %vm7768, 1, 0
    %v7801 = vsel %vm7769, 1, 0
    %v7802 = vsel %vm7770, 1, 0
    %v7803 = vsel %vm7771, 1, 0
    %v7804 = vsel %vm7772, 1, 0
    %v7805 = vsel %vm7773, 1, 0
    %v7806 = vsel %vm7774, 1, 0
    %v7807 = vsel %vm7775, 1, 0
    %v7808 = vsel %vm7776, 1, 0
    %v7809 = vsel %vm7777, 1, 0
    %v7810 = vsel %vm7778, 1, 0
    %v7811 = vsel %vm7779, 1, 0
    %v7812 = vsel %vm7780, 1, 0
    %v7813 = vsel %vm7781, 1, 0
    %v7814 = vsel %vm7782, 1, 0
    %v7815 = vsel %vm7783, 1, 0
    %v7816 = vsel %vm7784, 1, 0
    %v7817 = vsel %vm7785, 1, 0
    %v7818 = vsel %vm7786, 1, 0
    %v7819 = vcvt.s32.f32 %v7787
    %v7820 = vcvt.s32.f32 %v7788
    %v7821 = vcvt.s32.f32 %v7789
    %v7822 = vcvt.s32.f32 %v7790
    %v7823 = vcvt.s32.f32 %v7791
    %v7824 = vcvt.s32.f32 %v7792
    %v7825 = vcvt.s32.f32 %v7793
    %v7826 = vcvt.s32.f32 %v7794
    %v7827 = vcvt.s32.f32 %v7795
    %v7828 = vcvt.s32.f32 %v7796
    %v7829 = vcvt.s32.f32 %v7797
    %v7830 = vcvt.s32.f32 %v7798
    %v7831 = vcvt.s32.f32 %v7799
    %v7832 = vcvt.s32.f32 %v7800
    %v7833 = vcvt.s32.f32 %v7801
    %v7834 = vcvt.s32.f32 %v7802
    %v7835 = vcvt.s32.f32 %v7803
    %v7836 = vcvt.s32.f32 %v7804
    %v7837 = vcvt.s32.f32 %v7805
    %v7838 = vcvt.s32.f32 %v7806
    %v7839 = vcvt.s32.f32 %v7807
    %v7840 = vcvt.s32.f32 %v7808
    %v7841 = vcvt.s32.f32 %v7809
    %v7842 = vcvt.s32.f32 %v7810
    %v7843 = vcvt.s32.f32 %v7811
    %v7844 = vcvt.s32.f32 %v7812
    %v7845 = vcvt.s32.f32 %v7813
    %v7846 = vcvt.s32.f32 %v7814
    %v7847 = vcvt.s32.f32 %v7815
    %v7848 = vcvt.s32.f32 %v7816
    %v7849 = vcvt.s32.f32 %v7817
    %v7850 = vcvt.s32.f32 %v7818
    %v7851 = vsel %vm3637, %v7819, 0.0
    %v7852 = vsel %vm3637, %v7820, 0.0
    %v7853 = vadd.f32 %v7851, %v7852
    %v7854 = vsel %vm3637, %v7821, 0.0
    %v7855 = vadd.f32 %v7853, %v7854
    %v7856 = vsel %vm3637, %v7822, 0.0
    %v7857 = vadd.f32 %v7855, %v7856
    %v7858 = vsel %vm3637, %v7823, 0.0
    %v7859 = vadd.f32 %v7857, %v7858
    %v7860 = vsel %vm3637, %v7824, 0.0
    %v7861 = vadd.f32 %v7859, %v7860
    %v7862 = vsel %vm3637, %v7825, 0.0
    %v7863 = vadd.f32 %v7861, %v7862
    %v7864 = vsel %vm3637, %v7826, 0.0
    %v7865 = vadd.f32 %v7863, %v7864
    %v7866 = vsel %vm3637, %v7827, 0.0
    %v7867 = vadd.f32 %v7865, %v7866
    %v7868 = vsel %vm3637, %v7828, 0.0
    %v7869 = vadd.f32 %v7867, %v7868
    %v7870 = vsel %vm3637, %v7829, 0.0
    %v7871 = vadd.f32 %v7869, %v7870
    %v7872 = vsel %vm3637, %v7830, 0.0
    %v7873 = vadd.f32 %v7871, %v7872
    %v7874 = vsel %vm3637, %v7831, 0.0
    %v7875 = vadd.f32 %v7873, %v7874
    %v7876 = vsel %vm3637, %v7832, 0.0
    %v7877 = vadd.f32 %v7875, %v7876
    %v7878 = vsel %vm3637, %v7833, 0.0
    %v7879 = vadd.f32 %v7877, %v7878
    %v7880 = vsel %vm3637, %v7834, 0.0
    %v7881 = vadd.f32 %v7879, %v7880
    %v7882 = vsel %vm3637, %v7835, 0.0
    %v7883 = vadd.f32 %v7881, %v7882
    %v7884 = vsel %vm3637, %v7836, 0.0
    %v7885 = vadd.f32 %v7883, %v7884
    %v7886 = vsel %vm3637, %v7837, 0.0
    %v7887 = vadd.f32 %v7885, %v7886
    %v7888 = vsel %vm3637, %v7838, 0.0
    %v7889 = vadd.f32 %v7887, %v7888
    %v7890 = vsel %vm3637, %v7839, 0.0
    %v7891 = vadd.f32 %v7889, %v7890
    %v7892 = vsel %vm3637, %v7840, 0.0
    %v7893 = vadd.f32 %v7891, %v7892
    %v7894 = vsel %vm3637, %v7841, 0.0
    %v7895 = vadd.f32 %v7893, %v7894
    %v7896 = vsel %vm3637, %v7842, 0.0
    %v7897 = vadd.f32 %v7895, %v7896
    %v7898 = vsel %vm3637, %v7843, 0.0
    %v7899 = vadd.f32 %v7897, %v7898
    %v7900 = vsel %vm3637, %v7844, 0.0
    %v7901 = vadd.f32 %v7899, %v7900
    %v7902 = vsel %vm3637, %v7845, 0.0
    %v7903 = vadd.f32 %v7901, %v7902
    %v7904 = vsel %vm3637, %v7846, 0.0
    %v7905 = vadd.f32 %v7903, %v7904
    %v7906 = vsel %vm3637, %v7847, 0.0
    %v7907 = vadd.f32 %v7905, %v7906
    %v7908 = vsel %vm3637, %v7848, 0.0
    %v7909 = vadd.f32 %v7907, %v7908
    %v7910 = vsel %vm3637, %v7849, 0.0
    %v7911 = vadd.f32 %v7909, %v7910
    %v7912 = vsel %vm3637, %v7850, 0.0
    %v7913 = vadd.f32 %v7911, %v7912
    %7914 = vadd.xlane.f32.xlu0 %v7913
    %v7915 = vpop.xlane.xlu0 %7914
    %v7916 = vmul.f32 %v3703, %v7819
    %v7917 = vmul.f32 %v3704, %v7820
    %v7918 = vmul.f32 %v3705, %v7821
    %v7919 = vmul.f32 %v3706, %v7822
    %v7920 = vmul.f32 %v3707, %v7823
    %v7921 = vmul.f32 %v3708, %v7824
    %v7922 = vmul.f32 %v3709, %v7825
    %v7923 = vmul.f32 %v3710, %v7826
    %v7924 = vmul.f32 %v3711, %v7827
    %v7925 = vmul.f32 %v3712, %v7828
    %v7926 = vmul.f32 %v3713, %v7829
    %v7927 = vmul.f32 %v3714, %v7830
    %v7928 = vmul.f32 %v3715, %v7831
    %v7929 = vmul.f32 %v3716, %v7832
    %v7930 = vmul.f32 %v3717, %v7833
    %v7931 = vmul.f32 %v3718, %v7834
    %v7932 = vmul.f32 %v3719, %v7835
    %v7933 = vmul.f32 %v3720, %v7836
    %v7934 = vmul.f32 %v3721, %v7837
    %v7935 = vmul.f32 %v3722, %v7838
    %v7936 = vmul.f32 %v3723, %v7839
    %v7937 = vmul.f32 %v3724, %v7840
    %v7938 = vmul.f32 %v3725, %v7841
    %v7939 = vmul.f32 %v3726, %v7842
    %v7940 = vmul.f32 %v3727, %v7843
    %v7941 = vmul.f32 %v3728, %v7844
    %v7942 = vmul.f32 %v3729, %v7845
    %v7943 = vmul.f32 %v3730, %v7846
    %v7944 = vmul.f32 %v3731, %v7847
    %v7945 = vmul.f32 %v3732, %v7848
    %v7946 = vmul.f32 %v3733, %v7849
    %v7947 = vmul.f32 %v3734, %v7850
    %v7948 = vsel %vm3637, %v7916, 0.0
    %v7949 = vsel %vm3637, %v7917, 0.0
    %v7950 = vadd.f32 %v7948, %v7949
    %v7951 = vsel %vm3637, %v7918, 0.0
    %v7952 = vadd.f32 %v7950, %v7951
    %v7953 = vsel %vm3637, %v7919, 0.0
    %v7954 = vadd.f32 %v7952, %v7953
    %v7955 = vsel %vm3637, %v7920, 0.0
    %v7956 = vadd.f32 %v7954, %v7955
    %v7957 = vsel %vm3637, %v7921, 0.0
    %v7958 = vadd.f32 %v7956, %v7957
    %v7959 = vsel %vm3637, %v7922, 0.0
    %v7960 = vadd.f32 %v7958, %v7959
    %v7961 = vsel %vm3637, %v7923, 0.0
    %v7962 = vadd.f32 %v7960, %v7961
    %v7963 = vsel %vm3637, %v7924, 0.0
    %v7964 = vadd.f32 %v7962, %v7963
    %v7965 = vsel %vm3637, %v7925, 0.0
    %v7966 = vadd.f32 %v7964, %v7965
    %v7967 = vsel %vm3637, %v7926, 0.0
    %v7968 = vadd.f32 %v7966, %v7967
    %v7969 = vsel %vm3637, %v7927, 0.0
    %v7970 = vadd.f32 %v7968, %v7969
    %v7971 = vsel %vm3637, %v7928, 0.0
    %v7972 = vadd.f32 %v7970, %v7971
    %v7973 = vsel %vm3637, %v7929, 0.0
    %v7974 = vadd.f32 %v7972, %v7973
    %v7975 = vsel %vm3637, %v7930, 0.0
    %v7976 = vadd.f32 %v7974, %v7975
    %v7977 = vsel %vm3637, %v7931, 0.0
    %v7978 = vadd.f32 %v7976, %v7977
    %v7979 = vsel %vm3637, %v7932, 0.0
    %v7980 = vadd.f32 %v7978, %v7979
    %v7981 = vsel %vm3637, %v7933, 0.0
    %v7982 = vadd.f32 %v7980, %v7981
    %v7983 = vsel %vm3637, %v7934, 0.0
    %v7984 = vadd.f32 %v7982, %v7983
    %v7985 = vsel %vm3637, %v7935, 0.0
    %v7986 = vadd.f32 %v7984, %v7985
    %v7987 = vsel %vm3637, %v7936, 0.0
    %v7988 = vadd.f32 %v7986, %v7987
    %v7989 = vsel %vm3637, %v7937, 0.0
    %v7990 = vadd.f32 %v7988, %v7989
    %v7991 = vsel %vm3637, %v7938, 0.0
    %v7992 = vadd.f32 %v7990, %v7991
    %v7993 = vsel %vm3637, %v7939, 0.0
    %v7994 = vadd.f32 %v7992, %v7993
    %v7995 = vsel %vm3637, %v7940, 0.0
    %v7996 = vadd.f32 %v7994, %v7995
    %v7997 = vsel %vm3637, %v7941, 0.0
    %v7998 = vadd.f32 %v7996, %v7997
    %v7999 = vsel %vm3637, %v7942, 0.0
    %v8000 = vadd.f32 %v7998, %v7999
    %v8001 = vsel %vm3637, %v7943, 0.0
    %v8002 = vadd.f32 %v8000, %v8001
    %v8003 = vsel %vm3637, %v7944, 0.0
    %v8004 = vadd.f32 %v8002, %v8003
    %v8005 = vsel %vm3637, %v7945, 0.0
    %v8006 = vadd.f32 %v8004, %v8005
    %v8007 = vsel %vm3637, %v7946, 0.0
    %v8008 = vadd.f32 %v8006, %v8007
    %v8009 = vsel %vm3637, %v7947, 0.0
    %v8010 = vadd.f32 %v8008, %v8009
    %8011 = vadd.xlane.f32.xlu0 %v8010
    %v8012 = vpop.xlane.xlu0 %8011
    %v8013 = vsub.f32 %v8012, 1.0
    %v8014 = vrcp.pop %v7915
    %v8015 = vmul.f32 %v7915, %v8014
    %v8016 = vsub.f32 1.0, %v8015
    %v8017 = vmul.f32 %v8014, %v8016
    %v8018 = vadd.f32 %v8014, %v8017
    %vm8019 = vweird.f32 %v7915
    %vm8020 = vweird.f32 %v8014
    %vm8021 = vmor %vm8019, %vm8020
    %v8022 = vsel %vm8021, %v8014, %v8018
    %v8023 = vand.u32 2147483647, %v7915
    %vm8024 = vcmp.eq.f32.partialorder %v8023, 8.507059e+37
    %v8025 = vand.u32 %v7915, 2147483648
    %v8026 = vor.u32 1.1754944e-38, %v8025
    %v8027 = vsel %vm8024, %v8026, %v8022
    %v8028 = vmul.f32 %v8013, %v8027
    %v8029 = vsub.f32 %v3703, %v8028
    %v8030 = vsub.f32 %v3704, %v8028
    %v8031 = vsub.f32 %v3705, %v8028
    %v8032 = vsub.f32 %v3706, %v8028
    %v8033 = vsub.f32 %v3707, %v8028
    %v8034 = vsub.f32 %v3708, %v8028
    %v8035 = vsub.f32 %v3709, %v8028
    %v8036 = vsub.f32 %v3710, %v8028
    %v8037 = vsub.f32 %v3711, %v8028
    %v8038 = vsub.f32 %v3712, %v8028
    %v8039 = vsub.f32 %v3713, %v8028
    %v8040 = vsub.f32 %v3714, %v8028
    %v8041 = vsub.f32 %v3715, %v8028
    %v8042 = vsub.f32 %v3716, %v8028
    %v8043 = vsub.f32 %v3717, %v8028
    %v8044 = vsub.f32 %v3718, %v8028
    %v8045 = vsub.f32 %v3719, %v8028
    %v8046 = vsub.f32 %v3720, %v8028
    %v8047 = vsub.f32 %v3721, %v8028
    %v8048 = vsub.f32 %v3722, %v8028
    %v8049 = vsub.f32 %v3723, %v8028
    %v8050 = vsub.f32 %v3724, %v8028
    %v8051 = vsub.f32 %v3725, %v8028
    %v8052 = vsub.f32 %v3726, %v8028
    %v8053 = vsub.f32 %v3727, %v8028
    %v8054 = vsub.f32 %v3728, %v8028
    %v8055 = vsub.f32 %v3729, %v8028
    %v8056 = vsub.f32 %v3730, %v8028
    %v8057 = vsub.f32 %v3731, %v8028
    %v8058 = vsub.f32 %v3732, %v8028
    %v8059 = vsub.f32 %v3733, %v8028
    %v8060 = vsub.f32 %v3734, %v8028
    %v8061 = vmax.f32 %v8029, 0.0
    %v8062 = vmax.f32 %v8030, 0.0
    %v8063 = vmax.f32 %v8031, 0.0
    %v8064 = vmax.f32 %v8032, 0.0
    %v8065 = vmax.f32 %v8033, 0.0
    %v8066 = vmax.f32 %v8034, 0.0
    %v8067 = vmax.f32 %v8035, 0.0
    %v8068 = vmax.f32 %v8036, 0.0
    %v8069 = vmax.f32 %v8037, 0.0
    %v8070 = vmax.f32 %v8038, 0.0
    %v8071 = vmax.f32 %v8039, 0.0
    %v8072 = vmax.f32 %v8040, 0.0
    %v8073 = vmax.f32 %v8041, 0.0
    %v8074 = vmax.f32 %v8042, 0.0
    %v8075 = vmax.f32 %v8043, 0.0
    %v8076 = vmax.f32 %v8044, 0.0
    %v8077 = vmax.f32 %v8045, 0.0
    %v8078 = vmax.f32 %v8046, 0.0
    %v8079 = vmax.f32 %v8047, 0.0
    %v8080 = vmax.f32 %v8048, 0.0
    %v8081 = vmax.f32 %v8049, 0.0
    %v8082 = vmax.f32 %v8050, 0.0
    %v8083 = vmax.f32 %v8051, 0.0
    %v8084 = vmax.f32 %v8052, 0.0
    %v8085 = vmax.f32 %v8053, 0.0
    %v8086 = vmax.f32 %v8054, 0.0
    %v8087 = vmax.f32 %v8055, 0.0
    %v8088 = vmax.f32 %v8056, 0.0
    %v8089 = vmax.f32 %v8057, 0.0
    %v8090 = vmax.f32 %v8058, 0.0
    %v8091 = vmax.f32 %v8059, 0.0
    %v8092 = vmax.f32 %v8060, 0.0
    %v8093 = vld [vmem:[%s20] sm:$0xff]
    %v8094 = vld [vmem:[%s20 + $0x8] sm:$0xff]
    %v8095 = vld [vmem:[%s20 + $0x10] sm:$0xff]
    %v8096 = vld [vmem:[%s20 + $0x18] sm:$0xff]
    %v8097 = vld [vmem:[%s20 + $0x20] sm:$0xff]
    %v8098 = vld [vmem:[%s20 + $0x28] sm:$0xff]
    %v8099 = vld [vmem:[%s20 + $0x30] sm:$0xff]
    %v8100 = vld [vmem:[%s20 + $0x38] sm:$0xff]
    %v8101 = vld [vmem:[%s20 + $0x40] sm:$0xff]
    %v8102 = vld [vmem:[%s20 + $0x48] sm:$0xff]
    %v8103 = vld [vmem:[%s20 + $0x50] sm:$0xff]
    %v8104 = vld [vmem:[%s20 + $0x58] sm:$0xff]
    %v8105 = vld [vmem:[%s20 + $0x60] sm:$0xff]
    %v8106 = vld [vmem:[%s20 + $0x68] sm:$0xff]
    %v8107 = vld [vmem:[%s20 + $0x70] sm:$0xff]
    %v8108 = vld [vmem:[%s20 + $0x78] sm:$0xff]
    %v8109 = vld [vmem:[%s20 + $0x80] sm:$0xff]
    %v8110 = vld [vmem:[%s20 + $0x88] sm:$0xff]
    %v8111 = vld [vmem:[%s20 + $0x90] sm:$0xff]
    %v8112 = vld [vmem:[%s20 + $0x98] sm:$0xff]
    %v8113 = vld [vmem:[%s20 + $0xa0] sm:$0xff]
    %v8114 = vld [vmem:[%s20 + $0xa8] sm:$0xff]
    %v8115 = vld [vmem:[%s20 + $0xb0] sm:$0xff]
    %v8116 = vld [vmem:[%s20 + $0xb8] sm:$0xff]
    %v8117 = vld [vmem:[%s20 + $0xc0] sm:$0xff]
    %v8118 = vld [vmem:[%s20 + $0xc8] sm:$0xff]
    %v8119 = vld [vmem:[%s20 + $0xd0] sm:$0xff]
    %v8120 = vld [vmem:[%s20 + $0xd8] sm:$0xff]
    %v8121 = vld [vmem:[%s20 + $0xe0] sm:$0xff]
    %v8122 = vld [vmem:[%s20 + $0xe8] sm:$0xff]
    %v8123 = vld [vmem:[%s20 + $0xf0] sm:$0xff]
    %v8124 = vld [vmem:[%s20 + $0xf8] sm:$0xff]
    %v8125 = vld [vmem:[%s20 + $0x100] sm:$0xff]
    %v8126 = vld [vmem:[%s20 + $0x108] sm:$0xff]
    %v8127 = vld [vmem:[%s20 + $0x110] sm:$0xff]
    %v8128 = vld [vmem:[%s20 + $0x118] sm:$0xff]
    %v8129 = vld [vmem:[%s20 + $0x120] sm:$0xff]
    %v8130 = vld [vmem:[%s20 + $0x128] sm:$0xff]
    %v8131 = vld [vmem:[%s20 + $0x130] sm:$0xff]
    %v8132 = vld [vmem:[%s20 + $0x138] sm:$0xff]
    %v8133 = vld [vmem:[%s20 + $0x140] sm:$0xff]
    %v8134 = vld [vmem:[%s20 + $0x148] sm:$0xff]
    %v8135 = vld [vmem:[%s20 + $0x150] sm:$0xff]
    %v8136 = vld [vmem:[%s20 + $0x158] sm:$0xff]
    %v8137 = vld [vmem:[%s20 + $0x160] sm:$0xff]
    %v8138 = vld [vmem:[%s20 + $0x168] sm:$0xff]
    %v8139 = vld [vmem:[%s20 + $0x170] sm:$0xff]
    %v8140 = vld [vmem:[%s20 + $0x178] sm:$0xff]
    %v8141 = vld [vmem:[%s20 + $0x180] sm:$0xff]
    %v8142 = vld [vmem:[%s20 + $0x188] sm:$0xff]
    %v8143 = vld [vmem:[%s20 + $0x190] sm:$0xff]
    %v8144 = vld [vmem:[%s20 + $0x198] sm:$0xff]
    %v8145 = vld [vmem:[%s20 + $0x1a0] sm:$0xff]
    %v8146 = vld [vmem:[%s20 + $0x1a8] sm:$0xff]
    %v8147 = vld [vmem:[%s20 + $0x1b0] sm:$0xff]
    %v8148 = vld [vmem:[%s20 + $0x1b8] sm:$0xff]
    %v8149 = vld [vmem:[%s20 + $0x1c0] sm:$0xff]
    %v8150 = vld [vmem:[%s20 + $0x1c8] sm:$0xff]
    %v8151 = vld [vmem:[%s20 + $0x1d0] sm:$0xff]
    %v8152 = vld [vmem:[%s20 + $0x1d8] sm:$0xff]
    %v8153 = vld [vmem:[%s20 + $0x1e0] sm:$0xff]
    %v8154 = vld [vmem:[%s20 + $0x1e8] sm:$0xff]
    %v8155 = vld [vmem:[%s20 + $0x1f0] sm:$0xff]
    %v8156 = vld [vmem:[%s20 + $0x1f8] sm:$0xff]
    %v8157 = vld [vmem:[%s20 + $0x200] sm:$0xff]
    %v8158 = vld [vmem:[%s20 + $0x208] sm:$0xff]
    %v8159 = vld [vmem:[%s20 + $0x210] sm:$0xff]
    %v8160 = vld [vmem:[%s20 + $0x218] sm:$0xff]
    %v8161 = vld [vmem:[%s20 + $0x220] sm:$0xff]
    %v8162 = vld [vmem:[%s20 + $0x228] sm:$0xff]
    %v8163 = vld [vmem:[%s20 + $0x230] sm:$0xff]
    %v8164 = vld [vmem:[%s20 + $0x238] sm:$0xff]
    %v8165 = vld [vmem:[%s20 + $0x240] sm:$0xff]
    %v8166 = vld [vmem:[%s20 + $0x248] sm:$0xff]
    %v8167 = vld [vmem:[%s20 + $0x250] sm:$0xff]
    %v8168 = vld [vmem:[%s20 + $0x258] sm:$0xff]
    %v8169 = vld [vmem:[%s20 + $0x260] sm:$0xff]
    %v8170 = vld [vmem:[%s20 + $0x268] sm:$0xff]
    %v8171 = vld [vmem:[%s20 + $0x270] sm:$0xff]
    %v8172 = vld [vmem:[%s20 + $0x278] sm:$0xff]
    %v8173 = vld [vmem:[%s20 + $0x280] sm:$0xff]
    %v8174 = vld [vmem:[%s20 + $0x288] sm:$0xff]
    %v8175 = vld [vmem:[%s20 + $0x290] sm:$0xff]
    %v8176 = vld [vmem:[%s20 + $0x298] sm:$0xff]
    %v8177 = vld [vmem:[%s20 + $0x2a0] sm:$0xff]
    %v8178 = vld [vmem:[%s20 + $0x2a8] sm:$0xff]
    %v8179 = vld [vmem:[%s20 + $0x2b0] sm:$0xff]
    %v8180 = vld [vmem:[%s20 + $0x2b8] sm:$0xff]
    %v8181 = vld [vmem:[%s20 + $0x2c0] sm:$0xff]
    %v8182 = vld [vmem:[%s20 + $0x2c8] sm:$0xff]
    %v8183 = vld [vmem:[%s20 + $0x2d0] sm:$0xff]
    %v8184 = vld [vmem:[%s20 + $0x2d8] sm:$0xff]
    %v8185 = vld [vmem:[%s20 + $0x2e0] sm:$0xff]
    %v8186 = vld [vmem:[%s20 + $0x2e8] sm:$0xff]
    %v8187 = vld [vmem:[%s20 + $0x2f0] sm:$0xff]
    %v8188 = vld [vmem:[%s20 + $0x2f8] sm:$0xff]
    %v8189 = vld [vmem:[%s20 + $0x300] sm:$0xff]
    %v8190 = vld [vmem:[%s20 + $0x308] sm:$0xff]
    %v8191 = vld [vmem:[%s20 + $0x310] sm:$0xff]
    %v8192 = vld [vmem:[%s20 + $0x318] sm:$0xff]
    %v8193 = vld [vmem:[%s20 + $0x320] sm:$0xff]
    %v8194 = vld [vmem:[%s20 + $0x328] sm:$0xff]
    %v8195 = vld [vmem:[%s20 + $0x330] sm:$0xff]
    %v8196 = vld [vmem:[%s20 + $0x338] sm:$0xff]
    %v8197 = vld [vmem:[%s20 + $0x340] sm:$0xff]
    %v8198 = vld [vmem:[%s20 + $0x348] sm:$0xff]
    %v8199 = vld [vmem:[%s20 + $0x350] sm:$0xff]
    %v8200 = vld [vmem:[%s20 + $0x358] sm:$0xff]
    %v8201 = vld [vmem:[%s20 + $0x360] sm:$0xff]
    %v8202 = vld [vmem:[%s20 + $0x368] sm:$0xff]
    %v8203 = vld [vmem:[%s20 + $0x370] sm:$0xff]
    %v8204 = vld [vmem:[%s20 + $0x378] sm:$0xff]
    %v8205 = vld [vmem:[%s20 + $0x380] sm:$0xff]
    %v8206 = vld [vmem:[%s20 + $0x388] sm:$0xff]
    %v8207 = vld [vmem:[%s20 + $0x390] sm:$0xff]
    %v8208 = vld [vmem:[%s20 + $0x398] sm:$0xff]
    %v8209 = vld [vmem:[%s20 + $0x3a0] sm:$0xff]
    %v8210 = vld [vmem:[%s20 + $0x3a8] sm:$0xff]
    %v8211 = vld [vmem:[%s20 + $0x3b0] sm:$0xff]
    %v8212 = vld [vmem:[%s20 + $0x3b8] sm:$0xff]
    %v8213 = vld [vmem:[%s20 + $0x3c0] sm:$0xff]
    %v8214 = vld [vmem:[%s20 + $0x3c8] sm:$0xff]
    %v8215 = vld [vmem:[%s20 + $0x3d0] sm:$0xff]
    %v8216 = vld [vmem:[%s20 + $0x3d8] sm:$0xff]
    %v8217 = vld [vmem:[%s20 + $0x3e0] sm:$0xff]
    %v8218 = vld [vmem:[%s20 + $0x3e8] sm:$0xff]
    %v8219 = vld [vmem:[%s20 + $0x3f0] sm:$0xff]
    %v8220 = vld [vmem:[%s20 + $0x3f8] sm:$0xff]
    %v8221 = vld [vmem:[%s20 + $0x400] sm:$0xff]
    %v8222 = vld [vmem:[%s20 + $0x408] sm:$0xff]
    %v8223 = vld [vmem:[%s20 + $0x410] sm:$0xff]
    %v8224 = vld [vmem:[%s20 + $0x418] sm:$0xff]
    %v8225 = vld [vmem:[%s20 + $0x420] sm:$0xff]
    %v8226 = vld [vmem:[%s20 + $0x428] sm:$0xff]
    %v8227 = vld [vmem:[%s20 + $0x430] sm:$0xff]
    %v8228 = vld [vmem:[%s20 + $0x438] sm:$0xff]
    %v8229 = vld [vmem:[%s20 + $0x440] sm:$0xff]
    %v8230 = vld [vmem:[%s20 + $0x448] sm:$0xff]
    %v8231 = vld [vmem:[%s20 + $0x450] sm:$0xff]
    %v8232 = vld [vmem:[%s20 + $0x458] sm:$0xff]
    %v8233 = vld [vmem:[%s20 + $0x460] sm:$0xff]
    %v8234 = vld [vmem:[%s20 + $0x468] sm:$0xff]
    %v8235 = vld [vmem:[%s20 + $0x470] sm:$0xff]
    %v8236 = vld [vmem:[%s20 + $0x478] sm:$0xff]
    %v8237 = vld [vmem:[%s20 + $0x480] sm:$0xff]
    %v8238 = vld [vmem:[%s20 + $0x488] sm:$0xff]
    %v8239 = vld [vmem:[%s20 + $0x490] sm:$0xff]
    %v8240 = vld [vmem:[%s20 + $0x498] sm:$0xff]
    %v8241 = vld [vmem:[%s20 + $0x4a0] sm:$0xff]
    %v8242 = vld [vmem:[%s20 + $0x4a8] sm:$0xff]
    %v8243 = vld [vmem:[%s20 + $0x4b0] sm:$0xff]
    %v8244 = vld [vmem:[%s20 + $0x4b8] sm:$0xff]
    %v8245 = vld [vmem:[%s20 + $0x4c0] sm:$0xff]
    %v8246 = vld [vmem:[%s20 + $0x4c8] sm:$0xff]
    %v8247 = vld [vmem:[%s20 + $0x4d0] sm:$0xff]
    %v8248 = vld [vmem:[%s20 + $0x4d8] sm:$0xff]
    %v8249 = vld [vmem:[%s20 + $0x4e0] sm:$0xff]
    %v8250 = vld [vmem:[%s20 + $0x4e8] sm:$0xff]
    %v8251 = vld [vmem:[%s20 + $0x4f0] sm:$0xff]
    %v8252 = vld [vmem:[%s20 + $0x4f8] sm:$0xff]
    %v8253 = vld [vmem:[%s20 + $0x500] sm:$0xff]
    %v8254 = vld [vmem:[%s20 + $0x508] sm:$0xff]
    %v8255 = vld [vmem:[%s20 + $0x510] sm:$0xff]
    %v8256 = vld [vmem:[%s20 + $0x518] sm:$0xff]
    %v8257 = vld [vmem:[%s20 + $0x520] sm:$0xff]
    %v8258 = vld [vmem:[%s20 + $0x528] sm:$0xff]
    %v8259 = vld [vmem:[%s20 + $0x530] sm:$0xff]
    %v8260 = vld [vmem:[%s20 + $0x538] sm:$0xff]
    %v8261 = vld [vmem:[%s20 + $0x540] sm:$0xff]
    %v8262 = vld [vmem:[%s20 + $0x548] sm:$0xff]
    %v8263 = vld [vmem:[%s20 + $0x550] sm:$0xff]
    %v8264 = vld [vmem:[%s20 + $0x558] sm:$0xff]
    %v8265 = vld [vmem:[%s20 + $0x560] sm:$0xff]
    %v8266 = vld [vmem:[%s20 + $0x568] sm:$0xff]
    %v8267 = vld [vmem:[%s20 + $0x570] sm:$0xff]
    %v8268 = vld [vmem:[%s20 + $0x578] sm:$0xff]
    %v8269 = vld [vmem:[%s20 + $0x580] sm:$0xff]
    %v8270 = vld [vmem:[%s20 + $0x588] sm:$0xff]
    %v8271 = vld [vmem:[%s20 + $0x590] sm:$0xff]
    %v8272 = vld [vmem:[%s20 + $0x598] sm:$0xff]
    %v8273 = vld [vmem:[%s20 + $0x5a0] sm:$0xff]
    %v8274 = vld [vmem:[%s20 + $0x5a8] sm:$0xff]
    %v8275 = vld [vmem:[%s20 + $0x5b0] sm:$0xff]
    %v8276 = vld [vmem:[%s20 + $0x5b8] sm:$0xff]
    %v8277 = vld [vmem:[%s20 + $0x5c0] sm:$0xff]
    %v8278 = vld [vmem:[%s20 + $0x5c8] sm:$0xff]
    %v8279 = vld [vmem:[%s20 + $0x5d0] sm:$0xff]
    %v8280 = vld [vmem:[%s20 + $0x5d8] sm:$0xff]
    %v8281 = vld [vmem:[%s20 + $0x5e0] sm:$0xff]
    %v8282 = vld [vmem:[%s20 + $0x5e8] sm:$0xff]
    %v8283 = vld [vmem:[%s20 + $0x5f0] sm:$0xff]
    %v8284 = vld [vmem:[%s20 + $0x5f8] sm:$0xff]
    %v8285 = vld [vmem:[%s20 + $0x600] sm:$0xff]
    %v8286 = vld [vmem:[%s20 + $0x608] sm:$0xff]
    %v8287 = vld [vmem:[%s20 + $0x610] sm:$0xff]
    %v8288 = vld [vmem:[%s20 + $0x618] sm:$0xff]
    %v8289 = vld [vmem:[%s20 + $0x620] sm:$0xff]
    %v8290 = vld [vmem:[%s20 + $0x628] sm:$0xff]
    %v8291 = vld [vmem:[%s20 + $0x630] sm:$0xff]
    %v8292 = vld [vmem:[%s20 + $0x638] sm:$0xff]
    %v8293 = vld [vmem:[%s20 + $0x640] sm:$0xff]
    %v8294 = vld [vmem:[%s20 + $0x648] sm:$0xff]
    %v8295 = vld [vmem:[%s20 + $0x650] sm:$0xff]
    %v8296 = vld [vmem:[%s20 + $0x658] sm:$0xff]
    %v8297 = vld [vmem:[%s20 + $0x660] sm:$0xff]
    %v8298 = vld [vmem:[%s20 + $0x668] sm:$0xff]
    %v8299 = vld [vmem:[%s20 + $0x670] sm:$0xff]
    %v8300 = vld [vmem:[%s20 + $0x678] sm:$0xff]
    %v8301 = vld [vmem:[%s20 + $0x680] sm:$0xff]
    %v8302 = vld [vmem:[%s20 + $0x688] sm:$0xff]
    %v8303 = vld [vmem:[%s20 + $0x690] sm:$0xff]
    %v8304 = vld [vmem:[%s20 + $0x698] sm:$0xff]
    %v8305 = vld [vmem:[%s20 + $0x6a0] sm:$0xff]
    %v8306 = vld [vmem:[%s20 + $0x6a8] sm:$0xff]
    %v8307 = vld [vmem:[%s20 + $0x6b0] sm:$0xff]
    %v8308 = vld [vmem:[%s20 + $0x6b8] sm:$0xff]
    %v8309 = vld [vmem:[%s20 + $0x6c0] sm:$0xff]
    %v8310 = vld [vmem:[%s20 + $0x6c8] sm:$0xff]
    %v8311 = vld [vmem:[%s20 + $0x6d0] sm:$0xff]
    %v8312 = vld [vmem:[%s20 + $0x6d8] sm:$0xff]
    %v8313 = vld [vmem:[%s20 + $0x6e0] sm:$0xff]
    %v8314 = vld [vmem:[%s20 + $0x6e8] sm:$0xff]
    %v8315 = vld [vmem:[%s20 + $0x6f0] sm:$0xff]
    %v8316 = vld [vmem:[%s20 + $0x6f8] sm:$0xff]
    %v8317 = vld [vmem:[%s20 + $0x700] sm:$0xff]
    %v8318 = vld [vmem:[%s20 + $0x708] sm:$0xff]
    %v8319 = vld [vmem:[%s20 + $0x710] sm:$0xff]
    %v8320 = vld [vmem:[%s20 + $0x718] sm:$0xff]
    %v8321 = vld [vmem:[%s20 + $0x720] sm:$0xff]
    %v8322 = vld [vmem:[%s20 + $0x728] sm:$0xff]
    %v8323 = vld [vmem:[%s20 + $0x730] sm:$0xff]
    %v8324 = vld [vmem:[%s20 + $0x738] sm:$0xff]
    %v8325 = vld [vmem:[%s20 + $0x740] sm:$0xff]
    %v8326 = vld [vmem:[%s20 + $0x748] sm:$0xff]
    %v8327 = vld [vmem:[%s20 + $0x750] sm:$0xff]
    %v8328 = vld [vmem:[%s20 + $0x758] sm:$0xff]
    %v8329 = vld [vmem:[%s20 + $0x760] sm:$0xff]
    %v8330 = vld [vmem:[%s20 + $0x768] sm:$0xff]
    %v8331 = vld [vmem:[%s20 + $0x770] sm:$0xff]
    %v8332 = vld [vmem:[%s20 + $0x778] sm:$0xff]
    %v8333 = vld [vmem:[%s20 + $0x780] sm:$0xff]
    %v8334 = vld [vmem:[%s20 + $0x788] sm:$0xff]
    %v8335 = vld [vmem:[%s20 + $0x790] sm:$0xff]
    %v8336 = vld [vmem:[%s20 + $0x798] sm:$0xff]
    %v8337 = vld [vmem:[%s20 + $0x7a0] sm:$0xff]
    %v8338 = vld [vmem:[%s20 + $0x7a8] sm:$0xff]
    %v8339 = vld [vmem:[%s20 + $0x7b0] sm:$0xff]
    %v8340 = vld [vmem:[%s20 + $0x7b8] sm:$0xff]
    %v8341 = vld [vmem:[%s20 + $0x7c0] sm:$0xff]
    %v8342 = vld [vmem:[%s20 + $0x7c8] sm:$0xff]
    %v8343 = vld [vmem:[%s20 + $0x7d0] sm:$0xff]
    %v8344 = vld [vmem:[%s20 + $0x7d8] sm:$0xff]
    %v8345 = vld [vmem:[%s20 + $0x7e0] sm:$0xff]
    %v8346 = vld [vmem:[%s20 + $0x7e8] sm:$0xff]
    %v8347 = vld [vmem:[%s20 + $0x7f0] sm:$0xff]
    %v8348 = vld [vmem:[%s20 + $0x7f8] sm:$0xff]
    %v8349 = vld [vmem:[%s20 + $0x800] sm:$0xff]
    %v8350 = vld [vmem:[%s20 + $0x808] sm:$0xff]
    %v8351 = vld [vmem:[%s20 + $0x810] sm:$0xff]
    %v8352 = vld [vmem:[%s20 + $0x818] sm:$0xff]
    %v8353 = vld [vmem:[%s20 + $0x820] sm:$0xff]
    %v8354 = vld [vmem:[%s20 + $0x828] sm:$0xff]
    %v8355 = vld [vmem:[%s20 + $0x830] sm:$0xff]
    %v8356 = vld [vmem:[%s20 + $0x838] sm:$0xff]
    %v8357 = vld [vmem:[%s20 + $0x840] sm:$0xff]
    %v8358 = vld [vmem:[%s20 + $0x848] sm:$0xff]
    %v8359 = vld [vmem:[%s20 + $0x850] sm:$0xff]
    %v8360 = vld [vmem:[%s20 + $0x858] sm:$0xff]
    %v8361 = vld [vmem:[%s20 + $0x860] sm:$0xff]
    %v8362 = vld [vmem:[%s20 + $0x868] sm:$0xff]
    %v8363 = vld [vmem:[%s20 + $0x870] sm:$0xff]
    %v8364 = vld [vmem:[%s20 + $0x878] sm:$0xff]
    %v8365 = vld [vmem:[%s20 + $0x880] sm:$0xff]
    %v8366 = vld [vmem:[%s20 + $0x888] sm:$0xff]
    %v8367 = vld [vmem:[%s20 + $0x890] sm:$0xff]
    %v8368 = vld [vmem:[%s20 + $0x898] sm:$0xff]
    %v8369 = vld [vmem:[%s20 + $0x8a0] sm:$0xff]
    %v8370 = vld [vmem:[%s20 + $0x8a8] sm:$0xff]
    %v8371 = vld [vmem:[%s20 + $0x8b0] sm:$0xff]
    %v8372 = vld [vmem:[%s20 + $0x8b8] sm:$0xff]
    %v8373 = vld [vmem:[%s20 + $0x8c0] sm:$0xff]
    %v8374 = vld [vmem:[%s20 + $0x8c8] sm:$0xff]
    %v8375 = vld [vmem:[%s20 + $0x8d0] sm:$0xff]
    %v8376 = vld [vmem:[%s20 + $0x8d8] sm:$0xff]
    %v8377 = vld [vmem:[%s20 + $0x8e0] sm:$0xff]
    %v8378 = vld [vmem:[%s20 + $0x8e8] sm:$0xff]
    %v8379 = vld [vmem:[%s20 + $0x8f0] sm:$0xff]
    %v8380 = vld [vmem:[%s20 + $0x8f8] sm:$0xff]
    %v8381 = vld [vmem:[%s20 + $0x900] sm:$0xff]
    %v8382 = vld [vmem:[%s20 + $0x908] sm:$0xff]
    %v8383 = vld [vmem:[%s20 + $0x910] sm:$0xff]
    %v8384 = vld [vmem:[%s20 + $0x918] sm:$0xff]
    %v8385 = vld [vmem:[%s20 + $0x920] sm:$0xff]
    %v8386 = vld [vmem:[%s20 + $0x928] sm:$0xff]
    %v8387 = vld [vmem:[%s20 + $0x930] sm:$0xff]
    %v8388 = vld [vmem:[%s20 + $0x938] sm:$0xff]
    %v8389 = vld [vmem:[%s20 + $0x940] sm:$0xff]
    %v8390 = vld [vmem:[%s20 + $0x948] sm:$0xff]
    %v8391 = vld [vmem:[%s20 + $0x950] sm:$0xff]
    %v8392 = vld [vmem:[%s20 + $0x958] sm:$0xff]
    %v8393 = vld [vmem:[%s20 + $0x960] sm:$0xff]
    %v8394 = vld [vmem:[%s20 + $0x968] sm:$0xff]
    %v8395 = vld [vmem:[%s20 + $0x970] sm:$0xff]
    %v8396 = vld [vmem:[%s20 + $0x978] sm:$0xff]
    %v8397 = vld [vmem:[%s20 + $0x980] sm:$0xff]
    %v8398 = vld [vmem:[%s20 + $0x988] sm:$0xff]
    %v8399 = vld [vmem:[%s20 + $0x990] sm:$0xff]
    %v8400 = vld [vmem:[%s20 + $0x998] sm:$0xff]
    %v8401 = vld [vmem:[%s20 + $0x9a0] sm:$0xff]
    %v8402 = vld [vmem:[%s20 + $0x9a8] sm:$0xff]
    %v8403 = vld [vmem:[%s20 + $0x9b0] sm:$0xff]
    %v8404 = vld [vmem:[%s20 + $0x9b8] sm:$0xff]
    %v8405 = vld [vmem:[%s20 + $0x9c0] sm:$0xff]
    %v8406 = vld [vmem:[%s20 + $0x9c8] sm:$0xff]
    %v8407 = vld [vmem:[%s20 + $0x9d0] sm:$0xff]
    %v8408 = vld [vmem:[%s20 + $0x9d8] sm:$0xff]
    %v8409 = vld [vmem:[%s20 + $0x9e0] sm:$0xff]
    %v8410 = vld [vmem:[%s20 + $0x9e8] sm:$0xff]
    %v8411 = vld [vmem:[%s20 + $0x9f0] sm:$0xff]
    %v8412 = vld [vmem:[%s20 + $0x9f8] sm:$0xff]
    %v8413 = vld [vmem:[%s20 + $0xa00] sm:$0xff]
    %v8414 = vld [vmem:[%s20 + $0xa08] sm:$0xff]
    %v8415 = vld [vmem:[%s20 + $0xa10] sm:$0xff]
    %v8416 = vld [vmem:[%s20 + $0xa18] sm:$0xff]
    %v8417 = vld [vmem:[%s20 + $0xa20] sm:$0xff]
    %v8418 = vld [vmem:[%s20 + $0xa28] sm:$0xff]
    %v8419 = vld [vmem:[%s20 + $0xa30] sm:$0xff]
    %v8420 = vld [vmem:[%s20 + $0xa38] sm:$0xff]
    %v8421 = vld [vmem:[%s20 + $0xa40] sm:$0xff]
    %v8422 = vld [vmem:[%s20 + $0xa48] sm:$0xff]
    %v8423 = vld [vmem:[%s20 + $0xa50] sm:$0xff]
    %v8424 = vld [vmem:[%s20 + $0xa58] sm:$0xff]
    %v8425 = vld [vmem:[%s20 + $0xa60] sm:$0xff]
    %v8426 = vld [vmem:[%s20 + $0xa68] sm:$0xff]
    %v8427 = vld [vmem:[%s20 + $0xa70] sm:$0xff]
    %v8428 = vld [vmem:[%s20 + $0xa78] sm:$0xff]
    %v8429 = vld [vmem:[%s20 + $0xa80] sm:$0xff]
    %v8430 = vld [vmem:[%s20 + $0xa88] sm:$0xff]
    %v8431 = vld [vmem:[%s20 + $0xa90] sm:$0xff]
    %v8432 = vld [vmem:[%s20 + $0xa98] sm:$0xff]
    %v8433 = vld [vmem:[%s20 + $0xaa0] sm:$0xff]
    %v8434 = vld [vmem:[%s20 + $0xaa8] sm:$0xff]
    %v8435 = vld [vmem:[%s20 + $0xab0] sm:$0xff]
    %v8436 = vld [vmem:[%s20 + $0xab8] sm:$0xff]
    %v8437 = vld [vmem:[%s20 + $0xac0] sm:$0xff]
    %v8438 = vld [vmem:[%s20 + $0xac8] sm:$0xff]
    %v8439 = vld [vmem:[%s20 + $0xad0] sm:$0xff]
    %v8440 = vld [vmem:[%s20 + $0xad8] sm:$0xff]
    %v8441 = vld [vmem:[%s20 + $0xae0] sm:$0xff]
    %v8442 = vld [vmem:[%s20 + $0xae8] sm:$0xff]
    %v8443 = vld [vmem:[%s20 + $0xaf0] sm:$0xff]
    %v8444 = vld [vmem:[%s20 + $0xaf8] sm:$0xff]
    %v8445 = vld [vmem:[%s20 + $0xb00] sm:$0xff]
    %v8446 = vld [vmem:[%s20 + $0xb08] sm:$0xff]
    %v8447 = vld [vmem:[%s20 + $0xb10] sm:$0xff]
    %v8448 = vld [vmem:[%s20 + $0xb18] sm:$0xff]
    %v8449 = vld [vmem:[%s20 + $0xb20] sm:$0xff]
    %v8450 = vld [vmem:[%s20 + $0xb28] sm:$0xff]
    %v8451 = vld [vmem:[%s20 + $0xb30] sm:$0xff]
    %v8452 = vld [vmem:[%s20 + $0xb38] sm:$0xff]
    %v8453 = vld [vmem:[%s20 + $0xb40] sm:$0xff]
    %v8454 = vld [vmem:[%s20 + $0xb48] sm:$0xff]
    %v8455 = vld [vmem:[%s20 + $0xb50] sm:$0xff]
    %v8456 = vld [vmem:[%s20 + $0xb58] sm:$0xff]
    %v8457 = vld [vmem:[%s20 + $0xb60] sm:$0xff]
    %v8458 = vld [vmem:[%s20 + $0xb68] sm:$0xff]
    %v8459 = vld [vmem:[%s20 + $0xb70] sm:$0xff]
    %v8460 = vld [vmem:[%s20 + $0xb78] sm:$0xff]
    %v8461 = vld [vmem:[%s20 + $0xb80] sm:$0xff]
    %v8462 = vld [vmem:[%s20 + $0xb88] sm:$0xff]
    %v8463 = vld [vmem:[%s20 + $0xb90] sm:$0xff]
    %v8464 = vld [vmem:[%s20 + $0xb98] sm:$0xff]
    %v8465 = vld [vmem:[%s20 + $0xba0] sm:$0xff]
    %v8466 = vld [vmem:[%s20 + $0xba8] sm:$0xff]
    %v8467 = vld [vmem:[%s20 + $0xbb0] sm:$0xff]
    %v8468 = vld [vmem:[%s20 + $0xbb8] sm:$0xff]
    %v8469 = vld [vmem:[%s20 + $0xbc0] sm:$0xff]
    %v8470 = vld [vmem:[%s20 + $0xbc8] sm:$0xff]
    %v8471 = vld [vmem:[%s20 + $0xbd0] sm:$0xff]
    %v8472 = vld [vmem:[%s20 + $0xbd8] sm:$0xff]
    %v8473 = vld [vmem:[%s20 + $0xbe0] sm:$0xff]
    %v8474 = vld [vmem:[%s20 + $0xbe8] sm:$0xff]
    %v8475 = vld [vmem:[%s20 + $0xbf0] sm:$0xff]
    %v8476 = vld [vmem:[%s20 + $0xbf8] sm:$0xff]
    %v8477 = vld [vmem:[%s20 + $0xc00] sm:$0xff]
    %v8478 = vld [vmem:[%s20 + $0xc08] sm:$0xff]
    %v8479 = vld [vmem:[%s20 + $0xc10] sm:$0xff]
    %v8480 = vld [vmem:[%s20 + $0xc18] sm:$0xff]
    %v8481 = vld [vmem:[%s20 + $0xc20] sm:$0xff]
    %v8482 = vld [vmem:[%s20 + $0xc28] sm:$0xff]
    %v8483 = vld [vmem:[%s20 + $0xc30] sm:$0xff]
    %v8484 = vld [vmem:[%s20 + $0xc38] sm:$0xff]
    %v8485 = vld [vmem:[%s20 + $0xc40] sm:$0xff]
    %v8486 = vld [vmem:[%s20 + $0xc48] sm:$0xff]
    %v8487 = vld [vmem:[%s20 + $0xc50] sm:$0xff]
    %v8488 = vld [vmem:[%s20 + $0xc58] sm:$0xff]
    %v8489 = vld [vmem:[%s20 + $0xc60] sm:$0xff]
    %v8490 = vld [vmem:[%s20 + $0xc68] sm:$0xff]
    %v8491 = vld [vmem:[%s20 + $0xc70] sm:$0xff]
    %v8492 = vld [vmem:[%s20 + $0xc78] sm:$0xff]
    %v8493 = vld [vmem:[%s20 + $0xc80] sm:$0xff]
    %v8494 = vld [vmem:[%s20 + $0xc88] sm:$0xff]
    %v8495 = vld [vmem:[%s20 + $0xc90] sm:$0xff]
    %v8496 = vld [vmem:[%s20 + $0xc98] sm:$0xff]
    %v8497 = vld [vmem:[%s20 + $0xca0] sm:$0xff]
    %v8498 = vld [vmem:[%s20 + $0xca8] sm:$0xff]
    %v8499 = vld [vmem:[%s20 + $0xcb0] sm:$0xff]
    %v8500 = vld [vmem:[%s20 + $0xcb8] sm:$0xff]
    %v8501 = vld [vmem:[%s20 + $0xcc0] sm:$0xff]
    %v8502 = vld [vmem:[%s20 + $0xcc8] sm:$0xff]
    %v8503 = vld [vmem:[%s20 + $0xcd0] sm:$0xff]
    %v8504 = vld [vmem:[%s20 + $0xcd8] sm:$0xff]
    %v8505 = vld [vmem:[%s20 + $0xce0] sm:$0xff]
    %v8506 = vld [vmem:[%s20 + $0xce8] sm:$0xff]
    %v8507 = vld [vmem:[%s20 + $0xcf0] sm:$0xff]
    %v8508 = vld [vmem:[%s20 + $0xcf8] sm:$0xff]
    %v8509 = vld [vmem:[%s20 + $0xd00] sm:$0xff]
    %v8510 = vld [vmem:[%s20 + $0xd08] sm:$0xff]
    %v8511 = vld [vmem:[%s20 + $0xd10] sm:$0xff]
    %v8512 = vld [vmem:[%s20 + $0xd18] sm:$0xff]
    %v8513 = vld [vmem:[%s20 + $0xd20] sm:$0xff]
    %v8514 = vld [vmem:[%s20 + $0xd28] sm:$0xff]
    %v8515 = vld [vmem:[%s20 + $0xd30] sm:$0xff]
    %v8516 = vld [vmem:[%s20 + $0xd38] sm:$0xff]
    %v8517 = vld [vmem:[%s20 + $0xd40] sm:$0xff]
    %v8518 = vld [vmem:[%s20 + $0xd48] sm:$0xff]
    %v8519 = vld [vmem:[%s20 + $0xd50] sm:$0xff]
    %v8520 = vld [vmem:[%s20 + $0xd58] sm:$0xff]
    %v8521 = vld [vmem:[%s20 + $0xd60] sm:$0xff]
    %v8522 = vld [vmem:[%s20 + $0xd68] sm:$0xff]
    %v8523 = vld [vmem:[%s20 + $0xd70] sm:$0xff]
    %v8524 = vld [vmem:[%s20 + $0xd78] sm:$0xff]
    %v8525 = vld [vmem:[%s20 + $0xd80] sm:$0xff]
    %v8526 = vld [vmem:[%s20 + $0xd88] sm:$0xff]
    %v8527 = vld [vmem:[%s20 + $0xd90] sm:$0xff]
    %v8528 = vld [vmem:[%s20 + $0xd98] sm:$0xff]
    %v8529 = vld [vmem:[%s20 + $0xda0] sm:$0xff]
    %v8530 = vld [vmem:[%s20 + $0xda8] sm:$0xff]
    %v8531 = vld [vmem:[%s20 + $0xdb0] sm:$0xff]
    %v8532 = vld [vmem:[%s20 + $0xdb8] sm:$0xff]
    %v8533 = vld [vmem:[%s20 + $0xdc0] sm:$0xff]
    %v8534 = vld [vmem:[%s20 + $0xdc8] sm:$0xff]
    %v8535 = vld [vmem:[%s20 + $0xdd0] sm:$0xff]
    %v8536 = vld [vmem:[%s20 + $0xdd8] sm:$0xff]
    %v8537 = vld [vmem:[%s20 + $0xde0] sm:$0xff]
    %v8538 = vld [vmem:[%s20 + $0xde8] sm:$0xff]
    %v8539 = vld [vmem:[%s20 + $0xdf0] sm:$0xff]
    %v8540 = vld [vmem:[%s20 + $0xdf8] sm:$0xff]
    %v8541 = vld [vmem:[%s20 + $0xe00] sm:$0xff]
    %v8542 = vld [vmem:[%s20 + $0xe08] sm:$0xff]
    %v8543 = vld [vmem:[%s20 + $0xe10] sm:$0xff]
    %v8544 = vld [vmem:[%s20 + $0xe18] sm:$0xff]
    %v8545 = vld [vmem:[%s20 + $0xe20] sm:$0xff]
    %v8546 = vld [vmem:[%s20 + $0xe28] sm:$0xff]
    %v8547 = vld [vmem:[%s20 + $0xe30] sm:$0xff]
    %v8548 = vld [vmem:[%s20 + $0xe38] sm:$0xff]
    %v8549 = vld [vmem:[%s20 + $0xe40] sm:$0xff]
    %v8550 = vld [vmem:[%s20 + $0xe48] sm:$0xff]
    %v8551 = vld [vmem:[%s20 + $0xe50] sm:$0xff]
    %v8552 = vld [vmem:[%s20 + $0xe58] sm:$0xff]
    %v8553 = vld [vmem:[%s20 + $0xe60] sm:$0xff]
    %v8554 = vld [vmem:[%s20 + $0xe68] sm:$0xff]
    %v8555 = vld [vmem:[%s20 + $0xe70] sm:$0xff]
    %v8556 = vld [vmem:[%s20 + $0xe78] sm:$0xff]
    %v8557 = vld [vmem:[%s20 + $0xe80] sm:$0xff]
    %v8558 = vld [vmem:[%s20 + $0xe88] sm:$0xff]
    %v8559 = vld [vmem:[%s20 + $0xe90] sm:$0xff]
    %v8560 = vld [vmem:[%s20 + $0xe98] sm:$0xff]
    %v8561 = vld [vmem:[%s20 + $0xea0] sm:$0xff]
    %v8562 = vld [vmem:[%s20 + $0xea8] sm:$0xff]
    %v8563 = vld [vmem:[%s20 + $0xeb0] sm:$0xff]
    %v8564 = vld [vmem:[%s20 + $0xeb8] sm:$0xff]
    %v8565 = vld [vmem:[%s20 + $0xec0] sm:$0xff]
    %v8566 = vld [vmem:[%s20 + $0xec8] sm:$0xff]
    %v8567 = vld [vmem:[%s20 + $0xed0] sm:$0xff]
    %v8568 = vld [vmem:[%s20 + $0xed8] sm:$0xff]
    %v8569 = vld [vmem:[%s20 + $0xee0] sm:$0xff]
    %v8570 = vld [vmem:[%s20 + $0xee8] sm:$0xff]
    %v8571 = vld [vmem:[%s20 + $0xef0] sm:$0xff]
    %v8572 = vld [vmem:[%s20 + $0xef8] sm:$0xff]
    %v8573 = vld [vmem:[%s20 + $0xf00] sm:$0xff]
    %v8574 = vld [vmem:[%s20 + $0xf08] sm:$0xff]
    %v8575 = vld [vmem:[%s20 + $0xf10] sm:$0xff]
    %v8576 = vld [vmem:[%s20 + $0xf18] sm:$0xff]
    %v8577 = vld [vmem:[%s20 + $0xf20] sm:$0xff]
    %v8578 = vld [vmem:[%s20 + $0xf28] sm:$0xff]
    %v8579 = vld [vmem:[%s20 + $0xf30] sm:$0xff]
    %v8580 = vld [vmem:[%s20 + $0xf38] sm:$0xff]
    %v8581 = vld [vmem:[%s20 + $0xf40] sm:$0xff]
    %v8582 = vld [vmem:[%s20 + $0xf48] sm:$0xff]
    %v8583 = vld [vmem:[%s20 + $0xf50] sm:$0xff]
    %v8584 = vld [vmem:[%s20 + $0xf58] sm:$0xff]
    %v8585 = vld [vmem:[%s20 + $0xf60] sm:$0xff]
    %v8586 = vld [vmem:[%s20 + $0xf68] sm:$0xff]
    %v8587 = vld [vmem:[%s20 + $0xf70] sm:$0xff]
    %v8588 = vld [vmem:[%s20 + $0xf78] sm:$0xff]
    %v8589 = vld [vmem:[%s20 + $0xf80] sm:$0xff]
    %v8590 = vld [vmem:[%s20 + $0xf88] sm:$0xff]
    %v8591 = vld [vmem:[%s20 + $0xf90] sm:$0xff]
    %v8592 = vld [vmem:[%s20 + $0xf98] sm:$0xff]
    %v8593 = vld [vmem:[%s20 + $0xfa0] sm:$0xff]
    %v8594 = vld [vmem:[%s20 + $0xfa8] sm:$0xff]
    %v8595 = vld [vmem:[%s20 + $0xfb0] sm:$0xff]
    %v8596 = vld [vmem:[%s20 + $0xfb8] sm:$0xff]
    %v8597 = vld [vmem:[%s20 + $0xfc0] sm:$0xff]
    %v8598 = vld [vmem:[%s20 + $0xfc8] sm:$0xff]
    %v8599 = vld [vmem:[%s20 + $0xfd0] sm:$0xff]
    %v8600 = vld [vmem:[%s20 + $0xfd8] sm:$0xff]
    %v8601 = vld [vmem:[%s20 + $0xfe0] sm:$0xff]
    %v8602 = vld [vmem:[%s20 + $0xfe8] sm:$0xff]
    %v8603 = vld [vmem:[%s20 + $0xff0] sm:$0xff]
    %v8604 = vld [vmem:[%s20 + $0xff8] sm:$0xff]
    %8605 = vmatpush.msra.mxu0 %v8108
    %8606 = vmatpush.msra.mxu0 %v8107
    %8607 = vmatpush.msra.mxu0 %v8106
    %8608 = vmatpush.msra.mxu0 %v8105
    %8609 = vmatpush.msra.mxu0 %v8104
    %8610 = vmatpush.msra.mxu0 %v8103
    %8611 = vmatpush.msra.mxu0 %v8102
    %8612 = vmatpush.msra.mxu0 %v8101
    %8613 = vmatpush.msra.mxu0 %v8100
    %8614 = vmatpush.msra.mxu0 %v8099
    %8615 = vmatpush.msra.mxu0 %v8098
    %8616 = vmatpush.msra.mxu0 %v8097
    %8617 = vmatpush.msra.mxu0 %v8096
    %8618 = vmatpush.msra.mxu0 %v8095
    %8619 = vmatpush.msra.mxu0 %v8094
    %8620 = vmatpush.msra.mxu0 %v8093
    %8621 = vmatmul.f32.gmra.mxu0 %v8061
    %v8622 = vpop.f32.mrf.mxu0
    %v8623 = vadd.f32 0.0, %v8622
    %8624 = vdwg.mxu0
    %8625 = vmatpush.msra.mxu0 %v8124
    %8626 = vmatpush.msra.mxu0 %v8123
    %8627 = vmatpush.msra.mxu0 %v8122
    %8628 = vmatpush.msra.mxu0 %v8121
    %8629 = vmatpush.msra.mxu0 %v8120
    %8630 = vmatpush.msra.mxu0 %v8119
    %8631 = vmatpush.msra.mxu0 %v8118
    %8632 = vmatpush.msra.mxu0 %v8117
    %8633 = vmatpush.msra.mxu0 %v8116
    %8634 = vmatpush.msra.mxu0 %v8115
    %8635 = vmatpush.msra.mxu0 %v8114
    %8636 = vmatpush.msra.mxu0 %v8113
    %8637 = vmatpush.msra.mxu0 %v8112
    %8638 = vmatpush.msra.mxu0 %v8111
    %8639 = vmatpush.msra.mxu0 %v8110
    %8640 = vmatpush.msra.mxu0 %v8109
    %8641 = vmatmul.f32.gmra.mxu0 %v8062
    %v8642 = vpop.f32.mrf.mxu0
    %v8643 = vadd.f32 %v8623, %v8642
    %8644 = vdwg.mxu0
    %8645 = vmatpush.msra.mxu0 %v8140
    %8646 = vmatpush.msra.mxu0 %v8139
    %8647 = vmatpush.msra.mxu0 %v8138
    %8648 = vmatpush.msra.mxu0 %v8137
    %8649 = vmatpush.msra.mxu0 %v8136
    %8650 = vmatpush.msra.mxu0 %v8135
    %8651 = vmatpush.msra.mxu0 %v8134
    %8652 = vmatpush.msra.mxu0 %v8133
    %8653 = vmatpush.msra.mxu0 %v8132
    %8654 = vmatpush.msra.mxu0 %v8131
    %8655 = vmatpush.msra.mxu0 %v8130
    %8656 = vmatpush.msra.mxu0 %v8129
    %8657 = vmatpush.msra.mxu0 %v8128
    %8658 = vmatpush.msra.mxu0 %v8127
    %8659 = vmatpush.msra.mxu0 %v8126
    %8660 = vmatpush.msra.mxu0 %v8125
    %8661 = vmatmul.f32.gmra.mxu0 %v8063
    %v8662 = vpop.f32.mrf.mxu0
    %v8663 = vadd.f32 %v8643, %v8662
    %8664 = vdwg.mxu0
    %8665 = vmatpush.msra.mxu0 %v8156
    %8666 = vmatpush.msra.mxu0 %v8155
    %8667 = vmatpush.msra.mxu0 %v8154
    %8668 = vmatpush.msra.mxu0 %v8153
    %8669 = vmatpush.msra.mxu0 %v8152
    %8670 = vmatpush.msra.mxu0 %v8151
    %8671 = vmatpush.msra.mxu0 %v8150
    %8672 = vmatpush.msra.mxu0 %v8149
    %8673 = vmatpush.msra.mxu0 %v8148
    %8674 = vmatpush.msra.mxu0 %v8147
    %8675 = vmatpush.msra.mxu0 %v8146
    %8676 = vmatpush.msra.mxu0 %v8145
    %8677 = vmatpush.msra.mxu0 %v8144
    %8678 = vmatpush.msra.mxu0 %v8143
    %8679 = vmatpush.msra.mxu0 %v8142
    %8680 = vmatpush.msra.mxu0 %v8141
    %8681 = vmatmul.f32.gmra.mxu0 %v8064
    %v8682 = vpop.f32.mrf.mxu0
    %v8683 = vadd.f32 %v8663, %v8682
    %8684 = vdwg.mxu0
    %8685 = vmatpush.msra.mxu0 %v8172
    %8686 = vmatpush.msra.mxu0 %v8171
    %8687 = vmatpush.msra.mxu0 %v8170
    %8688 = vmatpush.msra.mxu0 %v8169
    %8689 = vmatpush.msra.mxu0 %v8168
    %8690 = vmatpush.msra.mxu0 %v8167
    %8691 = vmatpush.msra.mxu0 %v8166
    %8692 = vmatpush.msra.mxu0 %v8165
    %8693 = vmatpush.msra.mxu0 %v8164
    %8694 = vmatpush.msra.mxu0 %v8163
    %8695 = vmatpush.msra.mxu0 %v8162
    %8696 = vmatpush.msra.mxu0 %v8161
    %8697 = vmatpush.msra.mxu0 %v8160
    %8698 = vmatpush.msra.mxu0 %v8159
    %8699 = vmatpush.msra.mxu0 %v8158
    %8700 = vmatpush.msra.mxu0 %v8157
    %8701 = vmatmul.f32.gmra.mxu0 %v8065
    %v8702 = vpop.f32.mrf.mxu0
    %v8703 = vadd.f32 %v8683, %v8702
    %8704 = vdwg.mxu0
    %8705 = vmatpush.msra.mxu0 %v8188
    %8706 = vmatpush.msra.mxu0 %v8187
    %8707 = vmatpush.msra.mxu0 %v8186
    %8708 = vmatpush.msra.mxu0 %v8185
    %8709 = vmatpush.msra.mxu0 %v8184
    %8710 = vmatpush.msra.mxu0 %v8183
    %8711 = vmatpush.msra.mxu0 %v8182
    %8712 = vmatpush.msra.mxu0 %v8181
    %8713 = vmatpush.msra.mxu0 %v8180
    %8714 = vmatpush.msra.mxu0 %v8179
    %8715 = vmatpush.msra.mxu0 %v8178
    %8716 = vmatpush.msra.mxu0 %v8177
    %8717 = vmatpush.msra.mxu0 %v8176
    %8718 = vmatpush.msra.mxu0 %v8175
    %8719 = vmatpush.msra.mxu0 %v8174
    %8720 = vmatpush.msra.mxu0 %v8173
    %8721 = vmatmul.f32.gmra.mxu0 %v8066
    %v8722 = vpop.f32.mrf.mxu0
    %v8723 = vadd.f32 %v8703, %v8722
    %8724 = vdwg.mxu0
    %8725 = vmatpush.msra.mxu0 %v8204
    %8726 = vmatpush.msra.mxu0 %v8203
    %8727 = vmatpush.msra.mxu0 %v8202
    %8728 = vmatpush.msra.mxu0 %v8201
    %8729 = vmatpush.msra.mxu0 %v8200
    %8730 = vmatpush.msra.mxu0 %v8199
    %8731 = vmatpush.msra.mxu0 %v8198
    %8732 = vmatpush.msra.mxu0 %v8197
    %8733 = vmatpush.msra.mxu0 %v8196
    %8734 = vmatpush.msra.mxu0 %v8195
    %8735 = vmatpush.msra.mxu0 %v8194
    %8736 = vmatpush.msra.mxu0 %v8193
    %8737 = vmatpush.msra.mxu0 %v8192
    %8738 = vmatpush.msra.mxu0 %v8191
    %8739 = vmatpush.msra.mxu0 %v8190
    %8740 = vmatpush.msra.mxu0 %v8189
    %8741 = vmatmul.f32.gmra.mxu0 %v8067
    %v8742 = vpop.f32.mrf.mxu0
    %v8743 = vadd.f32 %v8723, %v8742
    %8744 = vdwg.mxu0
    %8745 = vmatpush.msra.mxu0 %v8220
    %8746 = vmatpush.msra.mxu0 %v8219
    %8747 = vmatpush.msra.mxu0 %v8218
    %8748 = vmatpush.msra.mxu0 %v8217
    %8749 = vmatpush.msra.mxu0 %v8216
    %8750 = vmatpush.msra.mxu0 %v8215
    %8751 = vmatpush.msra.mxu0 %v8214
    %8752 = vmatpush.msra.mxu0 %v8213
    %8753 = vmatpush.msra.mxu0 %v8212
    %8754 = vmatpush.msra.mxu0 %v8211
    %8755 = vmatpush.msra.mxu0 %v8210
    %8756 = vmatpush.msra.mxu0 %v8209
    %8757 = vmatpush.msra.mxu0 %v8208
    %8758 = vmatpush.msra.mxu0 %v8207
    %8759 = vmatpush.msra.mxu0 %v8206
    %8760 = vmatpush.msra.mxu0 %v8205
    %8761 = vmatmul.f32.gmra.mxu0 %v8068
    %v8762 = vpop.f32.mrf.mxu0
    %v8763 = vadd.f32 %v8743, %v8762
    %8764 = vdwg.mxu0
    %8765 = vmatpush.msra.mxu0 %v8236
    %8766 = vmatpush.msra.mxu0 %v8235
    %8767 = vmatpush.msra.mxu0 %v8234
    %8768 = vmatpush.msra.mxu0 %v8233
    %8769 = vmatpush.msra.mxu0 %v8232
    %8770 = vmatpush.msra.mxu0 %v8231
    %8771 = vmatpush.msra.mxu0 %v8230
    %8772 = vmatpush.msra.mxu0 %v8229
    %8773 = vmatpush.msra.mxu0 %v8228
    %8774 = vmatpush.msra.mxu0 %v8227
    %8775 = vmatpush.msra.mxu0 %v8226
    %8776 = vmatpush.msra.mxu0 %v8225
    %8777 = vmatpush.msra.mxu0 %v8224
    %8778 = vmatpush.msra.mxu0 %v8223
    %8779 = vmatpush.msra.mxu0 %v8222
    %8780 = vmatpush.msra.mxu0 %v8221
    %8781 = vmatmul.f32.gmra.mxu0 %v8069
    %v8782 = vpop.f32.mrf.mxu0
    %v8783 = vadd.f32 %v8763, %v8782
    %8784 = vdwg.mxu0
    %8785 = vmatpush.msra.mxu0 %v8252
    %8786 = vmatpush.msra.mxu0 %v8251
    %8787 = vmatpush.msra.mxu0 %v8250
    %8788 = vmatpush.msra.mxu0 %v8249
    %8789 = vmatpush.msra.mxu0 %v8248
    %8790 = vmatpush.msra.mxu0 %v8247
    %8791 = vmatpush.msra.mxu0 %v8246
    %8792 = vmatpush.msra.mxu0 %v8245
    %8793 = vmatpush.msra.mxu0 %v8244
    %8794 = vmatpush.msra.mxu0 %v8243
    %8795 = vmatpush.msra.mxu0 %v8242
    %8796 = vmatpush.msra.mxu0 %v8241
    %8797 = vmatpush.msra.mxu0 %v8240
    %8798 = vmatpush.msra.mxu0 %v8239
    %8799 = vmatpush.msra.mxu0 %v8238
    %8800 = vmatpush.msra.mxu0 %v8237
    %8801 = vmatmul.f32.gmra.mxu0 %v8070
    %v8802 = vpop.f32.mrf.mxu0
    %v8803 = vadd.f32 %v8783, %v8802
    %8804 = vdwg.mxu0
    %8805 = vmatpush.msra.mxu0 %v8268
    %8806 = vmatpush.msra.mxu0 %v8267
    %8807 = vmatpush.msra.mxu0 %v8266
    %8808 = vmatpush.msra.mxu0 %v8265
    %8809 = vmatpush.msra.mxu0 %v8264
    %8810 = vmatpush.msra.mxu0 %v8263
    %8811 = vmatpush.msra.mxu0 %v8262
    %8812 = vmatpush.msra.mxu0 %v8261
    %8813 = vmatpush.msra.mxu0 %v8260
    %8814 = vmatpush.msra.mxu0 %v8259
    %8815 = vmatpush.msra.mxu0 %v8258
    %8816 = vmatpush.msra.mxu0 %v8257
    %8817 = vmatpush.msra.mxu0 %v8256
    %8818 = vmatpush.msra.mxu0 %v8255
    %8819 = vmatpush.msra.mxu0 %v8254
    %8820 = vmatpush.msra.mxu0 %v8253
    %8821 = vmatmul.f32.gmra.mxu0 %v8071
    %v8822 = vpop.f32.mrf.mxu0
    %v8823 = vadd.f32 %v8803, %v8822
    %8824 = vdwg.mxu0
    %8825 = vmatpush.msra.mxu0 %v8284
    %8826 = vmatpush.msra.mxu0 %v8283
    %8827 = vmatpush.msra.mxu0 %v8282
    %8828 = vmatpush.msra.mxu0 %v8281
    %8829 = vmatpush.msra.mxu0 %v8280
    %8830 = vmatpush.msra.mxu0 %v8279
    %8831 = vmatpush.msra.mxu0 %v8278
    %8832 = vmatpush.msra.mxu0 %v8277
    %8833 = vmatpush.msra.mxu0 %v8276
    %8834 = vmatpush.msra.mxu0 %v8275
    %8835 = vmatpush.msra.mxu0 %v8274
    %8836 = vmatpush.msra.mxu0 %v8273
    %8837 = vmatpush.msra.mxu0 %v8272
    %8838 = vmatpush.msra.mxu0 %v8271
    %8839 = vmatpush.msra.mxu0 %v8270
    %8840 = vmatpush.msra.mxu0 %v8269
    %8841 = vmatmul.f32.gmra.mxu0 %v8072
    %v8842 = vpop.f32.mrf.mxu0
    %v8843 = vadd.f32 %v8823, %v8842
    %8844 = vdwg.mxu0
    %8845 = vmatpush.msra.mxu0 %v8300
    %8846 = vmatpush.msra.mxu0 %v8299
    %8847 = vmatpush.msra.mxu0 %v8298
    %8848 = vmatpush.msra.mxu0 %v8297
    %8849 = vmatpush.msra.mxu0 %v8296
    %8850 = vmatpush.msra.mxu0 %v8295
    %8851 = vmatpush.msra.mxu0 %v8294
    %8852 = vmatpush.msra.mxu0 %v8293
    %8853 = vmatpush.msra.mxu0 %v8292
    %8854 = vmatpush.msra.mxu0 %v8291
    %8855 = vmatpush.msra.mxu0 %v8290
    %8856 = vmatpush.msra.mxu0 %v8289
    %8857 = vmatpush.msra.mxu0 %v8288
    %8858 = vmatpush.msra.mxu0 %v8287
    %8859 = vmatpush.msra.mxu0 %v8286
    %8860 = vmatpush.msra.mxu0 %v8285
    %8861 = vmatmul.f32.gmra.mxu0 %v8073
    %v8862 = vpop.f32.mrf.mxu0
    %v8863 = vadd.f32 %v8843, %v8862
    %8864 = vdwg.mxu0
    %8865 = vmatpush.msra.mxu0 %v8316
    %8866 = vmatpush.msra.mxu0 %v8315
    %8867 = vmatpush.msra.mxu0 %v8314
    %8868 = vmatpush.msra.mxu0 %v8313
    %8869 = vmatpush.msra.mxu0 %v8312
    %8870 = vmatpush.msra.mxu0 %v8311
    %8871 = vmatpush.msra.mxu0 %v8310
    %8872 = vmatpush.msra.mxu0 %v8309
    %8873 = vmatpush.msra.mxu0 %v8308
    %8874 = vmatpush.msra.mxu0 %v8307
    %8875 = vmatpush.msra.mxu0 %v8306
    %8876 = vmatpush.msra.mxu0 %v8305
    %8877 = vmatpush.msra.mxu0 %v8304
    %8878 = vmatpush.msra.mxu0 %v8303
    %8879 = vmatpush.msra.mxu0 %v8302
    %8880 = vmatpush.msra.mxu0 %v8301
    %8881 = vmatmul.f32.gmra.mxu0 %v8074
    %v8882 = vpop.f32.mrf.mxu0
    %v8883 = vadd.f32 %v8863, %v8882
    %8884 = vdwg.mxu0
    %8885 = vmatpush.msra.mxu0 %v8332
    %8886 = vmatpush.msra.mxu0 %v8331
    %8887 = vmatpush.msra.mxu0 %v8330
    %8888 = vmatpush.msra.mxu0 %v8329
    %8889 = vmatpush.msra.mxu0 %v8328
    %8890 = vmatpush.msra.mxu0 %v8327
    %8891 = vmatpush.msra.mxu0 %v8326
    %8892 = vmatpush.msra.mxu0 %v8325
    %8893 = vmatpush.msra.mxu0 %v8324
    %8894 = vmatpush.msra.mxu0 %v8323
    %8895 = vmatpush.msra.mxu0 %v8322
    %8896 = vmatpush.msra.mxu0 %v8321
    %8897 = vmatpush.msra.mxu0 %v8320
    %8898 = vmatpush.msra.mxu0 %v8319
    %8899 = vmatpush.msra.mxu0 %v8318
    %8900 = vmatpush.msra.mxu0 %v8317
    %8901 = vmatmul.f32.gmra.mxu0 %v8075
    %v8902 = vpop.f32.mrf.mxu0
    %v8903 = vadd.f32 %v8883, %v8902
    %8904 = vdwg.mxu0
    %8905 = vmatpush.msra.mxu0 %v8348
    %8906 = vmatpush.msra.mxu0 %v8347
    %8907 = vmatpush.msra.mxu0 %v8346
    %8908 = vmatpush.msra.mxu0 %v8345
    %8909 = vmatpush.msra.mxu0 %v8344
    %8910 = vmatpush.msra.mxu0 %v8343
    %8911 = vmatpush.msra.mxu0 %v8342
    %8912 = vmatpush.msra.mxu0 %v8341
    %8913 = vmatpush.msra.mxu0 %v8340
    %8914 = vmatpush.msra.mxu0 %v8339
    %8915 = vmatpush.msra.mxu0 %v8338
    %8916 = vmatpush.msra.mxu0 %v8337
    %8917 = vmatpush.msra.mxu0 %v8336
    %8918 = vmatpush.msra.mxu0 %v8335
    %8919 = vmatpush.msra.mxu0 %v8334
    %8920 = vmatpush.msra.mxu0 %v8333
    %8921 = vmatmul.f32.gmra.mxu0 %v8076
    %v8922 = vpop.f32.mrf.mxu0
    %v8923 = vadd.f32 %v8903, %v8922
    %8924 = vdwg.mxu0
    %8925 = vmatpush.msra.mxu0 %v8364
    %8926 = vmatpush.msra.mxu0 %v8363
    %8927 = vmatpush.msra.mxu0 %v8362
    %8928 = vmatpush.msra.mxu0 %v8361
    %8929 = vmatpush.msra.mxu0 %v8360
    %8930 = vmatpush.msra.mxu0 %v8359
    %8931 = vmatpush.msra.mxu0 %v8358
    %8932 = vmatpush.msra.mxu0 %v8357
    %8933 = vmatpush.msra.mxu0 %v8356
    %8934 = vmatpush.msra.mxu0 %v8355
    %8935 = vmatpush.msra.mxu0 %v8354
    %8936 = vmatpush.msra.mxu0 %v8353
    %8937 = vmatpush.msra.mxu0 %v8352
    %8938 = vmatpush.msra.mxu0 %v8351
    %8939 = vmatpush.msra.mxu0 %v8350
    %8940 = vmatpush.msra.mxu0 %v8349
    %8941 = vmatmul.f32.gmra.mxu0 %v8077
    %v8942 = vpop.f32.mrf.mxu0
    %v8943 = vadd.f32 %v8923, %v8942
    %8944 = vdwg.mxu0
    %8945 = vmatpush.msra.mxu0 %v8380
    %8946 = vmatpush.msra.mxu0 %v8379
    %8947 = vmatpush.msra.mxu0 %v8378
    %8948 = vmatpush.msra.mxu0 %v8377
    %8949 = vmatpush.msra.mxu0 %v8376
    %8950 = vmatpush.msra.mxu0 %v8375
    %8951 = vmatpush.msra.mxu0 %v8374
    %8952 = vmatpush.msra.mxu0 %v8373
    %8953 = vmatpush.msra.mxu0 %v8372
    %8954 = vmatpush.msra.mxu0 %v8371
    %8955 = vmatpush.msra.mxu0 %v8370
    %8956 = vmatpush.msra.mxu0 %v8369
    %8957 = vmatpush.msra.mxu0 %v8368
    %8958 = vmatpush.msra.mxu0 %v8367
    %8959 = vmatpush.msra.mxu0 %v8366
    %8960 = vmatpush.msra.mxu0 %v8365
    %8961 = vmatmul.f32.gmra.mxu0 %v8078
    %v8962 = vpop.f32.mrf.mxu0
    %v8963 = vadd.f32 %v8943, %v8962
    %8964 = vdwg.mxu0
    %8965 = vmatpush.msra.mxu0 %v8396
    %8966 = vmatpush.msra.mxu0 %v8395
    %8967 = vmatpush.msra.mxu0 %v8394
    %8968 = vmatpush.msra.mxu0 %v8393
    %8969 = vmatpush.msra.mxu0 %v8392
    %8970 = vmatpush.msra.mxu0 %v8391
    %8971 = vmatpush.msra.mxu0 %v8390
    %8972 = vmatpush.msra.mxu0 %v8389
    %8973 = vmatpush.msra.mxu0 %v8388
    %8974 = vmatpush.msra.mxu0 %v8387
    %8975 = vmatpush.msra.mxu0 %v8386
    %8976 = vmatpush.msra.mxu0 %v8385
    %8977 = vmatpush.msra.mxu0 %v8384
    %8978 = vmatpush.msra.mxu0 %v8383
    %8979 = vmatpush.msra.mxu0 %v8382
    %8980 = vmatpush.msra.mxu0 %v8381
    %8981 = vmatmul.f32.gmra.mxu0 %v8079
    %v8982 = vpop.f32.mrf.mxu0
    %v8983 = vadd.f32 %v8963, %v8982
    %8984 = vdwg.mxu0
    %8985 = vmatpush.msra.mxu0 %v8412
    %8986 = vmatpush.msra.mxu0 %v8411
    %8987 = vmatpush.msra.mxu0 %v8410
    %8988 = vmatpush.msra.mxu0 %v8409
    %8989 = vmatpush.msra.mxu0 %v8408
    %8990 = vmatpush.msra.mxu0 %v8407
    %8991 = vmatpush.msra.mxu0 %v8406
    %8992 = vmatpush.msra.mxu0 %v8405
    %8993 = vmatpush.msra.mxu0 %v8404
    %8994 = vmatpush.msra.mxu0 %v8403
    %8995 = vmatpush.msra.mxu0 %v8402
    %8996 = vmatpush.msra.mxu0 %v8401
    %8997 = vmatpush.msra.mxu0 %v8400
    %8998 = vmatpush.msra.mxu0 %v8399
    %8999 = vmatpush.msra.mxu0 %v8398
    %9000 = vmatpush.msra.mxu0 %v8397
    %9001 = vmatmul.f32.gmra.mxu0 %v8080
    %v9002 = vpop.f32.mrf.mxu0
    %v9003 = vadd.f32 %v8983, %v9002
    %9004 = vdwg.mxu0
    %9005 = vmatpush.msra.mxu0 %v8428
    %9006 = vmatpush.msra.mxu0 %v8427
    %9007 = vmatpush.msra.mxu0 %v8426
    %9008 = vmatpush.msra.mxu0 %v8425
    %9009 = vmatpush.msra.mxu0 %v8424
    %9010 = vmatpush.msra.mxu0 %v8423
    %9011 = vmatpush.msra.mxu0 %v8422
    %9012 = vmatpush.msra.mxu0 %v8421
    %9013 = vmatpush.msra.mxu0 %v8420
    %9014 = vmatpush.msra.mxu0 %v8419
    %9015 = vmatpush.msra.mxu0 %v8418
    %9016 = vmatpush.msra.mxu0 %v8417
    %9017 = vmatpush.msra.mxu0 %v8416
    %9018 = vmatpush.msra.mxu0 %v8415
    %9019 = vmatpush.msra.mxu0 %v8414
    %9020 = vmatpush.msra.mxu0 %v8413
    %9021 = vmatmul.f32.gmra.mxu0 %v8081
    %v9022 = vpop.f32.mrf.mxu0
    %v9023 = vadd.f32 %v9003, %v9022
    %9024 = vdwg.mxu0
    %9025 = vmatpush.msra.mxu0 %v8444
    %9026 = vmatpush.msra.mxu0 %v8443
    %9027 = vmatpush.msra.mxu0 %v8442
    %9028 = vmatpush.msra.mxu0 %v8441
    %9029 = vmatpush.msra.mxu0 %v8440
    %9030 = vmatpush.msra.mxu0 %v8439
    %9031 = vmatpush.msra.mxu0 %v8438
    %9032 = vmatpush.msra.mxu0 %v8437
    %9033 = vmatpush.msra.mxu0 %v8436
    %9034 = vmatpush.msra.mxu0 %v8435
    %9035 = vmatpush.msra.mxu0 %v8434
    %9036 = vmatpush.msra.mxu0 %v8433
    %9037 = vmatpush.msra.mxu0 %v8432
    %9038 = vmatpush.msra.mxu0 %v8431
    %9039 = vmatpush.msra.mxu0 %v8430
    %9040 = vmatpush.msra.mxu0 %v8429
    %9041 = vmatmul.f32.gmra.mxu0 %v8082
    %v9042 = vpop.f32.mrf.mxu0
    %v9043 = vadd.f32 %v9023, %v9042
    %9044 = vdwg.mxu0
    %9045 = vmatpush.msra.mxu0 %v8460
    %9046 = vmatpush.msra.mxu0 %v8459
    %9047 = vmatpush.msra.mxu0 %v8458
    %9048 = vmatpush.msra.mxu0 %v8457
    %9049 = vmatpush.msra.mxu0 %v8456
    %9050 = vmatpush.msra.mxu0 %v8455
    %9051 = vmatpush.msra.mxu0 %v8454
    %9052 = vmatpush.msra.mxu0 %v8453
    %9053 = vmatpush.msra.mxu0 %v8452
    %9054 = vmatpush.msra.mxu0 %v8451
    %9055 = vmatpush.msra.mxu0 %v8450
    %9056 = vmatpush.msra.mxu0 %v8449
    %9057 = vmatpush.msra.mxu0 %v8448
    %9058 = vmatpush.msra.mxu0 %v8447
    %9059 = vmatpush.msra.mxu0 %v8446
    %9060 = vmatpush.msra.mxu0 %v8445
    %9061 = vmatmul.f32.gmra.mxu0 %v8083
    %v9062 = vpop.f32.mrf.mxu0
    %v9063 = vadd.f32 %v9043, %v9062
    %9064 = vdwg.mxu0
    %9065 = vmatpush.msra.mxu0 %v8476
    %9066 = vmatpush.msra.mxu0 %v8475
    %9067 = vmatpush.msra.mxu0 %v8474
    %9068 = vmatpush.msra.mxu0 %v8473
    %9069 = vmatpush.msra.mxu0 %v8472
    %9070 = vmatpush.msra.mxu0 %v8471
    %9071 = vmatpush.msra.mxu0 %v8470
    %9072 = vmatpush.msra.mxu0 %v8469
    %9073 = vmatpush.msra.mxu0 %v8468
    %9074 = vmatpush.msra.mxu0 %v8467
    %9075 = vmatpush.msra.mxu0 %v8466
    %9076 = vmatpush.msra.mxu0 %v8465
    %9077 = vmatpush.msra.mxu0 %v8464
    %9078 = vmatpush.msra.mxu0 %v8463
    %9079 = vmatpush.msra.mxu0 %v8462
    %9080 = vmatpush.msra.mxu0 %v8461
    %9081 = vmatmul.f32.gmra.mxu0 %v8084
    %v9082 = vpop.f32.mrf.mxu0
    %v9083 = vadd.f32 %v9063, %v9082
    %9084 = vdwg.mxu0
    %9085 = vmatpush.msra.mxu0 %v8492
    %9086 = vmatpush.msra.mxu0 %v8491
    %9087 = vmatpush.msra.mxu0 %v8490
    %9088 = vmatpush.msra.mxu0 %v8489
    %9089 = vmatpush.msra.mxu0 %v8488
    %9090 = vmatpush.msra.mxu0 %v8487
    %9091 = vmatpush.msra.mxu0 %v8486
    %9092 = vmatpush.msra.mxu0 %v8485
    %9093 = vmatpush.msra.mxu0 %v8484
    %9094 = vmatpush.msra.mxu0 %v8483
    %9095 = vmatpush.msra.mxu0 %v8482
    %9096 = vmatpush.msra.mxu0 %v8481
    %9097 = vmatpush.msra.mxu0 %v8480
    %9098 = vmatpush.msra.mxu0 %v8479
    %9099 = vmatpush.msra.mxu0 %v8478
    %9100 = vmatpush.msra.mxu0 %v8477
    %9101 = vmatmul.f32.gmra.mxu0 %v8085
    %v9102 = vpop.f32.mrf.mxu0
    %v9103 = vadd.f32 %v9083, %v9102
    %9104 = vdwg.mxu0
    %9105 = vmatpush.msra.mxu0 %v8508
    %9106 = vmatpush.msra.mxu0 %v8507
    %9107 = vmatpush.msra.mxu0 %v8506
    %9108 = vmatpush.msra.mxu0 %v8505
    %9109 = vmatpush.msra.mxu0 %v8504
    %9110 = vmatpush.msra.mxu0 %v8503
    %9111 = vmatpush.msra.mxu0 %v8502
    %9112 = vmatpush.msra.mxu0 %v8501
    %9113 = vmatpush.msra.mxu0 %v8500
    %9114 = vmatpush.msra.mxu0 %v8499
    %9115 = vmatpush.msra.mxu0 %v8498
    %9116 = vmatpush.msra.mxu0 %v8497
    %9117 = vmatpush.msra.mxu0 %v8496
    %9118 = vmatpush.msra.mxu0 %v8495
    %9119 = vmatpush.msra.mxu0 %v8494
    %9120 = vmatpush.msra.mxu0 %v8493
    %9121 = vmatmul.f32.gmra.mxu0 %v8086
    %v9122 = vpop.f32.mrf.mxu0
    %v9123 = vadd.f32 %v9103, %v9122
    %9124 = vdwg.mxu0
    %9125 = vmatpush.msra.mxu0 %v8524
    %9126 = vmatpush.msra.mxu0 %v8523
    %9127 = vmatpush.msra.mxu0 %v8522
    %9128 = vmatpush.msra.mxu0 %v8521
    %9129 = vmatpush.msra.mxu0 %v8520
    %9130 = vmatpush.msra.mxu0 %v8519
    %9131 = vmatpush.msra.mxu0 %v8518
    %9132 = vmatpush.msra.mxu0 %v8517
    %9133 = vmatpush.msra.mxu0 %v8516
    %9134 = vmatpush.msra.mxu0 %v8515
    %9135 = vmatpush.msra.mxu0 %v8514
    %9136 = vmatpush.msra.mxu0 %v8513
    %9137 = vmatpush.msra.mxu0 %v8512
    %9138 = vmatpush.msra.mxu0 %v8511
    %9139 = vmatpush.msra.mxu0 %v8510
    %9140 = vmatpush.msra.mxu0 %v8509
    %9141 = vmatmul.f32.gmra.mxu0 %v8087
    %v9142 = vpop.f32.mrf.mxu0
    %v9143 = vadd.f32 %v9123, %v9142
    %9144 = vdwg.mxu0
    %9145 = vmatpush.msra.mxu0 %v8540
    %9146 = vmatpush.msra.mxu0 %v8539
    %9147 = vmatpush.msra.mxu0 %v8538
    %9148 = vmatpush.msra.mxu0 %v8537
    %9149 = vmatpush.msra.mxu0 %v8536
    %9150 = vmatpush.msra.mxu0 %v8535
    %9151 = vmatpush.msra.mxu0 %v8534
    %9152 = vmatpush.msra.mxu0 %v8533
    %9153 = vmatpush.msra.mxu0 %v8532
    %9154 = vmatpush.msra.mxu0 %v8531
    %9155 = vmatpush.msra.mxu0 %v8530
    %9156 = vmatpush.msra.mxu0 %v8529
    %9157 = vmatpush.msra.mxu0 %v8528
    %9158 = vmatpush.msra.mxu0 %v8527
    %9159 = vmatpush.msra.mxu0 %v8526
    %9160 = vmatpush.msra.mxu0 %v8525
    %9161 = vmatmul.f32.gmra.mxu0 %v8088
    %v9162 = vpop.f32.mrf.mxu0
    %v9163 = vadd.f32 %v9143, %v9162
    %9164 = vdwg.mxu0
    %9165 = vmatpush.msra.mxu0 %v8556
    %9166 = vmatpush.msra.mxu0 %v8555
    %9167 = vmatpush.msra.mxu0 %v8554
    %9168 = vmatpush.msra.mxu0 %v8553
    %9169 = vmatpush.msra.mxu0 %v8552
    %9170 = vmatpush.msra.mxu0 %v8551
    %9171 = vmatpush.msra.mxu0 %v8550
    %9172 = vmatpush.msra.mxu0 %v8549
    %9173 = vmatpush.msra.mxu0 %v8548
    %9174 = vmatpush.msra.mxu0 %v8547
    %9175 = vmatpush.msra.mxu0 %v8546
    %9176 = vmatpush.msra.mxu0 %v8545
    %9177 = vmatpush.msra.mxu0 %v8544
    %9178 = vmatpush.msra.mxu0 %v8543
    %9179 = vmatpush.msra.mxu0 %v8542
    %9180 = vmatpush.msra.mxu0 %v8541
    %9181 = vmatmul.f32.gmra.mxu0 %v8089
    %v9182 = vpop.f32.mrf.mxu0
    %v9183 = vadd.f32 %v9163, %v9182
    %9184 = vdwg.mxu0
    %9185 = vmatpush.msra.mxu0 %v8572
    %9186 = vmatpush.msra.mxu0 %v8571
    %9187 = vmatpush.msra.mxu0 %v8570
    %9188 = vmatpush.msra.mxu0 %v8569
    %9189 = vmatpush.msra.mxu0 %v8568
    %9190 = vmatpush.msra.mxu0 %v8567
    %9191 = vmatpush.msra.mxu0 %v8566
    %9192 = vmatpush.msra.mxu0 %v8565
    %9193 = vmatpush.msra.mxu0 %v8564
    %9194 = vmatpush.msra.mxu0 %v8563
    %9195 = vmatpush.msra.mxu0 %v8562
    %9196 = vmatpush.msra.mxu0 %v8561
    %9197 = vmatpush.msra.mxu0 %v8560
    %9198 = vmatpush.msra.mxu0 %v8559
    %9199 = vmatpush.msra.mxu0 %v8558
    %9200 = vmatpush.msra.mxu0 %v8557
    %9201 = vmatmul.f32.gmra.mxu0 %v8090
    %v9202 = vpop.f32.mrf.mxu0
    %v9203 = vadd.f32 %v9183, %v9202
    %9204 = vdwg.mxu0
    %9205 = vmatpush.msra.mxu0 %v8588
    %9206 = vmatpush.msra.mxu0 %v8587
    %9207 = vmatpush.msra.mxu0 %v8586
    %9208 = vmatpush.msra.mxu0 %v8585
    %9209 = vmatpush.msra.mxu0 %v8584
    %9210 = vmatpush.msra.mxu0 %v8583
    %9211 = vmatpush.msra.mxu0 %v8582
    %9212 = vmatpush.msra.mxu0 %v8581
    %9213 = vmatpush.msra.mxu0 %v8580
    %9214 = vmatpush.msra.mxu0 %v8579
    %9215 = vmatpush.msra.mxu0 %v8578
    %9216 = vmatpush.msra.mxu0 %v8577
    %9217 = vmatpush.msra.mxu0 %v8576
    %9218 = vmatpush.msra.mxu0 %v8575
    %9219 = vmatpush.msra.mxu0 %v8574
    %9220 = vmatpush.msra.mxu0 %v8573
    %9221 = vmatmul.f32.gmra.mxu0 %v8091
    %v9222 = vpop.f32.mrf.mxu0
    %v9223 = vadd.f32 %v9203, %v9222
    %9224 = vdwg.mxu0
    %9225 = vmatpush.msra.mxu0 %v8604
    %9226 = vmatpush.msra.mxu0 %v8603
    %9227 = vmatpush.msra.mxu0 %v8602
    %9228 = vmatpush.msra.mxu0 %v8601
    %9229 = vmatpush.msra.mxu0 %v8600
    %9230 = vmatpush.msra.mxu0 %v8599
    %9231 = vmatpush.msra.mxu0 %v8598
    %9232 = vmatpush.msra.mxu0 %v8597
    %9233 = vmatpush.msra.mxu0 %v8596
    %9234 = vmatpush.msra.mxu0 %v8595
    %9235 = vmatpush.msra.mxu0 %v8594
    %9236 = vmatpush.msra.mxu0 %v8593
    %9237 = vmatpush.msra.mxu0 %v8592
    %9238 = vmatpush.msra.mxu0 %v8591
    %9239 = vmatpush.msra.mxu0 %v8590
    %9240 = vmatpush.msra.mxu0 %v8589
    %9241 = vmatmul.f32.gmra.mxu0 %v8092
    %v9242 = vpop.f32.mrf.mxu0
    %v9243 = vadd.f32 %v9223, %v9242
    %9244 = vdwg.mxu0
    %v9245 = vmul.f32 %v9243, %v9243
    %vm9246 = vcmask 254976
    %v9247 = vsel %vm9246, %v9245, 0.0
    %9248 = vadd.xlane.f32.xlu0 %v9247
    %v9249 = vpop.xlane.xlu0 %9248
    %v9250 = vrsqrt.pop %v9249
    %v9251 = vmul.f32 %v9250, %v9249
    %v9252 = vmul.f32 %v9251, %v9250
    %v9253 = vmul.f32 0.5, %v9252
    %v9254 = vsub.f32 1.5, %v9253
    %v9255 = vmul.f32 %v9250, %v9254
    %v9256 = vmul.f32 %v9249, %v9255
    %vm9257 = vcmp.eq.f32.partialorder %v9249, inf
    %v9258 = vsel %vm9257, %v9249, %v9256
    %vm9259 = vcmp.eq.f32.partialorder %v9249, 0.0
    %v9260 = vand.u32 %v9249, 2147483648
    %v9261 = vsel %vm9259, %v9260, %v9258
    %v9262 = vmax.f32 %v9261, 1e-12
    %v9263 = vrcp.pop %v9262
    %v9264 = vmul.f32 %v9262, %v9263
    %v9265 = vsub.f32 1.0, %v9264
    %v9266 = vmul.f32 %v9263, %v9265
    %v9267 = vadd.f32 %v9263, %v9266
    %vm9268 = vweird.f32 %v9262
    %vm9269 = vweird.f32 %v9263
    %vm9270 = vmor %vm9268, %vm9269
    %v9271 = vsel %vm9270, %v9263, %v9267
    %v9272 = vand.u32 2147483647, %v9262
    %vm9273 = vcmp.eq.f32.partialorder %v9272, 8.507059e+37
    %v9274 = vand.u32 %v9262, 2147483648
    %v9275 = vor.u32 1.1754944e-38, %v9274
    %v9276 = vsel %vm9273, %v9275, %v9271
    %v9277 = vmul.f32 %v9243, %v9276
    %vm9278 = vcmask 257026
    %v9279 = vsel %vm9278, %v9245, 0.0
    %9280 = vadd.xlane.f32.xlu0 %v9279
    %v9281 = vpop.xlane.xlu0 %9280
    %v9282 = vrsqrt.pop %v9281
    %v9283 = vmul.f32 %v9282, %v9281
    %v9284 = vmul.f32 %v9283, %v9282
    %v9285 = vmul.f32 0.5, %v9284
    %v9286 = vsub.f32 1.5, %v9285
    %v9287 = vmul.f32 %v9282, %v9286
    %v9288 = vmul.f32 %v9281, %v9287
    %vm9289 = vcmp.eq.f32.partialorder %v9281, inf
    %v9290 = vsel %vm9289, %v9281, %v9288
    %vm9291 = vcmp.eq.f32.partialorder %v9281, 0.0
    %v9292 = vand.u32 %v9281, 2147483648
    %v9293 = vsel %vm9291, %v9292, %v9290
    %v9294 = vmax.f32 %v9293, 1e-12
    %v9295 = vrcp.pop %v9294
    %v9296 = vmul.f32 %v9294, %v9295
    %v9297 = vsub.f32 1.0, %v9296
    %v9298 = vmul.f32 %v9295, %v9297
    %v9299 = vadd.f32 %v9295, %v9298
    %vm9300 = vweird.f32 %v9294
    %vm9301 = vweird.f32 %v9295
    %vm9302 = vmor %vm9300, %vm9301
    %v9303 = vsel %vm9302, %v9295, %v9299
    %v9304 = vand.u32 2147483647, %v9294
    %vm9305 = vcmp.eq.f32.partialorder %v9304, 8.507059e+37
    %v9306 = vand.u32 %v9294, 2147483648
    %v9307 = vor.u32 1.1754944e-38, %v9306
    %v9308 = vsel %vm9305, %v9307, %v9303
    %v9309 = vmul.f32 %v9243, %v9308
    %s9310 = sld [smem:[#allocation2]]
    %v9311 = vld [vmem:[%s21] sm:$0x3]
    %v9313 = vrot.slane %v9309, 2
    %v9315 = vsel %vm80, %v9277, 0
    %v9317 = vsel %vm80, %v9313, 0
    %9319 = vmatpush.xpose.msra.mxu0 0.0
    %9320 = vmatpush.xpose.msra.mxu0 0.0
    %9321 = vmatpush.xpose.msra.mxu0 0.0
    %9322 = vmatpush.xpose.msra.mxu0 0.0
    %9323 = vmatpush.xpose.msra.mxu0 0.0
    %9324 = vmatpush.xpose.msra.mxu0 0.0
    %9325 = vmatpush.xpose.msra.mxu0 0.0
    %9326 = vmatpush.xpose.msra.mxu0 0.0
    %9327 = vmatpush.xpose.msra.mxu0 0.0
    %9328 = vmatpush.xpose.msra.mxu0 0.0
    %9329 = vmatpush.xpose.msra.mxu0 0.0
    %9330 = vmatpush.xpose.msra.mxu0 0.0
    %9331 = vmatpush.xpose.msra.mxu0 0.0
    %9332 = vmatpush.xpose.msra.mxu0 0.0
    %9333 = vmatpush.xpose.msra.mxu0 0.0
    %9334 = vmatpush.xpose.msra.mxu0 %v9317
    %9335 = vmatmul.f32.gmra.mxu0 %v9315
    %v9336 = vpop.f32.mrf.mxu0
    %v9337 = vadd.f32 0.0, %v9336
    %9338 = vdwg.mxu0
    %v9339 = vstv %s9310
    %v9340 = vrcp.pop %v9339
    %v9341 = vmul.f32 %v9339, %v9340
    %v9342 = vsub.f32 1.0, %v9341
    %v9343 = vmul.f32 %v9340, %v9342
    %v9344 = vadd.f32 %v9340, %v9343
    %vm9345 = vweird.f32 %v9339
    %vm9346 = vweird.f32 %v9340
    %vm9347 = vmor %vm9345, %vm9346
    %v9348 = vsel %vm9347, %v9340, %v9344
    %v9349 = vand.u32 2147483647, %v9339
    %vm9350 = vcmp.eq.f32.partialorder %v9349, 8.507059e+37
    %v9351 = vand.u32 %v9339, 2147483648
    %v9352 = vor.u32 1.1754944e-38, %v9351
    %v9353 = vsel %vm9350, %v9352, %v9348
    %v9354 = vmul.f32 %v9337, %v9353
    %9355 = vmatpush.xpose.msra.mxu0 0.0
    %9356 = vmatpush.xpose.msra.mxu0 0.0
    %9357 = vmatpush.xpose.msra.mxu0 0.0
    %9358 = vmatpush.xpose.msra.mxu0 0.0
    %9359 = vmatpush.xpose.msra.mxu0 0.0
    %9360 = vmatpush.xpose.msra.mxu0 0.0
    %9361 = vmatpush.xpose.msra.mxu0 0.0
    %9362 = vmatpush.xpose.msra.mxu0 0.0
    %9363 = vmatpush.xpose.msra.mxu0 0.0
    %9364 = vmatpush.xpose.msra.mxu0 0.0
    %9365 = vmatpush.xpose.msra.mxu0 0.0
    %9366 = vmatpush.xpose.msra.mxu0 0.0
    %9367 = vmatpush.xpose.msra.mxu0 0.0
    %9368 = vmatpush.xpose.msra.mxu0 0.0
    %9369 = vmatpush.xpose.msra.mxu0 0.0
    %9370 = vmatpush.xpose.msra.mxu0 %v9315
    %9371 = vmatmul.f32.gmra.mxu0 %v9317
    %v9372 = vpop.f32.mrf.mxu0
    %v9373 = vadd.f32 0.0, %v9372
    %9374 = vdwg.mxu0
    %v9375 = vmul.f32 %v9373, %v9353
    %vm9376 = vcmask 9216
    %v9377 = vsel %vm9376, %v9354, -inf
    %9378 = vmax.xlane.f32.xlu0 %v9377
    %v9379 = vpop.xlane.xlu0 %9378
    %v9380 = vsub.f32 %v9354, %v9379
    %v9381 = vmul.f32 %v9380, 1.442695
    %v9382 = vpow.pop %v9381
    %v9383 = vsel %vm9376, %v9382, 0.0
    %9384 = vadd.xlane.f32.xlu0 %v9383
    %v9385 = vpop.xlane.xlu0 %9384
    %v9386 = vlog2.pop %v9385
    %v9387 = vmul.f32 %v9386, 0.6931472
    %v9388 = vadd.f32 %v9387, %v9379
    %v9389 = vsub.f32 %v9354, %v9388
    %v9390 = vsub.f32 0.0, %v9389
    %v9391 = vmul.f32 %v9390, %v9311
    %v9392 = vsel %vm9376, %v9391, 0.0
    %9393 = vadd.xlane.f32.xlu0 %v9392
    %v9394 = vpop.xlane.xlu0 %9393
    %v9395 = vsel %vm3604, %v9394, 0.0
    %v9396 = vrot.slane %v9395, 4
    %v9397 = vadd.f32 %v9395, %v9396
    %v9398 = vrot.slane %v9397, 2
    %v9399 = vadd.f32 %v9397, %v9398
    %v9400 = vrot.slane %v9399, 1
    %v9401 = vadd.f32 %v9399, %v9400
    %v9402 = vmul.f32 %v9401, 0.5
    %v9403 = vsel %vm9376, %v9375, -inf
    %9404 = vmax.xlane.f32.xlu0 %v9403
    %v9405 = vpop.xlane.xlu0 %9404
    %v9406 = vsub.f32 %v9375, %v9405
    %v9407 = vmul.f32 %v9406, 1.442695
    %v9408 = vpow.pop %v9407
    %v9409 = vsel %vm9376, %v9408, 0.0
    %9410 = vadd.xlane.f32.xlu0 %v9409
    %v9411 = vpop.xlane.xlu0 %9410
    %v9412 = vlog2.pop %v9411
    %v9413 = vmul.f32 %v9412, 0.6931472
    %v9414 = vadd.f32 %v9413, %v9405
    %v9415 = vsub.f32 %v9375, %v9414
    %v9416 = vsub.f32 0.0, %v9415
    %v9417 = vmul.f32 %v9416, %v9311
    %v9418 = vsel %vm9376, %v9417, 0.0
    %9419 = vadd.xlane.f32.xlu0 %v9418
    %v9420 = vpop.xlane.xlu0 %9419
    %v9421 = vsel %vm3604, %v9420, 0.0
    %v9422 = vrot.slane %v9421, 4
    %v9423 = vadd.f32 %v9421, %v9422
    %v9424 = vrot.slane %v9423, 2
    %v9425 = vadd.f32 %v9423, %v9424
    %v9426 = vrot.slane %v9425, 1
    %v9427 = vadd.f32 %v9425, %v9426
    %v9428 = vmul.f32 %v9427, 0.5
    %v9429 = vadd.f32 %v9402, %v9428
    %v9430 = vmul.f32 %v9429, 0.5
    %v9431 = vand.u32 2147483647, %v9277
    %v9432 = vsel %vm9246, %v9431, 0.0
    %9433 = vadd.xlane.f32.xlu0 %v9432
    %v9434 = vpop.xlane.xlu0 %9433
    %v9435 = vsel %vm3604, %v9434, 0.0
    %v9436 = vrot.slane %v9435, 4
    %v9437 = vadd.f32 %v9435, %v9436
    %v9438 = vrot.slane %v9437, 2
    %v9439 = vadd.f32 %v9437, %v9438
    %v9440 = vrot.slane %v9439, 1
    %v9441 = vadd.f32 %v9439, %v9440
    %v9442 = vmul.f32 %v9277, %v9277
    %v9443 = vsel %vm9246, %v9442, 0.0
    %9444 = vadd.xlane.f32.xlu0 %v9443
    %v9445 = vpop.xlane.xlu0 %9444
    %v9446 = vsel %vm3604, %v9445, 0.0
    %v9447 = vrot.slane %v9446, 4
    %v9448 = vadd.f32 %v9446, %v9447
    %v9449 = vrot.slane %v9448, 2
    %v9450 = vadd.f32 %v9448, %v9449
    %v9451 = vrot.slane %v9450, 1
    %v9452 = vadd.f32 %v9450, %v9451
    %v9453 = vmul.f32 %v9441, 0.015625
    %v9454 = vrsqrt.pop %v9452
    %v9455 = vmul.f32 %v9454, %v9452
    %v9456 = vmul.f32 %v9455, %v9454
    %v9457 = vmul.f32 0.5, %v9456
    %v9458 = vsub.f32 1.5, %v9457
    %v9459 = vmul.f32 %v9454, %v9458
    %v9460 = vmul.f32 %v9452, %v9459
    %vm9461 = vcmp.eq.f32.partialorder %v9452, inf
    %v9462 = vsel %vm9461, %v9452, %v9460
    %vm9463 = vcmp.eq.f32.partialorder %v9452, 0.0
    %v9464 = vand.u32 %v9452, 2147483648
    %v9465 = vsel %vm9463, %v9464, %v9462
    %v9466 = vrcp.pop %v9465
    %v9467 = vmul.f32 %v9465, %v9466
    %v9468 = vsub.f32 1.0, %v9467
    %v9469 = vmul.f32 %v9466, %v9468
    %v9470 = vadd.f32 %v9466, %v9469
    %vm9471 = vweird.f32 %v9465
    %vm9472 = vweird.f32 %v9466
    %vm9473 = vmor %vm9471, %vm9472
    %v9474 = vsel %vm9473, %v9466, %v9470
    %v9475 = vand.u32 2147483647, %v9465
    %vm9476 = vcmp.eq.f32.partialorder %v9475, 8.507059e+37
    %v9477 = vand.u32 %v9465, 2147483648
    %v9478 = vor.u32 1.1754944e-38, %v9477
    %v9479 = vsel %vm9476, %v9478, %v9474
    %v9480 = vmul.f32 %v9453, %v9479
    %v9481 = vadd.f32 %v9430, %v9480
    %v9482 = vand.u32 2147483647, %v9309
    %v9483 = vsel %vm9278, %v9482, 0.0
    %9484 = vadd.xlane.f32.xlu0 %v9483
    %v9485 = vpop.xlane.xlu0 %9484
    %v9487 = vrot.slane %v9485, 2
    %v9489 = vsel %vm3604, %v9487, 0.0
    %v9490 = vrot.slane %v9489, 4
    %v9491 = vadd.f32 %v9489, %v9490
    %v9492 = vrot.slane %v9491, 2
    %v9493 = vadd.f32 %v9491, %v9492
    %v9494 = vrot.slane %v9493, 1
    %v9495 = vadd.f32 %v9493, %v9494
    %v9496 = vmul.f32 %v9309, %v9309
    %v9497 = vsel %vm9278, %v9496, 0.0
    %9498 = vadd.xlane.f32.xlu0 %v9497
    %v9499 = vpop.xlane.xlu0 %9498
    %v9501 = vrot.slane %v9499, 2
    %v9503 = vsel %vm3604, %v9501, 0.0
    %v9504 = vrot.slane %v9503, 4
    %v9505 = vadd.f32 %v9503, %v9504
    %v9506 = vrot.slane %v9505, 2
    %v9507 = vadd.f32 %v9505, %v9506
    %v9508 = vrot.slane %v9507, 1
    %v9509 = vadd.f32 %v9507, %v9508
    %v9510 = vmul.f32 %v9495, 0.015625
    %v9511 = vrsqrt.pop %v9509
    %v9512 = vmul.f32 %v9511, %v9509
    %v9513 = vmul.f32 %v9512, %v9511
    %v9514 = vmul.f32 0.5, %v9513
    %v9515 = vsub.f32 1.5, %v9514
    %v9516 = vmul.f32 %v9511, %v9515
    %v9517 = vmul.f32 %v9509, %v9516
    %vm9518 = vcmp.eq.f32.partialorder %v9509, inf
    %v9519 = vsel %vm9518, %v9509, %v9517
    %vm9520 = vcmp.eq.f32.partialorder %v9509, 0.0
    %v9521 = vand.u32 %v9509, 2147483648
    %v9522 = vsel %vm9520, %v9521, %v9519
    %v9523 = vrcp.pop %v9522
    %v9524 = vmul.f32 %v9522, %v9523
    %v9525 = vsub.f32 1.0, %v9524
    %v9526 = vmul.f32 %v9523, %v9525
    %v9527 = vadd.f32 %v9523, %v9526
    %vm9528 = vweird.f32 %v9522
    %vm9529 = vweird.f32 %v9523
    %vm9530 = vmor %vm9528, %vm9529
    %v9531 = vsel %vm9530, %v9523, %v9527
    %v9532 = vand.u32 2147483647, %v9522
    %vm9533 = vcmp.eq.f32.partialorder %v9532, 8.507059e+37
    %v9534 = vand.u32 %v9522, 2147483648
    %v9535 = vor.u32 1.1754944e-38, %v9534
    %v9536 = vsel %vm9533, %v9535, %v9531
    %v9537 = vmul.f32 %v9510, %v9536
    %v9538 = vadd.f32 %v9481, %v9537
    %vm9539 = vcmask 0
    %9540 = vst.msk [vmem:[#allocation3] sm:$0x1] %vm9539, %v9538
    // Predicated region
    $region94: #{tpu_custom_call.1} parent=1 // pred_check
      _
    $region95: #{tpu_custom_call.1} parent=1 // pred_check_branch
      %9542 = sbr.rel (0) target = $region97
    $region96: #{tpu_custom_call.1} parent=1 // pred_region
      %9544 = vsyncadd [#allocation4], 0
      %s9546 = sshll.u32 [#allocation3], 4
      %s9547 = int_to_ptr.vmem [resolvable:$true] %s9546
      %s9548 = sshll.u32 %s23, 4
      %s9549 = int_to_ptr.hbm [resolvable:$true] %s9548
      %9551 = dma.vmem_to_hbm [thread:$0]  %s9547, 16, %s9549, [#allocation4]
    $region97: #{tpu_custom_call.1} parent=1 // pred_fallthru
      _
    // Predicated region
    $region98: #{tpu_custom_call.1} parent=1 // pred_check
      _
    $region99: #{tpu_custom_call.1} parent=1 // pred_check_branch
      %9553 = sbr.rel (0) target = $region101
    $region100: #{tpu_custom_call.1} parent=1 // pred_region
      %9555 = dma.done [#allocation4], 16
    $region101: #{tpu_custom_call.1} parent=1 // pred_fallthru
      _
    %9556 = vsyncpa [#allocation4], 1

</llo_original>
